<compile_context>
chip_gen: v7x
topology: tpu7x:2x2x1
jax: 0.10.0
libtpu: 0.0.40
codegen_flags: <defaults>
</compile_context>

<pallas_src>
import functools
import numpy as np
import jax
import jax.numpy as jnp
from jax.experimental import pallas as pl
from jax.experimental.pallas import tpu as pltpu

NUM_MICE = 3
LN_EPS = 1e-12


# ----------------------------------------------------------------------------
# small in-kernel helpers
# ----------------------------------------------------------------------------

def _ln(y, g, b, eps=LN_EPS):
    mean = jnp.mean(y, axis=-1, keepdims=True)
    var = jnp.mean((y - mean) ** 2, axis=-1, keepdims=True)
    return (y - mean) * jax.lax.rsqrt(var + eps) * g + b


def _gelu(y):
    # exact (erf) GELU, matching HF BERT default hidden_act="gelu"
    return 0.5 * y * (1.0 + jax.lax.erf(y * (1.0 / np.sqrt(2.0))))


# ----------------------------------------------------------------------------
# single fused forward kernel (one grid step per batch element)
# ----------------------------------------------------------------------------

def _forward_kernel(
        # per-batch inputs
        kp_ref, mp_ref, seg_ref, amask_ref,
        # embedding prologue params
        pe_w_ref, pe_b_ref, cls_ref, sep_ref, msk_ref,
        pos_ref, tok_ref, eg_ref, eb_ref,
        # stacked encoder params
        wq_ref, wk_ref, wv_ref, bq_ref, bk_ref, bv_ref,
        wo_ref, bo_ref, l1g_ref, l1b_ref,
        wi_ref, bi_ref, wf_ref, bf_ref, l2g_ref, l2b_ref,
        # fused projection + heads, pooler + group head
        wall_ref, ball_ref, pgw_ref, pgb_ref,
        # outputs
        slab_ref, pooled_ref, gpred_ref,
        *, num_layers, num_heads, seq_len, per_out, scale):
    T = kp_ref.shape[1]
    V = tok_ref.shape[0]

    # ---- embedding prologue: points-Linear + CLS/SEP/MASK + pos/seg + LN ----
    x_in = kp_ref[0]                                                  # (T, F)
    pe = jnp.dot(x_in, pe_w_ref[...],
                 preferred_element_type=jnp.float32) + pe_b_ref[...]  # (T, H)
    pos = jax.lax.broadcasted_iota(jnp.int32, (T, 1), 0)
    pe = jnp.where(pos == 0, cls_ref[...], pe)
    pe = jnp.where((pos > 0) & (pos % (seq_len + 1) == 0), sep_ref[...], pe)
    mp = mp_ref[0]                                                    # (T, 1)
    pe = mp * msk_ref[...] + (1.0 - mp) * pe

    # token-type embedding gather, in-kernel, via one-hot matmul against (V,H)
    seg = seg_ref[0]                                                  # (T, 1)
    one_hot = (seg == jax.lax.broadcasted_iota(jnp.int32, (T, V), 1)
               ).astype(jnp.float32)                                  # (T, V)
    seg_emb = jnp.dot(one_hot, tok_ref[...],
                      preferred_element_type=jnp.float32)             # (T, H)

    x = _ln(pe + pos_ref[...] + seg_emb, eg_ref[...], eb_ref[...])

    # extended attention mask -> additive key bias, (1, T)
    bias = (1.0 - amask_ref[0]) * -1e9

    # ---- encoder layers: weights stacked along leading (L*nH | L) axis ----
    for l in range(num_layers):
        attn = None
        for h in range(num_heads):
            i = l * num_heads + h
            # per-head weights are pre-split host-side: no activation slicing
            q = jnp.dot(x, wq_ref[i],
                        preferred_element_type=jnp.float32) + bq_ref[i]
            k = jnp.dot(x, wk_ref[i],
                        preferred_element_type=jnp.float32) + bk_ref[i]
            v = jnp.dot(x, wv_ref[i],
                        preferred_element_type=jnp.float32) + bv_ref[i]
            s = jax.lax.dot_general(q, k, (((1,), (1,)), ((), ())),
                                    preferred_element_type=jnp.float32)
            s = s * scale + bias                                      # (T, T)
            m = jnp.max(s, axis=-1, keepdims=True)
            p = jnp.exp(s - m)
            p = p / jnp.sum(p, axis=-1, keepdims=True)                # exact
            ctx = jnp.dot(p, v, preferred_element_type=jnp.float32)   # (T, dH)
            # head's (dH, H) slice of the output projection: replaces concat
            o_h = jnp.dot(ctx, wo_ref[i], preferred_element_type=jnp.float32)
            attn = o_h if attn is None else attn + o_h
        x = _ln(attn + bo_ref[l] + x, l1g_ref[l], l1b_ref[l])

        # FFN: x@Wi -> GELU -> @Wo -> +residual -> LayerNorm
        hmid = _gelu(jnp.dot(x, wi_ref[l],
                             preferred_element_type=jnp.float32) + bi_ref[l])
        y = jnp.dot(hmid, wf_ref[l],
                    preferred_element_type=jnp.float32) + bf_ref[l] + x
        x = _ln(y, l2g_ref[l], l2b_ref[l])

    # ---- fused output projection + all heads: single lane-dense slab ----
    # columns [0:per_out] = output_projection (== `embeds`), the rest are the
    # chases / lights / task / mm heads composed with the projection.
    slab = jnp.dot(x, wall_ref[...],
                   preferred_element_type=jnp.float32) + ball_ref[...]
    slab_ref[0] = slab.astype(slab_ref.dtype)

    # ---- per-mouse extraction + pooler + group-task head ----
    emb = slab[:, :per_out]                                           # (T, po)
    parts = []
    p0 = 1
    for _ in range(NUM_MICE):
        parts.append(emb[p0:p0 + seq_len, :])
        p0 += seq_len + 1
    combined = jnp.concatenate(parts, axis=-1)          # (seq_len, 3*per_out)

    lg = jnp.dot(combined, pgw_ref[...],
                 preferred_element_type=jnp.float32) + pgb_ref[...]   # (S, 2)
    logit = lg[:, 0:1]
    w = jnp.exp(logit - jnp.max(logit, axis=0, keepdims=True))
    w = w / jnp.sum(w, axis=0, keepdims=True)
    pooled_ref[0] = jnp.sum(w * combined, axis=0,
                            keepdims=True).astype(pooled_ref.dtype)
    gpred_ref[0] = lg[:, 1:2].astype(gpred_ref.dtype)


def fused_forward(params, cfg, keypoints, masked_positions, segments, amask,
                  seq_len):
    N, T, F = keypoints.shape
    H = cfg["hidden"]
    L = cfg["layers"]
    nH = cfg["heads"]
    dH = H // nH
    per_out = cfg["output_size"] // NUM_MICE
    NALL = params["w_all"].shape[1]
    PG = params["pg_w"].shape[0]
    scale = 1.0 / float(np.sqrt(dH))

    batched = lambda b: (b, 0, 0)
    sh2 = lambda b: (0, 0)
    sh3 = lambda b: (0, 0, 0)

    kernel = functools.partial(_forward_kernel, num_layers=L, num_heads=nH,
                               seq_len=seq_len, per_out=per_out, scale=scale)

    in_specs = [
        pl.BlockSpec((1, T, F), batched),              # keypoints
        pl.BlockSpec((1, T, 1), batched),              # masked_positions
        pl.BlockSpec((1, T, 1), batched),              # segments
        pl.BlockSpec((1, 1, T), batched),              # attention mask
        pl.BlockSpec((F, H), sh2),                     # pe_w
        pl.BlockSpec((1, H), sh2),                     # pe_b
        pl.BlockSpec((1, H), sh2),                     # cls
        pl.BlockSpec((1, H), sh2),                     # sep
        pl.BlockSpec((1, H), sh2),                     # mask
        pl.BlockSpec((T, H), sh2),                     # pos_emb[:T]
        pl.BlockSpec(params["tok_emb"].shape, sh2),    # tok_emb
        pl.BlockSpec((1, H), sh2),                     # emb_ln_g
        pl.BlockSpec((1, H), sh2),                     # emb_ln_b
        pl.BlockSpec((L * nH, H, dH), sh3),            # wq
        pl.BlockSpec((L * nH, H, dH), sh3),            # wk
        pl.BlockSpec((L * nH, H, dH), sh3),            # wv
        pl.BlockSpec((L * nH, 1, dH), sh3),            # bq
        pl.BlockSpec((L * nH, 1, dH), sh3),            # bk
        pl.BlockSpec((L * nH, 1, dH), sh3),            # bv
        pl.BlockSpec((L * nH, dH, H), sh3),            # wo (attn out, per head)
        pl.BlockSpec((L, 1, H), sh3),                  # bo
        pl.BlockSpec((L, 1, H), sh3),                  # ln1_g
        pl.BlockSpec((L, 1, H), sh3),                  # ln1_b
        pl.BlockSpec((L, H, cfg["intermediate"]), sh3),  # wi
        pl.BlockSpec((L, 1, cfg["intermediate"]), sh3),  # bi
        pl.BlockSpec((L, cfg["intermediate"], H), sh3),  # wf
        pl.BlockSpec((L, 1, H), sh3),                  # bf
        pl.BlockSpec((L, 1, H), sh3),                  # ln2_g
        pl.BlockSpec((L, 1, H), sh3),                  # ln2_b
        pl.BlockSpec((H, NALL), sh2),                  # w_all (proj + heads)
        pl.BlockSpec((1, NALL), sh2),                  # b_all
        pl.BlockSpec((PG, 2), sh2),                    # pooler+group weight
        pl.BlockSpec((1, 2), sh2),                     # pooler+group bias
    ]
    out_shapes = (
        jax.ShapeDtypeStruct((N, T, NALL), jnp.float32),
        jax.ShapeDtypeStruct((N, 1, PG), jnp.float32),
        jax.ShapeDtypeStruct((N, seq_len, 1), jnp.float32),
    )
    out_specs = (
        pl.BlockSpec((1, T, NALL), batched),
        pl.BlockSpec((1, 1, PG), batched),
        pl.BlockSpec((1, seq_len, 1), batched),
    )
    return pl.pallas_call(
        kernel,
        out_shape=out_shapes,
        grid=(N,),
        in_specs=in_specs,
        out_specs=out_specs,
        compiler_params=pltpu.CompilerParams(dimension_semantics=("parallel",)),
    )(keypoints, masked_positions, segments, amask,
      params["pe_w"], params["pe_b"], params["cls"], params["sep"],
      params["mask"], params["pos_emb"], params["tok_emb"],
      params["emb_g"], params["emb_b"],
      params["wq"], params["wk"], params["wv"],
      params["bq"], params["bk"], params["bv"],
      params["wo_attn"], params["bo_attn"], params["ln1_g"], params["ln1_b"],
      params["wi"], params["bi"], params["wf"], params["bf"],
      params["ln2_g"], params["ln2_b"],
      params["w_all"], params["b_all"], params["pg_w"], params["pg_b"])


# ----------------------------------------------------------------------------
# Losses (small scalar reductions -> plain JAX glue)
# ----------------------------------------------------------------------------

def bce_with_logits_mean(logits, labels):
    return jnp.mean(jnp.maximum(logits, 0.0) - logits * labels
                    + jnp.log1p(jnp.exp(-jnp.abs(logits))))


# ----------------------------------------------------------------------------
# Parameter initialization (deterministic, synthetic) -> kernel-ready layout
# ----------------------------------------------------------------------------

def init_params(key, cfg):
    keys = iter(jax.random.split(key, 64))
    H = cfg["hidden"]
    L = cfg["layers"]
    nH = cfg["heads"]
    I = cfg["intermediate"]
    dH = H // nH
    per_out = cfg["output_size"] // NUM_MICE
    per_feat = cfg["num_features"] // NUM_MICE

    def dense(kin, kout):
        return (jax.random.normal(next(keys), (kin, kout), jnp.float32) * 0.02,
                jnp.zeros((kout,), jnp.float32))

    def table(rows, cols):
        return jax.random.normal(next(keys), (rows, cols), jnp.float32) * 0.02

    p = {}
    pe_w, pe_b = dense(per_feat, H)
    p["pe_w"], p["pe_b"] = pe_w, pe_b.reshape(1, H)
    p["cls"] = table(1, H)
    p["sep"] = table(1, H)
    p["mask"] = table(1, H)
    p["pos_emb"] = table(cfg["max_pos"], H)
    p["tok_emb"] = table(cfg["type_vocab"], H)
    p["emb_g"] = jnp.ones((1, H), jnp.float32)
    p["emb_b"] = jnp.zeros((1, H), jnp.float32)

    wq, wk, wv, bq, bk, bv, wo, bo = [], [], [], [], [], [], [], []
    l1g, l1b, wi, bi, wf, bf, l2g, l2b = [], [], [], [], [], [], [], []
    for _ in range(L):
        qw, qb = dense(H, H)
        kw, kb = dense(H, H)
        vw, vb = dense(H, H)
        aw, ab = dense(H, H)
        # head-major repack (offline) so the kernel never lane-slices activations
        wq.append(qw.reshape(H, nH, dH).transpose(1, 0, 2))   # (nH, H, dH)
        wk.append(kw.reshape(H, nH, dH).transpose(1, 0, 2))
        wv.append(vw.reshape(H, nH, dH).transpose(1, 0, 2))
        bq.append(qb.reshape(nH, 1, dH))
        bk.append(kb.reshape(nH, 1, dH))
        bv.append(vb.reshape(nH, 1, dH))
        wo.append(aw.reshape(nH, dH, H))                      # (nH, dH, H)
        bo.append(ab.reshape(1, H))
        l1g.append(jnp.ones((1, H), jnp.float32))
        l1b.append(jnp.zeros((1, H), jnp.float32))
        iw, ib = dense(H, I)
        ow, ob = dense(I, H)
        wi.append(iw)
        bi.append(ib.reshape(1, I))
        wf.append(ow)
        bf.append(ob.reshape(1, H))
        l2g.append(jnp.ones((1, H), jnp.float32))
        l2b.append(jnp.zeros((1, H), jnp.float32))

    p["wq"] = jnp.concatenate(wq, axis=0)       # (L*nH, H, dH)
    p["wk"] = jnp.concatenate(wk, axis=0)
    p["wv"] = jnp.concatenate(wv, axis=0)
    p["bq"] = jnp.concatenate(bq, axis=0)       # (L*nH, 1, dH)
    p["bk"] = jnp.concatenate(bk, axis=0)
    p["bv"] = jnp.concatenate(bv, axis=0)
    p["wo_attn"] = jnp.concatenate(wo, axis=0)  # (L*nH, dH, H)
    p["bo_attn"] = jnp.stack(bo, axis=0)        # (L, 1, H)
    p["ln1_g"] = jnp.stack(l1g, axis=0)
    p["ln1_b"] = jnp.stack(l1b, axis=0)
    p["wi"] = jnp.stack(wi, axis=0)             # (L, H, I)
    p["bi"] = jnp.stack(bi, axis=0)
    p["wf"] = jnp.stack(wf, axis=0)             # (L, I, H)
    p["bf"] = jnp.stack(bf, axis=0)
    p["ln2_g"] = jnp.stack(l2g, axis=0)
    p["ln2_b"] = jnp.stack(l2b, axis=0)

    # output projection + heads, algebraically composed into one (H, 81) matmul
    proj_w, proj_b = dense(H, per_out)
    chases_w, chases_b = dense(per_out, 1)
    lights_w, lights_b = dense(per_out, 1)
    task_w, task_b = dense(per_out, 59)
    mm_w, mm_b = dense(per_out, per_feat)
    w_heads = jnp.concatenate([chases_w, lights_w, task_w, mm_w], axis=1)
    b_heads = jnp.concatenate([chases_b, lights_b, task_b, mm_b])
    p["w_all"] = jnp.concatenate([proj_w, proj_w @ w_heads], axis=1)
    p["b_all"] = jnp.concatenate([proj_b, proj_b @ w_heads + b_heads]
                                 ).reshape(1, -1)

    pooler_w, pooler_b = dense(NUM_MICE * per_out, 1)
    group_w, group_b = dense(NUM_MICE * per_out, 1)
    p["pg_w"] = jnp.concatenate([pooler_w, group_w], axis=1)   # (3*per_out, 2)
    p["pg_b"] = jnp.concatenate([pooler_b, group_b]).reshape(1, 2)

    # present in the module but not exercised (see TODOs in the forward)
    _ = dense(per_out, 1)   # seq_replace_head
    _ = dense(per_out, 9)   # inter_mouse_task_head
    return p


# ----------------------------------------------------------------------------
# MouseBERTSep forward
# ----------------------------------------------------------------------------

def mouse_bert_sep_forward(params, cfg, keypoints, attention_mask,
                           label_mask=None, labels=None, masked_positions=None,
                           segments=None, chases=None, lights=None,
                           task_annotations=None, group_task_annotations=None):
    N, T, _ = keypoints.shape
    seq_len = (T - 4) // NUM_MICE
    per_out = cfg["output_size"] // NUM_MICE
    per_feat = cfg["num_features"] // NUM_MICE
    labels = labels if labels is not None else keypoints

    if masked_positions is None:
        mp = jnp.zeros((N, T, 1), jnp.float32)
    else:
        mp = masked_positions.astype(jnp.float32).reshape(N, T, 1)
    if segments is None:
        seg = jnp.zeros((N, T, 1), jnp.int32)
    else:
        seg = segments.astype(jnp.int32).reshape(N, T, 1)
    amask = attention_mask.astype(jnp.float32).reshape(N, 1, T)

    # --- single fused kernel: embeddings -> encoder -> proj+heads -> pooler ---
    slab, pooled, group_preds = fused_forward(params, cfg, keypoints, mp, seg,
                                              amask, seq_len)

    embeddings = slab[..., :per_out]                       # (N, T, per_out)
    off = per_out
    chases_pred = slab[..., off:off + 1]; off += 1
    lights_pred = slab[..., off:off + 1]; off += 1
    task_pred = slab[..., off:off + 59]; off += 59
    mm_pred = slab[..., off:off + per_feat]
    pooled_embeddings = pooled[:, 0, :]                    # (N, 3*per_out)

    losses = {}
    loss = 0.0
    # TODO(synk): seq_replace_head(pooled) has a hidden-dim mismatch for
    #             NUM_MICE>1 in the reference module; branch not exercised.
    # TODO(synk): calculate_inter_mouse_loss is called with the wrong arity in
    #             the reference forward; branch not exercised.
    if chases is not None:
        chases_loss = bce_with_logits_mean(chases_pred, chases)
        losses["chases_loss"] = chases_loss
        loss = loss + 0.05 * chases_loss
    if lights is not None:
        lights_loss = bce_with_logits_mean(lights_pred, lights)
        losses["lights_loss"] = lights_loss
        loss = loss + 0.5 * lights_loss
    if task_annotations is not None:
        task_loss = jnp.mean((task_pred - task_annotations) ** 2)
        losses["task_loss"] = task_loss
        loss = loss + 0.8 * task_loss
    if group_task_annotations is not None:
        group_task_loss = jnp.mean((group_preds - group_task_annotations) ** 2)
        losses["group_task_loss"] = group_task_loss
        loss = loss + 0.4 * group_task_loss
    if label_mask is not None:
        se = (mm_pred - labels) ** 2
        num = (label_mask * se).sum(axis=1)
        den = label_mask.sum(axis=1)
        # guard against all-unmasked batches (would be NaN in the reference)
        mm_per = jnp.where(den > 0, num / jnp.where(den > 0, den, 1.0), 0.0)
        mm_loss = jnp.mean(mm_per)
        losses["masked_modelling_loss"] = mm_loss
        loss = loss + mm_loss

    return {"loss": loss, "embeds": embeddings,
            "pooled_embeds": pooled_embeddings, **losses}


# ----------------------------------------------------------------------------
# Demo
# ----------------------------------------------------------------------------

if __name__ == "__main__":
    cfg = dict(hidden=32, layers=2, heads=4, intermediate=64, max_pos=64,
               type_vocab=4, output_size=24, num_features=36)

    key = jax.random.PRNGKey(0)
    pkey, dkey = jax.random.split(key)
    params = init_params(pkey, cfg)

    N = 2
    seq_len = 4
    T = NUM_MICE * seq_len + 4                        # 16 = [CLS][m0][SEP]...
    per_feat = cfg["num_features"] // NUM_MICE        # 12

    ks = jax.random.split(dkey, 8)
    keypoints = jax.random.normal(ks[0], (N, T, per_feat), jnp.float32)
    attention_mask = jnp.ones((N, T), jnp.float32)
    masked_positions = jnp.broadcast_to(
        (jnp.arange(T) % 5 == 2)[None, :, None], (N, T, 1))
    label_mask = masked_positions.astype(jnp.float32)

    seg_np = np.zeros((T,), np.int32)
    pos = 1
    for m in range(NUM_MICE):
        seg_np[pos:pos + seq_len + 1] = m
        pos += seq_len + 1
    segments = jnp.broadcast_to(jnp.asarray(seg_np)[None, :], (N, T))

    chases = (jax.random.uniform(ks[1], (N, T, 1)) > 0.5).astype(jnp.float32)
    lights = (jax.random.uniform(ks[2], (N, T, 1)) > 0.5).astype(jnp.float32)
    task_annotations = jax.random.normal(ks[3], (N, T, 59), jnp.float32)
    group_task_annotations = jax.random.normal(ks[4], (N, seq_len, 1),
                                               jnp.float32)

    @jax.jit
    def run(params, keypoints, attention_mask, masked_positions, segments,
            chases, lights, task_annotations, group_task_annotations,
            label_mask):
        return mouse_bert_sep_forward(
            params, cfg, keypoints, attention_mask,
            label_mask=label_mask, labels=None,
            masked_positions=masked_positions, segments=segments,
            chases=chases, lights=lights,
            task_annotations=task_annotations,
            group_task_annotations=group_task_annotations)

    out = run(params, keypoints, attention_mask, masked_positions, segments,
              chases, lights, task_annotations, group_task_annotations,
              label_mask)
    jax.block_until_ready(out)
    print("KERNEL_OK")
</pallas_src>

<mosaic_0001>
module attributes {stable_mosaic.version = 11 : i64} {
  func.func @_forward_kernel(%arg0: i32, %arg1: memref<1x16x12xf32, #tpu.memory_space<vmem>>, %arg2: memref<1x16x1xf32, #tpu.memory_space<vmem>>, %arg3: memref<1x16x1xi32, #tpu.memory_space<vmem>>, %arg4: memref<1x1x16xf32, #tpu.memory_space<vmem>>, %arg5: memref<12x32xf32, #tpu.memory_space<vmem>>, %arg6: memref<1x32xf32, #tpu.memory_space<vmem>>, %arg7: memref<1x32xf32, #tpu.memory_space<vmem>>, %arg8: memref<1x32xf32, #tpu.memory_space<vmem>>, %arg9: memref<1x32xf32, #tpu.memory_space<vmem>>, %arg10: memref<16x32xf32, #tpu.memory_space<vmem>>, %arg11: memref<4x32xf32, #tpu.memory_space<vmem>>, %arg12: memref<1x32xf32, #tpu.memory_space<vmem>>, %arg13: memref<1x32xf32, #tpu.memory_space<vmem>>, %arg14: memref<8x32x8xf32, #tpu.memory_space<vmem>>, %arg15: memref<8x32x8xf32, #tpu.memory_space<vmem>>, %arg16: memref<8x32x8xf32, #tpu.memory_space<vmem>>, %arg17: memref<8x1x8xf32, #tpu.memory_space<vmem>>, %arg18: memref<8x1x8xf32, #tpu.memory_space<vmem>>, %arg19: memref<8x1x8xf32, #tpu.memory_space<vmem>>, %arg20: memref<8x8x32xf32, #tpu.memory_space<vmem>>, %arg21: memref<2x1x32xf32, #tpu.memory_space<vmem>>, %arg22: memref<2x1x32xf32, #tpu.memory_space<vmem>>, %arg23: memref<2x1x32xf32, #tpu.memory_space<vmem>>, %arg24: memref<2x32x64xf32, #tpu.memory_space<vmem>>, %arg25: memref<2x1x64xf32, #tpu.memory_space<vmem>>, %arg26: memref<2x64x32xf32, #tpu.memory_space<vmem>>, %arg27: memref<2x1x32xf32, #tpu.memory_space<vmem>>, %arg28: memref<2x1x32xf32, #tpu.memory_space<vmem>>, %arg29: memref<2x1x32xf32, #tpu.memory_space<vmem>>, %arg30: memref<32x81xf32, #tpu.memory_space<vmem>>, %arg31: memref<1x81xf32, #tpu.memory_space<vmem>>, %arg32: memref<24x2xf32, #tpu.memory_space<vmem>>, %arg33: memref<1x2xf32, #tpu.memory_space<vmem>>, %arg34: memref<1x16x81xf32, #tpu.memory_space<vmem>>, %arg35: memref<1x1x24xf32, #tpu.memory_space<vmem>>, %arg36: memref<1x4x1xf32, #tpu.memory_space<vmem>>) attributes {dimension_semantics = [#tpu.dimension_semantics<parallel>], iteration_bounds = array<i64: 2>, scalar_prefetch = 0 : i64, scratch_operands = 0 : i64, tpu.core_type = #tpu.core_type<tc>, window_params = [{transform_indices = @transform_0, window_bounds = array<i64: 1, 16, 12>}, {transform_indices = @transform_1, window_bounds = array<i64: 1, 16, 1>}, {transform_indices = @transform_2, window_bounds = array<i64: 1, 16, 1>}, {transform_indices = @transform_3, window_bounds = array<i64: 1, 1, 16>}, {pipeline_mode = #tpu.pipeline_mode<synchronous>, transform_indices = @transform_4, window_bounds = array<i64: 12, 32>}, {pipeline_mode = #tpu.pipeline_mode<synchronous>, transform_indices = @transform_5, window_bounds = array<i64: 1, 32>}, {pipeline_mode = #tpu.pipeline_mode<synchronous>, transform_indices = @transform_6, window_bounds = array<i64: 1, 32>}, {pipeline_mode = #tpu.pipeline_mode<synchronous>, transform_indices = @transform_7, window_bounds = array<i64: 1, 32>}, {pipeline_mode = #tpu.pipeline_mode<synchronous>, transform_indices = @transform_8, window_bounds = array<i64: 1, 32>}, {transform_indices = @transform_9, window_bounds = array<i64: 16, 32>}, {pipeline_mode = #tpu.pipeline_mode<synchronous>, transform_indices = @transform_10, window_bounds = array<i64: 4, 32>}, {pipeline_mode = #tpu.pipeline_mode<synchronous>, transform_indices = @transform_11, window_bounds = array<i64: 1, 32>}, {pipeline_mode = #tpu.pipeline_mode<synchronous>, transform_indices = @transform_12, window_bounds = array<i64: 1, 32>}, {pipeline_mode = #tpu.pipeline_mode<synchronous>, transform_indices = @transform_13, window_bounds = array<i64: 8, 32, 8>}, {pipeline_mode = #tpu.pipeline_mode<synchronous>, transform_indices = @transform_14, window_bounds = array<i64: 8, 32, 8>}, {pipeline_mode = #tpu.pipeline_mode<synchronous>, transform_indices = @transform_15, window_bounds = array<i64: 8, 32, 8>}, {pipeline_mode = #tpu.pipeline_mode<synchronous>, transform_indices = @transform_16, window_bounds = array<i64: 8, 1, 8>}, {pipeline_mode = #tpu.pipeline_mode<synchronous>, transform_indices = @transform_17, window_bounds = array<i64: 8, 1, 8>}, {pipeline_mode = #tpu.pipeline_mode<synchronous>, transform_indices = @transform_18, window_bounds = array<i64: 8, 1, 8>}, {pipeline_mode = #tpu.pipeline_mode<synchronous>, transform_indices = @transform_19, window_bounds = array<i64: 8, 8, 32>}, {pipeline_mode = #tpu.pipeline_mode<synchronous>, transform_indices = @transform_20, window_bounds = array<i64: 2, 1, 32>}, {pipeline_mode = #tpu.pipeline_mode<synchronous>, transform_indices = @transform_21, window_bounds = array<i64: 2, 1, 32>}, {pipeline_mode = #tpu.pipeline_mode<synchronous>, transform_indices = @transform_22, window_bounds = array<i64: 2, 1, 32>}, {pipeline_mode = #tpu.pipeline_mode<synchronous>, transform_indices = @transform_23, window_bounds = array<i64: 2, 32, 64>}, {pipeline_mode = #tpu.pipeline_mode<synchronous>, transform_indices = @transform_24, window_bounds = array<i64: 2, 1, 64>}, {pipeline_mode = #tpu.pipeline_mode<synchronous>, transform_indices = @transform_25, window_bounds = array<i64: 2, 64, 32>}, {pipeline_mode = #tpu.pipeline_mode<synchronous>, transform_indices = @transform_26, window_bounds = array<i64: 2, 1, 32>}, {pipeline_mode = #tpu.pipeline_mode<synchronous>, transform_indices = @transform_27, window_bounds = array<i64: 2, 1, 32>}, {pipeline_mode = #tpu.pipeline_mode<synchronous>, transform_indices = @transform_28, window_bounds = array<i64: 2, 1, 32>}, {pipeline_mode = #tpu.pipeline_mode<synchronous>, transform_indices = @transform_29, window_bounds = array<i64: 32, 81>}, {pipeline_mode = #tpu.pipeline_mode<synchronous>, transform_indices = @transform_30, window_bounds = array<i64: 1, 81>}, {pipeline_mode = #tpu.pipeline_mode<synchronous>, transform_indices = @transform_31, window_bounds = array<i64: 24, 2>}, {pipeline_mode = #tpu.pipeline_mode<synchronous>, transform_indices = @transform_32, window_bounds = array<i64: 1, 2>}, {transform_indices = @transform_33, window_bounds = array<i64: 1, 16, 81>}, {transform_indices = @transform_34, window_bounds = array<i64: 1, 1, 24>}, {transform_indices = @transform_35, window_bounds = array<i64: 1, 4, 1>}]} {
    %c0 = arith.constant 0 : index
    %c0_0 = arith.constant 0 : index
    %c0_1 = arith.constant 0 : index
    %0 = vector.load %arg1[%c0, %c0_0, %c0_1] : memref<1x16x12xf32, #tpu.memory_space<vmem>>, vector<1x16x12xf32>
    %1 = vector.shape_cast %0 : vector<1x16x12xf32> to vector<16x12xf32>
    %c0_2 = arith.constant 0 : index
    %c0_3 = arith.constant 0 : index
    %2 = vector.load %arg5[%c0_2, %c0_3] : memref<12x32xf32, #tpu.memory_space<vmem>>, vector<12x32xf32>
    %cst = arith.constant dense<0.000000e+00> : vector<16x32xf32>
    %3 = tpu.matmul %1, %2, %cst {dimension_numbers = #tpu.dot_dimension_numbers<[1], [0], [0], [1], [0, 0, 1, 1], [], []>} : vector<16x12xf32>, vector<12x32xf32>, vector<16x32xf32> -> vector<16x32xf32>
    %c0_4 = arith.constant 0 : index
    %c0_5 = arith.constant 0 : index
    %4 = vector.load %arg6[%c0_4, %c0_5] : memref<1x32xf32, #tpu.memory_space<vmem>>, vector<1x32xf32>
    %5 = vector.broadcast %4 : vector<1x32xf32> to vector<16x32xf32>
    %6 = arith.addf %3, %5 : vector<16x32xf32>
    %7 = tpu.iota {dimensions = array<i32: 0>} : vector<16x1xi32>
    %c0_i32 = arith.constant 0 : i32
    %8 = vector.broadcast %c0_i32 : i32 to vector<16x1xi32>
    %9 = arith.cmpi eq, %7, %8 : vector<16x1xi32>
    %c0_6 = arith.constant 0 : index
    %c0_7 = arith.constant 0 : index
    %10 = vector.load %arg7[%c0_6, %c0_7] : memref<1x32xf32, #tpu.memory_space<vmem>>, vector<1x32xf32>
    %11 = vector.shape_cast %9 : vector<16x1xi1> to vector<16x1xi1>
    %12 = vector.broadcast %11 : vector<16x1xi1> to vector<16x32xi1>
    %13 = vector.shape_cast %10 : vector<1x32xf32> to vector<1x32xf32>
    %14 = vector.broadcast %13 : vector<1x32xf32> to vector<16x32xf32>
    %15 = arith.select %12, %14, %6 : vector<16x32xi1>, vector<16x32xf32>
    %c0_i32_8 = arith.constant 0 : i32
    %16 = vector.broadcast %c0_i32_8 : i32 to vector<16x1xi32>
    %17 = arith.cmpi sgt, %7, %16 : vector<16x1xi32>
    %c5_i32 = arith.constant 5 : i32
    %c0_i32_9 = arith.constant 0 : i32
    %18 = arith.cmpi eq, %c5_i32, %c0_i32_9 : i32
    %c1_i32 = arith.constant 1 : i32
    %19 = arith.select %18, %c1_i32, %c5_i32 : i32
    %20 = vector.broadcast %19 : i32 to vector<16x1xi32>
    %21 = arith.remsi %7, %20 : vector<16x1xi32>
    %c0_i32_10 = arith.constant 0 : i32
    %22 = vector.broadcast %c0_i32_10 : i32 to vector<16x1xi32>
    %23 = arith.cmpi ne, %21, %22 : vector<16x1xi32>
    %c0_i32_11 = arith.constant 0 : i32
    %24 = vector.broadcast %c0_i32_11 : i32 to vector<16x1xi32>
    %25 = arith.cmpi slt, %21, %24 : vector<16x1xi32>
    %c0_i32_12 = arith.constant 0 : i32
    %26 = arith.cmpi slt, %19, %c0_i32_12 : i32
    %27 = vector.broadcast %26 : i1 to vector<16x1xi1>
    %28 = vector.broadcast %27 : vector<16x1xi1> to vector<16x1xi1>
    %29 = arith.xori %25, %28 : vector<16x1xi1>
    %30 = arith.andi %29, %23 : vector<16x1xi1>
    %31 = vector.broadcast %19 : i32 to vector<16x1xi32>
    %32 = arith.addi %21, %31 : vector<16x1xi32>
    %33 = arith.select %30, %32, %21 : vector<16x1xi1>, vector<16x1xi32>
    %c0_i32_13 = arith.constant 0 : i32
    %34 = vector.broadcast %c0_i32_13 : i32 to vector<16x1xi32>
    %35 = arith.cmpi eq, %33, %34 : vector<16x1xi32>
    %36 = arith.andi %17, %35 : vector<16x1xi1>
    %c0_14 = arith.constant 0 : index
    %c0_15 = arith.constant 0 : index
    %37 = vector.load %arg8[%c0_14, %c0_15] : memref<1x32xf32, #tpu.memory_space<vmem>>, vector<1x32xf32>
    %38 = vector.shape_cast %36 : vector<16x1xi1> to vector<16x1xi1>
    %39 = vector.broadcast %38 : vector<16x1xi1> to vector<16x32xi1>
    %40 = vector.shape_cast %37 : vector<1x32xf32> to vector<1x32xf32>
    %41 = vector.broadcast %40 : vector<1x32xf32> to vector<16x32xf32>
    %42 = arith.select %39, %41, %15 : vector<16x32xi1>, vector<16x32xf32>
    %c0_16 = arith.constant 0 : index
    %c0_17 = arith.constant 0 : index
    %c0_18 = arith.constant 0 : index
    %43 = vector.load %arg2[%c0_16, %c0_17, %c0_18] : memref<1x16x1xf32, #tpu.memory_space<vmem>>, vector<1x16x1xf32>
    %44 = vector.shape_cast %43 : vector<1x16x1xf32> to vector<16x1xf32>
    %c0_19 = arith.constant 0 : index
    %c0_20 = arith.constant 0 : index
    %45 = vector.load %arg9[%c0_19, %c0_20] : memref<1x32xf32, #tpu.memory_space<vmem>>, vector<1x32xf32>
    %46 = vector.broadcast %44 : vector<16x1xf32> to vector<16x32xf32>
    %47 = vector.broadcast %45 : vector<1x32xf32> to vector<16x32xf32>
    %48 = arith.mulf %46, %47 : vector<16x32xf32>
    %cst_21 = arith.constant 1.000000e+00 : f32
    %49 = vector.broadcast %cst_21 : f32 to vector<16x1xf32>
    %50 = arith.subf %49, %44 : vector<16x1xf32>
    %51 = vector.broadcast %50 : vector<16x1xf32> to vector<16x32xf32>
    %52 = arith.mulf %51, %42 : vector<16x32xf32>
    %53 = arith.addf %48, %52 : vector<16x32xf32>
    %c0_22 = arith.constant 0 : index
    %c0_23 = arith.constant 0 : index
    %c0_24 = arith.constant 0 : index
    %54 = vector.load %arg3[%c0_22, %c0_23, %c0_24] : memref<1x16x1xi32, #tpu.memory_space<vmem>>, vector<1x16x1xi32>
    %55 = vector.shape_cast %54 : vector<1x16x1xi32> to vector<16x1xi32>
    %56 = tpu.iota {dimensions = array<i32: 1>} : vector<16x4xi32>
    %57 = vector.broadcast %55 : vector<16x1xi32> to vector<16x4xi32>
    %58 = arith.cmpi eq, %57, %56 : vector<16x4xi32>
    %59 = arith.extui %58 : vector<16x4xi1> to vector<16x4xi32>
    %60 = arith.sitofp %59 : vector<16x4xi32> to vector<16x4xf32>
    %c0_25 = arith.constant 0 : index
    %c0_26 = arith.constant 0 : index
    %61 = vector.load %arg11[%c0_25, %c0_26] : memref<4x32xf32, #tpu.memory_space<vmem>>, vector<4x32xf32>
    %cst_27 = arith.constant dense<0.000000e+00> : vector<16x32xf32>
    %62 = tpu.matmul %60, %61, %cst_27 {dimension_numbers = #tpu.dot_dimension_numbers<[1], [0], [0], [1], [0, 0, 1, 1], [], []>} : vector<16x4xf32>, vector<4x32xf32>, vector<16x32xf32> -> vector<16x32xf32>
    %c0_28 = arith.constant 0 : index
    %c0_29 = arith.constant 0 : index
    %63 = vector.load %arg10[%c0_28, %c0_29] : memref<16x32xf32, #tpu.memory_space<vmem>>, vector<16x32xf32>
    %64 = arith.addf %53, %63 : vector<16x32xf32>
    %65 = arith.addf %64, %62 : vector<16x32xf32>
    %c0_30 = arith.constant 0 : index
    %c0_31 = arith.constant 0 : index
    %66 = vector.load %arg12[%c0_30, %c0_31] : memref<1x32xf32, #tpu.memory_space<vmem>>, vector<1x32xf32>
    %c0_32 = arith.constant 0 : index
    %c0_33 = arith.constant 0 : index
    %67 = vector.load %arg13[%c0_32, %c0_33] : memref<1x32xf32, #tpu.memory_space<vmem>>, vector<1x32xf32>
    %cst_34 = arith.constant dense<0.000000e+00> : vector<16xf32>
    %68 = vector.multi_reduction <add>, %65, %cst_34 [1] : vector<16x32xf32> to vector<16xf32>
    %69 = vector.shape_cast %68 : vector<16xf32> to vector<16x1xf32>
    %cst_35 = arith.constant 3.200000e+01 : f32
    %70 = vector.broadcast %cst_35 : f32 to vector<16x1xf32>
    %71 = arith.divf %69, %70 : vector<16x1xf32>
    %72 = vector.broadcast %71 : vector<16x1xf32> to vector<16x32xf32>
    %73 = arith.subf %65, %72 : vector<16x32xf32>
    %74 = arith.mulf %73, %73 : vector<16x32xf32>
    %cst_36 = arith.constant dense<0.000000e+00> : vector<16xf32>
    %75 = vector.multi_reduction <add>, %74, %cst_36 [1] : vector<16x32xf32> to vector<16xf32>
    %76 = vector.shape_cast %75 : vector<16xf32> to vector<16x1xf32>
    %cst_37 = arith.constant 3.200000e+01 : f32
    %77 = vector.broadcast %cst_37 : f32 to vector<16x1xf32>
    %78 = arith.divf %76, %77 : vector<16x1xf32>
    %79 = vector.broadcast %71 : vector<16x1xf32> to vector<16x32xf32>
    %80 = arith.subf %65, %79 : vector<16x32xf32>
    %cst_38 = arith.constant 9.99999996E-13 : f32
    %81 = vector.broadcast %cst_38 : f32 to vector<16x1xf32>
    %82 = arith.addf %78, %81 : vector<16x1xf32>
    %83 = math.rsqrt %82 : vector<16x1xf32>
    %84 = vector.broadcast %83 : vector<16x1xf32> to vector<16x32xf32>
    %85 = arith.mulf %80, %84 : vector<16x32xf32>
    %86 = vector.broadcast %66 : vector<1x32xf32> to vector<16x32xf32>
    %87 = arith.mulf %85, %86 : vector<16x32xf32>
    %88 = vector.broadcast %67 : vector<1x32xf32> to vector<16x32xf32>
    %89 = arith.addf %87, %88 : vector<16x32xf32>
    %c0_39 = arith.constant 0 : index
    %c0_40 = arith.constant 0 : index
    %c0_41 = arith.constant 0 : index
    %90 = vector.load %arg4[%c0_39, %c0_40, %c0_41] : memref<1x1x16xf32, #tpu.memory_space<vmem>>, vector<1x1x16xf32>
    %91 = vector.shape_cast %90 : vector<1x1x16xf32> to vector<1x16xf32>
    %cst_42 = arith.constant 1.000000e+00 : f32
    %92 = vector.broadcast %cst_42 : f32 to vector<1x16xf32>
    %93 = arith.subf %92, %91 : vector<1x16xf32>
    %cst_43 = arith.constant -1.000000e+09 : f32
    %94 = vector.broadcast %cst_43 : f32 to vector<1x16xf32>
    %95 = arith.mulf %93, %94 : vector<1x16xf32>
    %c0_44 = arith.constant 0 : index
    %c0_45 = arith.constant 0 : index
    %c0_46 = arith.constant 0 : index
    %96 = vector.load %arg14[%c0_44, %c0_45, %c0_46] : memref<8x32x8xf32, #tpu.memory_space<vmem>>, vector<1x32x8xf32>
    %97 = vector.shape_cast %96 : vector<1x32x8xf32> to vector<32x8xf32>
    %cst_47 = arith.constant dense<0.000000e+00> : vector<16x8xf32>
    %98 = tpu.matmul %89, %97, %cst_47 {dimension_numbers = #tpu.dot_dimension_numbers<[1], [0], [0], [1], [0, 0, 1, 1], [], []>} : vector<16x32xf32>, vector<32x8xf32>, vector<16x8xf32> -> vector<16x8xf32>
    %c0_48 = arith.constant 0 : index
    %c0_49 = arith.constant 0 : index
    %c0_50 = arith.constant 0 : index
    %99 = vector.load %arg17[%c0_48, %c0_49, %c0_50] : memref<8x1x8xf32, #tpu.memory_space<vmem>>, vector<1x1x8xf32>
    %100 = vector.shape_cast %99 : vector<1x1x8xf32> to vector<1x8xf32>
    %101 = vector.broadcast %100 : vector<1x8xf32> to vector<16x8xf32>
    %102 = arith.addf %98, %101 : vector<16x8xf32>
    %c0_51 = arith.constant 0 : index
    %c0_52 = arith.constant 0 : index
    %c0_53 = arith.constant 0 : index
    %103 = vector.load %arg15[%c0_51, %c0_52, %c0_53] : memref<8x32x8xf32, #tpu.memory_space<vmem>>, vector<1x32x8xf32>
    %104 = vector.shape_cast %103 : vector<1x32x8xf32> to vector<32x8xf32>
    %cst_54 = arith.constant dense<0.000000e+00> : vector<16x8xf32>
    %105 = tpu.matmul %89, %104, %cst_54 {dimension_numbers = #tpu.dot_dimension_numbers<[1], [0], [0], [1], [0, 0, 1, 1], [], []>} : vector<16x32xf32>, vector<32x8xf32>, vector<16x8xf32> -> vector<16x8xf32>
    %c0_55 = arith.constant 0 : index
    %c0_56 = arith.constant 0 : index
    %c0_57 = arith.constant 0 : index
    %106 = vector.load %arg18[%c0_55, %c0_56, %c0_57] : memref<8x1x8xf32, #tpu.memory_space<vmem>>, vector<1x1x8xf32>
    %107 = vector.shape_cast %106 : vector<1x1x8xf32> to vector<1x8xf32>
    %108 = vector.broadcast %107 : vector<1x8xf32> to vector<16x8xf32>
    %109 = arith.addf %105, %108 : vector<16x8xf32>
    %c0_58 = arith.constant 0 : index
    %c0_59 = arith.constant 0 : index
    %c0_60 = arith.constant 0 : index
    %110 = vector.load %arg16[%c0_58, %c0_59, %c0_60] : memref<8x32x8xf32, #tpu.memory_space<vmem>>, vector<1x32x8xf32>
    %111 = vector.shape_cast %110 : vector<1x32x8xf32> to vector<32x8xf32>
    %cst_61 = arith.constant dense<0.000000e+00> : vector<16x8xf32>
    %112 = tpu.matmul %89, %111, %cst_61 {dimension_numbers = #tpu.dot_dimension_numbers<[1], [0], [0], [1], [0, 0, 1, 1], [], []>} : vector<16x32xf32>, vector<32x8xf32>, vector<16x8xf32> -> vector<16x8xf32>
    %c0_62 = arith.constant 0 : index
    %c0_63 = arith.constant 0 : index
    %c0_64 = arith.constant 0 : index
    %113 = vector.load %arg19[%c0_62, %c0_63, %c0_64] : memref<8x1x8xf32, #tpu.memory_space<vmem>>, vector<1x1x8xf32>
    %114 = vector.shape_cast %113 : vector<1x1x8xf32> to vector<1x8xf32>
    %115 = vector.broadcast %114 : vector<1x8xf32> to vector<16x8xf32>
    %116 = arith.addf %112, %115 : vector<16x8xf32>
    %cst_65 = arith.constant dense<0.000000e+00> : vector<16x16xf32>
    %117 = tpu.matmul %102, %109, %cst_65 {dimension_numbers = #tpu.dot_dimension_numbers<[1], [1], [0], [0], [0, 0, 1, 0], [], []>} : vector<16x8xf32>, vector<16x8xf32>, vector<16x16xf32> -> vector<16x16xf32>
    %cst_66 = arith.constant 0.353553385 : f32
    %118 = vector.broadcast %cst_66 : f32 to vector<16x16xf32>
    %119 = arith.mulf %117, %118 : vector<16x16xf32>
    %120 = vector.broadcast %95 : vector<1x16xf32> to vector<16x16xf32>
    %121 = arith.addf %119, %120 : vector<16x16xf32>
    %cst_67 = arith.constant dense<0xFF800000> : vector<16xf32>
    %122 = vector.multi_reduction <maximumf>, %121, %cst_67 [1] : vector<16x16xf32> to vector<16xf32>
    %123 = vector.shape_cast %122 : vector<16xf32> to vector<16x1xf32>
    %124 = vector.broadcast %123 : vector<16x1xf32> to vector<16x16xf32>
    %125 = arith.subf %121, %124 : vector<16x16xf32>
    %126 = math.exp %125 : vector<16x16xf32>
    %cst_68 = arith.constant dense<0.000000e+00> : vector<16xf32>
    %127 = vector.multi_reduction <add>, %126, %cst_68 [1] : vector<16x16xf32> to vector<16xf32>
    %128 = vector.shape_cast %127 : vector<16xf32> to vector<16x1xf32>
    %129 = vector.broadcast %128 : vector<16x1xf32> to vector<16x16xf32>
    %130 = arith.divf %126, %129 : vector<16x16xf32>
    %cst_69 = arith.constant dense<0.000000e+00> : vector<16x8xf32>
    %131 = tpu.matmul %130, %116, %cst_69 {dimension_numbers = #tpu.dot_dimension_numbers<[1], [0], [0], [1], [0, 0, 1, 1], [], []>} : vector<16x16xf32>, vector<16x8xf32>, vector<16x8xf32> -> vector<16x8xf32>
    %c0_70 = arith.constant 0 : index
    %c0_71 = arith.constant 0 : index
    %c0_72 = arith.constant 0 : index
    %132 = vector.load %arg20[%c0_70, %c0_71, %c0_72] : memref<8x8x32xf32, #tpu.memory_space<vmem>>, vector<1x8x32xf32>
    %133 = vector.shape_cast %132 : vector<1x8x32xf32> to vector<8x32xf32>
    %cst_73 = arith.constant dense<0.000000e+00> : vector<16x32xf32>
    %134 = tpu.matmul %131, %133, %cst_73 {dimension_numbers = #tpu.dot_dimension_numbers<[1], [0], [0], [1], [0, 0, 1, 1], [], []>} : vector<16x8xf32>, vector<8x32xf32>, vector<16x32xf32> -> vector<16x32xf32>
    %c1 = arith.constant 1 : index
    %c0_74 = arith.constant 0 : index
    %c0_75 = arith.constant 0 : index
    %135 = vector.load %arg14[%c1, %c0_74, %c0_75] : memref<8x32x8xf32, #tpu.memory_space<vmem>>, vector<1x32x8xf32>
    %136 = vector.shape_cast %135 : vector<1x32x8xf32> to vector<32x8xf32>
    %cst_76 = arith.constant dense<0.000000e+00> : vector<16x8xf32>
    %137 = tpu.matmul %89, %136, %cst_76 {dimension_numbers = #tpu.dot_dimension_numbers<[1], [0], [0], [1], [0, 0, 1, 1], [], []>} : vector<16x32xf32>, vector<32x8xf32>, vector<16x8xf32> -> vector<16x8xf32>
    %c1_77 = arith.constant 1 : index
    %c0_78 = arith.constant 0 : index
    %c0_79 = arith.constant 0 : index
    %138 = vector.load %arg17[%c1_77, %c0_78, %c0_79] : memref<8x1x8xf32, #tpu.memory_space<vmem>>, vector<1x1x8xf32>
    %139 = vector.shape_cast %138 : vector<1x1x8xf32> to vector<1x8xf32>
    %140 = vector.broadcast %139 : vector<1x8xf32> to vector<16x8xf32>
    %141 = arith.addf %137, %140 : vector<16x8xf32>
    %c1_80 = arith.constant 1 : index
    %c0_81 = arith.constant 0 : index
    %c0_82 = arith.constant 0 : index
    %142 = vector.load %arg15[%c1_80, %c0_81, %c0_82] : memref<8x32x8xf32, #tpu.memory_space<vmem>>, vector<1x32x8xf32>
    %143 = vector.shape_cast %142 : vector<1x32x8xf32> to vector<32x8xf32>
    %cst_83 = arith.constant dense<0.000000e+00> : vector<16x8xf32>
    %144 = tpu.matmul %89, %143, %cst_83 {dimension_numbers = #tpu.dot_dimension_numbers<[1], [0], [0], [1], [0, 0, 1, 1], [], []>} : vector<16x32xf32>, vector<32x8xf32>, vector<16x8xf32> -> vector<16x8xf32>
    %c1_84 = arith.constant 1 : index
    %c0_85 = arith.constant 0 : index
    %c0_86 = arith.constant 0 : index
    %145 = vector.load %arg18[%c1_84, %c0_85, %c0_86] : memref<8x1x8xf32, #tpu.memory_space<vmem>>, vector<1x1x8xf32>
    %146 = vector.shape_cast %145 : vector<1x1x8xf32> to vector<1x8xf32>
    %147 = vector.broadcast %146 : vector<1x8xf32> to vector<16x8xf32>
    %148 = arith.addf %144, %147 : vector<16x8xf32>
    %c1_87 = arith.constant 1 : index
    %c0_88 = arith.constant 0 : index
    %c0_89 = arith.constant 0 : index
    %149 = vector.load %arg16[%c1_87, %c0_88, %c0_89] : memref<8x32x8xf32, #tpu.memory_space<vmem>>, vector<1x32x8xf32>
    %150 = vector.shape_cast %149 : vector<1x32x8xf32> to vector<32x8xf32>
    %cst_90 = arith.constant dense<0.000000e+00> : vector<16x8xf32>
    %151 = tpu.matmul %89, %150, %cst_90 {dimension_numbers = #tpu.dot_dimension_numbers<[1], [0], [0], [1], [0, 0, 1, 1], [], []>} : vector<16x32xf32>, vector<32x8xf32>, vector<16x8xf32> -> vector<16x8xf32>
    %c1_91 = arith.constant 1 : index
    %c0_92 = arith.constant 0 : index
    %c0_93 = arith.constant 0 : index
    %152 = vector.load %arg19[%c1_91, %c0_92, %c0_93] : memref<8x1x8xf32, #tpu.memory_space<vmem>>, vector<1x1x8xf32>
    %153 = vector.shape_cast %152 : vector<1x1x8xf32> to vector<1x8xf32>
    %154 = vector.broadcast %153 : vector<1x8xf32> to vector<16x8xf32>
    %155 = arith.addf %151, %154 : vector<16x8xf32>
    %cst_94 = arith.constant dense<0.000000e+00> : vector<16x16xf32>
    %156 = tpu.matmul %141, %148, %cst_94 {dimension_numbers = #tpu.dot_dimension_numbers<[1], [1], [0], [0], [0, 0, 1, 0], [], []>} : vector<16x8xf32>, vector<16x8xf32>, vector<16x16xf32> -> vector<16x16xf32>
    %cst_95 = arith.constant 0.353553385 : f32
    %157 = vector.broadcast %cst_95 : f32 to vector<16x16xf32>
    %158 = arith.mulf %156, %157 : vector<16x16xf32>
    %159 = vector.broadcast %95 : vector<1x16xf32> to vector<16x16xf32>
    %160 = arith.addf %158, %159 : vector<16x16xf32>
    %cst_96 = arith.constant dense<0xFF800000> : vector<16xf32>
    %161 = vector.multi_reduction <maximumf>, %160, %cst_96 [1] : vector<16x16xf32> to vector<16xf32>
    %162 = vector.shape_cast %161 : vector<16xf32> to vector<16x1xf32>
    %163 = vector.broadcast %162 : vector<16x1xf32> to vector<16x16xf32>
    %164 = arith.subf %160, %163 : vector<16x16xf32>
    %165 = math.exp %164 : vector<16x16xf32>
    %cst_97 = arith.constant dense<0.000000e+00> : vector<16xf32>
    %166 = vector.multi_reduction <add>, %165, %cst_97 [1] : vector<16x16xf32> to vector<16xf32>
    %167 = vector.shape_cast %166 : vector<16xf32> to vector<16x1xf32>
    %168 = vector.broadcast %167 : vector<16x1xf32> to vector<16x16xf32>
    %169 = arith.divf %165, %168 : vector<16x16xf32>
    %cst_98 = arith.constant dense<0.000000e+00> : vector<16x8xf32>
    %170 = tpu.matmul %169, %155, %cst_98 {dimension_numbers = #tpu.dot_dimension_numbers<[1], [0], [0], [1], [0, 0, 1, 1], [], []>} : vector<16x16xf32>, vector<16x8xf32>, vector<16x8xf32> -> vector<16x8xf32>
    %c1_99 = arith.constant 1 : index
    %c0_100 = arith.constant 0 : index
    %c0_101 = arith.constant 0 : index
    %171 = vector.load %arg20[%c1_99, %c0_100, %c0_101] : memref<8x8x32xf32, #tpu.memory_space<vmem>>, vector<1x8x32xf32>
    %172 = vector.shape_cast %171 : vector<1x8x32xf32> to vector<8x32xf32>
    %cst_102 = arith.constant dense<0.000000e+00> : vector<16x32xf32>
    %173 = tpu.matmul %170, %172, %cst_102 {dimension_numbers = #tpu.dot_dimension_numbers<[1], [0], [0], [1], [0, 0, 1, 1], [], []>} : vector<16x8xf32>, vector<8x32xf32>, vector<16x32xf32> -> vector<16x32xf32>
    %174 = arith.addf %134, %173 : vector<16x32xf32>
    %c2 = arith.constant 2 : index
    %c0_103 = arith.constant 0 : index
    %c0_104 = arith.constant 0 : index
    %175 = vector.load %arg14[%c2, %c0_103, %c0_104] : memref<8x32x8xf32, #tpu.memory_space<vmem>>, vector<1x32x8xf32>
    %176 = vector.shape_cast %175 : vector<1x32x8xf32> to vector<32x8xf32>
    %cst_105 = arith.constant dense<0.000000e+00> : vector<16x8xf32>
    %177 = tpu.matmul %89, %176, %cst_105 {dimension_numbers = #tpu.dot_dimension_numbers<[1], [0], [0], [1], [0, 0, 1, 1], [], []>} : vector<16x32xf32>, vector<32x8xf32>, vector<16x8xf32> -> vector<16x8xf32>
    %c2_106 = arith.constant 2 : index
    %c0_107 = arith.constant 0 : index
    %c0_108 = arith.constant 0 : index
    %178 = vector.load %arg17[%c2_106, %c0_107, %c0_108] : memref<8x1x8xf32, #tpu.memory_space<vmem>>, vector<1x1x8xf32>
    %179 = vector.shape_cast %178 : vector<1x1x8xf32> to vector<1x8xf32>
    %180 = vector.broadcast %179 : vector<1x8xf32> to vector<16x8xf32>
    %181 = arith.addf %177, %180 : vector<16x8xf32>
    %c2_109 = arith.constant 2 : index
    %c0_110 = arith.constant 0 : index
    %c0_111 = arith.constant 0 : index
    %182 = vector.load %arg15[%c2_109, %c0_110, %c0_111] : memref<8x32x8xf32, #tpu.memory_space<vmem>>, vector<1x32x8xf32>
    %183 = vector.shape_cast %182 : vector<1x32x8xf32> to vector<32x8xf32>
    %cst_112 = arith.constant dense<0.000000e+00> : vector<16x8xf32>
    %184 = tpu.matmul %89, %183, %cst_112 {dimension_numbers = #tpu.dot_dimension_numbers<[1], [0], [0], [1], [0, 0, 1, 1], [], []>} : vector<16x32xf32>, vector<32x8xf32>, vector<16x8xf32> -> vector<16x8xf32>
    %c2_113 = arith.constant 2 : index
    %c0_114 = arith.constant 0 : index
    %c0_115 = arith.constant 0 : index
    %185 = vector.load %arg18[%c2_113, %c0_114, %c0_115] : memref<8x1x8xf32, #tpu.memory_space<vmem>>, vector<1x1x8xf32>
    %186 = vector.shape_cast %185 : vector<1x1x8xf32> to vector<1x8xf32>
    %187 = vector.broadcast %186 : vector<1x8xf32> to vector<16x8xf32>
    %188 = arith.addf %184, %187 : vector<16x8xf32>
    %c2_116 = arith.constant 2 : index
    %c0_117 = arith.constant 0 : index
    %c0_118 = arith.constant 0 : index
    %189 = vector.load %arg16[%c2_116, %c0_117, %c0_118] : memref<8x32x8xf32, #tpu.memory_space<vmem>>, vector<1x32x8xf32>
    %190 = vector.shape_cast %189 : vector<1x32x8xf32> to vector<32x8xf32>
    %cst_119 = arith.constant dense<0.000000e+00> : vector<16x8xf32>
    %191 = tpu.matmul %89, %190, %cst_119 {dimension_numbers = #tpu.dot_dimension_numbers<[1], [0], [0], [1], [0, 0, 1, 1], [], []>} : vector<16x32xf32>, vector<32x8xf32>, vector<16x8xf32> -> vector<16x8xf32>
    %c2_120 = arith.constant 2 : index
    %c0_121 = arith.constant 0 : index
    %c0_122 = arith.constant 0 : index
    %192 = vector.load %arg19[%c2_120, %c0_121, %c0_122] : memref<8x1x8xf32, #tpu.memory_space<vmem>>, vector<1x1x8xf32>
    %193 = vector.shape_cast %192 : vector<1x1x8xf32> to vector<1x8xf32>
    %194 = vector.broadcast %193 : vector<1x8xf32> to vector<16x8xf32>
    %195 = arith.addf %191, %194 : vector<16x8xf32>
    %cst_123 = arith.constant dense<0.000000e+00> : vector<16x16xf32>
    %196 = tpu.matmul %181, %188, %cst_123 {dimension_numbers = #tpu.dot_dimension_numbers<[1], [1], [0], [0], [0, 0, 1, 0], [], []>} : vector<16x8xf32>, vector<16x8xf32>, vector<16x16xf32> -> vector<16x16xf32>
    %cst_124 = arith.constant 0.353553385 : f32
    %197 = vector.broadcast %cst_124 : f32 to vector<16x16xf32>
    %198 = arith.mulf %196, %197 : vector<16x16xf32>
    %199 = vector.broadcast %95 : vector<1x16xf32> to vector<16x16xf32>
    %200 = arith.addf %198, %199 : vector<16x16xf32>
    %cst_125 = arith.constant dense<0xFF800000> : vector<16xf32>
    %201 = vector.multi_reduction <maximumf>, %200, %cst_125 [1] : vector<16x16xf32> to vector<16xf32>
    %202 = vector.shape_cast %201 : vector<16xf32> to vector<16x1xf32>
    %203 = vector.broadcast %202 : vector<16x1xf32> to vector<16x16xf32>
    %204 = arith.subf %200, %203 : vector<16x16xf32>
    %205 = math.exp %204 : vector<16x16xf32>
    %cst_126 = arith.constant dense<0.000000e+00> : vector<16xf32>
    %206 = vector.multi_reduction <add>, %205, %cst_126 [1] : vector<16x16xf32> to vector<16xf32>
    %207 = vector.shape_cast %206 : vector<16xf32> to vector<16x1xf32>
    %208 = vector.broadcast %207 : vector<16x1xf32> to vector<16x16xf32>
    %209 = arith.divf %205, %208 : vector<16x16xf32>
    %cst_127 = arith.constant dense<0.000000e+00> : vector<16x8xf32>
    %210 = tpu.matmul %209, %195, %cst_127 {dimension_numbers = #tpu.dot_dimension_numbers<[1], [0], [0], [1], [0, 0, 1, 1], [], []>} : vector<16x16xf32>, vector<16x8xf32>, vector<16x8xf32> -> vector<16x8xf32>
    %c2_128 = arith.constant 2 : index
    %c0_129 = arith.constant 0 : index
    %c0_130 = arith.constant 0 : index
    %211 = vector.load %arg20[%c2_128, %c0_129, %c0_130] : memref<8x8x32xf32, #tpu.memory_space<vmem>>, vector<1x8x32xf32>
    %212 = vector.shape_cast %211 : vector<1x8x32xf32> to vector<8x32xf32>
    %cst_131 = arith.constant dense<0.000000e+00> : vector<16x32xf32>
    %213 = tpu.matmul %210, %212, %cst_131 {dimension_numbers = #tpu.dot_dimension_numbers<[1], [0], [0], [1], [0, 0, 1, 1], [], []>} : vector<16x8xf32>, vector<8x32xf32>, vector<16x32xf32> -> vector<16x32xf32>
    %214 = arith.addf %174, %213 : vector<16x32xf32>
    %c3 = arith.constant 3 : index
    %c0_132 = arith.constant 0 : index
    %c0_133 = arith.constant 0 : index
    %215 = vector.load %arg14[%c3, %c0_132, %c0_133] : memref<8x32x8xf32, #tpu.memory_space<vmem>>, vector<1x32x8xf32>
    %216 = vector.shape_cast %215 : vector<1x32x8xf32> to vector<32x8xf32>
    %cst_134 = arith.constant dense<0.000000e+00> : vector<16x8xf32>
    %217 = tpu.matmul %89, %216, %cst_134 {dimension_numbers = #tpu.dot_dimension_numbers<[1], [0], [0], [1], [0, 0, 1, 1], [], []>} : vector<16x32xf32>, vector<32x8xf32>, vector<16x8xf32> -> vector<16x8xf32>
    %c3_135 = arith.constant 3 : index
    %c0_136 = arith.constant 0 : index
    %c0_137 = arith.constant 0 : index
    %218 = vector.load %arg17[%c3_135, %c0_136, %c0_137] : memref<8x1x8xf32, #tpu.memory_space<vmem>>, vector<1x1x8xf32>
    %219 = vector.shape_cast %218 : vector<1x1x8xf32> to vector<1x8xf32>
    %220 = vector.broadcast %219 : vector<1x8xf32> to vector<16x8xf32>
    %221 = arith.addf %217, %220 : vector<16x8xf32>
    %c3_138 = arith.constant 3 : index
    %c0_139 = arith.constant 0 : index
    %c0_140 = arith.constant 0 : index
    %222 = vector.load %arg15[%c3_138, %c0_139, %c0_140] : memref<8x32x8xf32, #tpu.memory_space<vmem>>, vector<1x32x8xf32>
    %223 = vector.shape_cast %222 : vector<1x32x8xf32> to vector<32x8xf32>
    %cst_141 = arith.constant dense<0.000000e+00> : vector<16x8xf32>
    %224 = tpu.matmul %89, %223, %cst_141 {dimension_numbers = #tpu.dot_dimension_numbers<[1], [0], [0], [1], [0, 0, 1, 1], [], []>} : vector<16x32xf32>, vector<32x8xf32>, vector<16x8xf32> -> vector<16x8xf32>
    %c3_142 = arith.constant 3 : index
    %c0_143 = arith.constant 0 : index
    %c0_144 = arith.constant 0 : index
    %225 = vector.load %arg18[%c3_142, %c0_143, %c0_144] : memref<8x1x8xf32, #tpu.memory_space<vmem>>, vector<1x1x8xf32>
    %226 = vector.shape_cast %225 : vector<1x1x8xf32> to vector<1x8xf32>
    %227 = vector.broadcast %226 : vector<1x8xf32> to vector<16x8xf32>
    %228 = arith.addf %224, %227 : vector<16x8xf32>
    %c3_145 = arith.constant 3 : index
    %c0_146 = arith.constant 0 : index
    %c0_147 = arith.constant 0 : index
    %229 = vector.load %arg16[%c3_145, %c0_146, %c0_147] : memref<8x32x8xf32, #tpu.memory_space<vmem>>, vector<1x32x8xf32>
    %230 = vector.shape_cast %229 : vector<1x32x8xf32> to vector<32x8xf32>
    %cst_148 = arith.constant dense<0.000000e+00> : vector<16x8xf32>
    %231 = tpu.matmul %89, %230, %cst_148 {dimension_numbers = #tpu.dot_dimension_numbers<[1], [0], [0], [1], [0, 0, 1, 1], [], []>} : vector<16x32xf32>, vector<32x8xf32>, vector<16x8xf32> -> vector<16x8xf32>
    %c3_149 = arith.constant 3 : index
    %c0_150 = arith.constant 0 : index
    %c0_151 = arith.constant 0 : index
    %232 = vector.load %arg19[%c3_149, %c0_150, %c0_151] : memref<8x1x8xf32, #tpu.memory_space<vmem>>, vector<1x1x8xf32>
    %233 = vector.shape_cast %232 : vector<1x1x8xf32> to vector<1x8xf32>
    %234 = vector.broadcast %233 : vector<1x8xf32> to vector<16x8xf32>
    %235 = arith.addf %231, %234 : vector<16x8xf32>
    %cst_152 = arith.constant dense<0.000000e+00> : vector<16x16xf32>
    %236 = tpu.matmul %221, %228, %cst_152 {dimension_numbers = #tpu.dot_dimension_numbers<[1], [1], [0], [0], [0, 0, 1, 0], [], []>} : vector<16x8xf32>, vector<16x8xf32>, vector<16x16xf32> -> vector<16x16xf32>
    %cst_153 = arith.constant 0.353553385 : f32
    %237 = vector.broadcast %cst_153 : f32 to vector<16x16xf32>
    %238 = arith.mulf %236, %237 : vector<16x16xf32>
    %239 = vector.broadcast %95 : vector<1x16xf32> to vector<16x16xf32>
    %240 = arith.addf %238, %239 : vector<16x16xf32>
    %cst_154 = arith.constant dense<0xFF800000> : vector<16xf32>
    %241 = vector.multi_reduction <maximumf>, %240, %cst_154 [1] : vector<16x16xf32> to vector<16xf32>
    %242 = vector.shape_cast %241 : vector<16xf32> to vector<16x1xf32>
    %243 = vector.broadcast %242 : vector<16x1xf32> to vector<16x16xf32>
    %244 = arith.subf %240, %243 : vector<16x16xf32>
    %245 = math.exp %244 : vector<16x16xf32>
    %cst_155 = arith.constant dense<0.000000e+00> : vector<16xf32>
    %246 = vector.multi_reduction <add>, %245, %cst_155 [1] : vector<16x16xf32> to vector<16xf32>
    %247 = vector.shape_cast %246 : vector<16xf32> to vector<16x1xf32>
    %248 = vector.broadcast %247 : vector<16x1xf32> to vector<16x16xf32>
    %249 = arith.divf %245, %248 : vector<16x16xf32>
    %cst_156 = arith.constant dense<0.000000e+00> : vector<16x8xf32>
    %250 = tpu.matmul %249, %235, %cst_156 {dimension_numbers = #tpu.dot_dimension_numbers<[1], [0], [0], [1], [0, 0, 1, 1], [], []>} : vector<16x16xf32>, vector<16x8xf32>, vector<16x8xf32> -> vector<16x8xf32>
    %c3_157 = arith.constant 3 : index
    %c0_158 = arith.constant 0 : index
    %c0_159 = arith.constant 0 : index
    %251 = vector.load %arg20[%c3_157, %c0_158, %c0_159] : memref<8x8x32xf32, #tpu.memory_space<vmem>>, vector<1x8x32xf32>
    %252 = vector.shape_cast %251 : vector<1x8x32xf32> to vector<8x32xf32>
    %cst_160 = arith.constant dense<0.000000e+00> : vector<16x32xf32>
    %253 = tpu.matmul %250, %252, %cst_160 {dimension_numbers = #tpu.dot_dimension_numbers<[1], [0], [0], [1], [0, 0, 1, 1], [], []>} : vector<16x8xf32>, vector<8x32xf32>, vector<16x32xf32> -> vector<16x32xf32>
    %254 = arith.addf %214, %253 : vector<16x32xf32>
    %c0_161 = arith.constant 0 : index
    %c0_162 = arith.constant 0 : index
    %c0_163 = arith.constant 0 : index
    %255 = vector.load %arg21[%c0_161, %c0_162, %c0_163] : memref<2x1x32xf32, #tpu.memory_space<vmem>>, vector<1x1x32xf32>
    %256 = vector.shape_cast %255 : vector<1x1x32xf32> to vector<1x32xf32>
    %257 = vector.broadcast %256 : vector<1x32xf32> to vector<16x32xf32>
    %258 = arith.addf %254, %257 : vector<16x32xf32>
    %259 = arith.addf %258, %89 : vector<16x32xf32>
    %c0_164 = arith.constant 0 : index
    %c0_165 = arith.constant 0 : index
    %c0_166 = arith.constant 0 : index
    %260 = vector.load %arg22[%c0_164, %c0_165, %c0_166] : memref<2x1x32xf32, #tpu.memory_space<vmem>>, vector<1x1x32xf32>
    %261 = vector.shape_cast %260 : vector<1x1x32xf32> to vector<1x32xf32>
    %c0_167 = arith.constant 0 : index
    %c0_168 = arith.constant 0 : index
    %c0_169 = arith.constant 0 : index
    %262 = vector.load %arg23[%c0_167, %c0_168, %c0_169] : memref<2x1x32xf32, #tpu.memory_space<vmem>>, vector<1x1x32xf32>
    %263 = vector.shape_cast %262 : vector<1x1x32xf32> to vector<1x32xf32>
    %cst_170 = arith.constant dense<0.000000e+00> : vector<16xf32>
    %264 = vector.multi_reduction <add>, %259, %cst_170 [1] : vector<16x32xf32> to vector<16xf32>
    %265 = vector.shape_cast %264 : vector<16xf32> to vector<16x1xf32>
    %cst_171 = arith.constant 3.200000e+01 : f32
    %266 = vector.broadcast %cst_171 : f32 to vector<16x1xf32>
    %267 = arith.divf %265, %266 : vector<16x1xf32>
    %268 = vector.broadcast %267 : vector<16x1xf32> to vector<16x32xf32>
    %269 = arith.subf %259, %268 : vector<16x32xf32>
    %270 = arith.mulf %269, %269 : vector<16x32xf32>
    %cst_172 = arith.constant dense<0.000000e+00> : vector<16xf32>
    %271 = vector.multi_reduction <add>, %270, %cst_172 [1] : vector<16x32xf32> to vector<16xf32>
    %272 = vector.shape_cast %271 : vector<16xf32> to vector<16x1xf32>
    %cst_173 = arith.constant 3.200000e+01 : f32
    %273 = vector.broadcast %cst_173 : f32 to vector<16x1xf32>
    %274 = arith.divf %272, %273 : vector<16x1xf32>
    %275 = vector.broadcast %267 : vector<16x1xf32> to vector<16x32xf32>
    %276 = arith.subf %259, %275 : vector<16x32xf32>
    %cst_174 = arith.constant 9.99999996E-13 : f32
    %277 = vector.broadcast %cst_174 : f32 to vector<16x1xf32>
    %278 = arith.addf %274, %277 : vector<16x1xf32>
    %279 = math.rsqrt %278 : vector<16x1xf32>
    %280 = vector.broadcast %279 : vector<16x1xf32> to vector<16x32xf32>
    %281 = arith.mulf %276, %280 : vector<16x32xf32>
    %282 = vector.broadcast %261 : vector<1x32xf32> to vector<16x32xf32>
    %283 = arith.mulf %281, %282 : vector<16x32xf32>
    %284 = vector.broadcast %263 : vector<1x32xf32> to vector<16x32xf32>
    %285 = arith.addf %283, %284 : vector<16x32xf32>
    %c0_175 = arith.constant 0 : index
    %c0_176 = arith.constant 0 : index
    %c0_177 = arith.constant 0 : index
    %286 = vector.load %arg24[%c0_175, %c0_176, %c0_177] : memref<2x32x64xf32, #tpu.memory_space<vmem>>, vector<1x32x64xf32>
    %287 = vector.shape_cast %286 : vector<1x32x64xf32> to vector<32x64xf32>
    %cst_178 = arith.constant dense<0.000000e+00> : vector<16x64xf32>
    %288 = tpu.matmul %285, %287, %cst_178 {dimension_numbers = #tpu.dot_dimension_numbers<[1], [0], [0], [1], [0, 0, 1, 1], [], []>} : vector<16x32xf32>, vector<32x64xf32>, vector<16x64xf32> -> vector<16x64xf32>
    %c0_179 = arith.constant 0 : index
    %c0_180 = arith.constant 0 : index
    %c0_181 = arith.constant 0 : index
    %289 = vector.load %arg25[%c0_179, %c0_180, %c0_181] : memref<2x1x64xf32, #tpu.memory_space<vmem>>, vector<1x1x64xf32>
    %290 = vector.shape_cast %289 : vector<1x1x64xf32> to vector<1x64xf32>
    %291 = vector.broadcast %290 : vector<1x64xf32> to vector<16x64xf32>
    %292 = arith.addf %288, %291 : vector<16x64xf32>
    %cst_182 = arith.constant 5.000000e-01 : f32
    %293 = vector.broadcast %cst_182 : f32 to vector<16x64xf32>
    %294 = arith.mulf %293, %292 : vector<16x64xf32>
    %cst_183 = arith.constant 0.707106769 : f32
    %295 = vector.broadcast %cst_183 : f32 to vector<16x64xf32>
    %296 = arith.mulf %292, %295 : vector<16x64xf32>
    %297 = math.erf %296 : vector<16x64xf32>
    %cst_184 = arith.constant 1.000000e+00 : f32
    %298 = vector.broadcast %cst_184 : f32 to vector<16x64xf32>
    %299 = arith.addf %298, %297 : vector<16x64xf32>
    %300 = arith.mulf %294, %299 : vector<16x64xf32>
    %c0_185 = arith.constant 0 : index
    %c0_186 = arith.constant 0 : index
    %c0_187 = arith.constant 0 : index
    %301 = vector.load %arg26[%c0_185, %c0_186, %c0_187] : memref<2x64x32xf32, #tpu.memory_space<vmem>>, vector<1x64x32xf32>
    %302 = vector.shape_cast %301 : vector<1x64x32xf32> to vector<64x32xf32>
    %cst_188 = arith.constant dense<0.000000e+00> : vector<16x32xf32>
    %303 = tpu.matmul %300, %302, %cst_188 {dimension_numbers = #tpu.dot_dimension_numbers<[1], [0], [0], [1], [0, 0, 1, 1], [], []>} : vector<16x64xf32>, vector<64x32xf32>, vector<16x32xf32> -> vector<16x32xf32>
    %c0_189 = arith.constant 0 : index
    %c0_190 = arith.constant 0 : index
    %c0_191 = arith.constant 0 : index
    %304 = vector.load %arg27[%c0_189, %c0_190, %c0_191] : memref<2x1x32xf32, #tpu.memory_space<vmem>>, vector<1x1x32xf32>
    %305 = vector.shape_cast %304 : vector<1x1x32xf32> to vector<1x32xf32>
    %306 = vector.broadcast %305 : vector<1x32xf32> to vector<16x32xf32>
    %307 = arith.addf %303, %306 : vector<16x32xf32>
    %308 = arith.addf %307, %285 : vector<16x32xf32>
    %c0_192 = arith.constant 0 : index
    %c0_193 = arith.constant 0 : index
    %c0_194 = arith.constant 0 : index
    %309 = vector.load %arg28[%c0_192, %c0_193, %c0_194] : memref<2x1x32xf32, #tpu.memory_space<vmem>>, vector<1x1x32xf32>
    %310 = vector.shape_cast %309 : vector<1x1x32xf32> to vector<1x32xf32>
    %c0_195 = arith.constant 0 : index
    %c0_196 = arith.constant 0 : index
    %c0_197 = arith.constant 0 : index
    %311 = vector.load %arg29[%c0_195, %c0_196, %c0_197] : memref<2x1x32xf32, #tpu.memory_space<vmem>>, vector<1x1x32xf32>
    %312 = vector.shape_cast %311 : vector<1x1x32xf32> to vector<1x32xf32>
    %cst_198 = arith.constant dense<0.000000e+00> : vector<16xf32>
    %313 = vector.multi_reduction <add>, %308, %cst_198 [1] : vector<16x32xf32> to vector<16xf32>
    %314 = vector.shape_cast %313 : vector<16xf32> to vector<16x1xf32>
    %cst_199 = arith.constant 3.200000e+01 : f32
    %315 = vector.broadcast %cst_199 : f32 to vector<16x1xf32>
    %316 = arith.divf %314, %315 : vector<16x1xf32>
    %317 = vector.broadcast %316 : vector<16x1xf32> to vector<16x32xf32>
    %318 = arith.subf %308, %317 : vector<16x32xf32>
    %319 = arith.mulf %318, %318 : vector<16x32xf32>
    %cst_200 = arith.constant dense<0.000000e+00> : vector<16xf32>
    %320 = vector.multi_reduction <add>, %319, %cst_200 [1] : vector<16x32xf32> to vector<16xf32>
    %321 = vector.shape_cast %320 : vector<16xf32> to vector<16x1xf32>
    %cst_201 = arith.constant 3.200000e+01 : f32
    %322 = vector.broadcast %cst_201 : f32 to vector<16x1xf32>
    %323 = arith.divf %321, %322 : vector<16x1xf32>
    %324 = vector.broadcast %316 : vector<16x1xf32> to vector<16x32xf32>
    %325 = arith.subf %308, %324 : vector<16x32xf32>
    %cst_202 = arith.constant 9.99999996E-13 : f32
    %326 = vector.broadcast %cst_202 : f32 to vector<16x1xf32>
    %327 = arith.addf %323, %326 : vector<16x1xf32>
    %328 = math.rsqrt %327 : vector<16x1xf32>
    %329 = vector.broadcast %328 : vector<16x1xf32> to vector<16x32xf32>
    %330 = arith.mulf %325, %329 : vector<16x32xf32>
    %331 = vector.broadcast %310 : vector<1x32xf32> to vector<16x32xf32>
    %332 = arith.mulf %330, %331 : vector<16x32xf32>
    %333 = vector.broadcast %312 : vector<1x32xf32> to vector<16x32xf32>
    %334 = arith.addf %332, %333 : vector<16x32xf32>
    %c4 = arith.constant 4 : index
    %c0_203 = arith.constant 0 : index
    %c0_204 = arith.constant 0 : index
    %335 = vector.load %arg14[%c4, %c0_203, %c0_204] : memref<8x32x8xf32, #tpu.memory_space<vmem>>, vector<1x32x8xf32>
    %336 = vector.shape_cast %335 : vector<1x32x8xf32> to vector<32x8xf32>
    %cst_205 = arith.constant dense<0.000000e+00> : vector<16x8xf32>
    %337 = tpu.matmul %334, %336, %cst_205 {dimension_numbers = #tpu.dot_dimension_numbers<[1], [0], [0], [1], [0, 0, 1, 1], [], []>} : vector<16x32xf32>, vector<32x8xf32>, vector<16x8xf32> -> vector<16x8xf32>
    %c4_206 = arith.constant 4 : index
    %c0_207 = arith.constant 0 : index
    %c0_208 = arith.constant 0 : index
    %338 = vector.load %arg17[%c4_206, %c0_207, %c0_208] : memref<8x1x8xf32, #tpu.memory_space<vmem>>, vector<1x1x8xf32>
    %339 = vector.shape_cast %338 : vector<1x1x8xf32> to vector<1x8xf32>
    %340 = vector.broadcast %339 : vector<1x8xf32> to vector<16x8xf32>
    %341 = arith.addf %337, %340 : vector<16x8xf32>
    %c4_209 = arith.constant 4 : index
    %c0_210 = arith.constant 0 : index
    %c0_211 = arith.constant 0 : index
    %342 = vector.load %arg15[%c4_209, %c0_210, %c0_211] : memref<8x32x8xf32, #tpu.memory_space<vmem>>, vector<1x32x8xf32>
    %343 = vector.shape_cast %342 : vector<1x32x8xf32> to vector<32x8xf32>
    %cst_212 = arith.constant dense<0.000000e+00> : vector<16x8xf32>
    %344 = tpu.matmul %334, %343, %cst_212 {dimension_numbers = #tpu.dot_dimension_numbers<[1], [0], [0], [1], [0, 0, 1, 1], [], []>} : vector<16x32xf32>, vector<32x8xf32>, vector<16x8xf32> -> vector<16x8xf32>
    %c4_213 = arith.constant 4 : index
    %c0_214 = arith.constant 0 : index
    %c0_215 = arith.constant 0 : index
    %345 = vector.load %arg18[%c4_213, %c0_214, %c0_215] : memref<8x1x8xf32, #tpu.memory_space<vmem>>, vector<1x1x8xf32>
    %346 = vector.shape_cast %345 : vector<1x1x8xf32> to vector<1x8xf32>
    %347 = vector.broadcast %346 : vector<1x8xf32> to vector<16x8xf32>
    %348 = arith.addf %344, %347 : vector<16x8xf32>
    %c4_216 = arith.constant 4 : index
    %c0_217 = arith.constant 0 : index
    %c0_218 = arith.constant 0 : index
    %349 = vector.load %arg16[%c4_216, %c0_217, %c0_218] : memref<8x32x8xf32, #tpu.memory_space<vmem>>, vector<1x32x8xf32>
    %350 = vector.shape_cast %349 : vector<1x32x8xf32> to vector<32x8xf32>
    %cst_219 = arith.constant dense<0.000000e+00> : vector<16x8xf32>
    %351 = tpu.matmul %334, %350, %cst_219 {dimension_numbers = #tpu.dot_dimension_numbers<[1], [0], [0], [1], [0, 0, 1, 1], [], []>} : vector<16x32xf32>, vector<32x8xf32>, vector<16x8xf32> -> vector<16x8xf32>
    %c4_220 = arith.constant 4 : index
    %c0_221 = arith.constant 0 : index
    %c0_222 = arith.constant 0 : index
    %352 = vector.load %arg19[%c4_220, %c0_221, %c0_222] : memref<8x1x8xf32, #tpu.memory_space<vmem>>, vector<1x1x8xf32>
    %353 = vector.shape_cast %352 : vector<1x1x8xf32> to vector<1x8xf32>
    %354 = vector.broadcast %353 : vector<1x8xf32> to vector<16x8xf32>
    %355 = arith.addf %351, %354 : vector<16x8xf32>
    %cst_223 = arith.constant dense<0.000000e+00> : vector<16x16xf32>
    %356 = tpu.matmul %341, %348, %cst_223 {dimension_numbers = #tpu.dot_dimension_numbers<[1], [1], [0], [0], [0, 0, 1, 0], [], []>} : vector<16x8xf32>, vector<16x8xf32>, vector<16x16xf32> -> vector<16x16xf32>
    %cst_224 = arith.constant 0.353553385 : f32
    %357 = vector.broadcast %cst_224 : f32 to vector<16x16xf32>
    %358 = arith.mulf %356, %357 : vector<16x16xf32>
    %359 = vector.broadcast %95 : vector<1x16xf32> to vector<16x16xf32>
    %360 = arith.addf %358, %359 : vector<16x16xf32>
    %cst_225 = arith.constant dense<0xFF800000> : vector<16xf32>
    %361 = vector.multi_reduction <maximumf>, %360, %cst_225 [1] : vector<16x16xf32> to vector<16xf32>
    %362 = vector.shape_cast %361 : vector<16xf32> to vector<16x1xf32>
    %363 = vector.broadcast %362 : vector<16x1xf32> to vector<16x16xf32>
    %364 = arith.subf %360, %363 : vector<16x16xf32>
    %365 = math.exp %364 : vector<16x16xf32>
    %cst_226 = arith.constant dense<0.000000e+00> : vector<16xf32>
    %366 = vector.multi_reduction <add>, %365, %cst_226 [1] : vector<16x16xf32> to vector<16xf32>
    %367 = vector.shape_cast %366 : vector<16xf32> to vector<16x1xf32>
    %368 = vector.broadcast %367 : vector<16x1xf32> to vector<16x16xf32>
    %369 = arith.divf %365, %368 : vector<16x16xf32>
    %cst_227 = arith.constant dense<0.000000e+00> : vector<16x8xf32>
    %370 = tpu.matmul %369, %355, %cst_227 {dimension_numbers = #tpu.dot_dimension_numbers<[1], [0], [0], [1], [0, 0, 1, 1], [], []>} : vector<16x16xf32>, vector<16x8xf32>, vector<16x8xf32> -> vector<16x8xf32>
    %c4_228 = arith.constant 4 : index
    %c0_229 = arith.constant 0 : index
    %c0_230 = arith.constant 0 : index
    %371 = vector.load %arg20[%c4_228, %c0_229, %c0_230] : memref<8x8x32xf32, #tpu.memory_space<vmem>>, vector<1x8x32xf32>
    %372 = vector.shape_cast %371 : vector<1x8x32xf32> to vector<8x32xf32>
    %cst_231 = arith.constant dense<0.000000e+00> : vector<16x32xf32>
    %373 = tpu.matmul %370, %372, %cst_231 {dimension_numbers = #tpu.dot_dimension_numbers<[1], [0], [0], [1], [0, 0, 1, 1], [], []>} : vector<16x8xf32>, vector<8x32xf32>, vector<16x32xf32> -> vector<16x32xf32>
    %c5 = arith.constant 5 : index
    %c0_232 = arith.constant 0 : index
    %c0_233 = arith.constant 0 : index
    %374 = vector.load %arg14[%c5, %c0_232, %c0_233] : memref<8x32x8xf32, #tpu.memory_space<vmem>>, vector<1x32x8xf32>
    %375 = vector.shape_cast %374 : vector<1x32x8xf32> to vector<32x8xf32>
    %cst_234 = arith.constant dense<0.000000e+00> : vector<16x8xf32>
    %376 = tpu.matmul %334, %375, %cst_234 {dimension_numbers = #tpu.dot_dimension_numbers<[1], [0], [0], [1], [0, 0, 1, 1], [], []>} : vector<16x32xf32>, vector<32x8xf32>, vector<16x8xf32> -> vector<16x8xf32>
    %c5_235 = arith.constant 5 : index
    %c0_236 = arith.constant 0 : index
    %c0_237 = arith.constant 0 : index
    %377 = vector.load %arg17[%c5_235, %c0_236, %c0_237] : memref<8x1x8xf32, #tpu.memory_space<vmem>>, vector<1x1x8xf32>
    %378 = vector.shape_cast %377 : vector<1x1x8xf32> to vector<1x8xf32>
    %379 = vector.broadcast %378 : vector<1x8xf32> to vector<16x8xf32>
    %380 = arith.addf %376, %379 : vector<16x8xf32>
    %c5_238 = arith.constant 5 : index
    %c0_239 = arith.constant 0 : index
    %c0_240 = arith.constant 0 : index
    %381 = vector.load %arg15[%c5_238, %c0_239, %c0_240] : memref<8x32x8xf32, #tpu.memory_space<vmem>>, vector<1x32x8xf32>
    %382 = vector.shape_cast %381 : vector<1x32x8xf32> to vector<32x8xf32>
    %cst_241 = arith.constant dense<0.000000e+00> : vector<16x8xf32>
    %383 = tpu.matmul %334, %382, %cst_241 {dimension_numbers = #tpu.dot_dimension_numbers<[1], [0], [0], [1], [0, 0, 1, 1], [], []>} : vector<16x32xf32>, vector<32x8xf32>, vector<16x8xf32> -> vector<16x8xf32>
    %c5_242 = arith.constant 5 : index
    %c0_243 = arith.constant 0 : index
    %c0_244 = arith.constant 0 : index
    %384 = vector.load %arg18[%c5_242, %c0_243, %c0_244] : memref<8x1x8xf32, #tpu.memory_space<vmem>>, vector<1x1x8xf32>
    %385 = vector.shape_cast %384 : vector<1x1x8xf32> to vector<1x8xf32>
    %386 = vector.broadcast %385 : vector<1x8xf32> to vector<16x8xf32>
    %387 = arith.addf %383, %386 : vector<16x8xf32>
    %c5_245 = arith.constant 5 : index
    %c0_246 = arith.constant 0 : index
    %c0_247 = arith.constant 0 : index
    %388 = vector.load %arg16[%c5_245, %c0_246, %c0_247] : memref<8x32x8xf32, #tpu.memory_space<vmem>>, vector<1x32x8xf32>
    %389 = vector.shape_cast %388 : vector<1x32x8xf32> to vector<32x8xf32>
    %cst_248 = arith.constant dense<0.000000e+00> : vector<16x8xf32>
    %390 = tpu.matmul %334, %389, %cst_248 {dimension_numbers = #tpu.dot_dimension_numbers<[1], [0], [0], [1], [0, 0, 1, 1], [], []>} : vector<16x32xf32>, vector<32x8xf32>, vector<16x8xf32> -> vector<16x8xf32>
    %c5_249 = arith.constant 5 : index
    %c0_250 = arith.constant 0 : index
    %c0_251 = arith.constant 0 : index
    %391 = vector.load %arg19[%c5_249, %c0_250, %c0_251] : memref<8x1x8xf32, #tpu.memory_space<vmem>>, vector<1x1x8xf32>
    %392 = vector.shape_cast %391 : vector<1x1x8xf32> to vector<1x8xf32>
    %393 = vector.broadcast %392 : vector<1x8xf32> to vector<16x8xf32>
    %394 = arith.addf %390, %393 : vector<16x8xf32>
    %cst_252 = arith.constant dense<0.000000e+00> : vector<16x16xf32>
    %395 = tpu.matmul %380, %387, %cst_252 {dimension_numbers = #tpu.dot_dimension_numbers<[1], [1], [0], [0], [0, 0, 1, 0], [], []>} : vector<16x8xf32>, vector<16x8xf32>, vector<16x16xf32> -> vector<16x16xf32>
    %cst_253 = arith.constant 0.353553385 : f32
    %396 = vector.broadcast %cst_253 : f32 to vector<16x16xf32>
    %397 = arith.mulf %395, %396 : vector<16x16xf32>
    %398 = vector.broadcast %95 : vector<1x16xf32> to vector<16x16xf32>
    %399 = arith.addf %397, %398 : vector<16x16xf32>
    %cst_254 = arith.constant dense<0xFF800000> : vector<16xf32>
    %400 = vector.multi_reduction <maximumf>, %399, %cst_254 [1] : vector<16x16xf32> to vector<16xf32>
    %401 = vector.shape_cast %400 : vector<16xf32> to vector<16x1xf32>
    %402 = vector.broadcast %401 : vector<16x1xf32> to vector<16x16xf32>
    %403 = arith.subf %399, %402 : vector<16x16xf32>
    %404 = math.exp %403 : vector<16x16xf32>
    %cst_255 = arith.constant dense<0.000000e+00> : vector<16xf32>
    %405 = vector.multi_reduction <add>, %404, %cst_255 [1] : vector<16x16xf32> to vector<16xf32>
    %406 = vector.shape_cast %405 : vector<16xf32> to vector<16x1xf32>
    %407 = vector.broadcast %406 : vector<16x1xf32> to vector<16x16xf32>
    %408 = arith.divf %404, %407 : vector<16x16xf32>
    %cst_256 = arith.constant dense<0.000000e+00> : vector<16x8xf32>
    %409 = tpu.matmul %408, %394, %cst_256 {dimension_numbers = #tpu.dot_dimension_numbers<[1], [0], [0], [1], [0, 0, 1, 1], [], []>} : vector<16x16xf32>, vector<16x8xf32>, vector<16x8xf32> -> vector<16x8xf32>
    %c5_257 = arith.constant 5 : index
    %c0_258 = arith.constant 0 : index
    %c0_259 = arith.constant 0 : index
    %410 = vector.load %arg20[%c5_257, %c0_258, %c0_259] : memref<8x8x32xf32, #tpu.memory_space<vmem>>, vector<1x8x32xf32>
    %411 = vector.shape_cast %410 : vector<1x8x32xf32> to vector<8x32xf32>
    %cst_260 = arith.constant dense<0.000000e+00> : vector<16x32xf32>
    %412 = tpu.matmul %409, %411, %cst_260 {dimension_numbers = #tpu.dot_dimension_numbers<[1], [0], [0], [1], [0, 0, 1, 1], [], []>} : vector<16x8xf32>, vector<8x32xf32>, vector<16x32xf32> -> vector<16x32xf32>
    %413 = arith.addf %373, %412 : vector<16x32xf32>
    %c6 = arith.constant 6 : index
    %c0_261 = arith.constant 0 : index
    %c0_262 = arith.constant 0 : index
    %414 = vector.load %arg14[%c6, %c0_261, %c0_262] : memref<8x32x8xf32, #tpu.memory_space<vmem>>, vector<1x32x8xf32>
    %415 = vector.shape_cast %414 : vector<1x32x8xf32> to vector<32x8xf32>
    %cst_263 = arith.constant dense<0.000000e+00> : vector<16x8xf32>
    %416 = tpu.matmul %334, %415, %cst_263 {dimension_numbers = #tpu.dot_dimension_numbers<[1], [0], [0], [1], [0, 0, 1, 1], [], []>} : vector<16x32xf32>, vector<32x8xf32>, vector<16x8xf32> -> vector<16x8xf32>
    %c6_264 = arith.constant 6 : index
    %c0_265 = arith.constant 0 : index
    %c0_266 = arith.constant 0 : index
    %417 = vector.load %arg17[%c6_264, %c0_265, %c0_266] : memref<8x1x8xf32, #tpu.memory_space<vmem>>, vector<1x1x8xf32>
    %418 = vector.shape_cast %417 : vector<1x1x8xf32> to vector<1x8xf32>
    %419 = vector.broadcast %418 : vector<1x8xf32> to vector<16x8xf32>
    %420 = arith.addf %416, %419 : vector<16x8xf32>
    %c6_267 = arith.constant 6 : index
    %c0_268 = arith.constant 0 : index
    %c0_269 = arith.constant 0 : index
    %421 = vector.load %arg15[%c6_267, %c0_268, %c0_269] : memref<8x32x8xf32, #tpu.memory_space<vmem>>, vector<1x32x8xf32>
    %422 = vector.shape_cast %421 : vector<1x32x8xf32> to vector<32x8xf32>
    %cst_270 = arith.constant dense<0.000000e+00> : vector<16x8xf32>
    %423 = tpu.matmul %334, %422, %cst_270 {dimension_numbers = #tpu.dot_dimension_numbers<[1], [0], [0], [1], [0, 0, 1, 1], [], []>} : vector<16x32xf32>, vector<32x8xf32>, vector<16x8xf32> -> vector<16x8xf32>
    %c6_271 = arith.constant 6 : index
    %c0_272 = arith.constant 0 : index
    %c0_273 = arith.constant 0 : index
    %424 = vector.load %arg18[%c6_271, %c0_272, %c0_273] : memref<8x1x8xf32, #tpu.memory_space<vmem>>, vector<1x1x8xf32>
    %425 = vector.shape_cast %424 : vector<1x1x8xf32> to vector<1x8xf32>
    %426 = vector.broadcast %425 : vector<1x8xf32> to vector<16x8xf32>
    %427 = arith.addf %423, %426 : vector<16x8xf32>
    %c6_274 = arith.constant 6 : index
    %c0_275 = arith.constant 0 : index
    %c0_276 = arith.constant 0 : index
    %428 = vector.load %arg16[%c6_274, %c0_275, %c0_276] : memref<8x32x8xf32, #tpu.memory_space<vmem>>, vector<1x32x8xf32>
    %429 = vector.shape_cast %428 : vector<1x32x8xf32> to vector<32x8xf32>
    %cst_277 = arith.constant dense<0.000000e+00> : vector<16x8xf32>
    %430 = tpu.matmul %334, %429, %cst_277 {dimension_numbers = #tpu.dot_dimension_numbers<[1], [0], [0], [1], [0, 0, 1, 1], [], []>} : vector<16x32xf32>, vector<32x8xf32>, vector<16x8xf32> -> vector<16x8xf32>
    %c6_278 = arith.constant 6 : index
    %c0_279 = arith.constant 0 : index
    %c0_280 = arith.constant 0 : index
    %431 = vector.load %arg19[%c6_278, %c0_279, %c0_280] : memref<8x1x8xf32, #tpu.memory_space<vmem>>, vector<1x1x8xf32>
    %432 = vector.shape_cast %431 : vector<1x1x8xf32> to vector<1x8xf32>
    %433 = vector.broadcast %432 : vector<1x8xf32> to vector<16x8xf32>
    %434 = arith.addf %430, %433 : vector<16x8xf32>
    %cst_281 = arith.constant dense<0.000000e+00> : vector<16x16xf32>
    %435 = tpu.matmul %420, %427, %cst_281 {dimension_numbers = #tpu.dot_dimension_numbers<[1], [1], [0], [0], [0, 0, 1, 0], [], []>} : vector<16x8xf32>, vector<16x8xf32>, vector<16x16xf32> -> vector<16x16xf32>
    %cst_282 = arith.constant 0.353553385 : f32
    %436 = vector.broadcast %cst_282 : f32 to vector<16x16xf32>
    %437 = arith.mulf %435, %436 : vector<16x16xf32>
    %438 = vector.broadcast %95 : vector<1x16xf32> to vector<16x16xf32>
    %439 = arith.addf %437, %438 : vector<16x16xf32>
    %cst_283 = arith.constant dense<0xFF800000> : vector<16xf32>
    %440 = vector.multi_reduction <maximumf>, %439, %cst_283 [1] : vector<16x16xf32> to vector<16xf32>
    %441 = vector.shape_cast %440 : vector<16xf32> to vector<16x1xf32>
    %442 = vector.broadcast %441 : vector<16x1xf32> to vector<16x16xf32>
    %443 = arith.subf %439, %442 : vector<16x16xf32>
    %444 = math.exp %443 : vector<16x16xf32>
    %cst_284 = arith.constant dense<0.000000e+00> : vector<16xf32>
    %445 = vector.multi_reduction <add>, %444, %cst_284 [1] : vector<16x16xf32> to vector<16xf32>
    %446 = vector.shape_cast %445 : vector<16xf32> to vector<16x1xf32>
    %447 = vector.broadcast %446 : vector<16x1xf32> to vector<16x16xf32>
    %448 = arith.divf %444, %447 : vector<16x16xf32>
    %cst_285 = arith.constant dense<0.000000e+00> : vector<16x8xf32>
    %449 = tpu.matmul %448, %434, %cst_285 {dimension_numbers = #tpu.dot_dimension_numbers<[1], [0], [0], [1], [0, 0, 1, 1], [], []>} : vector<16x16xf32>, vector<16x8xf32>, vector<16x8xf32> -> vector<16x8xf32>
    %c6_286 = arith.constant 6 : index
    %c0_287 = arith.constant 0 : index
    %c0_288 = arith.constant 0 : index
    %450 = vector.load %arg20[%c6_286, %c0_287, %c0_288] : memref<8x8x32xf32, #tpu.memory_space<vmem>>, vector<1x8x32xf32>
    %451 = vector.shape_cast %450 : vector<1x8x32xf32> to vector<8x32xf32>
    %cst_289 = arith.constant dense<0.000000e+00> : vector<16x32xf32>
    %452 = tpu.matmul %449, %451, %cst_289 {dimension_numbers = #tpu.dot_dimension_numbers<[1], [0], [0], [1], [0, 0, 1, 1], [], []>} : vector<16x8xf32>, vector<8x32xf32>, vector<16x32xf32> -> vector<16x32xf32>
    %453 = arith.addf %413, %452 : vector<16x32xf32>
    %c7 = arith.constant 7 : index
    %c0_290 = arith.constant 0 : index
    %c0_291 = arith.constant 0 : index
    %454 = vector.load %arg14[%c7, %c0_290, %c0_291] : memref<8x32x8xf32, #tpu.memory_space<vmem>>, vector<1x32x8xf32>
    %455 = vector.shape_cast %454 : vector<1x32x8xf32> to vector<32x8xf32>
    %cst_292 = arith.constant dense<0.000000e+00> : vector<16x8xf32>
    %456 = tpu.matmul %334, %455, %cst_292 {dimension_numbers = #tpu.dot_dimension_numbers<[1], [0], [0], [1], [0, 0, 1, 1], [], []>} : vector<16x32xf32>, vector<32x8xf32>, vector<16x8xf32> -> vector<16x8xf32>
    %c7_293 = arith.constant 7 : index
    %c0_294 = arith.constant 0 : index
    %c0_295 = arith.constant 0 : index
    %457 = vector.load %arg17[%c7_293, %c0_294, %c0_295] : memref<8x1x8xf32, #tpu.memory_space<vmem>>, vector<1x1x8xf32>
    %458 = vector.shape_cast %457 : vector<1x1x8xf32> to vector<1x8xf32>
    %459 = vector.broadcast %458 : vector<1x8xf32> to vector<16x8xf32>
    %460 = arith.addf %456, %459 : vector<16x8xf32>
    %c7_296 = arith.constant 7 : index
    %c0_297 = arith.constant 0 : index
    %c0_298 = arith.constant 0 : index
    %461 = vector.load %arg15[%c7_296, %c0_297, %c0_298] : memref<8x32x8xf32, #tpu.memory_space<vmem>>, vector<1x32x8xf32>
    %462 = vector.shape_cast %461 : vector<1x32x8xf32> to vector<32x8xf32>
    %cst_299 = arith.constant dense<0.000000e+00> : vector<16x8xf32>
    %463 = tpu.matmul %334, %462, %cst_299 {dimension_numbers = #tpu.dot_dimension_numbers<[1], [0], [0], [1], [0, 0, 1, 1], [], []>} : vector<16x32xf32>, vector<32x8xf32>, vector<16x8xf32> -> vector<16x8xf32>
    %c7_300 = arith.constant 7 : index
    %c0_301 = arith.constant 0 : index
    %c0_302 = arith.constant 0 : index
    %464 = vector.load %arg18[%c7_300, %c0_301, %c0_302] : memref<8x1x8xf32, #tpu.memory_space<vmem>>, vector<1x1x8xf32>
    %465 = vector.shape_cast %464 : vector<1x1x8xf32> to vector<1x8xf32>
    %466 = vector.broadcast %465 : vector<1x8xf32> to vector<16x8xf32>
    %467 = arith.addf %463, %466 : vector<16x8xf32>
    %c7_303 = arith.constant 7 : index
    %c0_304 = arith.constant 0 : index
    %c0_305 = arith.constant 0 : index
    %468 = vector.load %arg16[%c7_303, %c0_304, %c0_305] : memref<8x32x8xf32, #tpu.memory_space<vmem>>, vector<1x32x8xf32>
    %469 = vector.shape_cast %468 : vector<1x32x8xf32> to vector<32x8xf32>
    %cst_306 = arith.constant dense<0.000000e+00> : vector<16x8xf32>
    %470 = tpu.matmul %334, %469, %cst_306 {dimension_numbers = #tpu.dot_dimension_numbers<[1], [0], [0], [1], [0, 0, 1, 1], [], []>} : vector<16x32xf32>, vector<32x8xf32>, vector<16x8xf32> -> vector<16x8xf32>
    %c7_307 = arith.constant 7 : index
    %c0_308 = arith.constant 0 : index
    %c0_309 = arith.constant 0 : index
    %471 = vector.load %arg19[%c7_307, %c0_308, %c0_309] : memref<8x1x8xf32, #tpu.memory_space<vmem>>, vector<1x1x8xf32>
    %472 = vector.shape_cast %471 : vector<1x1x8xf32> to vector<1x8xf32>
    %473 = vector.broadcast %472 : vector<1x8xf32> to vector<16x8xf32>
    %474 = arith.addf %470, %473 : vector<16x8xf32>
    %cst_310 = arith.constant dense<0.000000e+00> : vector<16x16xf32>
    %475 = tpu.matmul %460, %467, %cst_310 {dimension_numbers = #tpu.dot_dimension_numbers<[1], [1], [0], [0], [0, 0, 1, 0], [], []>} : vector<16x8xf32>, vector<16x8xf32>, vector<16x16xf32> -> vector<16x16xf32>
    %cst_311 = arith.constant 0.353553385 : f32
    %476 = vector.broadcast %cst_311 : f32 to vector<16x16xf32>
    %477 = arith.mulf %475, %476 : vector<16x16xf32>
    %478 = vector.broadcast %95 : vector<1x16xf32> to vector<16x16xf32>
    %479 = arith.addf %477, %478 : vector<16x16xf32>
    %cst_312 = arith.constant dense<0xFF800000> : vector<16xf32>
    %480 = vector.multi_reduction <maximumf>, %479, %cst_312 [1] : vector<16x16xf32> to vector<16xf32>
    %481 = vector.shape_cast %480 : vector<16xf32> to vector<16x1xf32>
    %482 = vector.broadcast %481 : vector<16x1xf32> to vector<16x16xf32>
    %483 = arith.subf %479, %482 : vector<16x16xf32>
    %484 = math.exp %483 : vector<16x16xf32>
    %cst_313 = arith.constant dense<0.000000e+00> : vector<16xf32>
    %485 = vector.multi_reduction <add>, %484, %cst_313 [1] : vector<16x16xf32> to vector<16xf32>
    %486 = vector.shape_cast %485 : vector<16xf32> to vector<16x1xf32>
    %487 = vector.broadcast %486 : vector<16x1xf32> to vector<16x16xf32>
    %488 = arith.divf %484, %487 : vector<16x16xf32>
    %cst_314 = arith.constant dense<0.000000e+00> : vector<16x8xf32>
    %489 = tpu.matmul %488, %474, %cst_314 {dimension_numbers = #tpu.dot_dimension_numbers<[1], [0], [0], [1], [0, 0, 1, 1], [], []>} : vector<16x16xf32>, vector<16x8xf32>, vector<16x8xf32> -> vector<16x8xf32>
    %c7_315 = arith.constant 7 : index
    %c0_316 = arith.constant 0 : index
    %c0_317 = arith.constant 0 : index
    %490 = vector.load %arg20[%c7_315, %c0_316, %c0_317] : memref<8x8x32xf32, #tpu.memory_space<vmem>>, vector<1x8x32xf32>
    %491 = vector.shape_cast %490 : vector<1x8x32xf32> to vector<8x32xf32>
    %cst_318 = arith.constant dense<0.000000e+00> : vector<16x32xf32>
    %492 = tpu.matmul %489, %491, %cst_318 {dimension_numbers = #tpu.dot_dimension_numbers<[1], [0], [0], [1], [0, 0, 1, 1], [], []>} : vector<16x8xf32>, vector<8x32xf32>, vector<16x32xf32> -> vector<16x32xf32>
    %493 = arith.addf %453, %492 : vector<16x32xf32>
    %c1_319 = arith.constant 1 : index
    %c0_320 = arith.constant 0 : index
    %c0_321 = arith.constant 0 : index
    %494 = vector.load %arg21[%c1_319, %c0_320, %c0_321] : memref<2x1x32xf32, #tpu.memory_space<vmem>>, vector<1x1x32xf32>
    %495 = vector.shape_cast %494 : vector<1x1x32xf32> to vector<1x32xf32>
    %496 = vector.broadcast %495 : vector<1x32xf32> to vector<16x32xf32>
    %497 = arith.addf %493, %496 : vector<16x32xf32>
    %498 = arith.addf %497, %334 : vector<16x32xf32>
    %c1_322 = arith.constant 1 : index
    %c0_323 = arith.constant 0 : index
    %c0_324 = arith.constant 0 : index
    %499 = vector.load %arg22[%c1_322, %c0_323, %c0_324] : memref<2x1x32xf32, #tpu.memory_space<vmem>>, vector<1x1x32xf32>
    %500 = vector.shape_cast %499 : vector<1x1x32xf32> to vector<1x32xf32>
    %c1_325 = arith.constant 1 : index
    %c0_326 = arith.constant 0 : index
    %c0_327 = arith.constant 0 : index
    %501 = vector.load %arg23[%c1_325, %c0_326, %c0_327] : memref<2x1x32xf32, #tpu.memory_space<vmem>>, vector<1x1x32xf32>
    %502 = vector.shape_cast %501 : vector<1x1x32xf32> to vector<1x32xf32>
    %cst_328 = arith.constant dense<0.000000e+00> : vector<16xf32>
    %503 = vector.multi_reduction <add>, %498, %cst_328 [1] : vector<16x32xf32> to vector<16xf32>
    %504 = vector.shape_cast %503 : vector<16xf32> to vector<16x1xf32>
    %cst_329 = arith.constant 3.200000e+01 : f32
    %505 = vector.broadcast %cst_329 : f32 to vector<16x1xf32>
    %506 = arith.divf %504, %505 : vector<16x1xf32>
    %507 = vector.broadcast %506 : vector<16x1xf32> to vector<16x32xf32>
    %508 = arith.subf %498, %507 : vector<16x32xf32>
    %509 = arith.mulf %508, %508 : vector<16x32xf32>
    %cst_330 = arith.constant dense<0.000000e+00> : vector<16xf32>
    %510 = vector.multi_reduction <add>, %509, %cst_330 [1] : vector<16x32xf32> to vector<16xf32>
    %511 = vector.shape_cast %510 : vector<16xf32> to vector<16x1xf32>
    %cst_331 = arith.constant 3.200000e+01 : f32
    %512 = vector.broadcast %cst_331 : f32 to vector<16x1xf32>
    %513 = arith.divf %511, %512 : vector<16x1xf32>
    %514 = vector.broadcast %506 : vector<16x1xf32> to vector<16x32xf32>
    %515 = arith.subf %498, %514 : vector<16x32xf32>
    %cst_332 = arith.constant 9.99999996E-13 : f32
    %516 = vector.broadcast %cst_332 : f32 to vector<16x1xf32>
    %517 = arith.addf %513, %516 : vector<16x1xf32>
    %518 = math.rsqrt %517 : vector<16x1xf32>
    %519 = vector.broadcast %518 : vector<16x1xf32> to vector<16x32xf32>
    %520 = arith.mulf %515, %519 : vector<16x32xf32>
    %521 = vector.broadcast %500 : vector<1x32xf32> to vector<16x32xf32>
    %522 = arith.mulf %520, %521 : vector<16x32xf32>
    %523 = vector.broadcast %502 : vector<1x32xf32> to vector<16x32xf32>
    %524 = arith.addf %522, %523 : vector<16x32xf32>
    %c1_333 = arith.constant 1 : index
    %c0_334 = arith.constant 0 : index
    %c0_335 = arith.constant 0 : index
    %525 = vector.load %arg24[%c1_333, %c0_334, %c0_335] : memref<2x32x64xf32, #tpu.memory_space<vmem>>, vector<1x32x64xf32>
    %526 = vector.shape_cast %525 : vector<1x32x64xf32> to vector<32x64xf32>
    %cst_336 = arith.constant dense<0.000000e+00> : vector<16x64xf32>
    %527 = tpu.matmul %524, %526, %cst_336 {dimension_numbers = #tpu.dot_dimension_numbers<[1], [0], [0], [1], [0, 0, 1, 1], [], []>} : vector<16x32xf32>, vector<32x64xf32>, vector<16x64xf32> -> vector<16x64xf32>
    %c1_337 = arith.constant 1 : index
    %c0_338 = arith.constant 0 : index
    %c0_339 = arith.constant 0 : index
    %528 = vector.load %arg25[%c1_337, %c0_338, %c0_339] : memref<2x1x64xf32, #tpu.memory_space<vmem>>, vector<1x1x64xf32>
    %529 = vector.shape_cast %528 : vector<1x1x64xf32> to vector<1x64xf32>
    %530 = vector.broadcast %529 : vector<1x64xf32> to vector<16x64xf32>
    %531 = arith.addf %527, %530 : vector<16x64xf32>
    %cst_340 = arith.constant 5.000000e-01 : f32
    %532 = vector.broadcast %cst_340 : f32 to vector<16x64xf32>
    %533 = arith.mulf %532, %531 : vector<16x64xf32>
    %cst_341 = arith.constant 0.707106769 : f32
    %534 = vector.broadcast %cst_341 : f32 to vector<16x64xf32>
    %535 = arith.mulf %531, %534 : vector<16x64xf32>
    %536 = math.erf %535 : vector<16x64xf32>
    %cst_342 = arith.constant 1.000000e+00 : f32
    %537 = vector.broadcast %cst_342 : f32 to vector<16x64xf32>
    %538 = arith.addf %537, %536 : vector<16x64xf32>
    %539 = arith.mulf %533, %538 : vector<16x64xf32>
    %c1_343 = arith.constant 1 : index
    %c0_344 = arith.constant 0 : index
    %c0_345 = arith.constant 0 : index
    %540 = vector.load %arg26[%c1_343, %c0_344, %c0_345] : memref<2x64x32xf32, #tpu.memory_space<vmem>>, vector<1x64x32xf32>
    %541 = vector.shape_cast %540 : vector<1x64x32xf32> to vector<64x32xf32>
    %cst_346 = arith.constant dense<0.000000e+00> : vector<16x32xf32>
    %542 = tpu.matmul %539, %541, %cst_346 {dimension_numbers = #tpu.dot_dimension_numbers<[1], [0], [0], [1], [0, 0, 1, 1], [], []>} : vector<16x64xf32>, vector<64x32xf32>, vector<16x32xf32> -> vector<16x32xf32>
    %c1_347 = arith.constant 1 : index
    %c0_348 = arith.constant 0 : index
    %c0_349 = arith.constant 0 : index
    %543 = vector.load %arg27[%c1_347, %c0_348, %c0_349] : memref<2x1x32xf32, #tpu.memory_space<vmem>>, vector<1x1x32xf32>
    %544 = vector.shape_cast %543 : vector<1x1x32xf32> to vector<1x32xf32>
    %545 = vector.broadcast %544 : vector<1x32xf32> to vector<16x32xf32>
    %546 = arith.addf %542, %545 : vector<16x32xf32>
    %547 = arith.addf %546, %524 : vector<16x32xf32>
    %c1_350 = arith.constant 1 : index
    %c0_351 = arith.constant 0 : index
    %c0_352 = arith.constant 0 : index
    %548 = vector.load %arg28[%c1_350, %c0_351, %c0_352] : memref<2x1x32xf32, #tpu.memory_space<vmem>>, vector<1x1x32xf32>
    %549 = vector.shape_cast %548 : vector<1x1x32xf32> to vector<1x32xf32>
    %c1_353 = arith.constant 1 : index
    %c0_354 = arith.constant 0 : index
    %c0_355 = arith.constant 0 : index
    %550 = vector.load %arg29[%c1_353, %c0_354, %c0_355] : memref<2x1x32xf32, #tpu.memory_space<vmem>>, vector<1x1x32xf32>
    %551 = vector.shape_cast %550 : vector<1x1x32xf32> to vector<1x32xf32>
    %cst_356 = arith.constant dense<0.000000e+00> : vector<16xf32>
    %552 = vector.multi_reduction <add>, %547, %cst_356 [1] : vector<16x32xf32> to vector<16xf32>
    %553 = vector.shape_cast %552 : vector<16xf32> to vector<16x1xf32>
    %cst_357 = arith.constant 3.200000e+01 : f32
    %554 = vector.broadcast %cst_357 : f32 to vector<16x1xf32>
    %555 = arith.divf %553, %554 : vector<16x1xf32>
    %556 = vector.broadcast %555 : vector<16x1xf32> to vector<16x32xf32>
    %557 = arith.subf %547, %556 : vector<16x32xf32>
    %558 = arith.mulf %557, %557 : vector<16x32xf32>
    %cst_358 = arith.constant dense<0.000000e+00> : vector<16xf32>
    %559 = vector.multi_reduction <add>, %558, %cst_358 [1] : vector<16x32xf32> to vector<16xf32>
    %560 = vector.shape_cast %559 : vector<16xf32> to vector<16x1xf32>
    %cst_359 = arith.constant 3.200000e+01 : f32
    %561 = vector.broadcast %cst_359 : f32 to vector<16x1xf32>
    %562 = arith.divf %560, %561 : vector<16x1xf32>
    %563 = vector.broadcast %555 : vector<16x1xf32> to vector<16x32xf32>
    %564 = arith.subf %547, %563 : vector<16x32xf32>
    %cst_360 = arith.constant 9.99999996E-13 : f32
    %565 = vector.broadcast %cst_360 : f32 to vector<16x1xf32>
    %566 = arith.addf %562, %565 : vector<16x1xf32>
    %567 = math.rsqrt %566 : vector<16x1xf32>
    %568 = vector.broadcast %567 : vector<16x1xf32> to vector<16x32xf32>
    %569 = arith.mulf %564, %568 : vector<16x32xf32>
    %570 = vector.broadcast %549 : vector<1x32xf32> to vector<16x32xf32>
    %571 = arith.mulf %569, %570 : vector<16x32xf32>
    %572 = vector.broadcast %551 : vector<1x32xf32> to vector<16x32xf32>
    %573 = arith.addf %571, %572 : vector<16x32xf32>
    %c0_361 = arith.constant 0 : index
    %c0_362 = arith.constant 0 : index
    %574 = vector.load %arg30[%c0_361, %c0_362] : memref<32x81xf32, #tpu.memory_space<vmem>>, vector<32x81xf32>
    %cst_363 = arith.constant dense<0.000000e+00> : vector<16x81xf32>
    %575 = tpu.matmul %573, %574, %cst_363 {dimension_numbers = #tpu.dot_dimension_numbers<[1], [0], [0], [1], [0, 0, 1, 1], [], []>} : vector<16x32xf32>, vector<32x81xf32>, vector<16x81xf32> -> vector<16x81xf32>
    %c0_364 = arith.constant 0 : index
    %c0_365 = arith.constant 0 : index
    %576 = vector.load %arg31[%c0_364, %c0_365] : memref<1x81xf32, #tpu.memory_space<vmem>>, vector<1x81xf32>
    %577 = vector.broadcast %576 : vector<1x81xf32> to vector<16x81xf32>
    %578 = arith.addf %575, %577 : vector<16x81xf32>
    %c0_366 = arith.constant 0 : index
    %c0_367 = arith.constant 0 : index
    %c0_368 = arith.constant 0 : index
    %579 = vector.load %arg34[%c0_366, %c0_367, %c0_368] : memref<1x16x81xf32, #tpu.memory_space<vmem>>, vector<1x16x81xf32>
    %580 = vector.shape_cast %579 : vector<1x16x81xf32> to vector<16x81xf32>
    %581 = vector.shape_cast %578 : vector<16x81xf32> to vector<1x16x81xf32>
    tpu.vector_store %arg34[%c0_366, %c0_367, %c0_368], %581 {strides = array<i32>} : memref<1x16x81xf32, #tpu.memory_space<vmem>>, vector<1x16x81xf32>,
    %582 = vector.extract_strided_slice %578 {offsets = [0, 0], sizes = [16, 8], strides = [1, 1]} : vector<16x81xf32> to vector<16x8xf32>
    %583 = vector.extract_strided_slice %582 {offsets = [1, 0], sizes = [4, 8], strides = [1, 1]} : vector<16x8xf32> to vector<4x8xf32>
    %584 = vector.extract_strided_slice %582 {offsets = [6, 0], sizes = [4, 8], strides = [1, 1]} : vector<16x8xf32> to vector<4x8xf32>
    %585 = vector.extract_strided_slice %582 {offsets = [11, 0], sizes = [4, 8], strides = [1, 1]} : vector<16x8xf32> to vector<4x8xf32>
    %586 = tpu.concatenate %583, %584, %585 in 1 : vector<4x8xf32>, vector<4x8xf32>, vector<4x8xf32> -> vector<4x24xf32>
    %c0_369 = arith.constant 0 : index
    %c0_370 = arith.constant 0 : index
    %587 = vector.load %arg32[%c0_369, %c0_370] : memref<24x2xf32, #tpu.memory_space<vmem>>, vector<24x2xf32>
    %cst_371 = arith.constant dense<0.000000e+00> : vector<4x2xf32>
    %588 = tpu.matmul %586, %587, %cst_371 {dimension_numbers = #tpu.dot_dimension_numbers<[1], [0], [0], [1], [0, 0, 1, 1], [], []>} : vector<4x24xf32>, vector<24x2xf32>, vector<4x2xf32> -> vector<4x2xf32>
    %c0_372 = arith.constant 0 : index
    %c0_373 = arith.constant 0 : index
    %589 = vector.load %arg33[%c0_372, %c0_373] : memref<1x2xf32, #tpu.memory_space<vmem>>, vector<1x2xf32>
    %590 = vector.broadcast %589 : vector<1x2xf32> to vector<4x2xf32>
    %591 = arith.addf %588, %590 : vector<4x2xf32>
    %592 = vector.extract_strided_slice %591 {offsets = [0, 0], sizes = [4, 1], strides = [1, 1]} : vector<4x2xf32> to vector<4x1xf32>
    %cst_374 = arith.constant dense<0xFF800000> : vector<1xf32>
    %593 = vector.multi_reduction <maximumf>, %592, %cst_374 [0] : vector<4x1xf32> to vector<1xf32>
    %594 = vector.shape_cast %593 : vector<1xf32> to vector<1x1xf32>
    %595 = vector.broadcast %594 : vector<1x1xf32> to vector<4x1xf32>
    %596 = arith.subf %592, %595 : vector<4x1xf32>
    %597 = math.exp %596 : vector<4x1xf32>
    %cst_375 = arith.constant dense<0.000000e+00> : vector<1xf32>
    %598 = vector.multi_reduction <add>, %597, %cst_375 [0] : vector<4x1xf32> to vector<1xf32>
    %599 = vector.shape_cast %598 : vector<1xf32> to vector<1x1xf32>
    %600 = vector.broadcast %599 : vector<1x1xf32> to vector<4x1xf32>
    %601 = arith.divf %597, %600 : vector<4x1xf32>
    %602 = vector.broadcast %601 : vector<4x1xf32> to vector<4x24xf32>
    %603 = arith.mulf %602, %586 : vector<4x24xf32>
    %cst_376 = arith.constant dense<0.000000e+00> : vector<24xf32>
    %604 = vector.multi_reduction <add>, %603, %cst_376 [0] : vector<4x24xf32> to vector<24xf32>
    %605 = vector.shape_cast %604 : vector<24xf32> to vector<1x24xf32>
    %c0_377 = arith.constant 0 : index
    %c0_378 = arith.constant 0 : index
    %c0_379 = arith.constant 0 : index
    %606 = vector.load %arg35[%c0_377, %c0_378, %c0_379] : memref<1x1x24xf32, #tpu.memory_space<vmem>>, vector<1x1x24xf32>
    %607 = vector.shape_cast %606 : vector<1x1x24xf32> to vector<1x24xf32>
    %608 = vector.shape_cast %605 : vector<1x24xf32> to vector<1x1x24xf32>
    tpu.vector_store %arg35[%c0_377, %c0_378, %c0_379], %608 {strides = array<i32>} : memref<1x1x24xf32, #tpu.memory_space<vmem>>, vector<1x1x24xf32>,
    %609 = vector.extract_strided_slice %591 {offsets = [0, 1], sizes = [4, 1], strides = [1, 1]} : vector<4x2xf32> to vector<4x1xf32>
    %c0_380 = arith.constant 0 : index
    %c0_381 = arith.constant 0 : index
    %c0_382 = arith.constant 0 : index
    %610 = vector.load %arg36[%c0_380, %c0_381, %c0_382] : memref<1x4x1xf32, #tpu.memory_space<vmem>>, vector<1x4x1xf32>
    %611 = vector.shape_cast %610 : vector<1x4x1xf32> to vector<4x1xf32>
    %612 = vector.shape_cast %609 : vector<4x1xf32> to vector<1x4x1xf32>
    tpu.vector_store %arg36[%c0_380, %c0_381, %c0_382], %612 {strides = array<i32>} : memref<1x4x1xf32, #tpu.memory_space<vmem>>, vector<1x4x1xf32>,
    return
  }
  func.func @transform_0(%arg0: i32) -> (i32, i32, i32) {
    %c0_i32 = arith.constant 0 : i32
    %c0_i32_0 = arith.constant 0 : i32
    %c0_i32_1 = arith.constant 0 : i32
    return %arg0, %c0_i32, %c0_i32_0 : i32, i32, i32
  }
  func.func @transform_1(%arg0: i32) -> (i32, i32, i32) {
    %c0_i32 = arith.constant 0 : i32
    %c0_i32_0 = arith.constant 0 : i32
    %c0_i32_1 = arith.constant 0 : i32
    return %arg0, %c0_i32, %c0_i32_0 : i32, i32, i32
  }
  func.func @transform_2(%arg0: i32) -> (i32, i32, i32) {
    %c0_i32 = arith.constant 0 : i32
    %c0_i32_0 = arith.constant 0 : i32
    %c0_i32_1 = arith.constant 0 : i32
    return %arg0, %c0_i32, %c0_i32_0 : i32, i32, i32
  }
  func.func @transform_3(%arg0: i32) -> (i32, i32, i32) {
    %c0_i32 = arith.constant 0 : i32
    %c0_i32_0 = arith.constant 0 : i32
    %c0_i32_1 = arith.constant 0 : i32
    return %arg0, %c0_i32, %c0_i32_0 : i32, i32, i32
  }
  func.func @transform_4(%arg0: i32) -> (i32, i32) {
    %c0_i32 = arith.constant 0 : i32
    %c0_i32_0 = arith.constant 0 : i32
    %c0_i32_1 = arith.constant 0 : i32
    return %c0_i32, %c0_i32_0 : i32, i32
  }
  func.func @transform_5(%arg0: i32) -> (i32, i32) {
    %c0_i32 = arith.constant 0 : i32
    %c0_i32_0 = arith.constant 0 : i32
    %c0_i32_1 = arith.constant 0 : i32
    return %c0_i32, %c0_i32_0 : i32, i32
  }
  func.func @transform_6(%arg0: i32) -> (i32, i32) {
    %c0_i32 = arith.constant 0 : i32
    %c0_i32_0 = arith.constant 0 : i32
    %c0_i32_1 = arith.constant 0 : i32
    return %c0_i32, %c0_i32_0 : i32, i32
  }
  func.func @transform_7(%arg0: i32) -> (i32, i32) {
    %c0_i32 = arith.constant 0 : i32
    %c0_i32_0 = arith.constant 0 : i32
    %c0_i32_1 = arith.constant 0 : i32
    return %c0_i32, %c0_i32_0 : i32, i32
  }
  func.func @transform_8(%arg0: i32) -> (i32, i32) {
    %c0_i32 = arith.constant 0 : i32
    %c0_i32_0 = arith.constant 0 : i32
    %c0_i32_1 = arith.constant 0 : i32
    return %c0_i32, %c0_i32_0 : i32, i32
  }
  func.func @transform_9(%arg0: i32) -> (i32, i32) {
    %c0_i32 = arith.constant 0 : i32
    %c0_i32_0 = arith.constant 0 : i32
    %c0_i32_1 = arith.constant 0 : i32
    return %c0_i32, %c0_i32_0 : i32, i32
  }
  func.func @transform_10(%arg0: i32) -> (i32, i32) {
    %c0_i32 = arith.constant 0 : i32
    %c0_i32_0 = arith.constant 0 : i32
    %c0_i32_1 = arith.constant 0 : i32
    return %c0_i32, %c0_i32_0 : i32, i32
  }
  func.func @transform_11(%arg0: i32) -> (i32, i32) {
    %c0_i32 = arith.constant 0 : i32
    %c0_i32_0 = arith.constant 0 : i32
    %c0_i32_1 = arith.constant 0 : i32
    return %c0_i32, %c0_i32_0 : i32, i32
  }
  func.func @transform_12(%arg0: i32) -> (i32, i32) {
    %c0_i32 = arith.constant 0 : i32
    %c0_i32_0 = arith.constant 0 : i32
    %c0_i32_1 = arith.constant 0 : i32
    return %c0_i32, %c0_i32_0 : i32, i32
  }
  func.func @transform_13(%arg0: i32) -> (i32, i32, i32) {
    %c0_i32 = arith.constant 0 : i32
    %c0_i32_0 = arith.constant 0 : i32
    %c0_i32_1 = arith.constant 0 : i32
    %c0_i32_2 = arith.constant 0 : i32
    return %c0_i32, %c0_i32_0, %c0_i32_1 : i32, i32, i32
  }
  func.func @transform_14(%arg0: i32) -> (i32, i32, i32) {
    %c0_i32 = arith.constant 0 : i32
    %c0_i32_0 = arith.constant 0 : i32
    %c0_i32_1 = arith.constant 0 : i32
    %c0_i32_2 = arith.constant 0 : i32
    return %c0_i32, %c0_i32_0, %c0_i32_1 : i32, i32, i32
  }
  func.func @transform_15(%arg0: i32) -> (i32, i32, i32) {
    %c0_i32 = arith.constant 0 : i32
    %c0_i32_0 = arith.constant 0 : i32
    %c0_i32_1 = arith.constant 0 : i32
    %c0_i32_2 = arith.constant 0 : i32
    return %c0_i32, %c0_i32_0, %c0_i32_1 : i32, i32, i32
  }
  func.func @transform_16(%arg0: i32) -> (i32, i32, i32) {
    %c0_i32 = arith.constant 0 : i32
    %c0_i32_0 = arith.constant 0 : i32
    %c0_i32_1 = arith.constant 0 : i32
    %c0_i32_2 = arith.constant 0 : i32
    return %c0_i32, %c0_i32_0, %c0_i32_1 : i32, i32, i32
  }
  func.func @transform_17(%arg0: i32) -> (i32, i32, i32) {
    %c0_i32 = arith.constant 0 : i32
    %c0_i32_0 = arith.constant 0 : i32
    %c0_i32_1 = arith.constant 0 : i32
    %c0_i32_2 = arith.constant 0 : i32
    return %c0_i32, %c0_i32_0, %c0_i32_1 : i32, i32, i32
  }
  func.func @transform_18(%arg0: i32) -> (i32, i32, i32) {
    %c0_i32 = arith.constant 0 : i32
    %c0_i32_0 = arith.constant 0 : i32
    %c0_i32_1 = arith.constant 0 : i32
    %c0_i32_2 = arith.constant 0 : i32
    return %c0_i32, %c0_i32_0, %c0_i32_1 : i32, i32, i32
  }
  func.func @transform_19(%arg0: i32) -> (i32, i32, i32) {
    %c0_i32 = arith.constant 0 : i32
    %c0_i32_0 = arith.constant 0 : i32
    %c0_i32_1 = arith.constant 0 : i32
    %c0_i32_2 = arith.constant 0 : i32
    return %c0_i32, %c0_i32_0, %c0_i32_1 : i32, i32, i32
  }
  func.func @transform_20(%arg0: i32) -> (i32, i32, i32) {
    %c0_i32 = arith.constant 0 : i32
    %c0_i32_0 = arith.constant 0 : i32
    %c0_i32_1 = arith.constant 0 : i32
    %c0_i32_2 = arith.constant 0 : i32
    return %c0_i32, %c0_i32_0, %c0_i32_1 : i32, i32, i32
  }
  func.func @transform_21(%arg0: i32) -> (i32, i32, i32) {
    %c0_i32 = arith.constant 0 : i32
    %c0_i32_0 = arith.constant 0 : i32
    %c0_i32_1 = arith.constant 0 : i32
    %c0_i32_2 = arith.constant 0 : i32
    return %c0_i32, %c0_i32_0, %c0_i32_1 : i32, i32, i32
  }
  func.func @transform_22(%arg0: i32) -> (i32, i32, i32) {
    %c0_i32 = arith.constant 0 : i32
    %c0_i32_0 = arith.constant 0 : i32
    %c0_i32_1 = arith.constant 0 : i32
    %c0_i32_2 = arith.constant 0 : i32
    return %c0_i32, %c0_i32_0, %c0_i32_1 : i32, i32, i32
  }
  func.func @transform_23(%arg0: i32) -> (i32, i32, i32) {
    %c0_i32 = arith.constant 0 : i32
    %c0_i32_0 = arith.constant 0 : i32
    %c0_i32_1 = arith.constant 0 : i32
    %c0_i32_2 = arith.constant 0 : i32
    return %c0_i32, %c0_i32_0, %c0_i32_1 : i32, i32, i32
  }
  func.func @transform_24(%arg0: i32) -> (i32, i32, i32) {
    %c0_i32 = arith.constant 0 : i32
    %c0_i32_0 = arith.constant 0 : i32
    %c0_i32_1 = arith.constant 0 : i32
    %c0_i32_2 = arith.constant 0 : i32
    return %c0_i32, %c0_i32_0, %c0_i32_1 : i32, i32, i32
  }
  func.func @transform_25(%arg0: i32) -> (i32, i32, i32) {
    %c0_i32 = arith.constant 0 : i32
    %c0_i32_0 = arith.constant 0 : i32
    %c0_i32_1 = arith.constant 0 : i32
    %c0_i32_2 = arith.constant 0 : i32
    return %c0_i32, %c0_i32_0, %c0_i32_1 : i32, i32, i32
  }
  func.func @transform_26(%arg0: i32) -> (i32, i32, i32) {
    %c0_i32 = arith.constant 0 : i32
    %c0_i32_0 = arith.constant 0 : i32
    %c0_i32_1 = arith.constant 0 : i32
    %c0_i32_2 = arith.constant 0 : i32
    return %c0_i32, %c0_i32_0, %c0_i32_1 : i32, i32, i32
  }
  func.func @transform_27(%arg0: i32) -> (i32, i32, i32) {
    %c0_i32 = arith.constant 0 : i32
    %c0_i32_0 = arith.constant 0 : i32
    %c0_i32_1 = arith.constant 0 : i32
    %c0_i32_2 = arith.constant 0 : i32
    return %c0_i32, %c0_i32_0, %c0_i32_1 : i32, i32, i32
  }
  func.func @transform_28(%arg0: i32) -> (i32, i32, i32) {
    %c0_i32 = arith.constant 0 : i32
    %c0_i32_0 = arith.constant 0 : i32
    %c0_i32_1 = arith.constant 0 : i32
    %c0_i32_2 = arith.constant 0 : i32
    return %c0_i32, %c0_i32_0, %c0_i32_1 : i32, i32, i32
  }
  func.func @transform_29(%arg0: i32) -> (i32, i32) {
    %c0_i32 = arith.constant 0 : i32
    %c0_i32_0 = arith.constant 0 : i32
    %c0_i32_1 = arith.constant 0 : i32
    return %c0_i32, %c0_i32_0 : i32, i32
  }
  func.func @transform_30(%arg0: i32) -> (i32, i32) {
    %c0_i32 = arith.constant 0 : i32
    %c0_i32_0 = arith.constant 0 : i32
    %c0_i32_1 = arith.constant 0 : i32
    return %c0_i32, %c0_i32_0 : i32, i32
  }
  func.func @transform_31(%arg0: i32) -> (i32, i32) {
    %c0_i32 = arith.constant 0 : i32
    %c0_i32_0 = arith.constant 0 : i32
    %c0_i32_1 = arith.constant 0 : i32
    return %c0_i32, %c0_i32_0 : i32, i32
  }
  func.func @transform_32(%arg0: i32) -> (i32, i32) {
    %c0_i32 = arith.constant 0 : i32
    %c0_i32_0 = arith.constant 0 : i32
    %c0_i32_1 = arith.constant 0 : i32
    return %c0_i32, %c0_i32_0 : i32, i32
  }
  func.func @transform_33(%arg0: i32) -> (i32, i32, i32) {
    %c0_i32 = arith.constant 0 : i32
    %c0_i32_0 = arith.constant 0 : i32
    %c0_i32_1 = arith.constant 0 : i32
    return %arg0, %c0_i32, %c0_i32_0 : i32, i32, i32
  }
  func.func @transform_34(%arg0: i32) -> (i32, i32, i32) {
    %c0_i32 = arith.constant 0 : i32
    %c0_i32_0 = arith.constant 0 : i32
    %c0_i32_1 = arith.constant 0 : i32
    return %arg0, %c0_i32, %c0_i32_0 : i32, i32, i32
  }
  func.func @transform_35(%arg0: i32) -> (i32, i32, i32) {
    %c0_i32 = arith.constant 0 : i32
    %c0_i32_0 = arith.constant 0 : i32
    %c0_i32_1 = arith.constant 0 : i32
    return %arg0, %c0_i32, %c0_i32_0 : i32, i32, i32
  }
}

</mosaic_0001>

<llo_original>
// kernel: run.1
$region0: #{run.1}
  #allocation0 [shape = 'u32[]', space=smem, size = 0x4, offset = 0x4, fixed_abs, tag = 'smem constant byte address 0x4 - core index']
  #allocation1 [shape = 'u32[144,128]{1,0:T(1,128)}', space=vmem, size = 0x12000, scoped, tag = 'internal scratch']
  %s0 = inlined_call_operand.smem [shape: u32[36], index: -1, kind: input, shape index: {}]
  %s1 = sld [smem:[%s0]]
  %s2 = scalar_lea.smem %s0, 1
  %s3 = sld [smem:[%s2]]
  %s4 = scalar_lea.smem %s0, 2
  %s5 = sld [smem:[%s4]]
  %s6 = scalar_lea.smem %s0, 3
  %s7 = sld [smem:[%s6]]
  %s8 = scalar_lea.smem %s0, 4
  %s9 = sld [smem:[%s8]]
  %s10 = scalar_lea.smem %s0, 5
  %s11 = sld [smem:[%s10]]
  %s12 = scalar_lea.smem %s0, 6
  %s13 = sld [smem:[%s12]]
  %s14 = scalar_lea.smem %s0, 7
  %s15 = sld [smem:[%s14]]
  %s16 = scalar_lea.smem %s0, 8
  %s17 = sld [smem:[%s16]]
  %s18 = scalar_lea.smem %s0, 9
  %s19 = sld [smem:[%s18]]
  %s20 = scalar_lea.smem %s0, 10
  %s21 = sld [smem:[%s20]]
  %s22 = scalar_lea.smem %s0, 11
  %s23 = sld [smem:[%s22]]
  %s24 = scalar_lea.smem %s0, 12
  %s25 = sld [smem:[%s24]]
  %s26 = scalar_lea.smem %s0, 13
  %s27 = sld [smem:[%s26]]
  %s28 = scalar_lea.smem %s0, 14
  %s29 = sld [smem:[%s28]]
  %s30 = scalar_lea.smem %s0, 15
  %s31 = sld [smem:[%s30]]
  %s32 = scalar_lea.smem %s0, 16
  %s33 = sld [smem:[%s32]]
  %s34 = scalar_lea.smem %s0, 17
  %s35 = sld [smem:[%s34]]
  %s36 = scalar_lea.smem %s0, 18
  %s37 = sld [smem:[%s36]]
  %s38 = scalar_lea.smem %s0, 19
  %s39 = sld [smem:[%s38]]
  %s40 = scalar_lea.smem %s0, 20
  %s41 = sld [smem:[%s40]]
  %s42 = scalar_lea.smem %s0, 21
  %s43 = sld [smem:[%s42]]
  %s44 = scalar_lea.smem %s0, 22
  %s45 = sld [smem:[%s44]]
  %s46 = scalar_lea.smem %s0, 23
  %s47 = sld [smem:[%s46]]
  %s48 = scalar_lea.smem %s0, 24
  %s49 = sld [smem:[%s48]]
  %s50 = scalar_lea.smem %s0, 25
  %s51 = sld [smem:[%s50]]
  %s52 = scalar_lea.smem %s0, 26
  %s53 = sld [smem:[%s52]]
  %s54 = scalar_lea.smem %s0, 27
  %s55 = sld [smem:[%s54]]
  %s56 = scalar_lea.smem %s0, 28
  %s57 = sld [smem:[%s56]]
  %s58 = scalar_lea.smem %s0, 29
  %s59 = sld [smem:[%s58]]
  %s60 = scalar_lea.smem %s0, 30
  %s61 = sld [smem:[%s60]]
  %s62 = scalar_lea.smem %s0, 31
  %s63 = sld [smem:[%s62]]
  %s64 = scalar_lea.smem %s0, 32
  %s65 = sld [smem:[%s64]]
  %s66 = scalar_lea.smem %s0, 33
  %s67 = sld [smem:[%s66]]
  %s68 = scalar_lea.smem %s0, 34
  %s69 = sld [smem:[%s68]]
  %s70 = scalar_lea.smem %s0, 35
  %s71 = sld [smem:[%s70]]
  %72 = xla_tuple %s67, %s69, %s71
  %s73 = sld [smem:[#allocation0]]
  $region181: #{run.1} parent=0
    _
  %s75 = ssub.s32 1, %s73
  %s76 = scalar_select 0, %s75, %s73
  $region1: #{run.1} parent=0
    #allocation2 [shape = 'u8[1024]{0}', space=vmem, size = 0x400, scoped, tag = 'output window, operand 1']
    #allocation3 [shape = 's32[2]{0}', space=sflag, size = 0x8, scoped, tag = 'scoped memory for run.1']
    %77 = vsyncpa [#allocation3], 0
    %s78 = scalar_lea.sflag [#allocation3], 1
    %79 = vsyncpa %s78, 0
    loop: start=0, step=1, limit=4
    $region2: #{run.1} parent=1 // loop_pre_header
      _
    $region3: #{run.1} parent=1 // loop_header
      %s81 = sphi 0, %s85
      %p82 = scmp.ge.s32.totalorder %s81, 4
      %s91 = sphi 0, %s93
      %s94 = sphi 0, %s91
      %s95 = sphi 0, %s94
      %s111 = sphi 0, %s95
      %s117 = sphi 0, %s119
      %s120 = sphi 0, %s117
      %s121 = sphi 0, %s120
      %s137 = sphi 0, %s121
      %s143 = sphi 0, %s145
      %s146 = sphi 0, %s143
      %s147 = sphi 0, %s146
      %s163 = sphi 0, %s147
      %s169 = sphi 0, %s171
      %s172 = sphi 0, %s169
      %s173 = sphi 0, %s172
      %s189 = sphi 0, %s173
      %s193 = sphi 0, %s193
      %s195 = sphi 0, %s193
      %s196 = sphi 0, %s195
      %s210 = sphi 0, %s196
      %s214 = sphi 0, %s214
      %s216 = sphi 0, %s214
      %s217 = sphi 0, %s216
      %s231 = sphi 0, %s217
      %s235 = sphi 0, %s235
      %s237 = sphi 0, %s235
      %s238 = sphi 0, %s237
      %s252 = sphi 0, %s238
      %s256 = sphi 0, %s256
      %s258 = sphi 0, %s256
      %s259 = sphi 0, %s258
      %s273 = sphi 0, %s259
      %s277 = sphi 0, %s277
      %s279 = sphi 0, %s277
      %s280 = sphi 0, %s279
      %s294 = sphi 0, %s280
      %s298 = sphi 0, %s298
      %s300 = sphi 0, %s298
      %s301 = sphi 0, %s300
      %s315 = sphi 0, %s301
      %s319 = sphi 0, %s319
      %s321 = sphi 0, %s319
      %s322 = sphi 0, %s321
      %s336 = sphi 0, %s322
      %s340 = sphi 0, %s340
      %s342 = sphi 0, %s340
      %s343 = sphi 0, %s342
      %s357 = sphi 0, %s343
      %s361 = sphi 0, %s361
      %s363 = sphi 0, %s361
      %s364 = sphi 0, %s363
      %s378 = sphi 0, %s364
      %s382 = sphi 0, %s382
      %s384 = sphi 0, %s382
      %s385 = sphi 0, %s384
      %s399 = sphi 0, %s385
      %s403 = sphi 0, %s403
      %s405 = sphi 0, %s403
      %s406 = sphi 0, %s405
      %s420 = sphi 0, %s406
      %s424 = sphi 0, %s424
      %s426 = sphi 0, %s424
      %s427 = sphi 0, %s426
      %s441 = sphi 0, %s427
      %s445 = sphi 0, %s445
      %s447 = sphi 0, %s445
      %s448 = sphi 0, %s447
      %s462 = sphi 0, %s448
      %s466 = sphi 0, %s466
      %s468 = sphi 0, %s466
      %s469 = sphi 0, %s468
      %s483 = sphi 0, %s469
      %s487 = sphi 0, %s487
      %s489 = sphi 0, %s487
      %s490 = sphi 0, %s489
      %s504 = sphi 0, %s490
      %s508 = sphi 0, %s508
      %s510 = sphi 0, %s508
      %s511 = sphi 0, %s510
      %s525 = sphi 0, %s511
      %s529 = sphi 0, %s529
      %s531 = sphi 0, %s529
      %s532 = sphi 0, %s531
      %s546 = sphi 0, %s532
      %s550 = sphi 0, %s550
      %s552 = sphi 0, %s550
      %s553 = sphi 0, %s552
      %s567 = sphi 0, %s553
      %s571 = sphi 0, %s571
      %s573 = sphi 0, %s571
      %s574 = sphi 0, %s573
      %s588 = sphi 0, %s574
      %s592 = sphi 0, %s592
      %s594 = sphi 0, %s592
      %s595 = sphi 0, %s594
      %s609 = sphi 0, %s595
      %s613 = sphi 0, %s613
      %s615 = sphi 0, %s613
      %s616 = sphi 0, %s615
      %s630 = sphi 0, %s616
      %s634 = sphi 0, %s634
      %s636 = sphi 0, %s634
      %s637 = sphi 0, %s636
      %s651 = sphi 0, %s637
      %s655 = sphi 0, %s655
      %s657 = sphi 0, %s655
      %s658 = sphi 0, %s657
      %s672 = sphi 0, %s658
      %s676 = sphi 0, %s676
      %s678 = sphi 0, %s676
      %s679 = sphi 0, %s678
      %s693 = sphi 0, %s679
      %s697 = sphi 0, %s697
      %s699 = sphi 0, %s697
      %s700 = sphi 0, %s699
      %s714 = sphi 0, %s700
      %s718 = sphi 0, %s718
      %s720 = sphi 0, %s718
      %s721 = sphi 0, %s720
      %s735 = sphi 0, %s721
      %s739 = sphi 0, %s739
      %s741 = sphi 0, %s739
      %s742 = sphi 0, %s741
      %s756 = sphi 0, %s742
      %s760 = sphi 0, %s760
      %s762 = sphi 0, %s760
      %s763 = sphi 0, %s762
      %s777 = sphi 0, %s763
      %s781 = sphi 0, %s781
      %s783 = sphi 0, %s781
      %s784 = sphi 0, %s783
      %s798 = sphi 0, %s784
      %s804 = sphi 0, %s806
      %s807 = sphi 0, %s804
      %s808 = sphi 0, %s807
      %s824 = sphi 0, %s808
      %s830 = sphi 0, %s832
      %s833 = sphi 0, %s830
      %s834 = sphi 0, %s833
      %s850 = sphi 0, %s834
      %s856 = sphi 0, %s858
      %s859 = sphi 0, %s856
      %s860 = sphi 0, %s859
      %s876 = sphi 0, %s860
    $region4: #{run.1} parent=1 // loop_header_branch
      %84 = sbr.rel (%p82) target = $region8
    $region5: #{run.1} parent=1 // loop_body
      %s86 = ssub.s32 %s81, 1
      %s87 = ssub.s32 %s81, 2
      %s88 = sadd.s32 %s81, 1
      %s89 = ssub.s32 %s81, %s88
      %p90 = scmp.eq.s32.totalorder %s89, 0
      %s92 = sadd.s32 %s91, 1
      %s93 = scalar_select %p90, %s91, %s92
      %p96 = pneg %p90
      %p97 = scmp.eq.s32.totalorder %s81, 1
      %p98 = por %p96, %p97
      %p99 = scmp.ne.s32.totalorder %s91, %s94
      %p100 = scmp.eq.s32.totalorder %s81, 0
      %p101 = por %p99, %p100
      %p102 = scmp.ne.s32.totalorder %s91, %s94
      %p103 = scmp.eq.s32.totalorder %s86, 1
      %p104 = por %p102, %p103
      %p105 = scmp.ne.s32.totalorder %s94, %s95
      %p106 = scmp.eq.s32.totalorder %s86, 0
      %p107 = por %p105, %p106
      %p108 = scmp.ne.s32.totalorder %s94, %s95
      %p109 = scmp.eq.s32.totalorder %s87, 1
      %p110 = por %p108, %p109
      %p112 = scmp.ne.s32.totalorder %s95, %s111
      %p113 = scmp.eq.s32.totalorder %s87, 0
      %p114 = por %p112, %p113
      %s115 = ssub.s32 %s81, %s88
      %p116 = scmp.eq.s32.totalorder %s115, 0
      %s118 = sadd.s32 %s117, 1
      %s119 = scalar_select %p116, %s117, %s118
      %p122 = pneg %p116
      %p123 = scmp.eq.s32.totalorder %s81, 1
      %p124 = por %p122, %p123
      %p125 = scmp.ne.s32.totalorder %s117, %s120
      %p126 = scmp.eq.s32.totalorder %s81, 0
      %p127 = por %p125, %p126
      %p128 = scmp.ne.s32.totalorder %s117, %s120
      %p129 = scmp.eq.s32.totalorder %s86, 1
      %p130 = por %p128, %p129
      %p131 = scmp.ne.s32.totalorder %s120, %s121
      %p132 = scmp.eq.s32.totalorder %s86, 0
      %p133 = por %p131, %p132
      %p134 = scmp.ne.s32.totalorder %s120, %s121
      %p135 = scmp.eq.s32.totalorder %s87, 1
      %p136 = por %p134, %p135
      %p138 = scmp.ne.s32.totalorder %s121, %s137
      %p139 = scmp.eq.s32.totalorder %s87, 0
      %p140 = por %p138, %p139
      %s141 = ssub.s32 %s81, %s88
      %p142 = scmp.eq.s32.totalorder %s141, 0
      %s144 = sadd.s32 %s143, 1
      %s145 = scalar_select %p142, %s143, %s144
      %p148 = pneg %p142
      %p149 = scmp.eq.s32.totalorder %s81, 1
      %p150 = por %p148, %p149
      %p151 = scmp.ne.s32.totalorder %s143, %s146
      %p152 = scmp.eq.s32.totalorder %s81, 0
      %p153 = por %p151, %p152
      %p154 = scmp.ne.s32.totalorder %s143, %s146
      %p155 = scmp.eq.s32.totalorder %s86, 1
      %p156 = por %p154, %p155
      %p157 = scmp.ne.s32.totalorder %s146, %s147
      %p158 = scmp.eq.s32.totalorder %s86, 0
      %p159 = por %p157, %p158
      %p160 = scmp.ne.s32.totalorder %s146, %s147
      %p161 = scmp.eq.s32.totalorder %s87, 1
      %p162 = por %p160, %p161
      %p164 = scmp.ne.s32.totalorder %s147, %s163
      %p165 = scmp.eq.s32.totalorder %s87, 0
      %p166 = por %p164, %p165
      %s167 = ssub.s32 %s81, %s88
      %p168 = scmp.eq.s32.totalorder %s167, 0
      %s170 = sadd.s32 %s169, 1
      %s171 = scalar_select %p168, %s169, %s170
      %p174 = pneg %p168
      %p175 = scmp.eq.s32.totalorder %s81, 1
      %p176 = por %p174, %p175
      %p177 = scmp.ne.s32.totalorder %s169, %s172
      %p178 = scmp.eq.s32.totalorder %s81, 0
      %p179 = por %p177, %p178
      %p180 = scmp.ne.s32.totalorder %s169, %s172
      %p181 = scmp.eq.s32.totalorder %s86, 1
      %p182 = por %p180, %p181
      %p183 = scmp.ne.s32.totalorder %s172, %s173
      %p184 = scmp.eq.s32.totalorder %s86, 0
      %p185 = por %p183, %p184
      %p186 = scmp.ne.s32.totalorder %s172, %s173
      %p187 = scmp.eq.s32.totalorder %s87, 1
      %p188 = por %p186, %p187
      %p190 = scmp.ne.s32.totalorder %s173, %s189
      %p191 = scmp.eq.s32.totalorder %s87, 0
      %p192 = por %p190, %p191
      %s194 = sadd.s32 %s193, 1
      %p197 = scmp.eq.s32.totalorder %s81, 1
      %p198 = scmp.ne.s32.totalorder %s193, %s195
      %p199 = scmp.eq.s32.totalorder %s81, 0
      %p200 = por %p198, %p199
      %p201 = scmp.ne.s32.totalorder %s193, %s195
      %p202 = scmp.eq.s32.totalorder %s86, 1
      %p203 = por %p201, %p202
      %p204 = scmp.ne.s32.totalorder %s195, %s196
      %p205 = scmp.eq.s32.totalorder %s86, 0
      %p206 = por %p204, %p205
      %p207 = scmp.ne.s32.totalorder %s195, %s196
      %p208 = scmp.eq.s32.totalorder %s87, 1
      %p209 = por %p207, %p208
      %p211 = scmp.ne.s32.totalorder %s196, %s210
      %p212 = scmp.eq.s32.totalorder %s87, 0
      %p213 = por %p211, %p212
      %s215 = sadd.s32 %s214, 1
      %p218 = scmp.eq.s32.totalorder %s81, 1
      %p219 = scmp.ne.s32.totalorder %s214, %s216
      %p220 = scmp.eq.s32.totalorder %s81, 0
      %p221 = por %p219, %p220
      %p222 = scmp.ne.s32.totalorder %s214, %s216
      %p223 = scmp.eq.s32.totalorder %s86, 1
      %p224 = por %p222, %p223
      %p225 = scmp.ne.s32.totalorder %s216, %s217
      %p226 = scmp.eq.s32.totalorder %s86, 0
      %p227 = por %p225, %p226
      %p228 = scmp.ne.s32.totalorder %s216, %s217
      %p229 = scmp.eq.s32.totalorder %s87, 1
      %p230 = por %p228, %p229
      %p232 = scmp.ne.s32.totalorder %s217, %s231
      %p233 = scmp.eq.s32.totalorder %s87, 0
      %p234 = por %p232, %p233
      %s236 = sadd.s32 %s235, 1
      %p239 = scmp.eq.s32.totalorder %s81, 1
      %p240 = scmp.ne.s32.totalorder %s235, %s237
      %p241 = scmp.eq.s32.totalorder %s81, 0
      %p242 = por %p240, %p241
      %p243 = scmp.ne.s32.totalorder %s235, %s237
      %p244 = scmp.eq.s32.totalorder %s86, 1
      %p245 = por %p243, %p244
      %p246 = scmp.ne.s32.totalorder %s237, %s238
      %p247 = scmp.eq.s32.totalorder %s86, 0
      %p248 = por %p246, %p247
      %p249 = scmp.ne.s32.totalorder %s237, %s238
      %p250 = scmp.eq.s32.totalorder %s87, 1
      %p251 = por %p249, %p250
      %p253 = scmp.ne.s32.totalorder %s238, %s252
      %p254 = scmp.eq.s32.totalorder %s87, 0
      %p255 = por %p253, %p254
      %s257 = sadd.s32 %s256, 1
      %p260 = scmp.eq.s32.totalorder %s81, 1
      %p261 = scmp.ne.s32.totalorder %s256, %s258
      %p262 = scmp.eq.s32.totalorder %s81, 0
      %p263 = por %p261, %p262
      %p264 = scmp.ne.s32.totalorder %s256, %s258
      %p265 = scmp.eq.s32.totalorder %s86, 1
      %p266 = por %p264, %p265
      %p267 = scmp.ne.s32.totalorder %s258, %s259
      %p268 = scmp.eq.s32.totalorder %s86, 0
      %p269 = por %p267, %p268
      %p270 = scmp.ne.s32.totalorder %s258, %s259
      %p271 = scmp.eq.s32.totalorder %s87, 1
      %p272 = por %p270, %p271
      %p274 = scmp.ne.s32.totalorder %s259, %s273
      %p275 = scmp.eq.s32.totalorder %s87, 0
      %p276 = por %p274, %p275
      %s278 = sadd.s32 %s277, 1
      %p281 = scmp.eq.s32.totalorder %s81, 1
      %p282 = scmp.ne.s32.totalorder %s277, %s279
      %p283 = scmp.eq.s32.totalorder %s81, 0
      %p284 = por %p282, %p283
      %p285 = scmp.ne.s32.totalorder %s277, %s279
      %p286 = scmp.eq.s32.totalorder %s86, 1
      %p287 = por %p285, %p286
      %p288 = scmp.ne.s32.totalorder %s279, %s280
      %p289 = scmp.eq.s32.totalorder %s86, 0
      %p290 = por %p288, %p289
      %p291 = scmp.ne.s32.totalorder %s279, %s280
      %p292 = scmp.eq.s32.totalorder %s87, 1
      %p293 = por %p291, %p292
      %p295 = scmp.ne.s32.totalorder %s280, %s294
      %p296 = scmp.eq.s32.totalorder %s87, 0
      %p297 = por %p295, %p296
      %s299 = sadd.s32 %s298, 1
      %p302 = scmp.eq.s32.totalorder %s81, 1
      %p303 = scmp.ne.s32.totalorder %s298, %s300
      %p304 = scmp.eq.s32.totalorder %s81, 0
      %p305 = por %p303, %p304
      %p306 = scmp.ne.s32.totalorder %s298, %s300
      %p307 = scmp.eq.s32.totalorder %s86, 1
      %p308 = por %p306, %p307
      %p309 = scmp.ne.s32.totalorder %s300, %s301
      %p310 = scmp.eq.s32.totalorder %s86, 0
      %p311 = por %p309, %p310
      %p312 = scmp.ne.s32.totalorder %s300, %s301
      %p313 = scmp.eq.s32.totalorder %s87, 1
      %p314 = por %p312, %p313
      %p316 = scmp.ne.s32.totalorder %s301, %s315
      %p317 = scmp.eq.s32.totalorder %s87, 0
      %p318 = por %p316, %p317
      %s320 = sadd.s32 %s319, 1
      %p323 = scmp.eq.s32.totalorder %s81, 1
      %p324 = scmp.ne.s32.totalorder %s319, %s321
      %p325 = scmp.eq.s32.totalorder %s81, 0
      %p326 = por %p324, %p325
      %p327 = scmp.ne.s32.totalorder %s319, %s321
      %p328 = scmp.eq.s32.totalorder %s86, 1
      %p329 = por %p327, %p328
      %p330 = scmp.ne.s32.totalorder %s321, %s322
      %p331 = scmp.eq.s32.totalorder %s86, 0
      %p332 = por %p330, %p331
      %p333 = scmp.ne.s32.totalorder %s321, %s322
      %p334 = scmp.eq.s32.totalorder %s87, 1
      %p335 = por %p333, %p334
      %p337 = scmp.ne.s32.totalorder %s322, %s336
      %p338 = scmp.eq.s32.totalorder %s87, 0
      %p339 = por %p337, %p338
      %s341 = sadd.s32 %s340, 1
      %p344 = scmp.eq.s32.totalorder %s81, 1
      %p345 = scmp.ne.s32.totalorder %s340, %s342
      %p346 = scmp.eq.s32.totalorder %s81, 0
      %p347 = por %p345, %p346
      %p348 = scmp.ne.s32.totalorder %s340, %s342
      %p349 = scmp.eq.s32.totalorder %s86, 1
      %p350 = por %p348, %p349
      %p351 = scmp.ne.s32.totalorder %s342, %s343
      %p352 = scmp.eq.s32.totalorder %s86, 0
      %p353 = por %p351, %p352
      %p354 = scmp.ne.s32.totalorder %s342, %s343
      %p355 = scmp.eq.s32.totalorder %s87, 1
      %p356 = por %p354, %p355
      %p358 = scmp.ne.s32.totalorder %s343, %s357
      %p359 = scmp.eq.s32.totalorder %s87, 0
      %p360 = por %p358, %p359
      %s362 = sadd.s32 %s361, 1
      %p365 = scmp.eq.s32.totalorder %s81, 1
      %p366 = scmp.ne.s32.totalorder %s361, %s363
      %p367 = scmp.eq.s32.totalorder %s81, 0
      %p368 = por %p366, %p367
      %p369 = scmp.ne.s32.totalorder %s361, %s363
      %p370 = scmp.eq.s32.totalorder %s86, 1
      %p371 = por %p369, %p370
      %p372 = scmp.ne.s32.totalorder %s363, %s364
      %p373 = scmp.eq.s32.totalorder %s86, 0
      %p374 = por %p372, %p373
      %p375 = scmp.ne.s32.totalorder %s363, %s364
      %p376 = scmp.eq.s32.totalorder %s87, 1
      %p377 = por %p375, %p376
      %p379 = scmp.ne.s32.totalorder %s364, %s378
      %p380 = scmp.eq.s32.totalorder %s87, 0
      %p381 = por %p379, %p380
      %s383 = sadd.s32 %s382, 1
      %p386 = scmp.eq.s32.totalorder %s81, 1
      %p387 = scmp.ne.s32.totalorder %s382, %s384
      %p388 = scmp.eq.s32.totalorder %s81, 0
      %p389 = por %p387, %p388
      %p390 = scmp.ne.s32.totalorder %s382, %s384
      %p391 = scmp.eq.s32.totalorder %s86, 1
      %p392 = por %p390, %p391
      %p393 = scmp.ne.s32.totalorder %s384, %s385
      %p394 = scmp.eq.s32.totalorder %s86, 0
      %p395 = por %p393, %p394
      %p396 = scmp.ne.s32.totalorder %s384, %s385
      %p397 = scmp.eq.s32.totalorder %s87, 1
      %p398 = por %p396, %p397
      %p400 = scmp.ne.s32.totalorder %s385, %s399
      %p401 = scmp.eq.s32.totalorder %s87, 0
      %p402 = por %p400, %p401
      %s404 = sadd.s32 %s403, 1
      %p407 = scmp.eq.s32.totalorder %s81, 1
      %p408 = scmp.ne.s32.totalorder %s403, %s405
      %p409 = scmp.eq.s32.totalorder %s81, 0
      %p410 = por %p408, %p409
      %p411 = scmp.ne.s32.totalorder %s403, %s405
      %p412 = scmp.eq.s32.totalorder %s86, 1
      %p413 = por %p411, %p412
      %p414 = scmp.ne.s32.totalorder %s405, %s406
      %p415 = scmp.eq.s32.totalorder %s86, 0
      %p416 = por %p414, %p415
      %p417 = scmp.ne.s32.totalorder %s405, %s406
      %p418 = scmp.eq.s32.totalorder %s87, 1
      %p419 = por %p417, %p418
      %p421 = scmp.ne.s32.totalorder %s406, %s420
      %p422 = scmp.eq.s32.totalorder %s87, 0
      %p423 = por %p421, %p422
      %s425 = sadd.s32 %s424, 1
      %p428 = scmp.eq.s32.totalorder %s81, 1
      %p429 = scmp.ne.s32.totalorder %s424, %s426
      %p430 = scmp.eq.s32.totalorder %s81, 0
      %p431 = por %p429, %p430
      %p432 = scmp.ne.s32.totalorder %s424, %s426
      %p433 = scmp.eq.s32.totalorder %s86, 1
      %p434 = por %p432, %p433
      %p435 = scmp.ne.s32.totalorder %s426, %s427
      %p436 = scmp.eq.s32.totalorder %s86, 0
      %p437 = por %p435, %p436
      %p438 = scmp.ne.s32.totalorder %s426, %s427
      %p439 = scmp.eq.s32.totalorder %s87, 1
      %p440 = por %p438, %p439
      %p442 = scmp.ne.s32.totalorder %s427, %s441
      %p443 = scmp.eq.s32.totalorder %s87, 0
      %p444 = por %p442, %p443
      %s446 = sadd.s32 %s445, 1
      %p449 = scmp.eq.s32.totalorder %s81, 1
      %p450 = scmp.ne.s32.totalorder %s445, %s447
      %p451 = scmp.eq.s32.totalorder %s81, 0
      %p452 = por %p450, %p451
      %p453 = scmp.ne.s32.totalorder %s445, %s447
      %p454 = scmp.eq.s32.totalorder %s86, 1
      %p455 = por %p453, %p454
      %p456 = scmp.ne.s32.totalorder %s447, %s448
      %p457 = scmp.eq.s32.totalorder %s86, 0
      %p458 = por %p456, %p457
      %p459 = scmp.ne.s32.totalorder %s447, %s448
      %p460 = scmp.eq.s32.totalorder %s87, 1
      %p461 = por %p459, %p460
      %p463 = scmp.ne.s32.totalorder %s448, %s462
      %p464 = scmp.eq.s32.totalorder %s87, 0
      %p465 = por %p463, %p464
      %s467 = sadd.s32 %s466, 1
      %p470 = scmp.eq.s32.totalorder %s81, 1
      %p471 = scmp.ne.s32.totalorder %s466, %s468
      %p472 = scmp.eq.s32.totalorder %s81, 0
      %p473 = por %p471, %p472
      %p474 = scmp.ne.s32.totalorder %s466, %s468
      %p475 = scmp.eq.s32.totalorder %s86, 1
      %p476 = por %p474, %p475
      %p477 = scmp.ne.s32.totalorder %s468, %s469
      %p478 = scmp.eq.s32.totalorder %s86, 0
      %p479 = por %p477, %p478
      %p480 = scmp.ne.s32.totalorder %s468, %s469
      %p481 = scmp.eq.s32.totalorder %s87, 1
      %p482 = por %p480, %p481
      %p484 = scmp.ne.s32.totalorder %s469, %s483
      %p485 = scmp.eq.s32.totalorder %s87, 0
      %p486 = por %p484, %p485
      %s488 = sadd.s32 %s487, 1
      %p491 = scmp.eq.s32.totalorder %s81, 1
      %p492 = scmp.ne.s32.totalorder %s487, %s489
      %p493 = scmp.eq.s32.totalorder %s81, 0
      %p494 = por %p492, %p493
      %p495 = scmp.ne.s32.totalorder %s487, %s489
      %p496 = scmp.eq.s32.totalorder %s86, 1
      %p497 = por %p495, %p496
      %p498 = scmp.ne.s32.totalorder %s489, %s490
      %p499 = scmp.eq.s32.totalorder %s86, 0
      %p500 = por %p498, %p499
      %p501 = scmp.ne.s32.totalorder %s489, %s490
      %p502 = scmp.eq.s32.totalorder %s87, 1
      %p503 = por %p501, %p502
      %p505 = scmp.ne.s32.totalorder %s490, %s504
      %p506 = scmp.eq.s32.totalorder %s87, 0
      %p507 = por %p505, %p506
      %s509 = sadd.s32 %s508, 1
      %p512 = scmp.eq.s32.totalorder %s81, 1
      %p513 = scmp.ne.s32.totalorder %s508, %s510
      %p514 = scmp.eq.s32.totalorder %s81, 0
      %p515 = por %p513, %p514
      %p516 = scmp.ne.s32.totalorder %s508, %s510
      %p517 = scmp.eq.s32.totalorder %s86, 1
      %p518 = por %p516, %p517
      %p519 = scmp.ne.s32.totalorder %s510, %s511
      %p520 = scmp.eq.s32.totalorder %s86, 0
      %p521 = por %p519, %p520
      %p522 = scmp.ne.s32.totalorder %s510, %s511
      %p523 = scmp.eq.s32.totalorder %s87, 1
      %p524 = por %p522, %p523
      %p526 = scmp.ne.s32.totalorder %s511, %s525
      %p527 = scmp.eq.s32.totalorder %s87, 0
      %p528 = por %p526, %p527
      %s530 = sadd.s32 %s529, 1
      %p533 = scmp.eq.s32.totalorder %s81, 1
      %p534 = scmp.ne.s32.totalorder %s529, %s531
      %p535 = scmp.eq.s32.totalorder %s81, 0
      %p536 = por %p534, %p535
      %p537 = scmp.ne.s32.totalorder %s529, %s531
      %p538 = scmp.eq.s32.totalorder %s86, 1
      %p539 = por %p537, %p538
      %p540 = scmp.ne.s32.totalorder %s531, %s532
      %p541 = scmp.eq.s32.totalorder %s86, 0
      %p542 = por %p540, %p541
      %p543 = scmp.ne.s32.totalorder %s531, %s532
      %p544 = scmp.eq.s32.totalorder %s87, 1
      %p545 = por %p543, %p544
      %p547 = scmp.ne.s32.totalorder %s532, %s546
      %p548 = scmp.eq.s32.totalorder %s87, 0
      %p549 = por %p547, %p548
      %s551 = sadd.s32 %s550, 1
      %p554 = scmp.eq.s32.totalorder %s81, 1
      %p555 = scmp.ne.s32.totalorder %s550, %s552
      %p556 = scmp.eq.s32.totalorder %s81, 0
      %p557 = por %p555, %p556
      %p558 = scmp.ne.s32.totalorder %s550, %s552
      %p559 = scmp.eq.s32.totalorder %s86, 1
      %p560 = por %p558, %p559
      %p561 = scmp.ne.s32.totalorder %s552, %s553
      %p562 = scmp.eq.s32.totalorder %s86, 0
      %p563 = por %p561, %p562
      %p564 = scmp.ne.s32.totalorder %s552, %s553
      %p565 = scmp.eq.s32.totalorder %s87, 1
      %p566 = por %p564, %p565
      %p568 = scmp.ne.s32.totalorder %s553, %s567
      %p569 = scmp.eq.s32.totalorder %s87, 0
      %p570 = por %p568, %p569
      %s572 = sadd.s32 %s571, 1
      %p575 = scmp.eq.s32.totalorder %s81, 1
      %p576 = scmp.ne.s32.totalorder %s571, %s573
      %p577 = scmp.eq.s32.totalorder %s81, 0
      %p578 = por %p576, %p577
      %p579 = scmp.ne.s32.totalorder %s571, %s573
      %p580 = scmp.eq.s32.totalorder %s86, 1
      %p581 = por %p579, %p580
      %p582 = scmp.ne.s32.totalorder %s573, %s574
      %p583 = scmp.eq.s32.totalorder %s86, 0
      %p584 = por %p582, %p583
      %p585 = scmp.ne.s32.totalorder %s573, %s574
      %p586 = scmp.eq.s32.totalorder %s87, 1
      %p587 = por %p585, %p586
      %p589 = scmp.ne.s32.totalorder %s574, %s588
      %p590 = scmp.eq.s32.totalorder %s87, 0
      %p591 = por %p589, %p590
      %s593 = sadd.s32 %s592, 1
      %p596 = scmp.eq.s32.totalorder %s81, 1
      %p597 = scmp.ne.s32.totalorder %s592, %s594
      %p598 = scmp.eq.s32.totalorder %s81, 0
      %p599 = por %p597, %p598
      %p600 = scmp.ne.s32.totalorder %s592, %s594
      %p601 = scmp.eq.s32.totalorder %s86, 1
      %p602 = por %p600, %p601
      %p603 = scmp.ne.s32.totalorder %s594, %s595
      %p604 = scmp.eq.s32.totalorder %s86, 0
      %p605 = por %p603, %p604
      %p606 = scmp.ne.s32.totalorder %s594, %s595
      %p607 = scmp.eq.s32.totalorder %s87, 1
      %p608 = por %p606, %p607
      %p610 = scmp.ne.s32.totalorder %s595, %s609
      %p611 = scmp.eq.s32.totalorder %s87, 0
      %p612 = por %p610, %p611
      %s614 = sadd.s32 %s613, 1
      %p617 = scmp.eq.s32.totalorder %s81, 1
      %p618 = scmp.ne.s32.totalorder %s613, %s615
      %p619 = scmp.eq.s32.totalorder %s81, 0
      %p620 = por %p618, %p619
      %p621 = scmp.ne.s32.totalorder %s613, %s615
      %p622 = scmp.eq.s32.totalorder %s86, 1
      %p623 = por %p621, %p622
      %p624 = scmp.ne.s32.totalorder %s615, %s616
      %p625 = scmp.eq.s32.totalorder %s86, 0
      %p626 = por %p624, %p625
      %p627 = scmp.ne.s32.totalorder %s615, %s616
      %p628 = scmp.eq.s32.totalorder %s87, 1
      %p629 = por %p627, %p628
      %p631 = scmp.ne.s32.totalorder %s616, %s630
      %p632 = scmp.eq.s32.totalorder %s87, 0
      %p633 = por %p631, %p632
      %s635 = sadd.s32 %s634, 1
      %p638 = scmp.eq.s32.totalorder %s81, 1
      %p639 = scmp.ne.s32.totalorder %s634, %s636
      %p640 = scmp.eq.s32.totalorder %s81, 0
      %p641 = por %p639, %p640
      %p642 = scmp.ne.s32.totalorder %s634, %s636
      %p643 = scmp.eq.s32.totalorder %s86, 1
      %p644 = por %p642, %p643
      %p645 = scmp.ne.s32.totalorder %s636, %s637
      %p646 = scmp.eq.s32.totalorder %s86, 0
      %p647 = por %p645, %p646
      %p648 = scmp.ne.s32.totalorder %s636, %s637
      %p649 = scmp.eq.s32.totalorder %s87, 1
      %p650 = por %p648, %p649
      %p652 = scmp.ne.s32.totalorder %s637, %s651
      %p653 = scmp.eq.s32.totalorder %s87, 0
      %p654 = por %p652, %p653
      %s656 = sadd.s32 %s655, 1
      %p659 = scmp.eq.s32.totalorder %s81, 1
      %p660 = scmp.ne.s32.totalorder %s655, %s657
      %p661 = scmp.eq.s32.totalorder %s81, 0
      %p662 = por %p660, %p661
      %p663 = scmp.ne.s32.totalorder %s655, %s657
      %p664 = scmp.eq.s32.totalorder %s86, 1
      %p665 = por %p663, %p664
      %p666 = scmp.ne.s32.totalorder %s657, %s658
      %p667 = scmp.eq.s32.totalorder %s86, 0
      %p668 = por %p666, %p667
      %p669 = scmp.ne.s32.totalorder %s657, %s658
      %p670 = scmp.eq.s32.totalorder %s87, 1
      %p671 = por %p669, %p670
      %p673 = scmp.ne.s32.totalorder %s658, %s672
      %p674 = scmp.eq.s32.totalorder %s87, 0
      %p675 = por %p673, %p674
      %s677 = sadd.s32 %s676, 1
      %p680 = scmp.eq.s32.totalorder %s81, 1
      %p681 = scmp.ne.s32.totalorder %s676, %s678
      %p682 = scmp.eq.s32.totalorder %s81, 0
      %p683 = por %p681, %p682
      %p684 = scmp.ne.s32.totalorder %s676, %s678
      %p685 = scmp.eq.s32.totalorder %s86, 1
      %p686 = por %p684, %p685
      %p687 = scmp.ne.s32.totalorder %s678, %s679
      %p688 = scmp.eq.s32.totalorder %s86, 0
      %p689 = por %p687, %p688
      %p690 = scmp.ne.s32.totalorder %s678, %s679
      %p691 = scmp.eq.s32.totalorder %s87, 1
      %p692 = por %p690, %p691
      %p694 = scmp.ne.s32.totalorder %s679, %s693
      %p695 = scmp.eq.s32.totalorder %s87, 0
      %p696 = por %p694, %p695
      %s698 = sadd.s32 %s697, 1
      %p701 = scmp.eq.s32.totalorder %s81, 1
      %p702 = scmp.ne.s32.totalorder %s697, %s699
      %p703 = scmp.eq.s32.totalorder %s81, 0
      %p704 = por %p702, %p703
      %p705 = scmp.ne.s32.totalorder %s697, %s699
      %p706 = scmp.eq.s32.totalorder %s86, 1
      %p707 = por %p705, %p706
      %p708 = scmp.ne.s32.totalorder %s699, %s700
      %p709 = scmp.eq.s32.totalorder %s86, 0
      %p710 = por %p708, %p709
      %p711 = scmp.ne.s32.totalorder %s699, %s700
      %p712 = scmp.eq.s32.totalorder %s87, 1
      %p713 = por %p711, %p712
      %p715 = scmp.ne.s32.totalorder %s700, %s714
      %p716 = scmp.eq.s32.totalorder %s87, 0
      %p717 = por %p715, %p716
      %s719 = sadd.s32 %s718, 1
      %p722 = scmp.eq.s32.totalorder %s81, 1
      %p723 = scmp.ne.s32.totalorder %s718, %s720
      %p724 = scmp.eq.s32.totalorder %s81, 0
      %p725 = por %p723, %p724
      %p726 = scmp.ne.s32.totalorder %s718, %s720
      %p727 = scmp.eq.s32.totalorder %s86, 1
      %p728 = por %p726, %p727
      %p729 = scmp.ne.s32.totalorder %s720, %s721
      %p730 = scmp.eq.s32.totalorder %s86, 0
      %p731 = por %p729, %p730
      %p732 = scmp.ne.s32.totalorder %s720, %s721
      %p733 = scmp.eq.s32.totalorder %s87, 1
      %p734 = por %p732, %p733
      %p736 = scmp.ne.s32.totalorder %s721, %s735
      %p737 = scmp.eq.s32.totalorder %s87, 0
      %p738 = por %p736, %p737
      %s740 = sadd.s32 %s739, 1
      %p743 = scmp.eq.s32.totalorder %s81, 1
      %p744 = scmp.ne.s32.totalorder %s739, %s741
      %p745 = scmp.eq.s32.totalorder %s81, 0
      %p746 = por %p744, %p745
      %p747 = scmp.ne.s32.totalorder %s739, %s741
      %p748 = scmp.eq.s32.totalorder %s86, 1
      %p749 = por %p747, %p748
      %p750 = scmp.ne.s32.totalorder %s741, %s742
      %p751 = scmp.eq.s32.totalorder %s86, 0
      %p752 = por %p750, %p751
      %p753 = scmp.ne.s32.totalorder %s741, %s742
      %p754 = scmp.eq.s32.totalorder %s87, 1
      %p755 = por %p753, %p754
      %p757 = scmp.ne.s32.totalorder %s742, %s756
      %p758 = scmp.eq.s32.totalorder %s87, 0
      %p759 = por %p757, %p758
      %s761 = sadd.s32 %s760, 1
      %p764 = scmp.eq.s32.totalorder %s81, 1
      %p765 = scmp.ne.s32.totalorder %s760, %s762
      %p766 = scmp.eq.s32.totalorder %s81, 0
      %p767 = por %p765, %p766
      %p768 = scmp.ne.s32.totalorder %s760, %s762
      %p769 = scmp.eq.s32.totalorder %s86, 1
      %p770 = por %p768, %p769
      %p771 = scmp.ne.s32.totalorder %s762, %s763
      %p772 = scmp.eq.s32.totalorder %s86, 0
      %p773 = por %p771, %p772
      %p774 = scmp.ne.s32.totalorder %s762, %s763
      %p775 = scmp.eq.s32.totalorder %s87, 1
      %p776 = por %p774, %p775
      %p778 = scmp.ne.s32.totalorder %s763, %s777
      %p779 = scmp.eq.s32.totalorder %s87, 0
      %p780 = por %p778, %p779
      %s782 = sadd.s32 %s781, 1
      %p785 = scmp.eq.s32.totalorder %s81, 1
      %p786 = scmp.ne.s32.totalorder %s781, %s783
      %p787 = scmp.eq.s32.totalorder %s81, 0
      %p788 = por %p786, %p787
      %p789 = scmp.ne.s32.totalorder %s781, %s783
      %p790 = scmp.eq.s32.totalorder %s86, 1
      %p791 = por %p789, %p790
      %p792 = scmp.ne.s32.totalorder %s783, %s784
      %p793 = scmp.eq.s32.totalorder %s86, 0
      %p794 = por %p792, %p793
      %p795 = scmp.ne.s32.totalorder %s783, %s784
      %p796 = scmp.eq.s32.totalorder %s87, 1
      %p797 = por %p795, %p796
      %p799 = scmp.ne.s32.totalorder %s784, %s798
      %p800 = scmp.eq.s32.totalorder %s87, 0
      %p801 = por %p799, %p800
      %s802 = ssub.s32 %s81, %s88
      %p803 = scmp.eq.s32.totalorder %s802, 0
      %s805 = sadd.s32 %s804, 1
      %s806 = scalar_select %p803, %s804, %s805
      %p809 = pneg %p803
      %p810 = scmp.eq.s32.totalorder %s81, 1
      %p811 = por %p809, %p810
      %p812 = scmp.ne.s32.totalorder %s804, %s807
      %p813 = scmp.eq.s32.totalorder %s81, 0
      %p814 = por %p812, %p813
      %p815 = scmp.ne.s32.totalorder %s804, %s807
      %p816 = scmp.eq.s32.totalorder %s86, 1
      %p817 = por %p815, %p816
      %p818 = scmp.ne.s32.totalorder %s807, %s808
      %p819 = scmp.eq.s32.totalorder %s86, 0
      %p820 = por %p818, %p819
      %p821 = scmp.ne.s32.totalorder %s807, %s808
      %p822 = scmp.eq.s32.totalorder %s87, 1
      %p823 = por %p821, %p822
      %p825 = scmp.ne.s32.totalorder %s808, %s824
      %p826 = scmp.eq.s32.totalorder %s87, 0
      %p827 = por %p825, %p826
      %s828 = ssub.s32 %s81, %s88
      %p829 = scmp.eq.s32.totalorder %s828, 0
      %s831 = sadd.s32 %s830, 1
      %s832 = scalar_select %p829, %s830, %s831
      %p835 = pneg %p829
      %p836 = scmp.eq.s32.totalorder %s81, 1
      %p837 = por %p835, %p836
      %p838 = scmp.ne.s32.totalorder %s830, %s833
      %p839 = scmp.eq.s32.totalorder %s81, 0
      %p840 = por %p838, %p839
      %p841 = scmp.ne.s32.totalorder %s830, %s833
      %p842 = scmp.eq.s32.totalorder %s86, 1
      %p843 = por %p841, %p842
      %p844 = scmp.ne.s32.totalorder %s833, %s834
      %p845 = scmp.eq.s32.totalorder %s86, 0
      %p846 = por %p844, %p845
      %p847 = scmp.ne.s32.totalorder %s833, %s834
      %p848 = scmp.eq.s32.totalorder %s87, 1
      %p849 = por %p847, %p848
      %p851 = scmp.ne.s32.totalorder %s834, %s850
      %p852 = scmp.eq.s32.totalorder %s87, 0
      %p853 = por %p851, %p852
      %s854 = ssub.s32 %s81, %s88
      %p855 = scmp.eq.s32.totalorder %s854, 0
      %s857 = sadd.s32 %s856, 1
      %s858 = scalar_select %p855, %s856, %s857
      %p861 = pneg %p855
      %p862 = scmp.eq.s32.totalorder %s81, 1
      %p863 = por %p861, %p862
      %p864 = scmp.ne.s32.totalorder %s856, %s859
      %p865 = scmp.eq.s32.totalorder %s81, 0
      %p866 = por %p864, %p865
      %p867 = scmp.ne.s32.totalorder %s856, %s859
      %p868 = scmp.eq.s32.totalorder %s86, 1
      %p869 = por %p867, %p868
      %p870 = scmp.ne.s32.totalorder %s859, %s860
      %p871 = scmp.eq.s32.totalorder %s86, 0
      %p872 = por %p870, %p871
      %p873 = scmp.ne.s32.totalorder %s859, %s860
      %p874 = scmp.eq.s32.totalorder %s87, 1
      %p875 = por %p873, %p874
      %p877 = scmp.ne.s32.totalorder %s860, %s876
      %p878 = scmp.eq.s32.totalorder %s87, 0
      %p879 = por %p877, %p878
      %p880 = scmp.le.s32.totalorder 1, %s81
      %p881 = scmp.lt.s32.totalorder %s81, 3
      %p882 = pnand %p880, %p881
      %p883 = pneg %p882
      // Predicated region
      $region9: #{run.1} parent=5 // pred_check
        _
      $region10: #{run.1} parent=5 // pred_check_branch
        %885 = sbr.rel (%p882) target = $region12
      $region11: #{run.1} parent=5 // pred_region
        %s886 = ssub.s32 %s81, 1
        // Predicated region
        $region13: #{run.1} parent=11 // pred_check
          %p887 = pneg %p206
        $region14: #{run.1} parent=11 // pred_check_branch
          %889 = sbr.rel (%p887) target = $region16
        $region15: #{run.1} parent=11 // pred_region
          _
        $region16: #{run.1} parent=11 // pred_fallthru
          _
        // Predicated region
        $region17: #{run.1} parent=11 // pred_check
          %p890 = pneg %p227
        $region18: #{run.1} parent=11 // pred_check_branch
          %892 = sbr.rel (%p890) target = $region20
        $region19: #{run.1} parent=11 // pred_region
          _
        $region20: #{run.1} parent=11 // pred_fallthru
          _
        // Predicated region
        $region21: #{run.1} parent=11 // pred_check
          %p893 = pneg %p248
        $region22: #{run.1} parent=11 // pred_check_branch
          %895 = sbr.rel (%p893) target = $region24
        $region23: #{run.1} parent=11 // pred_region
          _
        $region24: #{run.1} parent=11 // pred_fallthru
          _
        // Predicated region
        $region25: #{run.1} parent=11 // pred_check
          %p896 = pneg %p269
        $region26: #{run.1} parent=11 // pred_check_branch
          %898 = sbr.rel (%p896) target = $region28
        $region27: #{run.1} parent=11 // pred_region
          _
        $region28: #{run.1} parent=11 // pred_fallthru
          _
        // Predicated region
        $region29: #{run.1} parent=11 // pred_check
          %p899 = pneg %p290
        $region30: #{run.1} parent=11 // pred_check_branch
          %901 = sbr.rel (%p899) target = $region32
        $region31: #{run.1} parent=11 // pred_region
          _
        $region32: #{run.1} parent=11 // pred_fallthru
          _
        // Predicated region
        $region33: #{run.1} parent=11 // pred_check
          %p902 = pneg %p311
        $region34: #{run.1} parent=11 // pred_check_branch
          %904 = sbr.rel (%p902) target = $region36
        $region35: #{run.1} parent=11 // pred_region
          _
        $region36: #{run.1} parent=11 // pred_fallthru
          _
        // Predicated region
        $region37: #{run.1} parent=11 // pred_check
          %p905 = pneg %p332
        $region38: #{run.1} parent=11 // pred_check_branch
          %907 = sbr.rel (%p905) target = $region40
        $region39: #{run.1} parent=11 // pred_region
          _
        $region40: #{run.1} parent=11 // pred_fallthru
          _
        // Predicated region
        $region41: #{run.1} parent=11 // pred_check
          %p908 = pneg %p353
        $region42: #{run.1} parent=11 // pred_check_branch
          %910 = sbr.rel (%p908) target = $region44
        $region43: #{run.1} parent=11 // pred_region
          _
        $region44: #{run.1} parent=11 // pred_fallthru
          _
        // Predicated region
        $region45: #{run.1} parent=11 // pred_check
          %p911 = pneg %p374
        $region46: #{run.1} parent=11 // pred_check_branch
          %913 = sbr.rel (%p911) target = $region48
        $region47: #{run.1} parent=11 // pred_region
          _
        $region48: #{run.1} parent=11 // pred_fallthru
          _
        // Predicated region
        $region49: #{run.1} parent=11 // pred_check
          %p914 = pneg %p395
        $region50: #{run.1} parent=11 // pred_check_branch
          %916 = sbr.rel (%p914) target = $region52
        $region51: #{run.1} parent=11 // pred_region
          _
        $region52: #{run.1} parent=11 // pred_fallthru
          _
        // Predicated region
        $region53: #{run.1} parent=11 // pred_check
          %p917 = pneg %p416
        $region54: #{run.1} parent=11 // pred_check_branch
          %919 = sbr.rel (%p917) target = $region56
        $region55: #{run.1} parent=11 // pred_region
          _
        $region56: #{run.1} parent=11 // pred_fallthru
          _
        // Predicated region
        $region57: #{run.1} parent=11 // pred_check
          %p920 = pneg %p437
        $region58: #{run.1} parent=11 // pred_check_branch
          %922 = sbr.rel (%p920) target = $region60
        $region59: #{run.1} parent=11 // pred_region
          _
        $region60: #{run.1} parent=11 // pred_fallthru
          _
        // Predicated region
        $region61: #{run.1} parent=11 // pred_check
          %p923 = pneg %p458
        $region62: #{run.1} parent=11 // pred_check_branch
          %925 = sbr.rel (%p923) target = $region64
        $region63: #{run.1} parent=11 // pred_region
          _
        $region64: #{run.1} parent=11 // pred_fallthru
          _
        // Predicated region
        $region65: #{run.1} parent=11 // pred_check
          %p926 = pneg %p479
        $region66: #{run.1} parent=11 // pred_check_branch
          %928 = sbr.rel (%p926) target = $region68
        $region67: #{run.1} parent=11 // pred_region
          _
        $region68: #{run.1} parent=11 // pred_fallthru
          _
        // Predicated region
        $region69: #{run.1} parent=11 // pred_check
          %p929 = pneg %p500
        $region70: #{run.1} parent=11 // pred_check_branch
          %931 = sbr.rel (%p929) target = $region72
        $region71: #{run.1} parent=11 // pred_region
          _
        $region72: #{run.1} parent=11 // pred_fallthru
          _
        // Predicated region
        $region73: #{run.1} parent=11 // pred_check
          %p932 = pneg %p521
        $region74: #{run.1} parent=11 // pred_check_branch
          %934 = sbr.rel (%p932) target = $region76
        $region75: #{run.1} parent=11 // pred_region
          _
        $region76: #{run.1} parent=11 // pred_fallthru
          _
        // Predicated region
        $region77: #{run.1} parent=11 // pred_check
          %p935 = pneg %p542
        $region78: #{run.1} parent=11 // pred_check_branch
          %937 = sbr.rel (%p935) target = $region80
        $region79: #{run.1} parent=11 // pred_region
          _
        $region80: #{run.1} parent=11 // pred_fallthru
          _
        // Predicated region
        $region81: #{run.1} parent=11 // pred_check
          %p938 = pneg %p563
        $region82: #{run.1} parent=11 // pred_check_branch
          %940 = sbr.rel (%p938) target = $region84
        $region83: #{run.1} parent=11 // pred_region
          _
        $region84: #{run.1} parent=11 // pred_fallthru
          _
        // Predicated region
        $region85: #{run.1} parent=11 // pred_check
          %p941 = pneg %p584
        $region86: #{run.1} parent=11 // pred_check_branch
          %943 = sbr.rel (%p941) target = $region88
        $region87: #{run.1} parent=11 // pred_region
          _
        $region88: #{run.1} parent=11 // pred_fallthru
          _
        // Predicated region
        $region89: #{run.1} parent=11 // pred_check
          %p944 = pneg %p605
        $region90: #{run.1} parent=11 // pred_check_branch
          %946 = sbr.rel (%p944) target = $region92
        $region91: #{run.1} parent=11 // pred_region
          _
        $region92: #{run.1} parent=11 // pred_fallthru
          _
        // Predicated region
        $region93: #{run.1} parent=11 // pred_check
          %p947 = pneg %p626
        $region94: #{run.1} parent=11 // pred_check_branch
          %949 = sbr.rel (%p947) target = $region96
        $region95: #{run.1} parent=11 // pred_region
          _
        $region96: #{run.1} parent=11 // pred_fallthru
          _
        // Predicated region
        $region97: #{run.1} parent=11 // pred_check
          %p950 = pneg %p647
        $region98: #{run.1} parent=11 // pred_check_branch
          %952 = sbr.rel (%p950) target = $region100
        $region99: #{run.1} parent=11 // pred_region
          _
        $region100: #{run.1} parent=11 // pred_fallthru
          _
        // Predicated region
        $region101: #{run.1} parent=11 // pred_check
          %p953 = pneg %p668
        $region102: #{run.1} parent=11 // pred_check_branch
          %955 = sbr.rel (%p953) target = $region104
        $region103: #{run.1} parent=11 // pred_region
          _
        $region104: #{run.1} parent=11 // pred_fallthru
          _
        // Predicated region
        $region105: #{run.1} parent=11 // pred_check
          %p956 = pneg %p689
        $region106: #{run.1} parent=11 // pred_check_branch
          %958 = sbr.rel (%p956) target = $region108
        $region107: #{run.1} parent=11 // pred_region
          _
        $region108: #{run.1} parent=11 // pred_fallthru
          _
        // Predicated region
        $region109: #{run.1} parent=11 // pred_check
          %p959 = pneg %p710
        $region110: #{run.1} parent=11 // pred_check_branch
          %961 = sbr.rel (%p959) target = $region112
        $region111: #{run.1} parent=11 // pred_region
          _
        $region112: #{run.1} parent=11 // pred_fallthru
          _
        // Predicated region
        $region113: #{run.1} parent=11 // pred_check
          %p962 = pneg %p731
        $region114: #{run.1} parent=11 // pred_check_branch
          %964 = sbr.rel (%p962) target = $region116
        $region115: #{run.1} parent=11 // pred_region
          _
        $region116: #{run.1} parent=11 // pred_fallthru
          _
        // Predicated region
        $region117: #{run.1} parent=11 // pred_check
          %p965 = pneg %p752
        $region118: #{run.1} parent=11 // pred_check_branch
          %967 = sbr.rel (%p965) target = $region120
        $region119: #{run.1} parent=11 // pred_region
          _
        $region120: #{run.1} parent=11 // pred_fallthru
          _
        // Predicated region
        $region121: #{run.1} parent=11 // pred_check
          %p968 = pneg %p773
        $region122: #{run.1} parent=11 // pred_check_branch
          %970 = sbr.rel (%p968) target = $region124
        $region123: #{run.1} parent=11 // pred_region
          _
        $region124: #{run.1} parent=11 // pred_fallthru
          _
        // Predicated region
        $region125: #{run.1} parent=11 // pred_check
          %p971 = pneg %p794
        $region126: #{run.1} parent=11 // pred_check_branch
          %973 = sbr.rel (%p971) target = $region128
        $region127: #{run.1} parent=11 // pred_region
          _
        $region128: #{run.1} parent=11 // pred_fallthru
          _
      $region12: #{run.1} parent=5 // pred_fallthru
        _
      %p974 = scmp.lt.s32.totalorder %s81, 2
      // Predicated region
      $region129: #{run.1} parent=5 // pred_check
        %p975 = pneg %p974
      $region130: #{run.1} parent=5 // pred_check_branch
        %977 = sbr.rel (%p975) target = $region132
      $region131: #{run.1} parent=5 // pred_region
        // Predicated region
        $region133: #{run.1} parent=131 // pred_check
          %p978 = pneg %p101
        $region134: #{run.1} parent=131 // pred_check_branch
          %980 = sbr.rel (%p978) target = $region136
        $region135: #{run.1} parent=131 // pred_region
          %p981 = scmp.lt.s32.totalorder %s81, 1
          %s982 = scalar_select %p981, %s81, 1
          %s983 = smul.addr %s982, 2
          %s984 = smul.addr %s983, 8
          %s985 = scalar_lea.vmem %s1, %s984
        $region136: #{run.1} parent=131 // pred_fallthru
          _
        // Predicated region
        $region137: #{run.1} parent=131 // pred_check
          %p986 = pneg %p127
        $region138: #{run.1} parent=131 // pred_check_branch
          %988 = sbr.rel (%p986) target = $region140
        $region139: #{run.1} parent=131 // pred_region
          %p989 = scmp.lt.s32.totalorder %s81, 1
          %s990 = scalar_select %p989, %s81, 1
          %s991 = smul.addr %s990, 2
          %s992 = smul.addr %s991, 8
          %s993 = scalar_lea.vmem %s3, %s992
        $region140: #{run.1} parent=131 // pred_fallthru
          _
        // Predicated region
        $region141: #{run.1} parent=131 // pred_check
          %p994 = pneg %p153
        $region142: #{run.1} parent=131 // pred_check_branch
          %996 = sbr.rel (%p994) target = $region144
        $region143: #{run.1} parent=131 // pred_region
          %p997 = scmp.lt.s32.totalorder %s81, 1
          %s998 = scalar_select %p997, %s81, 1
          %s999 = smul.addr %s998, 2
          %s1000 = smul.addr %s999, 8
          %s1001 = scalar_lea.vmem %s5, %s1000
        $region144: #{run.1} parent=131 // pred_fallthru
          _
        // Predicated region
        $region145: #{run.1} parent=131 // pred_check
          %p1002 = pneg %p179
        $region146: #{run.1} parent=131 // pred_check_branch
          %1004 = sbr.rel (%p1002) target = $region148
        $region147: #{run.1} parent=131 // pred_region
          %p1005 = scmp.lt.s32.totalorder %s81, 1
          %s1006 = scalar_select %p1005, %s81, 1
          %s1007 = scalar_lea.vmem %s7, %s1006
        $region148: #{run.1} parent=131 // pred_fallthru
          _
      $region132: #{run.1} parent=5 // pred_fallthru
        _
      %p1008 = scmp.le.s32.totalorder 1, %s81
      %p1009 = scmp.lt.s32.totalorder %s81, 3
      %p1010 = pnand %p1008, %p1009
      %p1011 = pneg %p1010
      // Predicated region
      $region149: #{run.1} parent=5 // pred_check
        _
      $region150: #{run.1} parent=5 // pred_check_branch
        %1013 = sbr.rel (%p1010) target = $region152
      $region151: #{run.1} parent=5 // pred_region
        %s1014 = ssub.s32 %s81, 1
        %p1015 = scmp.lt.s32.totalorder %s86, 1
        %s1016 = scalar_select %p1015, %s86, 1
        %s1017 = smul.addr %s1016, 2
        %s1018 = smul.addr %s1017, 8
        %s1019 = scalar_lea.vmem %s1, %s1018
        %p1020 = pneg %p107
        %p1021 = pneg %p104
        %p1022 = scmp.lt.s32.totalorder %s86, 1
        %s1023 = scalar_select %p1022, %s86, 1
        %s1024 = smul.addr %s1023, 2
        %s1025 = smul.addr %s1024, 8
        %s1026 = scalar_lea.vmem %s3, %s1025
        %p1027 = pneg %p133
        %p1028 = pneg %p130
        %p1029 = scmp.lt.s32.totalorder %s86, 1
        %s1030 = scalar_select %p1029, %s86, 1
        %s1031 = smul.addr %s1030, 2
        %s1032 = smul.addr %s1031, 8
        %s1033 = scalar_lea.vmem %s5, %s1032
        %p1034 = pneg %p159
        %p1035 = pneg %p156
        %p1036 = scmp.lt.s32.totalorder %s86, 1
        %s1037 = scalar_select %p1036, %s86, 1
        %s1038 = scalar_lea.vmem %s7, %s1037
        %p1039 = pneg %p185
        %p1040 = pneg %p182
        %p1041 = pneg %p206
        %p1042 = pneg %p203
        %p1043 = pneg %p227
        %p1044 = pneg %p224
        %p1045 = pneg %p248
        %p1046 = pneg %p245
        %p1047 = pneg %p269
        %p1048 = pneg %p266
        %p1049 = pneg %p290
        %p1050 = pneg %p287
        %p1051 = pneg %p311
        %p1052 = pneg %p308
        %p1053 = pneg %p332
        %p1054 = pneg %p329
        %p1055 = pneg %p353
        %p1056 = pneg %p350
        %p1057 = pneg %p374
        %p1058 = pneg %p371
        %p1059 = pneg %p395
        %p1060 = pneg %p392
        %p1061 = pneg %p416
        %p1062 = pneg %p413
        %p1063 = pneg %p437
        %p1064 = pneg %p434
        %p1065 = pneg %p458
        %p1066 = pneg %p455
        %p1067 = pneg %p479
        %p1068 = pneg %p476
        %p1069 = pneg %p500
        %p1070 = pneg %p497
        %p1071 = pneg %p521
        %p1072 = pneg %p518
        %p1073 = pneg %p542
        %p1074 = pneg %p539
        %p1075 = pneg %p563
        %p1076 = pneg %p560
        %p1077 = pneg %p584
        %p1078 = pneg %p581
        %p1079 = pneg %p605
        %p1080 = pneg %p602
        %p1081 = pneg %p626
        %p1082 = pneg %p623
        %p1083 = pneg %p647
        %p1084 = pneg %p644
        %p1085 = pneg %p668
        %p1086 = pneg %p665
        %p1087 = pneg %p689
        %p1088 = pneg %p686
        %p1089 = pneg %p710
        %p1090 = pneg %p707
        %p1091 = pneg %p731
        %p1092 = pneg %p728
        %p1093 = pneg %p752
        %p1094 = pneg %p749
        %p1095 = pneg %p773
        %p1096 = pneg %p770
        %p1097 = pneg %p794
        %p1098 = pneg %p791
        %p1099 = pneg %p820
        %p1100 = pneg %p817
        %p1101 = scmp.lt.s32.totalorder %s86, 1
        %s1102 = scalar_select %p1101, %s86, 1
        %s1103 = smul.addr %s1102, 2
        %s1104 = smul.addr %s1103, 8
        %s1105 = scalar_lea.vmem %s67, %s1104
        %p1106 = pneg %p846
        %p1107 = pneg %p843
        %s1108 = sand.u32 %s833, 1
        %s1109 = scalar_lea.sflag [#allocation3], %s1108
        %s1110 = sand.u32 %s833, 1
        %s1111 = scalar_lea.vmem [#allocation2], %s1110
        %p1112 = pneg %p872
        %p1113 = pneg %p869
        %p1114 = scmp.lt.s32.totalorder %s86, 1
        %s1115 = scalar_select %p1114, %s86, 1
        %s1116 = smul.addr %s1115, 4
        %s1117 = scalar_lea.vmem %s71, %s1116
        %p1118 = scmp.lt.s32.totalorder %s86, 1
        %s1119 = scalar_select %p1118, %s86, 1
        %s1120 = smul.addr %s1119, 2
        %s1121 = smul.addr %s1120, 8
        %s1122 = scalar_lea.vmem %s1, %s1121
        %p1123 = scmp.lt.s32.totalorder %s86, 1
        %s1124 = scalar_select %p1123, %s86, 1
        %s1125 = smul.addr %s1124, 2
        %s1126 = smul.addr %s1125, 8
        %s1127 = scalar_lea.vmem %s3, %s1126
        %p1128 = scmp.lt.s32.totalorder %s86, 1
        %s1129 = scalar_select %p1128, %s86, 1
        %s1130 = smul.addr %s1129, 2
        %s1131 = smul.addr %s1130, 8
        %s1132 = scalar_lea.vmem %s5, %s1131
        %p1133 = scmp.lt.s32.totalorder %s86, 1
        %s1134 = scalar_select %p1133, %s86, 1
        %s1135 = scalar_lea.vmem %s7, %s1134
        %p1136 = scmp.lt.s32.totalorder %s86, 1
        %s1137 = scalar_select %p1136, %s86, 1
        %s1138 = smul.addr %s1137, 2
        %s1139 = smul.addr %s1138, 8
        %s1140 = scalar_lea.vmem %s67, %s1139
        %p1141 = scmp.lt.s32.totalorder %s86, 1
        %s1142 = scalar_select %p1141, %s86, 1
        %s1143 = smul.addr %s1142, 4
        %s1144 = scalar_lea.vmem %s71, %s1143
        %v1145 = vld [vmem:[%s1122] sm:$0xff]
        %v1146 = vld [vmem:[%s1122 + $0x8] sm:$0xff]
        %v1147 = vld [vmem:[%s9] sm:$0xff]
        %v1148 = vld [vmem:[%s9 + $0x8] sm:$0xf]
        %v1149 = vld [vmem:[%s11] sm:$0x1]
        %v1151 = vlaneseq
        %v1152 = vshrl.u32 %v1151, 7
        %v1153 = vsub.s32 0, %v1152
        %v1154 = vrot.slane %v1149, %v1153
        %vm1156 = vcmask 97280
        %v1158 = vsel %vm1156, %v1145, 0
        %v1161 = vsel %vm1156, %v1146, 0
        %vm1163 = vcmask 1043456
        %v1165 = vsel %vm1163, %v1148, 0
        %1167 = vmatprep.subr.mxu0 0.0
        %1168 = vmatpush1.msra.mxu0 %v1147
        %1169 = vmatprep.subr.mxu0 0.0
        %1170 = vmatpush1.msra.mxu0 %v1165
        %1171 = vmatprep.subr.mxu0 0.0
        %1172 = vmatpush1.msra.mxu0 0.0
        %1173 = vmatprep.subr.mxu0 0.0
        %1174 = vmatpush1.msra.mxu0 0.0
        %1175 = vmatprep.subr.mxu0 0.0
        %1176 = vmatpush1.msra.mxu0 0.0
        %1177 = vmatprep.subr.mxu0 0.0
        %1178 = vmatpush1.msra.mxu0 0.0
        %1179 = vmatprep.subr.mxu0 0.0
        %1180 = vmatpush1.msra.mxu0 0.0
        %1181 = vmatprep.subr.mxu0 0.0
        %1182 = vmatpush1.msra.mxu0 0.0
        %1183 = vmatprep.subr.mxu0 0.0
        %1184 = vmatpush1.msra.mxu0 0.0
        %1185 = vmatprep.subr.mxu0 0.0
        %1186 = vmatpush1.msra.mxu0 0.0
        %1187 = vmatprep.subr.mxu0 0.0
        %1188 = vmatpush1.msra.mxu0 0.0
        %1189 = vmatprep.subr.mxu0 0.0
        %1190 = vmatpush1.msra.mxu0 0.0
        %1191 = vmatprep.subr.mxu0 0.0
        %1192 = vmatpush1.msra.mxu0 0.0
        %1193 = vmatprep.subr.mxu0 0.0
        %1194 = vmatpush1.msra.mxu0 0.0
        %1195 = vmatprep.subr.mxu0 0.0
        %1196 = vmatpush1.msra.mxu0 0.0
        %1197 = vmatprep.subr.mxu0 0.0
        %1198 = vmatpush1.msra.mxu0 0.0
        %1199 = vmatprep.subr.mxu0 0.0
        %1200 = vmatpush1.msra.mxu0 0.0
        %1201 = vmatprep.subr.mxu0 0.0
        %1202 = vmatpush1.msra.mxu0 0.0
        %1203 = vmatprep.subr.mxu0 0.0
        %1204 = vmatpush1.msra.mxu0 0.0
        %1205 = vmatprep.subr.mxu0 0.0
        %1206 = vmatpush1.msra.mxu0 0.0
        %1207 = vmatprep.subr.mxu0 0.0
        %1208 = vmatpush1.msra.mxu0 0.0
        %1209 = vmatprep.subr.mxu0 0.0
        %1210 = vmatpush1.msra.mxu0 0.0
        %1211 = vmatprep.subr.mxu0 0.0
        %1212 = vmatpush1.msra.mxu0 0.0
        %1213 = vmatprep.subr.mxu0 0.0
        %1214 = vmatpush1.msra.mxu0 0.0
        %1215 = vmatprep.subr.mxu0 0.0
        %1216 = vmatpush1.msra.mxu0 0.0
        %1217 = vmatprep.subr.mxu0 0.0
        %1218 = vmatpush1.msra.mxu0 0.0
        %1219 = vmatprep.subr.mxu0 0.0
        %1220 = vmatpush1.msra.mxu0 0.0
        %1221 = vmatprep.subr.mxu0 0.0
        %1222 = vmatpush1.msra.mxu0 0.0
        %1223 = vmatprep.subr.mxu0 0.0
        %1224 = vmatpush1.msra.mxu0 0.0
        %1225 = vmatprep.subr.mxu0 0.0
        %1226 = vmatpush1.msra.mxu0 0.0
        %1227 = vmatprep.subr.mxu0 0.0
        %1228 = vmatpush1.msra.mxu0 0.0
        %1229 = vmatprep.subr.mxu0 0.0
        %1230 = vmatpush1.msra.mxu0 0.0
        %1231 = vmatprep.mubr.f32.mxu0 0.0
        %1232 = vmatmul.mubr.f32.gmra.mrb[0].mxu0 %v1158
        %v1233 = vpop.f32.mrb[0].mxu0
        %v1234 = vadd.f32 %v1154, %v1233
        %v1235 = vpop.f32.mrb[0].mxu0
        %1236 = vmatprep.mubr.f32.mxu0 0.0
        %1237 = vmatmul.mubr.f32.gmra.mrb[0].mxu0 %v1161
        %v1238 = vpop.f32.mrb[0].mxu0
        %v1239 = vadd.f32 %v1154, %v1238
        %v1240 = vpop.f32.mrb[0].mxu0
        %1241 = vdwg.mxu0
        %v1242 = vlaneseq
        %v1243 = vshrl.u32 %v1242, 7
        %v1244 = vadd.s32 %v1243, 8
        %vm1245 = vcmp.eq.s32.totalorder %v1243, 0
        %vm1246 = vcmp.eq.s32.totalorder %v1244, 0
        %v1247 = vld [vmem:[%s13] sm:$0x1]
        %v1248 = vsel %vm1245, 1, 0
        %v1249 = vsel %vm1246, 1, 0
        %vm1250 = vcmp.eq.s32.totalorder %v1248, 1
        %vm1251 = vcmp.eq.s32.totalorder %v1249, 1
        %v1253 = vlaneseq
        %v1254 = vshrl.u32 %v1253, 7
        %v1255 = vsub.s32 0, %v1254
        %v1256 = vrot.slane %v1247, %v1255
        %v1258 = vsel %vm1250, %v1256, %v1234
        %v1259 = vsel %vm1251, %v1256, %v1239
        %vm1260 = vcmp.gt.s32.totalorder %v1243, 0
        %vm1261 = vcmp.gt.s32.totalorder %v1244, 0
        %vm1262 = vcmp.lt.s32.totalorder %v1243, 0
        %v1263 = vsub.s32 0, %v1243
        %v1264 = vsel %vm1262, %v1263, %v1243
        %v1265 = vmul.u32.u64.compose %v1264, 3435973837
        %v1266 = vextract.low.u32 %v1265
        %v1267 = vextract.high.u32 %v1265
        %v1268 = vshrl.u32 %v1267, 2
        %v1269 = vmul.u32 %v1268, 5
        %v1270 = vsub.s32 %v1264, %v1269
        %v1271 = vsub.s32 0, %v1270
        %v1272 = vsel %vm1262, %v1271, %v1270
        %vm1273 = vcmp.lt.s32.totalorder %v1244, 0
        %v1274 = vsub.s32 0, %v1244
        %v1275 = vsel %vm1273, %v1274, %v1244
        %v1276 = vmul.u32.u64.compose %v1275, 3435973837
        %v1277 = vextract.low.u32 %v1276
        %v1278 = vextract.high.u32 %v1276
        %v1279 = vshrl.u32 %v1278, 2
        %v1280 = vmul.u32 %v1279, 5
        %v1281 = vsub.s32 %v1275, %v1280
        %v1282 = vsub.s32 0, %v1281
        %v1283 = vsel %vm1273, %v1282, %v1281
        %vm1284 = vcmp.ne.s32.totalorder %v1272, 0
        %vm1285 = vcmp.ne.s32.totalorder %v1283, 0
        %vm1286 = vcmp.lt.s32.totalorder %v1272, 0
        %vm1287 = vcmp.lt.s32.totalorder %v1283, 0
        %vm1288 = vmand %vm1286, %vm1284
        %vm1289 = vmand %vm1287, %vm1285
        %v1290 = vadd.s32 %v1272, 5
        %v1291 = vadd.s32 %v1283, 5
        %v1292 = vsel %vm1288, %v1290, %v1272
        %v1293 = vsel %vm1289, %v1291, %v1283
        %vm1294 = vcmp.eq.s32.totalorder %v1292, 0
        %vm1295 = vcmp.eq.s32.totalorder %v1293, 0
        %vm1296 = vmand %vm1260, %vm1294
        %vm1297 = vmand %vm1261, %vm1295
        %v1298 = vld [vmem:[%s15] sm:$0x1]
        %v1299 = vsel %vm1296, 1, 0
        %v1300 = vsel %vm1297, 1, 0
        %vm1301 = vcmp.eq.s32.totalorder %v1299, 1
        %vm1302 = vcmp.eq.s32.totalorder %v1300, 1
        %v1304 = vlaneseq
        %v1305 = vshrl.u32 %v1304, 7
        %v1306 = vsub.s32 0, %v1305
        %v1307 = vrot.slane %v1298, %v1306
        %v1309 = vsel %vm1301, %v1307, %v1258
        %v1310 = vsel %vm1302, %v1307, %v1259
        %v1311 = vld [vmem:[%s1127] sm:$0xff]
        %v1312 = vld [vmem:[%s1127 + $0x8] sm:$0xff]
        %v1313 = vld [vmem:[%s17] sm:$0x1]
        %1315 = vset.pattern.permute.xlu0 0
        %1316 = vperm.xlu0 %1315, %v1311
        %v1317 = vpop.permute.xlu0 %1316
        %1320 = vset.pattern.permute.xlu0 0
        %1321 = vperm.xlu0 %1320, %v1312
        %v1322 = vpop.permute.xlu0 %1321
        %v1325 = vlaneseq
        %v1326 = vshrl.u32 %v1325, 7
        %v1327 = vsub.s32 0, %v1326
        %v1328 = vrot.slane %v1313, %v1327
        %v1330 = vmul.f32 %v1317, %v1328
        %v1331 = vmul.f32 %v1322, %v1328
        %v1332 = vsub.f32 1.0, %v1311
        %v1333 = vsub.f32 1.0, %v1312
        %1335 = vset.pattern.permute.xlu0 0
        %1336 = vperm.xlu0 %1335, %v1332
        %v1337 = vpop.permute.xlu0 %1336
        %1340 = vset.pattern.permute.xlu0 0
        %1341 = vperm.xlu0 %1340, %v1333
        %v1342 = vpop.permute.xlu0 %1341
        %v1344 = vmul.f32 %v1337, %v1309
        %v1345 = vmul.f32 %v1342, %v1310
        %v1346 = vadd.f32 %v1330, %v1344
        %v1347 = vadd.f32 %v1331, %v1345
        %v1348 = vld [vmem:[%s1132] sm:$0xff]
        %v1349 = vld [vmem:[%s1132 + $0x8] sm:$0xff]
        %v1350 = vlaneseq
        %v1351 = vand.u32 %v1350, 127
        %1352 = vset.pattern.permute.xlu0 0
        %1353 = vperm.xlu0 %1352, %v1348
        %v1354 = vpop.permute.xlu0 %1353
        %1355 = vset.pattern.permute.xlu0 0
        %1356 = vperm.xlu0 %1355, %v1349
        %v1357 = vpop.permute.xlu0 %1356
        %vm1358 = vcmp.eq.s32.totalorder %v1354, %v1351
        %vm1359 = vcmp.eq.s32.totalorder %v1357, %v1351
        %v1360 = vsel %vm1358, 1, 0
        %v1361 = vsel %vm1359, 1, 0
        %v1362 = vcvt.s32.f32 %v1360
        %v1363 = vcvt.s32.f32 %v1361
        %v1364 = vld [vmem:[%s21] sm:$0xf]
        %vm1365 = vcmask 31744
        %v1367 = vsel %vm1365, %v1362, 0
        %v1370 = vsel %vm1365, %v1363, 0
        %v1373 = vsel %vm1163, %v1364, 0
        %1375 = vmatprep.subr.mxu0 0.0
        %1376 = vmatpush1.msra.mxu0 %v1373
        %1377 = vmatprep.subr.mxu0 0.0
        %1378 = vmatpush1.msra.mxu0 0.0
        %1379 = vmatprep.subr.mxu0 0.0
        %1380 = vmatpush1.msra.mxu0 0.0
        %1381 = vmatprep.subr.mxu0 0.0
        %1382 = vmatpush1.msra.mxu0 0.0
        %1383 = vmatprep.subr.mxu0 0.0
        %1384 = vmatpush1.msra.mxu0 0.0
        %1385 = vmatprep.subr.mxu0 0.0
        %1386 = vmatpush1.msra.mxu0 0.0
        %1387 = vmatprep.subr.mxu0 0.0
        %1388 = vmatpush1.msra.mxu0 0.0
        %1389 = vmatprep.subr.mxu0 0.0
        %1390 = vmatpush1.msra.mxu0 0.0
        %1391 = vmatprep.subr.mxu0 0.0
        %1392 = vmatpush1.msra.mxu0 0.0
        %1393 = vmatprep.subr.mxu0 0.0
        %1394 = vmatpush1.msra.mxu0 0.0
        %1395 = vmatprep.subr.mxu0 0.0
        %1396 = vmatpush1.msra.mxu0 0.0
        %1397 = vmatprep.subr.mxu0 0.0
        %1398 = vmatpush1.msra.mxu0 0.0
        %1399 = vmatprep.subr.mxu0 0.0
        %1400 = vmatpush1.msra.mxu0 0.0
        %1401 = vmatprep.subr.mxu0 0.0
        %1402 = vmatpush1.msra.mxu0 0.0
        %1403 = vmatprep.subr.mxu0 0.0
        %1404 = vmatpush1.msra.mxu0 0.0
        %1405 = vmatprep.subr.mxu0 0.0
        %1406 = vmatpush1.msra.mxu0 0.0
        %1407 = vmatprep.subr.mxu0 0.0
        %1408 = vmatpush1.msra.mxu0 0.0
        %1409 = vmatprep.subr.mxu0 0.0
        %1410 = vmatpush1.msra.mxu0 0.0
        %1411 = vmatprep.subr.mxu0 0.0
        %1412 = vmatpush1.msra.mxu0 0.0
        %1413 = vmatprep.subr.mxu0 0.0
        %1414 = vmatpush1.msra.mxu0 0.0
        %1415 = vmatprep.subr.mxu0 0.0
        %1416 = vmatpush1.msra.mxu0 0.0
        %1417 = vmatprep.subr.mxu0 0.0
        %1418 = vmatpush1.msra.mxu0 0.0
        %1419 = vmatprep.subr.mxu0 0.0
        %1420 = vmatpush1.msra.mxu0 0.0
        %1421 = vmatprep.subr.mxu0 0.0
        %1422 = vmatpush1.msra.mxu0 0.0
        %1423 = vmatprep.subr.mxu0 0.0
        %1424 = vmatpush1.msra.mxu0 0.0
        %1425 = vmatprep.subr.mxu0 0.0
        %1426 = vmatpush1.msra.mxu0 0.0
        %1427 = vmatprep.subr.mxu0 0.0
        %1428 = vmatpush1.msra.mxu0 0.0
        %1429 = vmatprep.subr.mxu0 0.0
        %1430 = vmatpush1.msra.mxu0 0.0
        %1431 = vmatprep.subr.mxu0 0.0
        %1432 = vmatpush1.msra.mxu0 0.0
        %1433 = vmatprep.subr.mxu0 0.0
        %1434 = vmatpush1.msra.mxu0 0.0
        %1435 = vmatprep.subr.mxu0 0.0
        %1436 = vmatpush1.msra.mxu0 0.0
        %1437 = vmatprep.subr.mxu0 0.0
        %1438 = vmatpush1.msra.mxu0 0.0
        %1439 = vmatprep.mubr.f32.mxu0 0.0
        %1440 = vmatmul.mubr.f32.gmra.mrb[0].mxu0 %v1367
        %v1441 = vpop.f32.mrb[0].mxu0
        %v1442 = vadd.f32 0.0, %v1441
        %v1443 = vpop.f32.mrb[0].mxu0
        %1444 = vmatprep.mubr.f32.mxu0 0.0
        %1445 = vmatmul.mubr.f32.gmra.mrb[0].mxu0 %v1370
        %v1446 = vpop.f32.mrb[0].mxu0
        %v1447 = vadd.f32 0.0, %v1446
        %v1448 = vpop.f32.mrb[0].mxu0
        %1449 = vdwg.mxu0
        %v1450 = vld [vmem:[%s19] sm:$0xff]
        %v1451 = vld [vmem:[%s19 + $0x8] sm:$0xff]
        %v1452 = vadd.f32 %v1346, %v1450
        %v1453 = vadd.f32 %v1347, %v1451
        %v1454 = vadd.f32 %v1452, %v1442
        %v1455 = vadd.f32 %v1453, %v1447
        %v1456 = vld [vmem:[%s23] sm:$0x1]
        %v1457 = vld [vmem:[%s25] sm:$0x1]
        %vm1458 = vcmask 261120
        %v1459 = vsel %vm1458, %v1454, 0.0
        %1460 = vadd.xlane.f32.xlu0 %v1459
        %v1461 = vpop.xlane.xlu0 %1460
        %v1462 = vsel %vm1458, %v1455, 0.0
        %1463 = vadd.xlane.f32.xlu0 %v1462
        %v1464 = vpop.xlane.xlu0 %1463
        %v1465 = vrcp.pop 32.0
        %v1466 = vmul.f32 %v1461, %v1465
        %v1467 = vmul.f32 %v1464, %v1465
        %v1468 = vsub.f32 %v1454, %v1466
        %v1469 = vsub.f32 %v1455, %v1467
        %v1470 = vmul.f32 %v1468, %v1468
        %v1471 = vmul.f32 %v1469, %v1469
        %v1472 = vsel %vm1458, %v1470, 0.0
        %1473 = vadd.xlane.f32.xlu0 %v1472
        %v1474 = vpop.xlane.xlu0 %1473
        %v1475 = vsel %vm1458, %v1471, 0.0
        %1476 = vadd.xlane.f32.xlu0 %v1475
        %v1477 = vpop.xlane.xlu0 %1476
        %v1478 = vmul.f32 %v1474, %v1465
        %v1479 = vmul.f32 %v1477, %v1465
        %v1480 = vadd.f32 %v1478, 1e-12
        %v1481 = vadd.f32 %v1479, 1e-12
        %v1482 = vrsqrt.pop %v1480
        %v1483 = vrsqrt.pop %v1481
        %v1484 = vmul.f32 %v1468, %v1482
        %v1485 = vmul.f32 %v1469, %v1483
        %v1487 = vlaneseq
        %v1488 = vshrl.u32 %v1487, 7
        %v1489 = vsub.s32 0, %v1488
        %v1490 = vrot.slane %v1456, %v1489
        %v1492 = vmul.f32 %v1484, %v1490
        %v1493 = vmul.f32 %v1485, %v1490
        %v1495 = vlaneseq
        %v1496 = vshrl.u32 %v1495, 7
        %v1497 = vsub.s32 0, %v1496
        %v1498 = vrot.slane %v1457, %v1497
        %v1500 = vadd.f32 %v1492, %v1498
        %v1501 = vadd.f32 %v1493, %v1498
        %v1502 = vld [vmem:[%s1135] sm:$0x1]
        %v1503 = vsub.f32 1.0, %v1502
        %v1504 = vmul.f32 %v1503, -1e+09
        %v1505 = vld [vmem:[%s27] sm:$0xff]
        %v1506 = vld [vmem:[%s27 + $0x8] sm:$0xff]
        %v1507 = vld [vmem:[%s27 + $0x10] sm:$0xff]
        %v1508 = vld [vmem:[%s27 + $0x18] sm:$0xff]
        %v1509 = vld [vmem:[%s33] sm:$0x1]
        %v1511 = vlaneseq
        %v1512 = vshrl.u32 %v1511, 7
        %v1513 = vsub.s32 0, %v1512
        %v1514 = vrot.slane %v1509, %v1513
        %v1517 = vsel %vm1458, %v1500, 0
        %v1520 = vsel %vm1458, %v1501, 0
        %1522 = vmatprep.subr.mxu0 0.0
        %1523 = vmatpush1.msra.mxu0 %v1505
        %1524 = vmatprep.subr.mxu0 0.0
        %1525 = vmatpush1.msra.mxu0 %v1506
        %1526 = vmatprep.subr.mxu0 0.0
        %1527 = vmatpush1.msra.mxu0 %v1507
        %1528 = vmatprep.subr.mxu0 0.0
        %1529 = vmatpush1.msra.mxu0 %v1508
        %1530 = vmatprep.subr.mxu0 0.0
        %1531 = vmatpush1.msra.mxu0 0.0
        %1532 = vmatprep.subr.mxu0 0.0
        %1533 = vmatpush1.msra.mxu0 0.0
        %1534 = vmatprep.subr.mxu0 0.0
        %1535 = vmatpush1.msra.mxu0 0.0
        %1536 = vmatprep.subr.mxu0 0.0
        %1537 = vmatpush1.msra.mxu0 0.0
        %1538 = vmatprep.subr.mxu0 0.0
        %1539 = vmatpush1.msra.mxu0 0.0
        %1540 = vmatprep.subr.mxu0 0.0
        %1541 = vmatpush1.msra.mxu0 0.0
        %1542 = vmatprep.subr.mxu0 0.0
        %1543 = vmatpush1.msra.mxu0 0.0
        %1544 = vmatprep.subr.mxu0 0.0
        %1545 = vmatpush1.msra.mxu0 0.0
        %1546 = vmatprep.subr.mxu0 0.0
        %1547 = vmatpush1.msra.mxu0 0.0
        %1548 = vmatprep.subr.mxu0 0.0
        %1549 = vmatpush1.msra.mxu0 0.0
        %1550 = vmatprep.subr.mxu0 0.0
        %1551 = vmatpush1.msra.mxu0 0.0
        %1552 = vmatprep.subr.mxu0 0.0
        %1553 = vmatpush1.msra.mxu0 0.0
        %1554 = vmatprep.subr.mxu0 0.0
        %1555 = vmatpush1.msra.mxu0 0.0
        %1556 = vmatprep.subr.mxu0 0.0
        %1557 = vmatpush1.msra.mxu0 0.0
        %1558 = vmatprep.subr.mxu0 0.0
        %1559 = vmatpush1.msra.mxu0 0.0
        %1560 = vmatprep.subr.mxu0 0.0
        %1561 = vmatpush1.msra.mxu0 0.0
        %1562 = vmatprep.subr.mxu0 0.0
        %1563 = vmatpush1.msra.mxu0 0.0
        %1564 = vmatprep.subr.mxu0 0.0
        %1565 = vmatpush1.msra.mxu0 0.0
        %1566 = vmatprep.subr.mxu0 0.0
        %1567 = vmatpush1.msra.mxu0 0.0
        %1568 = vmatprep.subr.mxu0 0.0
        %1569 = vmatpush1.msra.mxu0 0.0
        %1570 = vmatprep.subr.mxu0 0.0
        %1571 = vmatpush1.msra.mxu0 0.0
        %1572 = vmatprep.subr.mxu0 0.0
        %1573 = vmatpush1.msra.mxu0 0.0
        %1574 = vmatprep.subr.mxu0 0.0
        %1575 = vmatpush1.msra.mxu0 0.0
        %1576 = vmatprep.subr.mxu0 0.0
        %1577 = vmatpush1.msra.mxu0 0.0
        %1578 = vmatprep.subr.mxu0 0.0
        %1579 = vmatpush1.msra.mxu0 0.0
        %1580 = vmatprep.subr.mxu0 0.0
        %1581 = vmatpush1.msra.mxu0 0.0
        %1582 = vmatprep.subr.mxu0 0.0
        %1583 = vmatpush1.msra.mxu0 0.0
        %1584 = vmatprep.subr.mxu0 0.0
        %1585 = vmatpush1.msra.mxu0 0.0
        %1586 = vmatprep.mubr.f32.mxu0 0.0
        %1587 = vmatmul.mubr.f32.gmra.mrb[0].mxu0 %v1517
        %v1588 = vpop.f32.mrb[0].mxu0
        %v1589 = vadd.f32 %v1514, %v1588
        %v1590 = vpop.f32.mrb[0].mxu0
        %1591 = vmatprep.mubr.f32.mxu0 0.0
        %1592 = vmatmul.mubr.f32.gmra.mrb[0].mxu0 %v1520
        %v1593 = vpop.f32.mrb[0].mxu0
        %v1594 = vadd.f32 %v1514, %v1593
        %v1595 = vpop.f32.mrb[0].mxu0
        %1596 = vdwg.mxu0
        %v1597 = vld [vmem:[%s29] sm:$0xff]
        %v1598 = vld [vmem:[%s29 + $0x8] sm:$0xff]
        %v1599 = vld [vmem:[%s29 + $0x10] sm:$0xff]
        %v1600 = vld [vmem:[%s29 + $0x18] sm:$0xff]
        %v1601 = vld [vmem:[%s35] sm:$0x1]
        %v1603 = vlaneseq
        %v1604 = vshrl.u32 %v1603, 7
        %v1605 = vsub.s32 0, %v1604
        %v1606 = vrot.slane %v1601, %v1605
        %1608 = vmatprep.subr.mxu0 0.0
        %1609 = vmatpush1.msra.mxu0 %v1597
        %1610 = vmatprep.subr.mxu0 0.0
        %1611 = vmatpush1.msra.mxu0 %v1598
        %1612 = vmatprep.subr.mxu0 0.0
        %1613 = vmatpush1.msra.mxu0 %v1599
        %1614 = vmatprep.subr.mxu0 0.0
        %1615 = vmatpush1.msra.mxu0 %v1600
        %1616 = vmatprep.subr.mxu0 0.0
        %1617 = vmatpush1.msra.mxu0 0.0
        %1618 = vmatprep.subr.mxu0 0.0
        %1619 = vmatpush1.msra.mxu0 0.0
        %1620 = vmatprep.subr.mxu0 0.0
        %1621 = vmatpush1.msra.mxu0 0.0
        %1622 = vmatprep.subr.mxu0 0.0
        %1623 = vmatpush1.msra.mxu0 0.0
        %1624 = vmatprep.subr.mxu0 0.0
        %1625 = vmatpush1.msra.mxu0 0.0
        %1626 = vmatprep.subr.mxu0 0.0
        %1627 = vmatpush1.msra.mxu0 0.0
        %1628 = vmatprep.subr.mxu0 0.0
        %1629 = vmatpush1.msra.mxu0 0.0
        %1630 = vmatprep.subr.mxu0 0.0
        %1631 = vmatpush1.msra.mxu0 0.0
        %1632 = vmatprep.subr.mxu0 0.0
        %1633 = vmatpush1.msra.mxu0 0.0
        %1634 = vmatprep.subr.mxu0 0.0
        %1635 = vmatpush1.msra.mxu0 0.0
        %1636 = vmatprep.subr.mxu0 0.0
        %1637 = vmatpush1.msra.mxu0 0.0
        %1638 = vmatprep.subr.mxu0 0.0
        %1639 = vmatpush1.msra.mxu0 0.0
        %1640 = vmatprep.subr.mxu0 0.0
        %1641 = vmatpush1.msra.mxu0 0.0
        %1642 = vmatprep.subr.mxu0 0.0
        %1643 = vmatpush1.msra.mxu0 0.0
        %1644 = vmatprep.subr.mxu0 0.0
        %1645 = vmatpush1.msra.mxu0 0.0
        %1646 = vmatprep.subr.mxu0 0.0
        %1647 = vmatpush1.msra.mxu0 0.0
        %1648 = vmatprep.subr.mxu0 0.0
        %1649 = vmatpush1.msra.mxu0 0.0
        %1650 = vmatprep.subr.mxu0 0.0
        %1651 = vmatpush1.msra.mxu0 0.0
        %1652 = vmatprep.subr.mxu0 0.0
        %1653 = vmatpush1.msra.mxu0 0.0
        %1654 = vmatprep.subr.mxu0 0.0
        %1655 = vmatpush1.msra.mxu0 0.0
        %1656 = vmatprep.subr.mxu0 0.0
        %1657 = vmatpush1.msra.mxu0 0.0
        %1658 = vmatprep.subr.mxu0 0.0
        %1659 = vmatpush1.msra.mxu0 0.0
        %1660 = vmatprep.subr.mxu0 0.0
        %1661 = vmatpush1.msra.mxu0 0.0
        %1662 = vmatprep.subr.mxu0 0.0
        %1663 = vmatpush1.msra.mxu0 0.0
        %1664 = vmatprep.subr.mxu0 0.0
        %1665 = vmatpush1.msra.mxu0 0.0
        %1666 = vmatprep.subr.mxu0 0.0
        %1667 = vmatpush1.msra.mxu0 0.0
        %1668 = vmatprep.subr.mxu0 0.0
        %1669 = vmatpush1.msra.mxu0 0.0
        %1670 = vmatprep.subr.mxu0 0.0
        %1671 = vmatpush1.msra.mxu0 0.0
        %1672 = vmatprep.mubr.f32.mxu0 0.0
        %1673 = vmatmul.mubr.f32.gmra.mrb[0].mxu0 %v1517
        %v1674 = vpop.f32.mrb[0].mxu0
        %v1675 = vadd.f32 %v1606, %v1674
        %v1676 = vpop.f32.mrb[0].mxu0
        %1677 = vmatprep.mubr.f32.mxu0 0.0
        %1678 = vmatmul.mubr.f32.gmra.mrb[0].mxu0 %v1520
        %v1679 = vpop.f32.mrb[0].mxu0
        %v1680 = vadd.f32 %v1606, %v1679
        %v1681 = vpop.f32.mrb[0].mxu0
        %1682 = vdwg.mxu0
        %v1683 = vld [vmem:[%s31] sm:$0xff]
        %v1684 = vld [vmem:[%s31 + $0x8] sm:$0xff]
        %v1685 = vld [vmem:[%s31 + $0x10] sm:$0xff]
        %v1686 = vld [vmem:[%s31 + $0x18] sm:$0xff]
        %v1687 = vld [vmem:[%s37] sm:$0x1]
        %v1689 = vlaneseq
        %v1690 = vshrl.u32 %v1689, 7
        %v1691 = vsub.s32 0, %v1690
        %v1692 = vrot.slane %v1687, %v1691
        %1694 = vmatprep.subr.mxu0 0.0
        %1695 = vmatpush1.msra.mxu0 %v1683
        %1696 = vmatprep.subr.mxu0 0.0
        %1697 = vmatpush1.msra.mxu0 %v1684
        %1698 = vmatprep.subr.mxu0 0.0
        %1699 = vmatpush1.msra.mxu0 %v1685
        %1700 = vmatprep.subr.mxu0 0.0
        %1701 = vmatpush1.msra.mxu0 %v1686
        %1702 = vmatprep.subr.mxu0 0.0
        %1703 = vmatpush1.msra.mxu0 0.0
        %1704 = vmatprep.subr.mxu0 0.0
        %1705 = vmatpush1.msra.mxu0 0.0
        %1706 = vmatprep.subr.mxu0 0.0
        %1707 = vmatpush1.msra.mxu0 0.0
        %1708 = vmatprep.subr.mxu0 0.0
        %1709 = vmatpush1.msra.mxu0 0.0
        %1710 = vmatprep.subr.mxu0 0.0
        %1711 = vmatpush1.msra.mxu0 0.0
        %1712 = vmatprep.subr.mxu0 0.0
        %1713 = vmatpush1.msra.mxu0 0.0
        %1714 = vmatprep.subr.mxu0 0.0
        %1715 = vmatpush1.msra.mxu0 0.0
        %1716 = vmatprep.subr.mxu0 0.0
        %1717 = vmatpush1.msra.mxu0 0.0
        %1718 = vmatprep.subr.mxu0 0.0
        %1719 = vmatpush1.msra.mxu0 0.0
        %1720 = vmatprep.subr.mxu0 0.0
        %1721 = vmatpush1.msra.mxu0 0.0
        %1722 = vmatprep.subr.mxu0 0.0
        %1723 = vmatpush1.msra.mxu0 0.0
        %1724 = vmatprep.subr.mxu0 0.0
        %1725 = vmatpush1.msra.mxu0 0.0
        %1726 = vmatprep.subr.mxu0 0.0
        %1727 = vmatpush1.msra.mxu0 0.0
        %1728 = vmatprep.subr.mxu0 0.0
        %1729 = vmatpush1.msra.mxu0 0.0
        %1730 = vmatprep.subr.mxu0 0.0
        %1731 = vmatpush1.msra.mxu0 0.0
        %1732 = vmatprep.subr.mxu0 0.0
        %1733 = vmatpush1.msra.mxu0 0.0
        %1734 = vmatprep.subr.mxu0 0.0
        %1735 = vmatpush1.msra.mxu0 0.0
        %1736 = vmatprep.subr.mxu0 0.0
        %1737 = vmatpush1.msra.mxu0 0.0
        %1738 = vmatprep.subr.mxu0 0.0
        %1739 = vmatpush1.msra.mxu0 0.0
        %1740 = vmatprep.subr.mxu0 0.0
        %1741 = vmatpush1.msra.mxu0 0.0
        %1742 = vmatprep.subr.mxu0 0.0
        %1743 = vmatpush1.msra.mxu0 0.0
        %1744 = vmatprep.subr.mxu0 0.0
        %1745 = vmatpush1.msra.mxu0 0.0
        %1746 = vmatprep.subr.mxu0 0.0
        %1747 = vmatpush1.msra.mxu0 0.0
        %1748 = vmatprep.subr.mxu0 0.0
        %1749 = vmatpush1.msra.mxu0 0.0
        %1750 = vmatprep.subr.mxu0 0.0
        %1751 = vmatpush1.msra.mxu0 0.0
        %1752 = vmatprep.subr.mxu0 0.0
        %1753 = vmatpush1.msra.mxu0 0.0
        %1754 = vmatprep.subr.mxu0 0.0
        %1755 = vmatpush1.msra.mxu0 0.0
        %1756 = vmatprep.subr.mxu0 0.0
        %1757 = vmatpush1.msra.mxu0 0.0
        %1758 = vmatprep.mubr.f32.mxu0 0.0
        %1759 = vmatmul.mubr.f32.gmra.mrb[0].mxu0 %v1517
        %v1760 = vpop.f32.mrb[0].mxu0
        %v1761 = vadd.f32 %v1692, %v1760
        %v1762 = vpop.f32.mrb[0].mxu0
        %1763 = vmatprep.mubr.f32.mxu0 0.0
        %1764 = vmatmul.mubr.f32.gmra.mrb[0].mxu0 %v1520
        %v1765 = vpop.f32.mrb[0].mxu0
        %v1766 = vadd.f32 %v1692, %v1765
        %v1767 = vpop.f32.mrb[0].mxu0
        %1768 = vdwg.mxu0
        %vm1769 = vcmask 64512
        %v1771 = vsel %vm1769, %v1589, 0
        %v1774 = vsel %vm1769, %v1594, 0
        %v1777 = vsel %vm1769, %v1675, 0
        %v1780 = vsel %vm1769, %v1680, 0
        %1782 = vmatprep.subr.mxu0 0.0
        %1783 = vmatpush1.xpose.msra.mxu0 %v1777
        %1784 = vmatprep.subr.mxu0 0.0
        %1785 = vmatpush1.xpose.msra.mxu0 %v1780
        %1786 = vmatprep.subr.mxu0 0.0
        %1787 = vmatpush1.xpose.msra.mxu0 0.0
        %1788 = vmatprep.subr.mxu0 0.0
        %1789 = vmatpush1.xpose.msra.mxu0 0.0
        %1790 = vmatprep.subr.mxu0 0.0
        %1791 = vmatpush1.xpose.msra.mxu0 0.0
        %1792 = vmatprep.subr.mxu0 0.0
        %1793 = vmatpush1.xpose.msra.mxu0 0.0
        %1794 = vmatprep.subr.mxu0 0.0
        %1795 = vmatpush1.xpose.msra.mxu0 0.0
        %1796 = vmatprep.subr.mxu0 0.0
        %1797 = vmatpush1.xpose.msra.mxu0 0.0
        %1798 = vmatprep.subr.mxu0 0.0
        %1799 = vmatpush1.xpose.msra.mxu0 0.0
        %1800 = vmatprep.subr.mxu0 0.0
        %1801 = vmatpush1.xpose.msra.mxu0 0.0
        %1802 = vmatprep.subr.mxu0 0.0
        %1803 = vmatpush1.xpose.msra.mxu0 0.0
        %1804 = vmatprep.subr.mxu0 0.0
        %1805 = vmatpush1.xpose.msra.mxu0 0.0
        %1806 = vmatprep.subr.mxu0 0.0
        %1807 = vmatpush1.xpose.msra.mxu0 0.0
        %1808 = vmatprep.subr.mxu0 0.0
        %1809 = vmatpush1.xpose.msra.mxu0 0.0
        %1810 = vmatprep.subr.mxu0 0.0
        %1811 = vmatpush1.xpose.msra.mxu0 0.0
        %1812 = vmatprep.subr.mxu0 0.0
        %1813 = vmatpush1.xpose.msra.mxu0 0.0
        %1814 = vmatprep.subr.mxu0 0.0
        %1815 = vmatpush1.xpose.msra.mxu0 0.0
        %1816 = vmatprep.subr.mxu0 0.0
        %1817 = vmatpush1.xpose.msra.mxu0 0.0
        %1818 = vmatprep.subr.mxu0 0.0
        %1819 = vmatpush1.xpose.msra.mxu0 0.0
        %1820 = vmatprep.subr.mxu0 0.0
        %1821 = vmatpush1.xpose.msra.mxu0 0.0
        %1822 = vmatprep.subr.mxu0 0.0
        %1823 = vmatpush1.xpose.msra.mxu0 0.0
        %1824 = vmatprep.subr.mxu0 0.0
        %1825 = vmatpush1.xpose.msra.mxu0 0.0
        %1826 = vmatprep.subr.mxu0 0.0
        %1827 = vmatpush1.xpose.msra.mxu0 0.0
        %1828 = vmatprep.subr.mxu0 0.0
        %1829 = vmatpush1.xpose.msra.mxu0 0.0
        %1830 = vmatprep.subr.mxu0 0.0
        %1831 = vmatpush1.xpose.msra.mxu0 0.0
        %1832 = vmatprep.subr.mxu0 0.0
        %1833 = vmatpush1.xpose.msra.mxu0 0.0
        %1834 = vmatprep.subr.mxu0 0.0
        %1835 = vmatpush1.xpose.msra.mxu0 0.0
        %1836 = vmatprep.subr.mxu0 0.0
        %1837 = vmatpush1.xpose.msra.mxu0 0.0
        %1838 = vmatprep.subr.mxu0 0.0
        %1839 = vmatpush1.xpose.msra.mxu0 0.0
        %1840 = vmatprep.subr.mxu0 0.0
        %1841 = vmatpush1.xpose.msra.mxu0 0.0
        %1842 = vmatprep.subr.mxu0 0.0
        %1843 = vmatpush1.xpose.msra.mxu0 0.0
        %1844 = vmatprep.subr.mxu0 0.0
        %1845 = vmatpush1.xpose.msra.mxu0 0.0
        %1846 = vmatprep.mubr.f32.mxu0 0.0
        %1847 = vmatmul.mubr.f32.gmra.mrb[0].mxu0 %v1771
        %v1848 = vpop.f32.mrb[0].mxu0
        %v1849 = vadd.f32 0.0, %v1848
        %v1850 = vpop.f32.mrb[0].mxu0
        %1851 = vmatprep.mubr.f32.mxu0 0.0
        %1852 = vmatmul.mubr.f32.gmra.mrb[0].mxu0 %v1774
        %v1853 = vpop.f32.mrb[0].mxu0
        %v1854 = vadd.f32 0.0, %v1853
        %v1855 = vpop.f32.mrb[0].mxu0
        %1856 = vdwg.mxu0
        %v1857 = vmul.f32 %v1849, 0.35355338
        %v1858 = vmul.f32 %v1854, 0.35355338
        %v1860 = vlaneseq
        %v1861 = vshrl.u32 %v1860, 7
        %v1862 = vsub.s32 0, %v1861
        %v1863 = vrot.slane %v1504, %v1862
        %v1865 = vadd.f32 %v1857, %v1863
        %v1866 = vadd.f32 %v1858, %v1863
        %vm1867 = vcmask 130048
        %v1868 = vsel %vm1867, %v1865, -inf
        %1869 = vmax.xlane.f32.xlu0 %v1868
        %v1870 = vpop.xlane.xlu0 %1869
        %v1871 = vsel %vm1867, %v1866, -inf
        %1872 = vmax.xlane.f32.xlu0 %v1871
        %v1873 = vpop.xlane.xlu0 %1872
        %v1874 = vsub.f32 %v1865, %v1870
        %v1875 = vsub.f32 %v1866, %v1873
        %v1876 = vmul.f32 %v1874, 1.442695
        %v1877 = vpow.pop %v1876
        %v1878 = vmul.f32 %v1875, 1.442695
        %v1879 = vpow.pop %v1878
        %v1880 = vsel %vm1867, %v1877, 0.0
        %1881 = vadd.xlane.f32.xlu0 %v1880
        %v1882 = vpop.xlane.xlu0 %1881
        %v1883 = vsel %vm1867, %v1879, 0.0
        %1884 = vadd.xlane.f32.xlu0 %v1883
        %v1885 = vpop.xlane.xlu0 %1884
        %v1886 = vrcp.pop %v1882
        %v1887 = vmul.f32 %v1877, %v1886
        %v1888 = vrcp.pop %v1885
        %v1889 = vmul.f32 %v1879, %v1888
        %v1891 = vsel %vm1867, %v1887, 0
        %v1894 = vsel %vm1867, %v1889, 0
        %1896 = vmatprep.subr.mxu0 0.0
        %1897 = vmatpush1.msra.mxu0 %v1761
        %1898 = vmatprep.subr.mxu0 0.0
        %1899 = vmatpush1.msra.mxu0 %v1766
        %1900 = vmatprep.subr.mxu0 0.0
        %1901 = vmatpush1.msra.mxu0 0.0
        %1902 = vmatprep.subr.mxu0 0.0
        %1903 = vmatpush1.msra.mxu0 0.0
        %1904 = vmatprep.subr.mxu0 0.0
        %1905 = vmatpush1.msra.mxu0 0.0
        %1906 = vmatprep.subr.mxu0 0.0
        %1907 = vmatpush1.msra.mxu0 0.0
        %1908 = vmatprep.subr.mxu0 0.0
        %1909 = vmatpush1.msra.mxu0 0.0
        %1910 = vmatprep.subr.mxu0 0.0
        %1911 = vmatpush1.msra.mxu0 0.0
        %1912 = vmatprep.subr.mxu0 0.0
        %1913 = vmatpush1.msra.mxu0 0.0
        %1914 = vmatprep.subr.mxu0 0.0
        %1915 = vmatpush1.msra.mxu0 0.0
        %1916 = vmatprep.subr.mxu0 0.0
        %1917 = vmatpush1.msra.mxu0 0.0
        %1918 = vmatprep.subr.mxu0 0.0
        %1919 = vmatpush1.msra.mxu0 0.0
        %1920 = vmatprep.subr.mxu0 0.0
        %1921 = vmatpush1.msra.mxu0 0.0
        %1922 = vmatprep.subr.mxu0 0.0
        %1923 = vmatpush1.msra.mxu0 0.0
        %1924 = vmatprep.subr.mxu0 0.0
        %1925 = vmatpush1.msra.mxu0 0.0
        %1926 = vmatprep.subr.mxu0 0.0
        %1927 = vmatpush1.msra.mxu0 0.0
        %1928 = vmatprep.subr.mxu0 0.0
        %1929 = vmatpush1.msra.mxu0 0.0
        %1930 = vmatprep.subr.mxu0 0.0
        %1931 = vmatpush1.msra.mxu0 0.0
        %1932 = vmatprep.subr.mxu0 0.0
        %1933 = vmatpush1.msra.mxu0 0.0
        %1934 = vmatprep.subr.mxu0 0.0
        %1935 = vmatpush1.msra.mxu0 0.0
        %1936 = vmatprep.subr.mxu0 0.0
        %1937 = vmatpush1.msra.mxu0 0.0
        %1938 = vmatprep.subr.mxu0 0.0
        %1939 = vmatpush1.msra.mxu0 0.0
        %1940 = vmatprep.subr.mxu0 0.0
        %1941 = vmatpush1.msra.mxu0 0.0
        %1942 = vmatprep.subr.mxu0 0.0
        %1943 = vmatpush1.msra.mxu0 0.0
        %1944 = vmatprep.subr.mxu0 0.0
        %1945 = vmatpush1.msra.mxu0 0.0
        %1946 = vmatprep.subr.mxu0 0.0
        %1947 = vmatpush1.msra.mxu0 0.0
        %1948 = vmatprep.subr.mxu0 0.0
        %1949 = vmatpush1.msra.mxu0 0.0
        %1950 = vmatprep.subr.mxu0 0.0
        %1951 = vmatpush1.msra.mxu0 0.0
        %1952 = vmatprep.subr.mxu0 0.0
        %1953 = vmatpush1.msra.mxu0 0.0
        %1954 = vmatprep.subr.mxu0 0.0
        %1955 = vmatpush1.msra.mxu0 0.0
        %1956 = vmatprep.subr.mxu0 0.0
        %1957 = vmatpush1.msra.mxu0 0.0
        %1958 = vmatprep.subr.mxu0 0.0
        %1959 = vmatpush1.msra.mxu0 0.0
        %1960 = vmatprep.mubr.f32.mxu0 0.0
        %1961 = vmatmul.mubr.f32.gmra.mrb[0].mxu0 %v1891
        %v1962 = vpop.f32.mrb[0].mxu0
        %v1963 = vadd.f32 0.0, %v1962
        %v1964 = vpop.f32.mrb[0].mxu0
        %1965 = vmatprep.mubr.f32.mxu0 0.0
        %1966 = vmatmul.mubr.f32.gmra.mrb[0].mxu0 %v1894
        %v1967 = vpop.f32.mrb[0].mxu0
        %v1968 = vadd.f32 0.0, %v1967
        %v1969 = vpop.f32.mrb[0].mxu0
        %1970 = vdwg.mxu0
        %v1971 = vld [vmem:[%s39] sm:$0xff]
        %s1972 = scalar_lea.vmem %s27, 32
        %v1973 = vld [vmem:[%s1972] sm:$0xff]
        %v1974 = vld [vmem:[%s1972 + $0x8] sm:$0xff]
        %v1975 = vld [vmem:[%s1972 + $0x10] sm:$0xff]
        %v1976 = vld [vmem:[%s1972 + $0x18] sm:$0xff]
        %s1977 = scalar_lea.vmem %s33, 1
        %v1978 = vld [vmem:[%s1977] sm:$0x1]
        %v1980 = vlaneseq
        %v1981 = vshrl.u32 %v1980, 7
        %v1982 = vsub.s32 0, %v1981
        %v1983 = vrot.slane %v1978, %v1982
        %1985 = vmatprep.subr.mxu0 0.0
        %1986 = vmatpush1.msra.mxu0 %v1973
        %1987 = vmatprep.subr.mxu0 0.0
        %1988 = vmatpush1.msra.mxu0 %v1974
        %1989 = vmatprep.subr.mxu0 0.0
        %1990 = vmatpush1.msra.mxu0 %v1975
        %1991 = vmatprep.subr.mxu0 0.0
        %1992 = vmatpush1.msra.mxu0 %v1976
        %1993 = vmatprep.subr.mxu0 0.0
        %1994 = vmatpush1.msra.mxu0 0.0
        %1995 = vmatprep.subr.mxu0 0.0
        %1996 = vmatpush1.msra.mxu0 0.0
        %1997 = vmatprep.subr.mxu0 0.0
        %1998 = vmatpush1.msra.mxu0 0.0
        %1999 = vmatprep.subr.mxu0 0.0
        %2000 = vmatpush1.msra.mxu0 0.0
        %2001 = vmatprep.subr.mxu0 0.0
        %2002 = vmatpush1.msra.mxu0 0.0
        %2003 = vmatprep.subr.mxu0 0.0
        %2004 = vmatpush1.msra.mxu0 0.0
        %2005 = vmatprep.subr.mxu0 0.0
        %2006 = vmatpush1.msra.mxu0 0.0
        %2007 = vmatprep.subr.mxu0 0.0
        %2008 = vmatpush1.msra.mxu0 0.0
        %2009 = vmatprep.subr.mxu0 0.0
        %2010 = vmatpush1.msra.mxu0 0.0
        %2011 = vmatprep.subr.mxu0 0.0
        %2012 = vmatpush1.msra.mxu0 0.0
        %2013 = vmatprep.subr.mxu0 0.0
        %2014 = vmatpush1.msra.mxu0 0.0
        %2015 = vmatprep.subr.mxu0 0.0
        %2016 = vmatpush1.msra.mxu0 0.0
        %2017 = vmatprep.subr.mxu0 0.0
        %2018 = vmatpush1.msra.mxu0 0.0
        %2019 = vmatprep.subr.mxu0 0.0
        %2020 = vmatpush1.msra.mxu0 0.0
        %2021 = vmatprep.subr.mxu0 0.0
        %2022 = vmatpush1.msra.mxu0 0.0
        %2023 = vmatprep.subr.mxu0 0.0
        %2024 = vmatpush1.msra.mxu0 0.0
        %2025 = vmatprep.subr.mxu0 0.0
        %2026 = vmatpush1.msra.mxu0 0.0
        %2027 = vmatprep.subr.mxu0 0.0
        %2028 = vmatpush1.msra.mxu0 0.0
        %2029 = vmatprep.subr.mxu0 0.0
        %2030 = vmatpush1.msra.mxu0 0.0
        %2031 = vmatprep.subr.mxu0 0.0
        %2032 = vmatpush1.msra.mxu0 0.0
        %2033 = vmatprep.subr.mxu0 0.0
        %2034 = vmatpush1.msra.mxu0 0.0
        %2035 = vmatprep.subr.mxu0 0.0
        %2036 = vmatpush1.msra.mxu0 0.0
        %2037 = vmatprep.subr.mxu0 0.0
        %2038 = vmatpush1.msra.mxu0 0.0
        %2039 = vmatprep.subr.mxu0 0.0
        %2040 = vmatpush1.msra.mxu0 0.0
        %2041 = vmatprep.subr.mxu0 0.0
        %2042 = vmatpush1.msra.mxu0 0.0
        %2043 = vmatprep.subr.mxu0 0.0
        %2044 = vmatpush1.msra.mxu0 0.0
        %2045 = vmatprep.subr.mxu0 0.0
        %2046 = vmatpush1.msra.mxu0 0.0
        %2047 = vmatprep.subr.mxu0 0.0
        %2048 = vmatpush1.msra.mxu0 0.0
        %2049 = vmatprep.mubr.f32.mxu0 0.0
        %2050 = vmatmul.mubr.f32.gmra.mrb[0].mxu0 %v1517
        %v2051 = vpop.f32.mrb[0].mxu0
        %v2052 = vadd.f32 %v1983, %v2051
        %v2053 = vpop.f32.mrb[0].mxu0
        %2054 = vmatprep.mubr.f32.mxu0 0.0
        %2055 = vmatmul.mubr.f32.gmra.mrb[0].mxu0 %v1520
        %v2056 = vpop.f32.mrb[0].mxu0
        %v2057 = vadd.f32 %v1983, %v2056
        %v2058 = vpop.f32.mrb[0].mxu0
        %2059 = vdwg.mxu0
        %s2060 = scalar_lea.vmem %s29, 32
        %v2061 = vld [vmem:[%s2060] sm:$0xff]
        %v2062 = vld [vmem:[%s2060 + $0x8] sm:$0xff]
        %v2063 = vld [vmem:[%s2060 + $0x10] sm:$0xff]
        %v2064 = vld [vmem:[%s2060 + $0x18] sm:$0xff]
        %s2065 = scalar_lea.vmem %s35, 1
        %v2066 = vld [vmem:[%s2065] sm:$0x1]
        %v2068 = vlaneseq
        %v2069 = vshrl.u32 %v2068, 7
        %v2070 = vsub.s32 0, %v2069
        %v2071 = vrot.slane %v2066, %v2070
        %2073 = vmatprep.subr.mxu0 0.0
        %2074 = vmatpush1.msra.mxu0 %v2061
        %2075 = vmatprep.subr.mxu0 0.0
        %2076 = vmatpush1.msra.mxu0 %v2062
        %2077 = vmatprep.subr.mxu0 0.0
        %2078 = vmatpush1.msra.mxu0 %v2063
        %2079 = vmatprep.subr.mxu0 0.0
        %2080 = vmatpush1.msra.mxu0 %v2064
        %2081 = vmatprep.subr.mxu0 0.0
        %2082 = vmatpush1.msra.mxu0 0.0
        %2083 = vmatprep.subr.mxu0 0.0
        %2084 = vmatpush1.msra.mxu0 0.0
        %2085 = vmatprep.subr.mxu0 0.0
        %2086 = vmatpush1.msra.mxu0 0.0
        %2087 = vmatprep.subr.mxu0 0.0
        %2088 = vmatpush1.msra.mxu0 0.0
        %2089 = vmatprep.subr.mxu0 0.0
        %2090 = vmatpush1.msra.mxu0 0.0
        %2091 = vmatprep.subr.mxu0 0.0
        %2092 = vmatpush1.msra.mxu0 0.0
        %2093 = vmatprep.subr.mxu0 0.0
        %2094 = vmatpush1.msra.mxu0 0.0
        %2095 = vmatprep.subr.mxu0 0.0
        %2096 = vmatpush1.msra.mxu0 0.0
        %2097 = vmatprep.subr.mxu0 0.0
        %2098 = vmatpush1.msra.mxu0 0.0
        %2099 = vmatprep.subr.mxu0 0.0
        %2100 = vmatpush1.msra.mxu0 0.0
        %2101 = vmatprep.subr.mxu0 0.0
        %2102 = vmatpush1.msra.mxu0 0.0
        %2103 = vmatprep.subr.mxu0 0.0
        %2104 = vmatpush1.msra.mxu0 0.0
        %2105 = vmatprep.subr.mxu0 0.0
        %2106 = vmatpush1.msra.mxu0 0.0
        %2107 = vmatprep.subr.mxu0 0.0
        %2108 = vmatpush1.msra.mxu0 0.0
        %2109 = vmatprep.subr.mxu0 0.0
        %2110 = vmatpush1.msra.mxu0 0.0
        %2111 = vmatprep.subr.mxu0 0.0
        %2112 = vmatpush1.msra.mxu0 0.0
        %2113 = vmatprep.subr.mxu0 0.0
        %2114 = vmatpush1.msra.mxu0 0.0
        %2115 = vmatprep.subr.mxu0 0.0
        %2116 = vmatpush1.msra.mxu0 0.0
        %2117 = vmatprep.subr.mxu0 0.0
        %2118 = vmatpush1.msra.mxu0 0.0
        %2119 = vmatprep.subr.mxu0 0.0
        %2120 = vmatpush1.msra.mxu0 0.0
        %2121 = vmatprep.subr.mxu0 0.0
        %2122 = vmatpush1.msra.mxu0 0.0
        %2123 = vmatprep.subr.mxu0 0.0
        %2124 = vmatpush1.msra.mxu0 0.0
        %2125 = vmatprep.subr.mxu0 0.0
        %2126 = vmatpush1.msra.mxu0 0.0
        %2127 = vmatprep.subr.mxu0 0.0
        %2128 = vmatpush1.msra.mxu0 0.0
        %2129 = vmatprep.subr.mxu0 0.0
        %2130 = vmatpush1.msra.mxu0 0.0
        %2131 = vmatprep.subr.mxu0 0.0
        %2132 = vmatpush1.msra.mxu0 0.0
        %2133 = vmatprep.subr.mxu0 0.0
        %2134 = vmatpush1.msra.mxu0 0.0
        %2135 = vmatprep.subr.mxu0 0.0
        %2136 = vmatpush1.msra.mxu0 0.0
        %2137 = vmatprep.mubr.f32.mxu0 0.0
        %2138 = vmatmul.mubr.f32.gmra.mrb[0].mxu0 %v1517
        %v2139 = vpop.f32.mrb[0].mxu0
        %v2140 = vadd.f32 %v2071, %v2139
        %v2141 = vpop.f32.mrb[0].mxu0
        %2142 = vmatprep.mubr.f32.mxu0 0.0
        %2143 = vmatmul.mubr.f32.gmra.mrb[0].mxu0 %v1520
        %v2144 = vpop.f32.mrb[0].mxu0
        %v2145 = vadd.f32 %v2071, %v2144
        %v2146 = vpop.f32.mrb[0].mxu0
        %2147 = vdwg.mxu0
        %s2148 = scalar_lea.vmem %s31, 32
        %v2149 = vld [vmem:[%s2148] sm:$0xff]
        %v2150 = vld [vmem:[%s2148 + $0x8] sm:$0xff]
        %v2151 = vld [vmem:[%s2148 + $0x10] sm:$0xff]
        %v2152 = vld [vmem:[%s2148 + $0x18] sm:$0xff]
        %s2153 = scalar_lea.vmem %s37, 1
        %v2154 = vld [vmem:[%s2153] sm:$0x1]
        %v2156 = vlaneseq
        %v2157 = vshrl.u32 %v2156, 7
        %v2158 = vsub.s32 0, %v2157
        %v2159 = vrot.slane %v2154, %v2158
        %2161 = vmatprep.subr.mxu0 0.0
        %2162 = vmatpush1.msra.mxu0 %v2149
        %2163 = vmatprep.subr.mxu0 0.0
        %2164 = vmatpush1.msra.mxu0 %v2150
        %2165 = vmatprep.subr.mxu0 0.0
        %2166 = vmatpush1.msra.mxu0 %v2151
        %2167 = vmatprep.subr.mxu0 0.0
        %2168 = vmatpush1.msra.mxu0 %v2152
        %2169 = vmatprep.subr.mxu0 0.0
        %2170 = vmatpush1.msra.mxu0 0.0
        %2171 = vmatprep.subr.mxu0 0.0
        %2172 = vmatpush1.msra.mxu0 0.0
        %2173 = vmatprep.subr.mxu0 0.0
        %2174 = vmatpush1.msra.mxu0 0.0
        %2175 = vmatprep.subr.mxu0 0.0
        %2176 = vmatpush1.msra.mxu0 0.0
        %2177 = vmatprep.subr.mxu0 0.0
        %2178 = vmatpush1.msra.mxu0 0.0
        %2179 = vmatprep.subr.mxu0 0.0
        %2180 = vmatpush1.msra.mxu0 0.0
        %2181 = vmatprep.subr.mxu0 0.0
        %2182 = vmatpush1.msra.mxu0 0.0
        %2183 = vmatprep.subr.mxu0 0.0
        %2184 = vmatpush1.msra.mxu0 0.0
        %2185 = vmatprep.subr.mxu0 0.0
        %2186 = vmatpush1.msra.mxu0 0.0
        %2187 = vmatprep.subr.mxu0 0.0
        %2188 = vmatpush1.msra.mxu0 0.0
        %2189 = vmatprep.subr.mxu0 0.0
        %2190 = vmatpush1.msra.mxu0 0.0
        %2191 = vmatprep.subr.mxu0 0.0
        %2192 = vmatpush1.msra.mxu0 0.0
        %2193 = vmatprep.subr.mxu0 0.0
        %2194 = vmatpush1.msra.mxu0 0.0
        %2195 = vmatprep.subr.mxu0 0.0
        %2196 = vmatpush1.msra.mxu0 0.0
        %2197 = vmatprep.subr.mxu0 0.0
        %2198 = vmatpush1.msra.mxu0 0.0
        %2199 = vmatprep.subr.mxu0 0.0
        %2200 = vmatpush1.msra.mxu0 0.0
        %2201 = vmatprep.subr.mxu0 0.0
        %2202 = vmatpush1.msra.mxu0 0.0
        %2203 = vmatprep.subr.mxu0 0.0
        %2204 = vmatpush1.msra.mxu0 0.0
        %2205 = vmatprep.subr.mxu0 0.0
        %2206 = vmatpush1.msra.mxu0 0.0
        %2207 = vmatprep.subr.mxu0 0.0
        %2208 = vmatpush1.msra.mxu0 0.0
        %2209 = vmatprep.subr.mxu0 0.0
        %2210 = vmatpush1.msra.mxu0 0.0
        %2211 = vmatprep.subr.mxu0 0.0
        %2212 = vmatpush1.msra.mxu0 0.0
        %2213 = vmatprep.subr.mxu0 0.0
        %2214 = vmatpush1.msra.mxu0 0.0
        %2215 = vmatprep.subr.mxu0 0.0
        %2216 = vmatpush1.msra.mxu0 0.0
        %2217 = vmatprep.subr.mxu0 0.0
        %2218 = vmatpush1.msra.mxu0 0.0
        %2219 = vmatprep.subr.mxu0 0.0
        %2220 = vmatpush1.msra.mxu0 0.0
        %2221 = vmatprep.subr.mxu0 0.0
        %2222 = vmatpush1.msra.mxu0 0.0
        %2223 = vmatprep.subr.mxu0 0.0
        %2224 = vmatpush1.msra.mxu0 0.0
        %2225 = vmatprep.mubr.f32.mxu0 0.0
        %2226 = vmatmul.mubr.f32.gmra.mrb[0].mxu0 %v1517
        %v2227 = vpop.f32.mrb[0].mxu0
        %v2228 = vadd.f32 %v2159, %v2227
        %v2229 = vpop.f32.mrb[0].mxu0
        %2230 = vmatprep.mubr.f32.mxu0 0.0
        %2231 = vmatmul.mubr.f32.gmra.mrb[0].mxu0 %v1520
        %v2232 = vpop.f32.mrb[0].mxu0
        %v2233 = vadd.f32 %v2159, %v2232
        %v2234 = vpop.f32.mrb[0].mxu0
        %2235 = vdwg.mxu0
        %v2237 = vsel %vm1769, %v2052, 0
        %v2240 = vsel %vm1769, %v2057, 0
        %v2243 = vsel %vm1769, %v2140, 0
        %v2246 = vsel %vm1769, %v2145, 0
        %2248 = vmatprep.subr.mxu0 0.0
        %2249 = vmatpush1.xpose.msra.mxu0 %v2243
        %2250 = vmatprep.subr.mxu0 0.0
        %2251 = vmatpush1.xpose.msra.mxu0 %v2246
        %2252 = vmatprep.subr.mxu0 0.0
        %2253 = vmatpush1.xpose.msra.mxu0 0.0
        %2254 = vmatprep.subr.mxu0 0.0
        %2255 = vmatpush1.xpose.msra.mxu0 0.0
        %2256 = vmatprep.subr.mxu0 0.0
        %2257 = vmatpush1.xpose.msra.mxu0 0.0
        %2258 = vmatprep.subr.mxu0 0.0
        %2259 = vmatpush1.xpose.msra.mxu0 0.0
        %2260 = vmatprep.subr.mxu0 0.0
        %2261 = vmatpush1.xpose.msra.mxu0 0.0
        %2262 = vmatprep.subr.mxu0 0.0
        %2263 = vmatpush1.xpose.msra.mxu0 0.0
        %2264 = vmatprep.subr.mxu0 0.0
        %2265 = vmatpush1.xpose.msra.mxu0 0.0
        %2266 = vmatprep.subr.mxu0 0.0
        %2267 = vmatpush1.xpose.msra.mxu0 0.0
        %2268 = vmatprep.subr.mxu0 0.0
        %2269 = vmatpush1.xpose.msra.mxu0 0.0
        %2270 = vmatprep.subr.mxu0 0.0
        %2271 = vmatpush1.xpose.msra.mxu0 0.0
        %2272 = vmatprep.subr.mxu0 0.0
        %2273 = vmatpush1.xpose.msra.mxu0 0.0
        %2274 = vmatprep.subr.mxu0 0.0
        %2275 = vmatpush1.xpose.msra.mxu0 0.0
        %2276 = vmatprep.subr.mxu0 0.0
        %2277 = vmatpush1.xpose.msra.mxu0 0.0
        %2278 = vmatprep.subr.mxu0 0.0
        %2279 = vmatpush1.xpose.msra.mxu0 0.0
        %2280 = vmatprep.subr.mxu0 0.0
        %2281 = vmatpush1.xpose.msra.mxu0 0.0
        %2282 = vmatprep.subr.mxu0 0.0
        %2283 = vmatpush1.xpose.msra.mxu0 0.0
        %2284 = vmatprep.subr.mxu0 0.0
        %2285 = vmatpush1.xpose.msra.mxu0 0.0
        %2286 = vmatprep.subr.mxu0 0.0
        %2287 = vmatpush1.xpose.msra.mxu0 0.0
        %2288 = vmatprep.subr.mxu0 0.0
        %2289 = vmatpush1.xpose.msra.mxu0 0.0
        %2290 = vmatprep.subr.mxu0 0.0
        %2291 = vmatpush1.xpose.msra.mxu0 0.0
        %2292 = vmatprep.subr.mxu0 0.0
        %2293 = vmatpush1.xpose.msra.mxu0 0.0
        %2294 = vmatprep.subr.mxu0 0.0
        %2295 = vmatpush1.xpose.msra.mxu0 0.0
        %2296 = vmatprep.subr.mxu0 0.0
        %2297 = vmatpush1.xpose.msra.mxu0 0.0
        %2298 = vmatprep.subr.mxu0 0.0
        %2299 = vmatpush1.xpose.msra.mxu0 0.0
        %2300 = vmatprep.subr.mxu0 0.0
        %2301 = vmatpush1.xpose.msra.mxu0 0.0
        %2302 = vmatprep.subr.mxu0 0.0
        %2303 = vmatpush1.xpose.msra.mxu0 0.0
        %2304 = vmatprep.subr.mxu0 0.0
        %2305 = vmatpush1.xpose.msra.mxu0 0.0
        %2306 = vmatprep.subr.mxu0 0.0
        %2307 = vmatpush1.xpose.msra.mxu0 0.0
        %2308 = vmatprep.subr.mxu0 0.0
        %2309 = vmatpush1.xpose.msra.mxu0 0.0
        %2310 = vmatprep.subr.mxu0 0.0
        %2311 = vmatpush1.xpose.msra.mxu0 0.0
        %2312 = vmatprep.mubr.f32.mxu0 0.0
        %2313 = vmatmul.mubr.f32.gmra.mrb[0].mxu0 %v2237
        %v2314 = vpop.f32.mrb[0].mxu0
        %v2315 = vadd.f32 0.0, %v2314
        %v2316 = vpop.f32.mrb[0].mxu0
        %2317 = vmatprep.mubr.f32.mxu0 0.0
        %2318 = vmatmul.mubr.f32.gmra.mrb[0].mxu0 %v2240
        %v2319 = vpop.f32.mrb[0].mxu0
        %v2320 = vadd.f32 0.0, %v2319
        %v2321 = vpop.f32.mrb[0].mxu0
        %2322 = vdwg.mxu0
        %v2323 = vmul.f32 %v2315, 0.35355338
        %v2324 = vmul.f32 %v2320, 0.35355338
        %v2325 = vadd.f32 %v2323, %v1863
        %v2326 = vadd.f32 %v2324, %v1863
        %v2327 = vsel %vm1867, %v2325, -inf
        %2328 = vmax.xlane.f32.xlu0 %v2327
        %v2329 = vpop.xlane.xlu0 %2328
        %v2330 = vsel %vm1867, %v2326, -inf
        %2331 = vmax.xlane.f32.xlu0 %v2330
        %v2332 = vpop.xlane.xlu0 %2331
        %v2333 = vsub.f32 %v2325, %v2329
        %v2334 = vsub.f32 %v2326, %v2332
        %v2335 = vmul.f32 %v2333, 1.442695
        %v2336 = vpow.pop %v2335
        %v2337 = vmul.f32 %v2334, 1.442695
        %v2338 = vpow.pop %v2337
        %v2339 = vsel %vm1867, %v2336, 0.0
        %2340 = vadd.xlane.f32.xlu0 %v2339
        %v2341 = vpop.xlane.xlu0 %2340
        %v2342 = vsel %vm1867, %v2338, 0.0
        %2343 = vadd.xlane.f32.xlu0 %v2342
        %v2344 = vpop.xlane.xlu0 %2343
        %v2345 = vrcp.pop %v2341
        %v2346 = vmul.f32 %v2336, %v2345
        %v2347 = vrcp.pop %v2344
        %v2348 = vmul.f32 %v2338, %v2347
        %v2350 = vsel %vm1867, %v2346, 0
        %v2353 = vsel %vm1867, %v2348, 0
        %2355 = vmatprep.subr.mxu0 0.0
        %2356 = vmatpush1.msra.mxu0 %v2228
        %2357 = vmatprep.subr.mxu0 0.0
        %2358 = vmatpush1.msra.mxu0 %v2233
        %2359 = vmatprep.subr.mxu0 0.0
        %2360 = vmatpush1.msra.mxu0 0.0
        %2361 = vmatprep.subr.mxu0 0.0
        %2362 = vmatpush1.msra.mxu0 0.0
        %2363 = vmatprep.subr.mxu0 0.0
        %2364 = vmatpush1.msra.mxu0 0.0
        %2365 = vmatprep.subr.mxu0 0.0
        %2366 = vmatpush1.msra.mxu0 0.0
        %2367 = vmatprep.subr.mxu0 0.0
        %2368 = vmatpush1.msra.mxu0 0.0
        %2369 = vmatprep.subr.mxu0 0.0
        %2370 = vmatpush1.msra.mxu0 0.0
        %2371 = vmatprep.subr.mxu0 0.0
        %2372 = vmatpush1.msra.mxu0 0.0
        %2373 = vmatprep.subr.mxu0 0.0
        %2374 = vmatpush1.msra.mxu0 0.0
        %2375 = vmatprep.subr.mxu0 0.0
        %2376 = vmatpush1.msra.mxu0 0.0
        %2377 = vmatprep.subr.mxu0 0.0
        %2378 = vmatpush1.msra.mxu0 0.0
        %2379 = vmatprep.subr.mxu0 0.0
        %2380 = vmatpush1.msra.mxu0 0.0
        %2381 = vmatprep.subr.mxu0 0.0
        %2382 = vmatpush1.msra.mxu0 0.0
        %2383 = vmatprep.subr.mxu0 0.0
        %2384 = vmatpush1.msra.mxu0 0.0
        %2385 = vmatprep.subr.mxu0 0.0
        %2386 = vmatpush1.msra.mxu0 0.0
        %2387 = vmatprep.subr.mxu0 0.0
        %2388 = vmatpush1.msra.mxu0 0.0
        %2389 = vmatprep.subr.mxu0 0.0
        %2390 = vmatpush1.msra.mxu0 0.0
        %2391 = vmatprep.subr.mxu0 0.0
        %2392 = vmatpush1.msra.mxu0 0.0
        %2393 = vmatprep.subr.mxu0 0.0
        %2394 = vmatpush1.msra.mxu0 0.0
        %2395 = vmatprep.subr.mxu0 0.0
        %2396 = vmatpush1.msra.mxu0 0.0
        %2397 = vmatprep.subr.mxu0 0.0
        %2398 = vmatpush1.msra.mxu0 0.0
        %2399 = vmatprep.subr.mxu0 0.0
        %2400 = vmatpush1.msra.mxu0 0.0
        %2401 = vmatprep.subr.mxu0 0.0
        %2402 = vmatpush1.msra.mxu0 0.0
        %2403 = vmatprep.subr.mxu0 0.0
        %2404 = vmatpush1.msra.mxu0 0.0
        %2405 = vmatprep.subr.mxu0 0.0
        %2406 = vmatpush1.msra.mxu0 0.0
        %2407 = vmatprep.subr.mxu0 0.0
        %2408 = vmatpush1.msra.mxu0 0.0
        %2409 = vmatprep.subr.mxu0 0.0
        %2410 = vmatpush1.msra.mxu0 0.0
        %2411 = vmatprep.subr.mxu0 0.0
        %2412 = vmatpush1.msra.mxu0 0.0
        %2413 = vmatprep.subr.mxu0 0.0
        %2414 = vmatpush1.msra.mxu0 0.0
        %2415 = vmatprep.subr.mxu0 0.0
        %2416 = vmatpush1.msra.mxu0 0.0
        %2417 = vmatprep.subr.mxu0 0.0
        %2418 = vmatpush1.msra.mxu0 0.0
        %2419 = vmatprep.mubr.f32.mxu0 0.0
        %2420 = vmatmul.mubr.f32.gmra.mrb[0].mxu0 %v2350
        %v2421 = vpop.f32.mrb[0].mxu0
        %v2422 = vadd.f32 0.0, %v2421
        %v2423 = vpop.f32.mrb[0].mxu0
        %2424 = vmatprep.mubr.f32.mxu0 0.0
        %2425 = vmatmul.mubr.f32.gmra.mrb[0].mxu0 %v2353
        %v2426 = vpop.f32.mrb[0].mxu0
        %v2427 = vadd.f32 0.0, %v2426
        %v2428 = vpop.f32.mrb[0].mxu0
        %2429 = vdwg.mxu0
        %s2430 = scalar_lea.vmem %s39, 8
        %v2431 = vld [vmem:[%s2430] sm:$0xff]
        %v2433 = vsel %vm1769, %v2422, 0
        %v2436 = vsel %vm1769, %v2427, 0
        %2438 = vmatprep.subr.mxu0 0.0
        %2439 = vmatpush1.msra.mxu0 %v2431
        %2440 = vmatprep.subr.mxu0 0.0
        %2441 = vmatpush1.msra.mxu0 0.0
        %2442 = vmatprep.subr.mxu0 0.0
        %2443 = vmatpush1.msra.mxu0 0.0
        %2444 = vmatprep.subr.mxu0 0.0
        %2445 = vmatpush1.msra.mxu0 0.0
        %2446 = vmatprep.subr.mxu0 0.0
        %2447 = vmatpush1.msra.mxu0 0.0
        %2448 = vmatprep.subr.mxu0 0.0
        %2449 = vmatpush1.msra.mxu0 0.0
        %2450 = vmatprep.subr.mxu0 0.0
        %2451 = vmatpush1.msra.mxu0 0.0
        %2452 = vmatprep.subr.mxu0 0.0
        %2453 = vmatpush1.msra.mxu0 0.0
        %2454 = vmatprep.subr.mxu0 0.0
        %2455 = vmatpush1.msra.mxu0 0.0
        %2456 = vmatprep.subr.mxu0 0.0
        %2457 = vmatpush1.msra.mxu0 0.0
        %2458 = vmatprep.subr.mxu0 0.0
        %2459 = vmatpush1.msra.mxu0 0.0
        %2460 = vmatprep.subr.mxu0 0.0
        %2461 = vmatpush1.msra.mxu0 0.0
        %2462 = vmatprep.subr.mxu0 0.0
        %2463 = vmatpush1.msra.mxu0 0.0
        %2464 = vmatprep.subr.mxu0 0.0
        %2465 = vmatpush1.msra.mxu0 0.0
        %2466 = vmatprep.subr.mxu0 0.0
        %2467 = vmatpush1.msra.mxu0 0.0
        %2468 = vmatprep.subr.mxu0 0.0
        %2469 = vmatpush1.msra.mxu0 0.0
        %2470 = vmatprep.subr.mxu0 0.0
        %2471 = vmatpush1.msra.mxu0 0.0
        %2472 = vmatprep.subr.mxu0 0.0
        %2473 = vmatpush1.msra.mxu0 0.0
        %2474 = vmatprep.subr.mxu0 0.0
        %2475 = vmatpush1.msra.mxu0 0.0
        %2476 = vmatprep.subr.mxu0 0.0
        %2477 = vmatpush1.msra.mxu0 0.0
        %2478 = vmatprep.subr.mxu0 0.0
        %2479 = vmatpush1.msra.mxu0 0.0
        %2480 = vmatprep.subr.mxu0 0.0
        %2481 = vmatpush1.msra.mxu0 0.0
        %2482 = vmatprep.subr.mxu0 0.0
        %2483 = vmatpush1.msra.mxu0 0.0
        %2484 = vmatprep.subr.mxu0 0.0
        %2485 = vmatpush1.msra.mxu0 0.0
        %2486 = vmatprep.subr.mxu0 0.0
        %2487 = vmatpush1.msra.mxu0 0.0
        %2488 = vmatprep.subr.mxu0 0.0
        %2489 = vmatpush1.msra.mxu0 0.0
        %2490 = vmatprep.subr.mxu0 0.0
        %2491 = vmatpush1.msra.mxu0 0.0
        %2492 = vmatprep.subr.mxu0 0.0
        %2493 = vmatpush1.msra.mxu0 0.0
        %2494 = vmatprep.subr.mxu0 0.0
        %2495 = vmatpush1.msra.mxu0 0.0
        %2496 = vmatprep.subr.mxu0 0.0
        %2497 = vmatpush1.msra.mxu0 0.0
        %2498 = vmatprep.subr.mxu0 0.0
        %2499 = vmatpush1.msra.mxu0 0.0
        %2500 = vmatprep.subr.mxu0 0.0
        %2501 = vmatpush1.msra.mxu0 0.0
        %2502 = vmatprep.mubr.f32.mxu0 0.0
        %2503 = vmatmul.mubr.f32.gmra.mrb[0].mxu0 %v2433
        %v2504 = vpop.f32.mrb[0].mxu0
        %v2505 = vadd.f32 0.0, %v2504
        %v2506 = vpop.f32.mrb[0].mxu0
        %2507 = vmatprep.mubr.f32.mxu0 0.0
        %2508 = vmatmul.mubr.f32.gmra.mrb[0].mxu0 %v2436
        %v2509 = vpop.f32.mrb[0].mxu0
        %v2510 = vadd.f32 0.0, %v2509
        %v2511 = vpop.f32.mrb[0].mxu0
        %2512 = vdwg.mxu0
        %v2514 = vsel %vm1769, %v1963, 0
        %v2517 = vsel %vm1769, %v1968, 0
        %2519 = vmatprep.subr.mxu0 0.0
        %2520 = vmatpush1.msra.mxu0 %v1971
        %2521 = vmatprep.subr.mxu0 0.0
        %2522 = vmatpush1.msra.mxu0 0.0
        %2523 = vmatprep.subr.mxu0 0.0
        %2524 = vmatpush1.msra.mxu0 0.0
        %2525 = vmatprep.subr.mxu0 0.0
        %2526 = vmatpush1.msra.mxu0 0.0
        %2527 = vmatprep.subr.mxu0 0.0
        %2528 = vmatpush1.msra.mxu0 0.0
        %2529 = vmatprep.subr.mxu0 0.0
        %2530 = vmatpush1.msra.mxu0 0.0
        %2531 = vmatprep.subr.mxu0 0.0
        %2532 = vmatpush1.msra.mxu0 0.0
        %2533 = vmatprep.subr.mxu0 0.0
        %2534 = vmatpush1.msra.mxu0 0.0
        %2535 = vmatprep.subr.mxu0 0.0
        %2536 = vmatpush1.msra.mxu0 0.0
        %2537 = vmatprep.subr.mxu0 0.0
        %2538 = vmatpush1.msra.mxu0 0.0
        %2539 = vmatprep.subr.mxu0 0.0
        %2540 = vmatpush1.msra.mxu0 0.0
        %2541 = vmatprep.subr.mxu0 0.0
        %2542 = vmatpush1.msra.mxu0 0.0
        %2543 = vmatprep.subr.mxu0 0.0
        %2544 = vmatpush1.msra.mxu0 0.0
        %2545 = vmatprep.subr.mxu0 0.0
        %2546 = vmatpush1.msra.mxu0 0.0
        %2547 = vmatprep.subr.mxu0 0.0
        %2548 = vmatpush1.msra.mxu0 0.0
        %2549 = vmatprep.subr.mxu0 0.0
        %2550 = vmatpush1.msra.mxu0 0.0
        %2551 = vmatprep.subr.mxu0 0.0
        %2552 = vmatpush1.msra.mxu0 0.0
        %2553 = vmatprep.subr.mxu0 0.0
        %2554 = vmatpush1.msra.mxu0 0.0
        %2555 = vmatprep.subr.mxu0 0.0
        %2556 = vmatpush1.msra.mxu0 0.0
        %2557 = vmatprep.subr.mxu0 0.0
        %2558 = vmatpush1.msra.mxu0 0.0
        %2559 = vmatprep.subr.mxu0 0.0
        %2560 = vmatpush1.msra.mxu0 0.0
        %2561 = vmatprep.subr.mxu0 0.0
        %2562 = vmatpush1.msra.mxu0 0.0
        %2563 = vmatprep.subr.mxu0 0.0
        %2564 = vmatpush1.msra.mxu0 0.0
        %2565 = vmatprep.subr.mxu0 0.0
        %2566 = vmatpush1.msra.mxu0 0.0
        %2567 = vmatprep.subr.mxu0 0.0
        %2568 = vmatpush1.msra.mxu0 0.0
        %2569 = vmatprep.subr.mxu0 0.0
        %2570 = vmatpush1.msra.mxu0 0.0
        %2571 = vmatprep.subr.mxu0 0.0
        %2572 = vmatpush1.msra.mxu0 0.0
        %2573 = vmatprep.subr.mxu0 0.0
        %2574 = vmatpush1.msra.mxu0 0.0
        %2575 = vmatprep.subr.mxu0 0.0
        %2576 = vmatpush1.msra.mxu0 0.0
        %2577 = vmatprep.subr.mxu0 0.0
        %2578 = vmatpush1.msra.mxu0 0.0
        %2579 = vmatprep.subr.mxu0 0.0
        %2580 = vmatpush1.msra.mxu0 0.0
        %2581 = vmatprep.subr.mxu0 0.0
        %2582 = vmatpush1.msra.mxu0 0.0
        %2583 = vmatprep.mubr.f32.mxu0 0.0
        %2584 = vmatmul.mubr.f32.gmra.mrb[0].mxu0 %v2514
        %v2585 = vpop.f32.mrb[0].mxu0
        %v2586 = vadd.f32 %v2505, %v2585
        %v2587 = vpop.f32.mrb[0].mxu0
        %2588 = vmatprep.mubr.f32.mxu0 0.0
        %2589 = vmatmul.mubr.f32.gmra.mrb[0].mxu0 %v2517
        %v2590 = vpop.f32.mrb[0].mxu0
        %v2591 = vadd.f32 %v2510, %v2590
        %v2592 = vpop.f32.mrb[0].mxu0
        %2593 = vdwg.mxu0
        %s2594 = scalar_lea.vmem %s27, 64
        %v2595 = vld [vmem:[%s2594] sm:$0xff]
        %v2596 = vld [vmem:[%s2594 + $0x8] sm:$0xff]
        %v2597 = vld [vmem:[%s2594 + $0x10] sm:$0xff]
        %v2598 = vld [vmem:[%s2594 + $0x18] sm:$0xff]
        %s2599 = scalar_lea.vmem %s33, 2
        %v2600 = vld [vmem:[%s2599] sm:$0x1]
        %v2602 = vlaneseq
        %v2603 = vshrl.u32 %v2602, 7
        %v2604 = vsub.s32 0, %v2603
        %v2605 = vrot.slane %v2600, %v2604
        %2607 = vmatprep.subr.mxu0 0.0
        %2608 = vmatpush1.msra.mxu0 %v2595
        %2609 = vmatprep.subr.mxu0 0.0
        %2610 = vmatpush1.msra.mxu0 %v2596
        %2611 = vmatprep.subr.mxu0 0.0
        %2612 = vmatpush1.msra.mxu0 %v2597
        %2613 = vmatprep.subr.mxu0 0.0
        %2614 = vmatpush1.msra.mxu0 %v2598
        %2615 = vmatprep.subr.mxu0 0.0
        %2616 = vmatpush1.msra.mxu0 0.0
        %2617 = vmatprep.subr.mxu0 0.0
        %2618 = vmatpush1.msra.mxu0 0.0
        %2619 = vmatprep.subr.mxu0 0.0
        %2620 = vmatpush1.msra.mxu0 0.0
        %2621 = vmatprep.subr.mxu0 0.0
        %2622 = vmatpush1.msra.mxu0 0.0
        %2623 = vmatprep.subr.mxu0 0.0
        %2624 = vmatpush1.msra.mxu0 0.0
        %2625 = vmatprep.subr.mxu0 0.0
        %2626 = vmatpush1.msra.mxu0 0.0
        %2627 = vmatprep.subr.mxu0 0.0
        %2628 = vmatpush1.msra.mxu0 0.0
        %2629 = vmatprep.subr.mxu0 0.0
        %2630 = vmatpush1.msra.mxu0 0.0
        %2631 = vmatprep.subr.mxu0 0.0
        %2632 = vmatpush1.msra.mxu0 0.0
        %2633 = vmatprep.subr.mxu0 0.0
        %2634 = vmatpush1.msra.mxu0 0.0
        %2635 = vmatprep.subr.mxu0 0.0
        %2636 = vmatpush1.msra.mxu0 0.0
        %2637 = vmatprep.subr.mxu0 0.0
        %2638 = vmatpush1.msra.mxu0 0.0
        %2639 = vmatprep.subr.mxu0 0.0
        %2640 = vmatpush1.msra.mxu0 0.0
        %2641 = vmatprep.subr.mxu0 0.0
        %2642 = vmatpush1.msra.mxu0 0.0
        %2643 = vmatprep.subr.mxu0 0.0
        %2644 = vmatpush1.msra.mxu0 0.0
        %2645 = vmatprep.subr.mxu0 0.0
        %2646 = vmatpush1.msra.mxu0 0.0
        %2647 = vmatprep.subr.mxu0 0.0
        %2648 = vmatpush1.msra.mxu0 0.0
        %2649 = vmatprep.subr.mxu0 0.0
        %2650 = vmatpush1.msra.mxu0 0.0
        %2651 = vmatprep.subr.mxu0 0.0
        %2652 = vmatpush1.msra.mxu0 0.0
        %2653 = vmatprep.subr.mxu0 0.0
        %2654 = vmatpush1.msra.mxu0 0.0
        %2655 = vmatprep.subr.mxu0 0.0
        %2656 = vmatpush1.msra.mxu0 0.0
        %2657 = vmatprep.subr.mxu0 0.0
        %2658 = vmatpush1.msra.mxu0 0.0
        %2659 = vmatprep.subr.mxu0 0.0
        %2660 = vmatpush1.msra.mxu0 0.0
        %2661 = vmatprep.subr.mxu0 0.0
        %2662 = vmatpush1.msra.mxu0 0.0
        %2663 = vmatprep.subr.mxu0 0.0
        %2664 = vmatpush1.msra.mxu0 0.0
        %2665 = vmatprep.subr.mxu0 0.0
        %2666 = vmatpush1.msra.mxu0 0.0
        %2667 = vmatprep.subr.mxu0 0.0
        %2668 = vmatpush1.msra.mxu0 0.0
        %2669 = vmatprep.subr.mxu0 0.0
        %2670 = vmatpush1.msra.mxu0 0.0
        %2671 = vmatprep.mubr.f32.mxu0 0.0
        %2672 = vmatmul.mubr.f32.gmra.mrb[0].mxu0 %v1517
        %v2673 = vpop.f32.mrb[0].mxu0
        %v2674 = vadd.f32 %v2605, %v2673
        %v2675 = vpop.f32.mrb[0].mxu0
        %2676 = vmatprep.mubr.f32.mxu0 0.0
        %2677 = vmatmul.mubr.f32.gmra.mrb[0].mxu0 %v1520
        %v2678 = vpop.f32.mrb[0].mxu0
        %v2679 = vadd.f32 %v2605, %v2678
        %v2680 = vpop.f32.mrb[0].mxu0
        %2681 = vdwg.mxu0
        %s2682 = scalar_lea.vmem %s29, 64
        %v2683 = vld [vmem:[%s2682] sm:$0xff]
        %v2684 = vld [vmem:[%s2682 + $0x8] sm:$0xff]
        %v2685 = vld [vmem:[%s2682 + $0x10] sm:$0xff]
        %v2686 = vld [vmem:[%s2682 + $0x18] sm:$0xff]
        %s2687 = scalar_lea.vmem %s35, 2
        %v2688 = vld [vmem:[%s2687] sm:$0x1]
        %v2690 = vlaneseq
        %v2691 = vshrl.u32 %v2690, 7
        %v2692 = vsub.s32 0, %v2691
        %v2693 = vrot.slane %v2688, %v2692
        %2695 = vmatprep.subr.mxu0 0.0
        %2696 = vmatpush1.msra.mxu0 %v2683
        %2697 = vmatprep.subr.mxu0 0.0
        %2698 = vmatpush1.msra.mxu0 %v2684
        %2699 = vmatprep.subr.mxu0 0.0
        %2700 = vmatpush1.msra.mxu0 %v2685
        %2701 = vmatprep.subr.mxu0 0.0
        %2702 = vmatpush1.msra.mxu0 %v2686
        %2703 = vmatprep.subr.mxu0 0.0
        %2704 = vmatpush1.msra.mxu0 0.0
        %2705 = vmatprep.subr.mxu0 0.0
        %2706 = vmatpush1.msra.mxu0 0.0
        %2707 = vmatprep.subr.mxu0 0.0
        %2708 = vmatpush1.msra.mxu0 0.0
        %2709 = vmatprep.subr.mxu0 0.0
        %2710 = vmatpush1.msra.mxu0 0.0
        %2711 = vmatprep.subr.mxu0 0.0
        %2712 = vmatpush1.msra.mxu0 0.0
        %2713 = vmatprep.subr.mxu0 0.0
        %2714 = vmatpush1.msra.mxu0 0.0
        %2715 = vmatprep.subr.mxu0 0.0
        %2716 = vmatpush1.msra.mxu0 0.0
        %2717 = vmatprep.subr.mxu0 0.0
        %2718 = vmatpush1.msra.mxu0 0.0
        %2719 = vmatprep.subr.mxu0 0.0
        %2720 = vmatpush1.msra.mxu0 0.0
        %2721 = vmatprep.subr.mxu0 0.0
        %2722 = vmatpush1.msra.mxu0 0.0
        %2723 = vmatprep.subr.mxu0 0.0
        %2724 = vmatpush1.msra.mxu0 0.0
        %2725 = vmatprep.subr.mxu0 0.0
        %2726 = vmatpush1.msra.mxu0 0.0
        %2727 = vmatprep.subr.mxu0 0.0
        %2728 = vmatpush1.msra.mxu0 0.0
        %2729 = vmatprep.subr.mxu0 0.0
        %2730 = vmatpush1.msra.mxu0 0.0
        %2731 = vmatprep.subr.mxu0 0.0
        %2732 = vmatpush1.msra.mxu0 0.0
        %2733 = vmatprep.subr.mxu0 0.0
        %2734 = vmatpush1.msra.mxu0 0.0
        %2735 = vmatprep.subr.mxu0 0.0
        %2736 = vmatpush1.msra.mxu0 0.0
        %2737 = vmatprep.subr.mxu0 0.0
        %2738 = vmatpush1.msra.mxu0 0.0
        %2739 = vmatprep.subr.mxu0 0.0
        %2740 = vmatpush1.msra.mxu0 0.0
        %2741 = vmatprep.subr.mxu0 0.0
        %2742 = vmatpush1.msra.mxu0 0.0
        %2743 = vmatprep.subr.mxu0 0.0
        %2744 = vmatpush1.msra.mxu0 0.0
        %2745 = vmatprep.subr.mxu0 0.0
        %2746 = vmatpush1.msra.mxu0 0.0
        %2747 = vmatprep.subr.mxu0 0.0
        %2748 = vmatpush1.msra.mxu0 0.0
        %2749 = vmatprep.subr.mxu0 0.0
        %2750 = vmatpush1.msra.mxu0 0.0
        %2751 = vmatprep.subr.mxu0 0.0
        %2752 = vmatpush1.msra.mxu0 0.0
        %2753 = vmatprep.subr.mxu0 0.0
        %2754 = vmatpush1.msra.mxu0 0.0
        %2755 = vmatprep.subr.mxu0 0.0
        %2756 = vmatpush1.msra.mxu0 0.0
        %2757 = vmatprep.subr.mxu0 0.0
        %2758 = vmatpush1.msra.mxu0 0.0
        %2759 = vmatprep.mubr.f32.mxu0 0.0
        %2760 = vmatmul.mubr.f32.gmra.mrb[0].mxu0 %v1517
        %v2761 = vpop.f32.mrb[0].mxu0
        %v2762 = vadd.f32 %v2693, %v2761
        %v2763 = vpop.f32.mrb[0].mxu0
        %2764 = vmatprep.mubr.f32.mxu0 0.0
        %2765 = vmatmul.mubr.f32.gmra.mrb[0].mxu0 %v1520
        %v2766 = vpop.f32.mrb[0].mxu0
        %v2767 = vadd.f32 %v2693, %v2766
        %v2768 = vpop.f32.mrb[0].mxu0
        %2769 = vdwg.mxu0
        %s2770 = scalar_lea.vmem %s31, 64
        %v2771 = vld [vmem:[%s2770] sm:$0xff]
        %v2772 = vld [vmem:[%s2770 + $0x8] sm:$0xff]
        %v2773 = vld [vmem:[%s2770 + $0x10] sm:$0xff]
        %v2774 = vld [vmem:[%s2770 + $0x18] sm:$0xff]
        %s2775 = scalar_lea.vmem %s37, 2
        %v2776 = vld [vmem:[%s2775] sm:$0x1]
        %v2778 = vlaneseq
        %v2779 = vshrl.u32 %v2778, 7
        %v2780 = vsub.s32 0, %v2779
        %v2781 = vrot.slane %v2776, %v2780
        %2783 = vmatprep.subr.mxu0 0.0
        %2784 = vmatpush1.msra.mxu0 %v2771
        %2785 = vmatprep.subr.mxu0 0.0
        %2786 = vmatpush1.msra.mxu0 %v2772
        %2787 = vmatprep.subr.mxu0 0.0
        %2788 = vmatpush1.msra.mxu0 %v2773
        %2789 = vmatprep.subr.mxu0 0.0
        %2790 = vmatpush1.msra.mxu0 %v2774
        %2791 = vmatprep.subr.mxu0 0.0
        %2792 = vmatpush1.msra.mxu0 0.0
        %2793 = vmatprep.subr.mxu0 0.0
        %2794 = vmatpush1.msra.mxu0 0.0
        %2795 = vmatprep.subr.mxu0 0.0
        %2796 = vmatpush1.msra.mxu0 0.0
        %2797 = vmatprep.subr.mxu0 0.0
        %2798 = vmatpush1.msra.mxu0 0.0
        %2799 = vmatprep.subr.mxu0 0.0
        %2800 = vmatpush1.msra.mxu0 0.0
        %2801 = vmatprep.subr.mxu0 0.0
        %2802 = vmatpush1.msra.mxu0 0.0
        %2803 = vmatprep.subr.mxu0 0.0
        %2804 = vmatpush1.msra.mxu0 0.0
        %2805 = vmatprep.subr.mxu0 0.0
        %2806 = vmatpush1.msra.mxu0 0.0
        %2807 = vmatprep.subr.mxu0 0.0
        %2808 = vmatpush1.msra.mxu0 0.0
        %2809 = vmatprep.subr.mxu0 0.0
        %2810 = vmatpush1.msra.mxu0 0.0
        %2811 = vmatprep.subr.mxu0 0.0
        %2812 = vmatpush1.msra.mxu0 0.0
        %2813 = vmatprep.subr.mxu0 0.0
        %2814 = vmatpush1.msra.mxu0 0.0
        %2815 = vmatprep.subr.mxu0 0.0
        %2816 = vmatpush1.msra.mxu0 0.0
        %2817 = vmatprep.subr.mxu0 0.0
        %2818 = vmatpush1.msra.mxu0 0.0
        %2819 = vmatprep.subr.mxu0 0.0
        %2820 = vmatpush1.msra.mxu0 0.0
        %2821 = vmatprep.subr.mxu0 0.0
        %2822 = vmatpush1.msra.mxu0 0.0
        %2823 = vmatprep.subr.mxu0 0.0
        %2824 = vmatpush1.msra.mxu0 0.0
        %2825 = vmatprep.subr.mxu0 0.0
        %2826 = vmatpush1.msra.mxu0 0.0
        %2827 = vmatprep.subr.mxu0 0.0
        %2828 = vmatpush1.msra.mxu0 0.0
        %2829 = vmatprep.subr.mxu0 0.0
        %2830 = vmatpush1.msra.mxu0 0.0
        %2831 = vmatprep.subr.mxu0 0.0
        %2832 = vmatpush1.msra.mxu0 0.0
        %2833 = vmatprep.subr.mxu0 0.0
        %2834 = vmatpush1.msra.mxu0 0.0
        %2835 = vmatprep.subr.mxu0 0.0
        %2836 = vmatpush1.msra.mxu0 0.0
        %2837 = vmatprep.subr.mxu0 0.0
        %2838 = vmatpush1.msra.mxu0 0.0
        %2839 = vmatprep.subr.mxu0 0.0
        %2840 = vmatpush1.msra.mxu0 0.0
        %2841 = vmatprep.subr.mxu0 0.0
        %2842 = vmatpush1.msra.mxu0 0.0
        %2843 = vmatprep.subr.mxu0 0.0
        %2844 = vmatpush1.msra.mxu0 0.0
        %2845 = vmatprep.subr.mxu0 0.0
        %2846 = vmatpush1.msra.mxu0 0.0
        %2847 = vmatprep.mubr.f32.mxu0 0.0
        %2848 = vmatmul.mubr.f32.gmra.mrb[0].mxu0 %v1517
        %v2849 = vpop.f32.mrb[0].mxu0
        %v2850 = vadd.f32 %v2781, %v2849
        %v2851 = vpop.f32.mrb[0].mxu0
        %2852 = vmatprep.mubr.f32.mxu0 0.0
        %2853 = vmatmul.mubr.f32.gmra.mrb[0].mxu0 %v1520
        %v2854 = vpop.f32.mrb[0].mxu0
        %v2855 = vadd.f32 %v2781, %v2854
        %v2856 = vpop.f32.mrb[0].mxu0
        %2857 = vdwg.mxu0
        %v2859 = vsel %vm1769, %v2674, 0
        %v2862 = vsel %vm1769, %v2679, 0
        %v2865 = vsel %vm1769, %v2762, 0
        %v2868 = vsel %vm1769, %v2767, 0
        %2870 = vmatprep.subr.mxu0 0.0
        %2871 = vmatpush1.xpose.msra.mxu0 %v2865
        %2872 = vmatprep.subr.mxu0 0.0
        %2873 = vmatpush1.xpose.msra.mxu0 %v2868
        %2874 = vmatprep.subr.mxu0 0.0
        %2875 = vmatpush1.xpose.msra.mxu0 0.0
        %2876 = vmatprep.subr.mxu0 0.0
        %2877 = vmatpush1.xpose.msra.mxu0 0.0
        %2878 = vmatprep.subr.mxu0 0.0
        %2879 = vmatpush1.xpose.msra.mxu0 0.0
        %2880 = vmatprep.subr.mxu0 0.0
        %2881 = vmatpush1.xpose.msra.mxu0 0.0
        %2882 = vmatprep.subr.mxu0 0.0
        %2883 = vmatpush1.xpose.msra.mxu0 0.0
        %2884 = vmatprep.subr.mxu0 0.0
        %2885 = vmatpush1.xpose.msra.mxu0 0.0
        %2886 = vmatprep.subr.mxu0 0.0
        %2887 = vmatpush1.xpose.msra.mxu0 0.0
        %2888 = vmatprep.subr.mxu0 0.0
        %2889 = vmatpush1.xpose.msra.mxu0 0.0
        %2890 = vmatprep.subr.mxu0 0.0
        %2891 = vmatpush1.xpose.msra.mxu0 0.0
        %2892 = vmatprep.subr.mxu0 0.0
        %2893 = vmatpush1.xpose.msra.mxu0 0.0
        %2894 = vmatprep.subr.mxu0 0.0
        %2895 = vmatpush1.xpose.msra.mxu0 0.0
        %2896 = vmatprep.subr.mxu0 0.0
        %2897 = vmatpush1.xpose.msra.mxu0 0.0
        %2898 = vmatprep.subr.mxu0 0.0
        %2899 = vmatpush1.xpose.msra.mxu0 0.0
        %2900 = vmatprep.subr.mxu0 0.0
        %2901 = vmatpush1.xpose.msra.mxu0 0.0
        %2902 = vmatprep.subr.mxu0 0.0
        %2903 = vmatpush1.xpose.msra.mxu0 0.0
        %2904 = vmatprep.subr.mxu0 0.0
        %2905 = vmatpush1.xpose.msra.mxu0 0.0
        %2906 = vmatprep.subr.mxu0 0.0
        %2907 = vmatpush1.xpose.msra.mxu0 0.0
        %2908 = vmatprep.subr.mxu0 0.0
        %2909 = vmatpush1.xpose.msra.mxu0 0.0
        %2910 = vmatprep.subr.mxu0 0.0
        %2911 = vmatpush1.xpose.msra.mxu0 0.0
        %2912 = vmatprep.subr.mxu0 0.0
        %2913 = vmatpush1.xpose.msra.mxu0 0.0
        %2914 = vmatprep.subr.mxu0 0.0
        %2915 = vmatpush1.xpose.msra.mxu0 0.0
        %2916 = vmatprep.subr.mxu0 0.0
        %2917 = vmatpush1.xpose.msra.mxu0 0.0
        %2918 = vmatprep.subr.mxu0 0.0
        %2919 = vmatpush1.xpose.msra.mxu0 0.0
        %2920 = vmatprep.subr.mxu0 0.0
        %2921 = vmatpush1.xpose.msra.mxu0 0.0
        %2922 = vmatprep.subr.mxu0 0.0
        %2923 = vmatpush1.xpose.msra.mxu0 0.0
        %2924 = vmatprep.subr.mxu0 0.0
        %2925 = vmatpush1.xpose.msra.mxu0 0.0
        %2926 = vmatprep.subr.mxu0 0.0
        %2927 = vmatpush1.xpose.msra.mxu0 0.0
        %2928 = vmatprep.subr.mxu0 0.0
        %2929 = vmatpush1.xpose.msra.mxu0 0.0
        %2930 = vmatprep.subr.mxu0 0.0
        %2931 = vmatpush1.xpose.msra.mxu0 0.0
        %2932 = vmatprep.subr.mxu0 0.0
        %2933 = vmatpush1.xpose.msra.mxu0 0.0
        %2934 = vmatprep.mubr.f32.mxu0 0.0
        %2935 = vmatmul.mubr.f32.gmra.mrb[0].mxu0 %v2859
        %v2936 = vpop.f32.mrb[0].mxu0
        %v2937 = vadd.f32 0.0, %v2936
        %v2938 = vpop.f32.mrb[0].mxu0
        %2939 = vmatprep.mubr.f32.mxu0 0.0
        %2940 = vmatmul.mubr.f32.gmra.mrb[0].mxu0 %v2862
        %v2941 = vpop.f32.mrb[0].mxu0
        %v2942 = vadd.f32 0.0, %v2941
        %v2943 = vpop.f32.mrb[0].mxu0
        %2944 = vdwg.mxu0
        %v2945 = vmul.f32 %v2937, 0.35355338
        %v2946 = vmul.f32 %v2942, 0.35355338
        %v2947 = vadd.f32 %v2945, %v1863
        %v2948 = vadd.f32 %v2946, %v1863
        %v2949 = vsel %vm1867, %v2947, -inf
        %2950 = vmax.xlane.f32.xlu0 %v2949
        %v2951 = vpop.xlane.xlu0 %2950
        %v2952 = vsel %vm1867, %v2948, -inf
        %2953 = vmax.xlane.f32.xlu0 %v2952
        %v2954 = vpop.xlane.xlu0 %2953
        %v2955 = vsub.f32 %v2947, %v2951
        %v2956 = vsub.f32 %v2948, %v2954
        %v2957 = vmul.f32 %v2955, 1.442695
        %v2958 = vpow.pop %v2957
        %v2959 = vmul.f32 %v2956, 1.442695
        %v2960 = vpow.pop %v2959
        %v2961 = vsel %vm1867, %v2958, 0.0
        %2962 = vadd.xlane.f32.xlu0 %v2961
        %v2963 = vpop.xlane.xlu0 %2962
        %v2964 = vsel %vm1867, %v2960, 0.0
        %2965 = vadd.xlane.f32.xlu0 %v2964
        %v2966 = vpop.xlane.xlu0 %2965
        %v2967 = vrcp.pop %v2963
        %v2968 = vmul.f32 %v2958, %v2967
        %v2969 = vrcp.pop %v2966
        %v2970 = vmul.f32 %v2960, %v2969
        %v2972 = vsel %vm1867, %v2968, 0
        %v2975 = vsel %vm1867, %v2970, 0
        %2977 = vmatprep.subr.mxu0 0.0
        %2978 = vmatpush1.msra.mxu0 %v2850
        %2979 = vmatprep.subr.mxu0 0.0
        %2980 = vmatpush1.msra.mxu0 %v2855
        %2981 = vmatprep.subr.mxu0 0.0
        %2982 = vmatpush1.msra.mxu0 0.0
        %2983 = vmatprep.subr.mxu0 0.0
        %2984 = vmatpush1.msra.mxu0 0.0
        %2985 = vmatprep.subr.mxu0 0.0
        %2986 = vmatpush1.msra.mxu0 0.0
        %2987 = vmatprep.subr.mxu0 0.0
        %2988 = vmatpush1.msra.mxu0 0.0
        %2989 = vmatprep.subr.mxu0 0.0
        %2990 = vmatpush1.msra.mxu0 0.0
        %2991 = vmatprep.subr.mxu0 0.0
        %2992 = vmatpush1.msra.mxu0 0.0
        %2993 = vmatprep.subr.mxu0 0.0
        %2994 = vmatpush1.msra.mxu0 0.0
        %2995 = vmatprep.subr.mxu0 0.0
        %2996 = vmatpush1.msra.mxu0 0.0
        %2997 = vmatprep.subr.mxu0 0.0
        %2998 = vmatpush1.msra.mxu0 0.0
        %2999 = vmatprep.subr.mxu0 0.0
        %3000 = vmatpush1.msra.mxu0 0.0
        %3001 = vmatprep.subr.mxu0 0.0
        %3002 = vmatpush1.msra.mxu0 0.0
        %3003 = vmatprep.subr.mxu0 0.0
        %3004 = vmatpush1.msra.mxu0 0.0
        %3005 = vmatprep.subr.mxu0 0.0
        %3006 = vmatpush1.msra.mxu0 0.0
        %3007 = vmatprep.subr.mxu0 0.0
        %3008 = vmatpush1.msra.mxu0 0.0
        %3009 = vmatprep.subr.mxu0 0.0
        %3010 = vmatpush1.msra.mxu0 0.0
        %3011 = vmatprep.subr.mxu0 0.0
        %3012 = vmatpush1.msra.mxu0 0.0
        %3013 = vmatprep.subr.mxu0 0.0
        %3014 = vmatpush1.msra.mxu0 0.0
        %3015 = vmatprep.subr.mxu0 0.0
        %3016 = vmatpush1.msra.mxu0 0.0
        %3017 = vmatprep.subr.mxu0 0.0
        %3018 = vmatpush1.msra.mxu0 0.0
        %3019 = vmatprep.subr.mxu0 0.0
        %3020 = vmatpush1.msra.mxu0 0.0
        %3021 = vmatprep.subr.mxu0 0.0
        %3022 = vmatpush1.msra.mxu0 0.0
        %3023 = vmatprep.subr.mxu0 0.0
        %3024 = vmatpush1.msra.mxu0 0.0
        %3025 = vmatprep.subr.mxu0 0.0
        %3026 = vmatpush1.msra.mxu0 0.0
        %3027 = vmatprep.subr.mxu0 0.0
        %3028 = vmatpush1.msra.mxu0 0.0
        %3029 = vmatprep.subr.mxu0 0.0
        %3030 = vmatpush1.msra.mxu0 0.0
        %3031 = vmatprep.subr.mxu0 0.0
        %3032 = vmatpush1.msra.mxu0 0.0
        %3033 = vmatprep.subr.mxu0 0.0
        %3034 = vmatpush1.msra.mxu0 0.0
        %3035 = vmatprep.subr.mxu0 0.0
        %3036 = vmatpush1.msra.mxu0 0.0
        %3037 = vmatprep.subr.mxu0 0.0
        %3038 = vmatpush1.msra.mxu0 0.0
        %3039 = vmatprep.subr.mxu0 0.0
        %3040 = vmatpush1.msra.mxu0 0.0
        %3041 = vmatprep.mubr.f32.mxu0 0.0
        %3042 = vmatmul.mubr.f32.gmra.mrb[0].mxu0 %v2972
        %v3043 = vpop.f32.mrb[0].mxu0
        %v3044 = vadd.f32 0.0, %v3043
        %v3045 = vpop.f32.mrb[0].mxu0
        %3046 = vmatprep.mubr.f32.mxu0 0.0
        %3047 = vmatmul.mubr.f32.gmra.mrb[0].mxu0 %v2975
        %v3048 = vpop.f32.mrb[0].mxu0
        %v3049 = vadd.f32 0.0, %v3048
        %v3050 = vpop.f32.mrb[0].mxu0
        %3051 = vdwg.mxu0
        %s3052 = scalar_lea.vmem %s39, 16
        %v3053 = vld [vmem:[%s3052] sm:$0xff]
        %v3055 = vsel %vm1769, %v3044, 0
        %v3058 = vsel %vm1769, %v3049, 0
        %3060 = vmatprep.subr.mxu0 0.0
        %3061 = vmatpush1.msra.mxu0 %v3053
        %3062 = vmatprep.subr.mxu0 0.0
        %3063 = vmatpush1.msra.mxu0 0.0
        %3064 = vmatprep.subr.mxu0 0.0
        %3065 = vmatpush1.msra.mxu0 0.0
        %3066 = vmatprep.subr.mxu0 0.0
        %3067 = vmatpush1.msra.mxu0 0.0
        %3068 = vmatprep.subr.mxu0 0.0
        %3069 = vmatpush1.msra.mxu0 0.0
        %3070 = vmatprep.subr.mxu0 0.0
        %3071 = vmatpush1.msra.mxu0 0.0
        %3072 = vmatprep.subr.mxu0 0.0
        %3073 = vmatpush1.msra.mxu0 0.0
        %3074 = vmatprep.subr.mxu0 0.0
        %3075 = vmatpush1.msra.mxu0 0.0
        %3076 = vmatprep.subr.mxu0 0.0
        %3077 = vmatpush1.msra.mxu0 0.0
        %3078 = vmatprep.subr.mxu0 0.0
        %3079 = vmatpush1.msra.mxu0 0.0
        %3080 = vmatprep.subr.mxu0 0.0
        %3081 = vmatpush1.msra.mxu0 0.0
        %3082 = vmatprep.subr.mxu0 0.0
        %3083 = vmatpush1.msra.mxu0 0.0
        %3084 = vmatprep.subr.mxu0 0.0
        %3085 = vmatpush1.msra.mxu0 0.0
        %3086 = vmatprep.subr.mxu0 0.0
        %3087 = vmatpush1.msra.mxu0 0.0
        %3088 = vmatprep.subr.mxu0 0.0
        %3089 = vmatpush1.msra.mxu0 0.0
        %3090 = vmatprep.subr.mxu0 0.0
        %3091 = vmatpush1.msra.mxu0 0.0
        %3092 = vmatprep.subr.mxu0 0.0
        %3093 = vmatpush1.msra.mxu0 0.0
        %3094 = vmatprep.subr.mxu0 0.0
        %3095 = vmatpush1.msra.mxu0 0.0
        %3096 = vmatprep.subr.mxu0 0.0
        %3097 = vmatpush1.msra.mxu0 0.0
        %3098 = vmatprep.subr.mxu0 0.0
        %3099 = vmatpush1.msra.mxu0 0.0
        %3100 = vmatprep.subr.mxu0 0.0
        %3101 = vmatpush1.msra.mxu0 0.0
        %3102 = vmatprep.subr.mxu0 0.0
        %3103 = vmatpush1.msra.mxu0 0.0
        %3104 = vmatprep.subr.mxu0 0.0
        %3105 = vmatpush1.msra.mxu0 0.0
        %3106 = vmatprep.subr.mxu0 0.0
        %3107 = vmatpush1.msra.mxu0 0.0
        %3108 = vmatprep.subr.mxu0 0.0
        %3109 = vmatpush1.msra.mxu0 0.0
        %3110 = vmatprep.subr.mxu0 0.0
        %3111 = vmatpush1.msra.mxu0 0.0
        %3112 = vmatprep.subr.mxu0 0.0
        %3113 = vmatpush1.msra.mxu0 0.0
        %3114 = vmatprep.subr.mxu0 0.0
        %3115 = vmatpush1.msra.mxu0 0.0
        %3116 = vmatprep.subr.mxu0 0.0
        %3117 = vmatpush1.msra.mxu0 0.0
        %3118 = vmatprep.subr.mxu0 0.0
        %3119 = vmatpush1.msra.mxu0 0.0
        %3120 = vmatprep.subr.mxu0 0.0
        %3121 = vmatpush1.msra.mxu0 0.0
        %3122 = vmatprep.subr.mxu0 0.0
        %3123 = vmatpush1.msra.mxu0 0.0
        %3124 = vmatprep.mubr.f32.mxu0 0.0
        %3125 = vmatmul.mubr.f32.gmra.mrb[0].mxu0 %v3055
        %v3126 = vpop.f32.mrb[0].mxu0
        %v3127 = vadd.f32 0.0, %v3126
        %v3128 = vpop.f32.mrb[0].mxu0
        %3129 = vmatprep.mubr.f32.mxu0 0.0
        %3130 = vmatmul.mubr.f32.gmra.mrb[0].mxu0 %v3058
        %v3131 = vpop.f32.mrb[0].mxu0
        %v3132 = vadd.f32 0.0, %v3131
        %v3133 = vpop.f32.mrb[0].mxu0
        %3134 = vdwg.mxu0
        %v3135 = vadd.f32 %v2586, %v3127
        %v3136 = vadd.f32 %v2591, %v3132
        %s3137 = scalar_lea.vmem %s27, 96
        %v3138 = vld [vmem:[%s3137] sm:$0xff]
        %v3139 = vld [vmem:[%s3137 + $0x8] sm:$0xff]
        %v3140 = vld [vmem:[%s3137 + $0x10] sm:$0xff]
        %v3141 = vld [vmem:[%s3137 + $0x18] sm:$0xff]
        %s3142 = scalar_lea.vmem %s33, 3
        %v3143 = vld [vmem:[%s3142] sm:$0x1]
        %v3145 = vlaneseq
        %v3146 = vshrl.u32 %v3145, 7
        %v3147 = vsub.s32 0, %v3146
        %v3148 = vrot.slane %v3143, %v3147
        %3150 = vmatprep.subr.mxu0 0.0
        %3151 = vmatpush1.msra.mxu0 %v3138
        %3152 = vmatprep.subr.mxu0 0.0
        %3153 = vmatpush1.msra.mxu0 %v3139
        %3154 = vmatprep.subr.mxu0 0.0
        %3155 = vmatpush1.msra.mxu0 %v3140
        %3156 = vmatprep.subr.mxu0 0.0
        %3157 = vmatpush1.msra.mxu0 %v3141
        %3158 = vmatprep.subr.mxu0 0.0
        %3159 = vmatpush1.msra.mxu0 0.0
        %3160 = vmatprep.subr.mxu0 0.0
        %3161 = vmatpush1.msra.mxu0 0.0
        %3162 = vmatprep.subr.mxu0 0.0
        %3163 = vmatpush1.msra.mxu0 0.0
        %3164 = vmatprep.subr.mxu0 0.0
        %3165 = vmatpush1.msra.mxu0 0.0
        %3166 = vmatprep.subr.mxu0 0.0
        %3167 = vmatpush1.msra.mxu0 0.0
        %3168 = vmatprep.subr.mxu0 0.0
        %3169 = vmatpush1.msra.mxu0 0.0
        %3170 = vmatprep.subr.mxu0 0.0
        %3171 = vmatpush1.msra.mxu0 0.0
        %3172 = vmatprep.subr.mxu0 0.0
        %3173 = vmatpush1.msra.mxu0 0.0
        %3174 = vmatprep.subr.mxu0 0.0
        %3175 = vmatpush1.msra.mxu0 0.0
        %3176 = vmatprep.subr.mxu0 0.0
        %3177 = vmatpush1.msra.mxu0 0.0
        %3178 = vmatprep.subr.mxu0 0.0
        %3179 = vmatpush1.msra.mxu0 0.0
        %3180 = vmatprep.subr.mxu0 0.0
        %3181 = vmatpush1.msra.mxu0 0.0
        %3182 = vmatprep.subr.mxu0 0.0
        %3183 = vmatpush1.msra.mxu0 0.0
        %3184 = vmatprep.subr.mxu0 0.0
        %3185 = vmatpush1.msra.mxu0 0.0
        %3186 = vmatprep.subr.mxu0 0.0
        %3187 = vmatpush1.msra.mxu0 0.0
        %3188 = vmatprep.subr.mxu0 0.0
        %3189 = vmatpush1.msra.mxu0 0.0
        %3190 = vmatprep.subr.mxu0 0.0
        %3191 = vmatpush1.msra.mxu0 0.0
        %3192 = vmatprep.subr.mxu0 0.0
        %3193 = vmatpush1.msra.mxu0 0.0
        %3194 = vmatprep.subr.mxu0 0.0
        %3195 = vmatpush1.msra.mxu0 0.0
        %3196 = vmatprep.subr.mxu0 0.0
        %3197 = vmatpush1.msra.mxu0 0.0
        %3198 = vmatprep.subr.mxu0 0.0
        %3199 = vmatpush1.msra.mxu0 0.0
        %3200 = vmatprep.subr.mxu0 0.0
        %3201 = vmatpush1.msra.mxu0 0.0
        %3202 = vmatprep.subr.mxu0 0.0
        %3203 = vmatpush1.msra.mxu0 0.0
        %3204 = vmatprep.subr.mxu0 0.0
        %3205 = vmatpush1.msra.mxu0 0.0
        %3206 = vmatprep.subr.mxu0 0.0
        %3207 = vmatpush1.msra.mxu0 0.0
        %3208 = vmatprep.subr.mxu0 0.0
        %3209 = vmatpush1.msra.mxu0 0.0
        %3210 = vmatprep.subr.mxu0 0.0
        %3211 = vmatpush1.msra.mxu0 0.0
        %3212 = vmatprep.subr.mxu0 0.0
        %3213 = vmatpush1.msra.mxu0 0.0
        %3214 = vmatprep.mubr.f32.mxu0 0.0
        %3215 = vmatmul.mubr.f32.gmra.mrb[0].mxu0 %v1517
        %v3216 = vpop.f32.mrb[0].mxu0
        %v3217 = vadd.f32 %v3148, %v3216
        %v3218 = vpop.f32.mrb[0].mxu0
        %3219 = vmatprep.mubr.f32.mxu0 0.0
        %3220 = vmatmul.mubr.f32.gmra.mrb[0].mxu0 %v1520
        %v3221 = vpop.f32.mrb[0].mxu0
        %v3222 = vadd.f32 %v3148, %v3221
        %v3223 = vpop.f32.mrb[0].mxu0
        %3224 = vdwg.mxu0
        %s3225 = scalar_lea.vmem %s29, 96
        %v3226 = vld [vmem:[%s3225] sm:$0xff]
        %v3227 = vld [vmem:[%s3225 + $0x8] sm:$0xff]
        %v3228 = vld [vmem:[%s3225 + $0x10] sm:$0xff]
        %v3229 = vld [vmem:[%s3225 + $0x18] sm:$0xff]
        %s3230 = scalar_lea.vmem %s35, 3
        %v3231 = vld [vmem:[%s3230] sm:$0x1]
        %v3233 = vlaneseq
        %v3234 = vshrl.u32 %v3233, 7
        %v3235 = vsub.s32 0, %v3234
        %v3236 = vrot.slane %v3231, %v3235
        %3238 = vmatprep.subr.mxu0 0.0
        %3239 = vmatpush1.msra.mxu0 %v3226
        %3240 = vmatprep.subr.mxu0 0.0
        %3241 = vmatpush1.msra.mxu0 %v3227
        %3242 = vmatprep.subr.mxu0 0.0
        %3243 = vmatpush1.msra.mxu0 %v3228
        %3244 = vmatprep.subr.mxu0 0.0
        %3245 = vmatpush1.msra.mxu0 %v3229
        %3246 = vmatprep.subr.mxu0 0.0
        %3247 = vmatpush1.msra.mxu0 0.0
        %3248 = vmatprep.subr.mxu0 0.0
        %3249 = vmatpush1.msra.mxu0 0.0
        %3250 = vmatprep.subr.mxu0 0.0
        %3251 = vmatpush1.msra.mxu0 0.0
        %3252 = vmatprep.subr.mxu0 0.0
        %3253 = vmatpush1.msra.mxu0 0.0
        %3254 = vmatprep.subr.mxu0 0.0
        %3255 = vmatpush1.msra.mxu0 0.0
        %3256 = vmatprep.subr.mxu0 0.0
        %3257 = vmatpush1.msra.mxu0 0.0
        %3258 = vmatprep.subr.mxu0 0.0
        %3259 = vmatpush1.msra.mxu0 0.0
        %3260 = vmatprep.subr.mxu0 0.0
        %3261 = vmatpush1.msra.mxu0 0.0
        %3262 = vmatprep.subr.mxu0 0.0
        %3263 = vmatpush1.msra.mxu0 0.0
        %3264 = vmatprep.subr.mxu0 0.0
        %3265 = vmatpush1.msra.mxu0 0.0
        %3266 = vmatprep.subr.mxu0 0.0
        %3267 = vmatpush1.msra.mxu0 0.0
        %3268 = vmatprep.subr.mxu0 0.0
        %3269 = vmatpush1.msra.mxu0 0.0
        %3270 = vmatprep.subr.mxu0 0.0
        %3271 = vmatpush1.msra.mxu0 0.0
        %3272 = vmatprep.subr.mxu0 0.0
        %3273 = vmatpush1.msra.mxu0 0.0
        %3274 = vmatprep.subr.mxu0 0.0
        %3275 = vmatpush1.msra.mxu0 0.0
        %3276 = vmatprep.subr.mxu0 0.0
        %3277 = vmatpush1.msra.mxu0 0.0
        %3278 = vmatprep.subr.mxu0 0.0
        %3279 = vmatpush1.msra.mxu0 0.0
        %3280 = vmatprep.subr.mxu0 0.0
        %3281 = vmatpush1.msra.mxu0 0.0
        %3282 = vmatprep.subr.mxu0 0.0
        %3283 = vmatpush1.msra.mxu0 0.0
        %3284 = vmatprep.subr.mxu0 0.0
        %3285 = vmatpush1.msra.mxu0 0.0
        %3286 = vmatprep.subr.mxu0 0.0
        %3287 = vmatpush1.msra.mxu0 0.0
        %3288 = vmatprep.subr.mxu0 0.0
        %3289 = vmatpush1.msra.mxu0 0.0
        %3290 = vmatprep.subr.mxu0 0.0
        %3291 = vmatpush1.msra.mxu0 0.0
        %3292 = vmatprep.subr.mxu0 0.0
        %3293 = vmatpush1.msra.mxu0 0.0
        %3294 = vmatprep.subr.mxu0 0.0
        %3295 = vmatpush1.msra.mxu0 0.0
        %3296 = vmatprep.subr.mxu0 0.0
        %3297 = vmatpush1.msra.mxu0 0.0
        %3298 = vmatprep.subr.mxu0 0.0
        %3299 = vmatpush1.msra.mxu0 0.0
        %3300 = vmatprep.subr.mxu0 0.0
        %3301 = vmatpush1.msra.mxu0 0.0
        %3302 = vmatprep.mubr.f32.mxu0 0.0
        %3303 = vmatmul.mubr.f32.gmra.mrb[0].mxu0 %v1517
        %v3304 = vpop.f32.mrb[0].mxu0
        %v3305 = vadd.f32 %v3236, %v3304
        %v3306 = vpop.f32.mrb[0].mxu0
        %3307 = vmatprep.mubr.f32.mxu0 0.0
        %3308 = vmatmul.mubr.f32.gmra.mrb[0].mxu0 %v1520
        %v3309 = vpop.f32.mrb[0].mxu0
        %v3310 = vadd.f32 %v3236, %v3309
        %v3311 = vpop.f32.mrb[0].mxu0
        %3312 = vdwg.mxu0
        %s3313 = scalar_lea.vmem %s31, 96
        %v3314 = vld [vmem:[%s3313] sm:$0xff]
        %v3315 = vld [vmem:[%s3313 + $0x8] sm:$0xff]
        %v3316 = vld [vmem:[%s3313 + $0x10] sm:$0xff]
        %v3317 = vld [vmem:[%s3313 + $0x18] sm:$0xff]
        %s3318 = scalar_lea.vmem %s37, 3
        %v3319 = vld [vmem:[%s3318] sm:$0x1]
        %v3321 = vlaneseq
        %v3322 = vshrl.u32 %v3321, 7
        %v3323 = vsub.s32 0, %v3322
        %v3324 = vrot.slane %v3319, %v3323
        %3326 = vmatprep.subr.mxu0 0.0
        %3327 = vmatpush1.msra.mxu0 %v3314
        %3328 = vmatprep.subr.mxu0 0.0
        %3329 = vmatpush1.msra.mxu0 %v3315
        %3330 = vmatprep.subr.mxu0 0.0
        %3331 = vmatpush1.msra.mxu0 %v3316
        %3332 = vmatprep.subr.mxu0 0.0
        %3333 = vmatpush1.msra.mxu0 %v3317
        %3334 = vmatprep.subr.mxu0 0.0
        %3335 = vmatpush1.msra.mxu0 0.0
        %3336 = vmatprep.subr.mxu0 0.0
        %3337 = vmatpush1.msra.mxu0 0.0
        %3338 = vmatprep.subr.mxu0 0.0
        %3339 = vmatpush1.msra.mxu0 0.0
        %3340 = vmatprep.subr.mxu0 0.0
        %3341 = vmatpush1.msra.mxu0 0.0
        %3342 = vmatprep.subr.mxu0 0.0
        %3343 = vmatpush1.msra.mxu0 0.0
        %3344 = vmatprep.subr.mxu0 0.0
        %3345 = vmatpush1.msra.mxu0 0.0
        %3346 = vmatprep.subr.mxu0 0.0
        %3347 = vmatpush1.msra.mxu0 0.0
        %3348 = vmatprep.subr.mxu0 0.0
        %3349 = vmatpush1.msra.mxu0 0.0
        %3350 = vmatprep.subr.mxu0 0.0
        %3351 = vmatpush1.msra.mxu0 0.0
        %3352 = vmatprep.subr.mxu0 0.0
        %3353 = vmatpush1.msra.mxu0 0.0
        %3354 = vmatprep.subr.mxu0 0.0
        %3355 = vmatpush1.msra.mxu0 0.0
        %3356 = vmatprep.subr.mxu0 0.0
        %3357 = vmatpush1.msra.mxu0 0.0
        %3358 = vmatprep.subr.mxu0 0.0
        %3359 = vmatpush1.msra.mxu0 0.0
        %3360 = vmatprep.subr.mxu0 0.0
        %3361 = vmatpush1.msra.mxu0 0.0
        %3362 = vmatprep.subr.mxu0 0.0
        %3363 = vmatpush1.msra.mxu0 0.0
        %3364 = vmatprep.subr.mxu0 0.0
        %3365 = vmatpush1.msra.mxu0 0.0
        %3366 = vmatprep.subr.mxu0 0.0
        %3367 = vmatpush1.msra.mxu0 0.0
        %3368 = vmatprep.subr.mxu0 0.0
        %3369 = vmatpush1.msra.mxu0 0.0
        %3370 = vmatprep.subr.mxu0 0.0
        %3371 = vmatpush1.msra.mxu0 0.0
        %3372 = vmatprep.subr.mxu0 0.0
        %3373 = vmatpush1.msra.mxu0 0.0
        %3374 = vmatprep.subr.mxu0 0.0
        %3375 = vmatpush1.msra.mxu0 0.0
        %3376 = vmatprep.subr.mxu0 0.0
        %3377 = vmatpush1.msra.mxu0 0.0
        %3378 = vmatprep.subr.mxu0 0.0
        %3379 = vmatpush1.msra.mxu0 0.0
        %3380 = vmatprep.subr.mxu0 0.0
        %3381 = vmatpush1.msra.mxu0 0.0
        %3382 = vmatprep.subr.mxu0 0.0
        %3383 = vmatpush1.msra.mxu0 0.0
        %3384 = vmatprep.subr.mxu0 0.0
        %3385 = vmatpush1.msra.mxu0 0.0
        %3386 = vmatprep.subr.mxu0 0.0
        %3387 = vmatpush1.msra.mxu0 0.0
        %3388 = vmatprep.subr.mxu0 0.0
        %3389 = vmatpush1.msra.mxu0 0.0
        %3390 = vmatprep.mubr.f32.mxu0 0.0
        %3391 = vmatmul.mubr.f32.gmra.mrb[0].mxu0 %v1517
        %v3392 = vpop.f32.mrb[0].mxu0
        %v3393 = vadd.f32 %v3324, %v3392
        %v3394 = vpop.f32.mrb[0].mxu0
        %3395 = vmatprep.mubr.f32.mxu0 0.0
        %3396 = vmatmul.mubr.f32.gmra.mrb[0].mxu0 %v1520
        %v3397 = vpop.f32.mrb[0].mxu0
        %v3398 = vadd.f32 %v3324, %v3397
        %v3399 = vpop.f32.mrb[0].mxu0
        %3400 = vdwg.mxu0
        %v3402 = vsel %vm1769, %v3217, 0
        %v3405 = vsel %vm1769, %v3222, 0
        %v3408 = vsel %vm1769, %v3305, 0
        %v3411 = vsel %vm1769, %v3310, 0
        %3413 = vmatprep.subr.mxu0 0.0
        %3414 = vmatpush1.xpose.msra.mxu0 %v3408
        %3415 = vmatprep.subr.mxu0 0.0
        %3416 = vmatpush1.xpose.msra.mxu0 %v3411
        %3417 = vmatprep.subr.mxu0 0.0
        %3418 = vmatpush1.xpose.msra.mxu0 0.0
        %3419 = vmatprep.subr.mxu0 0.0
        %3420 = vmatpush1.xpose.msra.mxu0 0.0
        %3421 = vmatprep.subr.mxu0 0.0
        %3422 = vmatpush1.xpose.msra.mxu0 0.0
        %3423 = vmatprep.subr.mxu0 0.0
        %3424 = vmatpush1.xpose.msra.mxu0 0.0
        %3425 = vmatprep.subr.mxu0 0.0
        %3426 = vmatpush1.xpose.msra.mxu0 0.0
        %3427 = vmatprep.subr.mxu0 0.0
        %3428 = vmatpush1.xpose.msra.mxu0 0.0
        %3429 = vmatprep.subr.mxu0 0.0
        %3430 = vmatpush1.xpose.msra.mxu0 0.0
        %3431 = vmatprep.subr.mxu0 0.0
        %3432 = vmatpush1.xpose.msra.mxu0 0.0
        %3433 = vmatprep.subr.mxu0 0.0
        %3434 = vmatpush1.xpose.msra.mxu0 0.0
        %3435 = vmatprep.subr.mxu0 0.0
        %3436 = vmatpush1.xpose.msra.mxu0 0.0
        %3437 = vmatprep.subr.mxu0 0.0
        %3438 = vmatpush1.xpose.msra.mxu0 0.0
        %3439 = vmatprep.subr.mxu0 0.0
        %3440 = vmatpush1.xpose.msra.mxu0 0.0
        %3441 = vmatprep.subr.mxu0 0.0
        %3442 = vmatpush1.xpose.msra.mxu0 0.0
        %3443 = vmatprep.subr.mxu0 0.0
        %3444 = vmatpush1.xpose.msra.mxu0 0.0
        %3445 = vmatprep.subr.mxu0 0.0
        %3446 = vmatpush1.xpose.msra.mxu0 0.0
        %3447 = vmatprep.subr.mxu0 0.0
        %3448 = vmatpush1.xpose.msra.mxu0 0.0
        %3449 = vmatprep.subr.mxu0 0.0
        %3450 = vmatpush1.xpose.msra.mxu0 0.0
        %3451 = vmatprep.subr.mxu0 0.0
        %3452 = vmatpush1.xpose.msra.mxu0 0.0
        %3453 = vmatprep.subr.mxu0 0.0
        %3454 = vmatpush1.xpose.msra.mxu0 0.0
        %3455 = vmatprep.subr.mxu0 0.0
        %3456 = vmatpush1.xpose.msra.mxu0 0.0
        %3457 = vmatprep.subr.mxu0 0.0
        %3458 = vmatpush1.xpose.msra.mxu0 0.0
        %3459 = vmatprep.subr.mxu0 0.0
        %3460 = vmatpush1.xpose.msra.mxu0 0.0
        %3461 = vmatprep.subr.mxu0 0.0
        %3462 = vmatpush1.xpose.msra.mxu0 0.0
        %3463 = vmatprep.subr.mxu0 0.0
        %3464 = vmatpush1.xpose.msra.mxu0 0.0
        %3465 = vmatprep.subr.mxu0 0.0
        %3466 = vmatpush1.xpose.msra.mxu0 0.0
        %3467 = vmatprep.subr.mxu0 0.0
        %3468 = vmatpush1.xpose.msra.mxu0 0.0
        %3469 = vmatprep.subr.mxu0 0.0
        %3470 = vmatpush1.xpose.msra.mxu0 0.0
        %3471 = vmatprep.subr.mxu0 0.0
        %3472 = vmatpush1.xpose.msra.mxu0 0.0
        %3473 = vmatprep.subr.mxu0 0.0
        %3474 = vmatpush1.xpose.msra.mxu0 0.0
        %3475 = vmatprep.subr.mxu0 0.0
        %3476 = vmatpush1.xpose.msra.mxu0 0.0
        %3477 = vmatprep.mubr.f32.mxu0 0.0
        %3478 = vmatmul.mubr.f32.gmra.mrb[0].mxu0 %v3402
        %v3479 = vpop.f32.mrb[0].mxu0
        %v3480 = vadd.f32 0.0, %v3479
        %v3481 = vpop.f32.mrb[0].mxu0
        %3482 = vmatprep.mubr.f32.mxu0 0.0
        %3483 = vmatmul.mubr.f32.gmra.mrb[0].mxu0 %v3405
        %v3484 = vpop.f32.mrb[0].mxu0
        %v3485 = vadd.f32 0.0, %v3484
        %v3486 = vpop.f32.mrb[0].mxu0
        %3487 = vdwg.mxu0
        %v3488 = vmul.f32 %v3480, 0.35355338
        %v3489 = vmul.f32 %v3485, 0.35355338
        %v3490 = vadd.f32 %v3488, %v1863
        %v3491 = vadd.f32 %v3489, %v1863
        %v3492 = vsel %vm1867, %v3490, -inf
        %3493 = vmax.xlane.f32.xlu0 %v3492
        %v3494 = vpop.xlane.xlu0 %3493
        %v3495 = vsel %vm1867, %v3491, -inf
        %3496 = vmax.xlane.f32.xlu0 %v3495
        %v3497 = vpop.xlane.xlu0 %3496
        %v3498 = vsub.f32 %v3490, %v3494
        %v3499 = vsub.f32 %v3491, %v3497
        %v3500 = vmul.f32 %v3498, 1.442695
        %v3501 = vpow.pop %v3500
        %v3502 = vmul.f32 %v3499, 1.442695
        %v3503 = vpow.pop %v3502
        %v3504 = vsel %vm1867, %v3501, 0.0
        %3505 = vadd.xlane.f32.xlu0 %v3504
        %v3506 = vpop.xlane.xlu0 %3505
        %v3507 = vsel %vm1867, %v3503, 0.0
        %3508 = vadd.xlane.f32.xlu0 %v3507
        %v3509 = vpop.xlane.xlu0 %3508
        %v3510 = vrcp.pop %v3506
        %v3511 = vmul.f32 %v3501, %v3510
        %v3512 = vrcp.pop %v3509
        %v3513 = vmul.f32 %v3503, %v3512
        %v3515 = vsel %vm1867, %v3511, 0
        %v3518 = vsel %vm1867, %v3513, 0
        %3520 = vmatprep.subr.mxu0 0.0
        %3521 = vmatpush1.msra.mxu0 %v3393
        %3522 = vmatprep.subr.mxu0 0.0
        %3523 = vmatpush1.msra.mxu0 %v3398
        %3524 = vmatprep.subr.mxu0 0.0
        %3525 = vmatpush1.msra.mxu0 0.0
        %3526 = vmatprep.subr.mxu0 0.0
        %3527 = vmatpush1.msra.mxu0 0.0
        %3528 = vmatprep.subr.mxu0 0.0
        %3529 = vmatpush1.msra.mxu0 0.0
        %3530 = vmatprep.subr.mxu0 0.0
        %3531 = vmatpush1.msra.mxu0 0.0
        %3532 = vmatprep.subr.mxu0 0.0
        %3533 = vmatpush1.msra.mxu0 0.0
        %3534 = vmatprep.subr.mxu0 0.0
        %3535 = vmatpush1.msra.mxu0 0.0
        %3536 = vmatprep.subr.mxu0 0.0
        %3537 = vmatpush1.msra.mxu0 0.0
        %3538 = vmatprep.subr.mxu0 0.0
        %3539 = vmatpush1.msra.mxu0 0.0
        %3540 = vmatprep.subr.mxu0 0.0
        %3541 = vmatpush1.msra.mxu0 0.0
        %3542 = vmatprep.subr.mxu0 0.0
        %3543 = vmatpush1.msra.mxu0 0.0
        %3544 = vmatprep.subr.mxu0 0.0
        %3545 = vmatpush1.msra.mxu0 0.0
        %3546 = vmatprep.subr.mxu0 0.0
        %3547 = vmatpush1.msra.mxu0 0.0
        %3548 = vmatprep.subr.mxu0 0.0
        %3549 = vmatpush1.msra.mxu0 0.0
        %3550 = vmatprep.subr.mxu0 0.0
        %3551 = vmatpush1.msra.mxu0 0.0
        %3552 = vmatprep.subr.mxu0 0.0
        %3553 = vmatpush1.msra.mxu0 0.0
        %3554 = vmatprep.subr.mxu0 0.0
        %3555 = vmatpush1.msra.mxu0 0.0
        %3556 = vmatprep.subr.mxu0 0.0
        %3557 = vmatpush1.msra.mxu0 0.0
        %3558 = vmatprep.subr.mxu0 0.0
        %3559 = vmatpush1.msra.mxu0 0.0
        %3560 = vmatprep.subr.mxu0 0.0
        %3561 = vmatpush1.msra.mxu0 0.0
        %3562 = vmatprep.subr.mxu0 0.0
        %3563 = vmatpush1.msra.mxu0 0.0
        %3564 = vmatprep.subr.mxu0 0.0
        %3565 = vmatpush1.msra.mxu0 0.0
        %3566 = vmatprep.subr.mxu0 0.0
        %3567 = vmatpush1.msra.mxu0 0.0
        %3568 = vmatprep.subr.mxu0 0.0
        %3569 = vmatpush1.msra.mxu0 0.0
        %3570 = vmatprep.subr.mxu0 0.0
        %3571 = vmatpush1.msra.mxu0 0.0
        %3572 = vmatprep.subr.mxu0 0.0
        %3573 = vmatpush1.msra.mxu0 0.0
        %3574 = vmatprep.subr.mxu0 0.0
        %3575 = vmatpush1.msra.mxu0 0.0
        %3576 = vmatprep.subr.mxu0 0.0
        %3577 = vmatpush1.msra.mxu0 0.0
        %3578 = vmatprep.subr.mxu0 0.0
        %3579 = vmatpush1.msra.mxu0 0.0
        %3580 = vmatprep.subr.mxu0 0.0
        %3581 = vmatpush1.msra.mxu0 0.0
        %3582 = vmatprep.subr.mxu0 0.0
        %3583 = vmatpush1.msra.mxu0 0.0
        %3584 = vmatprep.mubr.f32.mxu0 0.0
        %3585 = vmatmul.mubr.f32.gmra.mrb[0].mxu0 %v3515
        %v3586 = vpop.f32.mrb[0].mxu0
        %v3587 = vadd.f32 0.0, %v3586
        %v3588 = vpop.f32.mrb[0].mxu0
        %3589 = vmatprep.mubr.f32.mxu0 0.0
        %3590 = vmatmul.mubr.f32.gmra.mrb[0].mxu0 %v3518
        %v3591 = vpop.f32.mrb[0].mxu0
        %v3592 = vadd.f32 0.0, %v3591
        %v3593 = vpop.f32.mrb[0].mxu0
        %3594 = vdwg.mxu0
        %s3595 = scalar_lea.vmem %s39, 24
        %v3596 = vld [vmem:[%s3595] sm:$0xff]
        %v3598 = vsel %vm1769, %v3587, 0
        %v3601 = vsel %vm1769, %v3592, 0
        %3603 = vmatprep.subr.mxu0 0.0
        %3604 = vmatpush1.msra.mxu0 %v3596
        %3605 = vmatprep.subr.mxu0 0.0
        %3606 = vmatpush1.msra.mxu0 0.0
        %3607 = vmatprep.subr.mxu0 0.0
        %3608 = vmatpush1.msra.mxu0 0.0
        %3609 = vmatprep.subr.mxu0 0.0
        %3610 = vmatpush1.msra.mxu0 0.0
        %3611 = vmatprep.subr.mxu0 0.0
        %3612 = vmatpush1.msra.mxu0 0.0
        %3613 = vmatprep.subr.mxu0 0.0
        %3614 = vmatpush1.msra.mxu0 0.0
        %3615 = vmatprep.subr.mxu0 0.0
        %3616 = vmatpush1.msra.mxu0 0.0
        %3617 = vmatprep.subr.mxu0 0.0
        %3618 = vmatpush1.msra.mxu0 0.0
        %3619 = vmatprep.subr.mxu0 0.0
        %3620 = vmatpush1.msra.mxu0 0.0
        %3621 = vmatprep.subr.mxu0 0.0
        %3622 = vmatpush1.msra.mxu0 0.0
        %3623 = vmatprep.subr.mxu0 0.0
        %3624 = vmatpush1.msra.mxu0 0.0
        %3625 = vmatprep.subr.mxu0 0.0
        %3626 = vmatpush1.msra.mxu0 0.0
        %3627 = vmatprep.subr.mxu0 0.0
        %3628 = vmatpush1.msra.mxu0 0.0
        %3629 = vmatprep.subr.mxu0 0.0
        %3630 = vmatpush1.msra.mxu0 0.0
        %3631 = vmatprep.subr.mxu0 0.0
        %3632 = vmatpush1.msra.mxu0 0.0
        %3633 = vmatprep.subr.mxu0 0.0
        %3634 = vmatpush1.msra.mxu0 0.0
        %3635 = vmatprep.subr.mxu0 0.0
        %3636 = vmatpush1.msra.mxu0 0.0
        %3637 = vmatprep.subr.mxu0 0.0
        %3638 = vmatpush1.msra.mxu0 0.0
        %3639 = vmatprep.subr.mxu0 0.0
        %3640 = vmatpush1.msra.mxu0 0.0
        %3641 = vmatprep.subr.mxu0 0.0
        %3642 = vmatpush1.msra.mxu0 0.0
        %3643 = vmatprep.subr.mxu0 0.0
        %3644 = vmatpush1.msra.mxu0 0.0
        %3645 = vmatprep.subr.mxu0 0.0
        %3646 = vmatpush1.msra.mxu0 0.0
        %3647 = vmatprep.subr.mxu0 0.0
        %3648 = vmatpush1.msra.mxu0 0.0
        %3649 = vmatprep.subr.mxu0 0.0
        %3650 = vmatpush1.msra.mxu0 0.0
        %3651 = vmatprep.subr.mxu0 0.0
        %3652 = vmatpush1.msra.mxu0 0.0
        %3653 = vmatprep.subr.mxu0 0.0
        %3654 = vmatpush1.msra.mxu0 0.0
        %3655 = vmatprep.subr.mxu0 0.0
        %3656 = vmatpush1.msra.mxu0 0.0
        %3657 = vmatprep.subr.mxu0 0.0
        %3658 = vmatpush1.msra.mxu0 0.0
        %3659 = vmatprep.subr.mxu0 0.0
        %3660 = vmatpush1.msra.mxu0 0.0
        %3661 = vmatprep.subr.mxu0 0.0
        %3662 = vmatpush1.msra.mxu0 0.0
        %3663 = vmatprep.subr.mxu0 0.0
        %3664 = vmatpush1.msra.mxu0 0.0
        %3665 = vmatprep.subr.mxu0 0.0
        %3666 = vmatpush1.msra.mxu0 0.0
        %3667 = vmatprep.mubr.f32.mxu0 0.0
        %3668 = vmatmul.mubr.f32.gmra.mrb[0].mxu0 %v3598
        %v3669 = vpop.f32.mrb[0].mxu0
        %v3670 = vadd.f32 0.0, %v3669
        %v3671 = vpop.f32.mrb[0].mxu0
        %3672 = vmatprep.mubr.f32.mxu0 0.0
        %3673 = vmatmul.mubr.f32.gmra.mrb[0].mxu0 %v3601
        %v3674 = vpop.f32.mrb[0].mxu0
        %v3675 = vadd.f32 0.0, %v3674
        %v3676 = vpop.f32.mrb[0].mxu0
        %3677 = vdwg.mxu0
        %v3678 = vadd.f32 %v3135, %v3670
        %v3679 = vadd.f32 %v3136, %v3675
        %v3680 = vld [vmem:[%s41] sm:$0x1]
        %v3682 = vlaneseq
        %v3683 = vshrl.u32 %v3682, 7
        %v3684 = vsub.s32 0, %v3683
        %v3685 = vrot.slane %v3680, %v3684
        %v3687 = vadd.f32 %v3678, %v3685
        %v3688 = vadd.f32 %v3679, %v3685
        %v3689 = vadd.f32 %v3687, %v1500
        %v3690 = vadd.f32 %v3688, %v1501
        %v3691 = vld [vmem:[%s43] sm:$0x1]
        %v3692 = vld [vmem:[%s45] sm:$0x1]
        %v3693 = vsel %vm1458, %v3689, 0.0
        %3694 = vadd.xlane.f32.xlu0 %v3693
        %v3695 = vpop.xlane.xlu0 %3694
        %v3696 = vsel %vm1458, %v3690, 0.0
        %3697 = vadd.xlane.f32.xlu0 %v3696
        %v3698 = vpop.xlane.xlu0 %3697
        %v3699 = vmul.f32 %v3695, %v1465
        %v3700 = vmul.f32 %v3698, %v1465
        %v3701 = vsub.f32 %v3689, %v3699
        %v3702 = vsub.f32 %v3690, %v3700
        %v3703 = vmul.f32 %v3701, %v3701
        %v3704 = vmul.f32 %v3702, %v3702
        %v3705 = vsel %vm1458, %v3703, 0.0
        %3706 = vadd.xlane.f32.xlu0 %v3705
        %v3707 = vpop.xlane.xlu0 %3706
        %v3708 = vsel %vm1458, %v3704, 0.0
        %3709 = vadd.xlane.f32.xlu0 %v3708
        %v3710 = vpop.xlane.xlu0 %3709
        %v3711 = vmul.f32 %v3707, %v1465
        %v3712 = vmul.f32 %v3710, %v1465
        %v3713 = vadd.f32 %v3711, 1e-12
        %v3714 = vadd.f32 %v3712, 1e-12
        %v3715 = vrsqrt.pop %v3713
        %v3716 = vrsqrt.pop %v3714
        %v3717 = vmul.f32 %v3701, %v3715
        %v3718 = vmul.f32 %v3702, %v3716
        %v3720 = vlaneseq
        %v3721 = vshrl.u32 %v3720, 7
        %v3722 = vsub.s32 0, %v3721
        %v3723 = vrot.slane %v3691, %v3722
        %v3725 = vmul.f32 %v3717, %v3723
        %v3726 = vmul.f32 %v3718, %v3723
        %v3728 = vlaneseq
        %v3729 = vshrl.u32 %v3728, 7
        %v3730 = vsub.s32 0, %v3729
        %v3731 = vrot.slane %v3692, %v3730
        %v3733 = vadd.f32 %v3725, %v3731
        %v3734 = vadd.f32 %v3726, %v3731
        %v3735 = vld [vmem:[%s47] sm:$0xff]
        %v3736 = vld [vmem:[%s47 + $0x8] sm:$0xff]
        %v3737 = vld [vmem:[%s47 + $0x10] sm:$0xff]
        %v3738 = vld [vmem:[%s47 + $0x18] sm:$0xff]
        %v3739 = vld [vmem:[%s49] sm:$0x1]
        %v3741 = vlaneseq
        %v3742 = vshrl.u32 %v3741, 7
        %v3743 = vsub.s32 0, %v3742
        %v3744 = vrot.slane %v3739, %v3743
        %v3747 = vsel %vm1458, %v3733, 0
        %v3750 = vsel %vm1458, %v3734, 0
        %3752 = vmatprep.subr.mxu0 0.0
        %3753 = vmatpush1.msra.mxu0 %v3735
        %3754 = vmatprep.subr.mxu0 0.0
        %3755 = vmatpush1.msra.mxu0 %v3736
        %3756 = vmatprep.subr.mxu0 0.0
        %3757 = vmatpush1.msra.mxu0 %v3737
        %3758 = vmatprep.subr.mxu0 0.0
        %3759 = vmatpush1.msra.mxu0 %v3738
        %3760 = vmatprep.subr.mxu0 0.0
        %3761 = vmatpush1.msra.mxu0 0.0
        %3762 = vmatprep.subr.mxu0 0.0
        %3763 = vmatpush1.msra.mxu0 0.0
        %3764 = vmatprep.subr.mxu0 0.0
        %3765 = vmatpush1.msra.mxu0 0.0
        %3766 = vmatprep.subr.mxu0 0.0
        %3767 = vmatpush1.msra.mxu0 0.0
        %3768 = vmatprep.subr.mxu0 0.0
        %3769 = vmatpush1.msra.mxu0 0.0
        %3770 = vmatprep.subr.mxu0 0.0
        %3771 = vmatpush1.msra.mxu0 0.0
        %3772 = vmatprep.subr.mxu0 0.0
        %3773 = vmatpush1.msra.mxu0 0.0
        %3774 = vmatprep.subr.mxu0 0.0
        %3775 = vmatpush1.msra.mxu0 0.0
        %3776 = vmatprep.subr.mxu0 0.0
        %3777 = vmatpush1.msra.mxu0 0.0
        %3778 = vmatprep.subr.mxu0 0.0
        %3779 = vmatpush1.msra.mxu0 0.0
        %3780 = vmatprep.subr.mxu0 0.0
        %3781 = vmatpush1.msra.mxu0 0.0
        %3782 = vmatprep.subr.mxu0 0.0
        %3783 = vmatpush1.msra.mxu0 0.0
        %3784 = vmatprep.subr.mxu0 0.0
        %3785 = vmatpush1.msra.mxu0 0.0
        %3786 = vmatprep.subr.mxu0 0.0
        %3787 = vmatpush1.msra.mxu0 0.0
        %3788 = vmatprep.subr.mxu0 0.0
        %3789 = vmatpush1.msra.mxu0 0.0
        %3790 = vmatprep.subr.mxu0 0.0
        %3791 = vmatpush1.msra.mxu0 0.0
        %3792 = vmatprep.subr.mxu0 0.0
        %3793 = vmatpush1.msra.mxu0 0.0
        %3794 = vmatprep.subr.mxu0 0.0
        %3795 = vmatpush1.msra.mxu0 0.0
        %3796 = vmatprep.subr.mxu0 0.0
        %3797 = vmatpush1.msra.mxu0 0.0
        %3798 = vmatprep.subr.mxu0 0.0
        %3799 = vmatpush1.msra.mxu0 0.0
        %3800 = vmatprep.subr.mxu0 0.0
        %3801 = vmatpush1.msra.mxu0 0.0
        %3802 = vmatprep.subr.mxu0 0.0
        %3803 = vmatpush1.msra.mxu0 0.0
        %3804 = vmatprep.subr.mxu0 0.0
        %3805 = vmatpush1.msra.mxu0 0.0
        %3806 = vmatprep.subr.mxu0 0.0
        %3807 = vmatpush1.msra.mxu0 0.0
        %3808 = vmatprep.subr.mxu0 0.0
        %3809 = vmatpush1.msra.mxu0 0.0
        %3810 = vmatprep.subr.mxu0 0.0
        %3811 = vmatpush1.msra.mxu0 0.0
        %3812 = vmatprep.subr.mxu0 0.0
        %3813 = vmatpush1.msra.mxu0 0.0
        %3814 = vmatprep.subr.mxu0 0.0
        %3815 = vmatpush1.msra.mxu0 0.0
        %3816 = vmatprep.mubr.f32.mxu0 0.0
        %3817 = vmatmul.mubr.f32.gmra.mrb[0].mxu0 %v3747
        %v3818 = vpop.f32.mrb[0].mxu0
        %v3819 = vadd.f32 %v3744, %v3818
        %v3820 = vpop.f32.mrb[0].mxu0
        %3821 = vmatprep.mubr.f32.mxu0 0.0
        %3822 = vmatmul.mubr.f32.gmra.mrb[0].mxu0 %v3750
        %v3823 = vpop.f32.mrb[0].mxu0
        %v3824 = vadd.f32 %v3744, %v3823
        %v3825 = vpop.f32.mrb[0].mxu0
        %3826 = vdwg.mxu0
        %v3827 = vmul.f32 %v3819, 0.5
        %v3828 = vmul.f32 %v3824, 0.5
        %v3829 = vmul.f32 %v3819, 0.70710677
        %v3830 = vmul.f32 %v3824, 0.70710677
        %v3831 = verf.f32.pop %v3829
        %v3832 = verf.f32.pop %v3830
        %v3833 = vadd.f32 %v3831, 1.0
        %v3834 = vadd.f32 %v3832, 1.0
        %v3835 = vmul.f32 %v3827, %v3833
        %v3836 = vmul.f32 %v3828, %v3834
        %v3837 = vld [vmem:[%s51] sm:$0xff]
        %v3838 = vld [vmem:[%s51 + $0x8] sm:$0xff]
        %v3839 = vld [vmem:[%s51 + $0x10] sm:$0xff]
        %v3840 = vld [vmem:[%s51 + $0x18] sm:$0xff]
        %v3841 = vld [vmem:[%s51 + $0x20] sm:$0xff]
        %v3842 = vld [vmem:[%s51 + $0x28] sm:$0xff]
        %v3843 = vld [vmem:[%s51 + $0x30] sm:$0xff]
        %v3844 = vld [vmem:[%s51 + $0x38] sm:$0xff]
        %v3845 = vld [vmem:[%s53] sm:$0x1]
        %v3847 = vlaneseq
        %v3848 = vshrl.u32 %v3847, 7
        %v3849 = vsub.s32 0, %v3848
        %v3850 = vrot.slane %v3845, %v3849
        %vm3852 = vcmask 523264
        %v3854 = vsel %vm3852, %v3835, 0
        %v3857 = vsel %vm3852, %v3836, 0
        %3859 = vmatprep.subr.mxu0 0.0
        %3860 = vmatpush1.msra.mxu0 %v3837
        %3861 = vmatprep.subr.mxu0 0.0
        %3862 = vmatpush1.msra.mxu0 %v3838
        %3863 = vmatprep.subr.mxu0 0.0
        %3864 = vmatpush1.msra.mxu0 %v3839
        %3865 = vmatprep.subr.mxu0 0.0
        %3866 = vmatpush1.msra.mxu0 %v3840
        %3867 = vmatprep.subr.mxu0 0.0
        %3868 = vmatpush1.msra.mxu0 %v3841
        %3869 = vmatprep.subr.mxu0 0.0
        %3870 = vmatpush1.msra.mxu0 %v3842
        %3871 = vmatprep.subr.mxu0 0.0
        %3872 = vmatpush1.msra.mxu0 %v3843
        %3873 = vmatprep.subr.mxu0 0.0
        %3874 = vmatpush1.msra.mxu0 %v3844
        %3875 = vmatprep.subr.mxu0 0.0
        %3876 = vmatpush1.msra.mxu0 0.0
        %3877 = vmatprep.subr.mxu0 0.0
        %3878 = vmatpush1.msra.mxu0 0.0
        %3879 = vmatprep.subr.mxu0 0.0
        %3880 = vmatpush1.msra.mxu0 0.0
        %3881 = vmatprep.subr.mxu0 0.0
        %3882 = vmatpush1.msra.mxu0 0.0
        %3883 = vmatprep.subr.mxu0 0.0
        %3884 = vmatpush1.msra.mxu0 0.0
        %3885 = vmatprep.subr.mxu0 0.0
        %3886 = vmatpush1.msra.mxu0 0.0
        %3887 = vmatprep.subr.mxu0 0.0
        %3888 = vmatpush1.msra.mxu0 0.0
        %3889 = vmatprep.subr.mxu0 0.0
        %3890 = vmatpush1.msra.mxu0 0.0
        %3891 = vmatprep.subr.mxu0 0.0
        %3892 = vmatpush1.msra.mxu0 0.0
        %3893 = vmatprep.subr.mxu0 0.0
        %3894 = vmatpush1.msra.mxu0 0.0
        %3895 = vmatprep.subr.mxu0 0.0
        %3896 = vmatpush1.msra.mxu0 0.0
        %3897 = vmatprep.subr.mxu0 0.0
        %3898 = vmatpush1.msra.mxu0 0.0
        %3899 = vmatprep.subr.mxu0 0.0
        %3900 = vmatpush1.msra.mxu0 0.0
        %3901 = vmatprep.subr.mxu0 0.0
        %3902 = vmatpush1.msra.mxu0 0.0
        %3903 = vmatprep.subr.mxu0 0.0
        %3904 = vmatpush1.msra.mxu0 0.0
        %3905 = vmatprep.subr.mxu0 0.0
        %3906 = vmatpush1.msra.mxu0 0.0
        %3907 = vmatprep.subr.mxu0 0.0
        %3908 = vmatpush1.msra.mxu0 0.0
        %3909 = vmatprep.subr.mxu0 0.0
        %3910 = vmatpush1.msra.mxu0 0.0
        %3911 = vmatprep.subr.mxu0 0.0
        %3912 = vmatpush1.msra.mxu0 0.0
        %3913 = vmatprep.subr.mxu0 0.0
        %3914 = vmatpush1.msra.mxu0 0.0
        %3915 = vmatprep.subr.mxu0 0.0
        %3916 = vmatpush1.msra.mxu0 0.0
        %3917 = vmatprep.subr.mxu0 0.0
        %3918 = vmatpush1.msra.mxu0 0.0
        %3919 = vmatprep.subr.mxu0 0.0
        %3920 = vmatpush1.msra.mxu0 0.0
        %3921 = vmatprep.subr.mxu0 0.0
        %3922 = vmatpush1.msra.mxu0 0.0
        %3923 = vmatprep.mubr.f32.mxu0 0.0
        %3924 = vmatmul.mubr.f32.gmra.mrb[0].mxu0 %v3854
        %v3925 = vpop.f32.mrb[0].mxu0
        %v3926 = vadd.f32 %v3850, %v3925
        %v3927 = vpop.f32.mrb[0].mxu0
        %3928 = vmatprep.mubr.f32.mxu0 0.0
        %3929 = vmatmul.mubr.f32.gmra.mrb[0].mxu0 %v3857
        %v3930 = vpop.f32.mrb[0].mxu0
        %v3931 = vadd.f32 %v3850, %v3930
        %v3932 = vpop.f32.mrb[0].mxu0
        %3933 = vdwg.mxu0
        %v3934 = vadd.f32 %v3926, %v3733
        %v3935 = vadd.f32 %v3931, %v3734
        %v3936 = vld [vmem:[%s55] sm:$0x1]
        %v3937 = vld [vmem:[%s57] sm:$0x1]
        %v3938 = vsel %vm1458, %v3934, 0.0
        %3939 = vadd.xlane.f32.xlu0 %v3938
        %v3940 = vpop.xlane.xlu0 %3939
        %v3941 = vsel %vm1458, %v3935, 0.0
        %3942 = vadd.xlane.f32.xlu0 %v3941
        %v3943 = vpop.xlane.xlu0 %3942
        %v3944 = vmul.f32 %v3940, %v1465
        %v3945 = vmul.f32 %v3943, %v1465
        %v3946 = vsub.f32 %v3934, %v3944
        %v3947 = vsub.f32 %v3935, %v3945
        %v3948 = vmul.f32 %v3946, %v3946
        %v3949 = vmul.f32 %v3947, %v3947
        %v3950 = vsel %vm1458, %v3948, 0.0
        %3951 = vadd.xlane.f32.xlu0 %v3950
        %v3952 = vpop.xlane.xlu0 %3951
        %v3953 = vsel %vm1458, %v3949, 0.0
        %3954 = vadd.xlane.f32.xlu0 %v3953
        %v3955 = vpop.xlane.xlu0 %3954
        %v3956 = vmul.f32 %v3952, %v1465
        %v3957 = vmul.f32 %v3955, %v1465
        %v3958 = vadd.f32 %v3956, 1e-12
        %v3959 = vadd.f32 %v3957, 1e-12
        %v3960 = vrsqrt.pop %v3958
        %v3961 = vrsqrt.pop %v3959
        %v3962 = vmul.f32 %v3946, %v3960
        %v3963 = vmul.f32 %v3947, %v3961
        %v3965 = vlaneseq
        %v3966 = vshrl.u32 %v3965, 7
        %v3967 = vsub.s32 0, %v3966
        %v3968 = vrot.slane %v3936, %v3967
        %v3970 = vmul.f32 %v3962, %v3968
        %v3971 = vmul.f32 %v3963, %v3968
        %v3973 = vlaneseq
        %v3974 = vshrl.u32 %v3973, 7
        %v3975 = vsub.s32 0, %v3974
        %v3976 = vrot.slane %v3937, %v3975
        %v3978 = vadd.f32 %v3970, %v3976
        %v3979 = vadd.f32 %v3971, %v3976
        %s3980 = scalar_lea.vmem %s27, 128
        %v3981 = vld [vmem:[%s3980] sm:$0xff]
        %v3982 = vld [vmem:[%s3980 + $0x8] sm:$0xff]
        %v3983 = vld [vmem:[%s3980 + $0x10] sm:$0xff]
        %v3984 = vld [vmem:[%s3980 + $0x18] sm:$0xff]
        %s3985 = scalar_lea.vmem %s33, 4
        %v3986 = vld [vmem:[%s3985] sm:$0x1]
        %v3988 = vlaneseq
        %v3989 = vshrl.u32 %v3988, 7
        %v3990 = vsub.s32 0, %v3989
        %v3991 = vrot.slane %v3986, %v3990
        %v3994 = vsel %vm1458, %v3978, 0
        %v3997 = vsel %vm1458, %v3979, 0
        %3999 = vmatprep.subr.mxu0 0.0
        %4000 = vmatpush1.msra.mxu0 %v3981
        %4001 = vmatprep.subr.mxu0 0.0
        %4002 = vmatpush1.msra.mxu0 %v3982
        %4003 = vmatprep.subr.mxu0 0.0
        %4004 = vmatpush1.msra.mxu0 %v3983
        %4005 = vmatprep.subr.mxu0 0.0
        %4006 = vmatpush1.msra.mxu0 %v3984
        %4007 = vmatprep.subr.mxu0 0.0
        %4008 = vmatpush1.msra.mxu0 0.0
        %4009 = vmatprep.subr.mxu0 0.0
        %4010 = vmatpush1.msra.mxu0 0.0
        %4011 = vmatprep.subr.mxu0 0.0
        %4012 = vmatpush1.msra.mxu0 0.0
        %4013 = vmatprep.subr.mxu0 0.0
        %4014 = vmatpush1.msra.mxu0 0.0
        %4015 = vmatprep.subr.mxu0 0.0
        %4016 = vmatpush1.msra.mxu0 0.0
        %4017 = vmatprep.subr.mxu0 0.0
        %4018 = vmatpush1.msra.mxu0 0.0
        %4019 = vmatprep.subr.mxu0 0.0
        %4020 = vmatpush1.msra.mxu0 0.0
        %4021 = vmatprep.subr.mxu0 0.0
        %4022 = vmatpush1.msra.mxu0 0.0
        %4023 = vmatprep.subr.mxu0 0.0
        %4024 = vmatpush1.msra.mxu0 0.0
        %4025 = vmatprep.subr.mxu0 0.0
        %4026 = vmatpush1.msra.mxu0 0.0
        %4027 = vmatprep.subr.mxu0 0.0
        %4028 = vmatpush1.msra.mxu0 0.0
        %4029 = vmatprep.subr.mxu0 0.0
        %4030 = vmatpush1.msra.mxu0 0.0
        %4031 = vmatprep.subr.mxu0 0.0
        %4032 = vmatpush1.msra.mxu0 0.0
        %4033 = vmatprep.subr.mxu0 0.0
        %4034 = vmatpush1.msra.mxu0 0.0
        %4035 = vmatprep.subr.mxu0 0.0
        %4036 = vmatpush1.msra.mxu0 0.0
        %4037 = vmatprep.subr.mxu0 0.0
        %4038 = vmatpush1.msra.mxu0 0.0
        %4039 = vmatprep.subr.mxu0 0.0
        %4040 = vmatpush1.msra.mxu0 0.0
        %4041 = vmatprep.subr.mxu0 0.0
        %4042 = vmatpush1.msra.mxu0 0.0
        %4043 = vmatprep.subr.mxu0 0.0
        %4044 = vmatpush1.msra.mxu0 0.0
        %4045 = vmatprep.subr.mxu0 0.0
        %4046 = vmatpush1.msra.mxu0 0.0
        %4047 = vmatprep.subr.mxu0 0.0
        %4048 = vmatpush1.msra.mxu0 0.0
        %4049 = vmatprep.subr.mxu0 0.0
        %4050 = vmatpush1.msra.mxu0 0.0
        %4051 = vmatprep.subr.mxu0 0.0
        %4052 = vmatpush1.msra.mxu0 0.0
        %4053 = vmatprep.subr.mxu0 0.0
        %4054 = vmatpush1.msra.mxu0 0.0
        %4055 = vmatprep.subr.mxu0 0.0
        %4056 = vmatpush1.msra.mxu0 0.0
        %4057 = vmatprep.subr.mxu0 0.0
        %4058 = vmatpush1.msra.mxu0 0.0
        %4059 = vmatprep.subr.mxu0 0.0
        %4060 = vmatpush1.msra.mxu0 0.0
        %4061 = vmatprep.subr.mxu0 0.0
        %4062 = vmatpush1.msra.mxu0 0.0
        %4063 = vmatprep.mubr.f32.mxu0 0.0
        %4064 = vmatmul.mubr.f32.gmra.mrb[0].mxu0 %v3994
        %v4065 = vpop.f32.mrb[0].mxu0
        %v4066 = vadd.f32 %v3991, %v4065
        %v4067 = vpop.f32.mrb[0].mxu0
        %4068 = vmatprep.mubr.f32.mxu0 0.0
        %4069 = vmatmul.mubr.f32.gmra.mrb[0].mxu0 %v3997
        %v4070 = vpop.f32.mrb[0].mxu0
        %v4071 = vadd.f32 %v3991, %v4070
        %v4072 = vpop.f32.mrb[0].mxu0
        %4073 = vdwg.mxu0
        %s4074 = scalar_lea.vmem %s29, 128
        %v4075 = vld [vmem:[%s4074] sm:$0xff]
        %v4076 = vld [vmem:[%s4074 + $0x8] sm:$0xff]
        %v4077 = vld [vmem:[%s4074 + $0x10] sm:$0xff]
        %v4078 = vld [vmem:[%s4074 + $0x18] sm:$0xff]
        %s4079 = scalar_lea.vmem %s35, 4
        %v4080 = vld [vmem:[%s4079] sm:$0x1]
        %v4082 = vlaneseq
        %v4083 = vshrl.u32 %v4082, 7
        %v4084 = vsub.s32 0, %v4083
        %v4085 = vrot.slane %v4080, %v4084
        %4087 = vmatprep.subr.mxu0 0.0
        %4088 = vmatpush1.msra.mxu0 %v4075
        %4089 = vmatprep.subr.mxu0 0.0
        %4090 = vmatpush1.msra.mxu0 %v4076
        %4091 = vmatprep.subr.mxu0 0.0
        %4092 = vmatpush1.msra.mxu0 %v4077
        %4093 = vmatprep.subr.mxu0 0.0
        %4094 = vmatpush1.msra.mxu0 %v4078
        %4095 = vmatprep.subr.mxu0 0.0
        %4096 = vmatpush1.msra.mxu0 0.0
        %4097 = vmatprep.subr.mxu0 0.0
        %4098 = vmatpush1.msra.mxu0 0.0
        %4099 = vmatprep.subr.mxu0 0.0
        %4100 = vmatpush1.msra.mxu0 0.0
        %4101 = vmatprep.subr.mxu0 0.0
        %4102 = vmatpush1.msra.mxu0 0.0
        %4103 = vmatprep.subr.mxu0 0.0
        %4104 = vmatpush1.msra.mxu0 0.0
        %4105 = vmatprep.subr.mxu0 0.0
        %4106 = vmatpush1.msra.mxu0 0.0
        %4107 = vmatprep.subr.mxu0 0.0
        %4108 = vmatpush1.msra.mxu0 0.0
        %4109 = vmatprep.subr.mxu0 0.0
        %4110 = vmatpush1.msra.mxu0 0.0
        %4111 = vmatprep.subr.mxu0 0.0
        %4112 = vmatpush1.msra.mxu0 0.0
        %4113 = vmatprep.subr.mxu0 0.0
        %4114 = vmatpush1.msra.mxu0 0.0
        %4115 = vmatprep.subr.mxu0 0.0
        %4116 = vmatpush1.msra.mxu0 0.0
        %4117 = vmatprep.subr.mxu0 0.0
        %4118 = vmatpush1.msra.mxu0 0.0
        %4119 = vmatprep.subr.mxu0 0.0
        %4120 = vmatpush1.msra.mxu0 0.0
        %4121 = vmatprep.subr.mxu0 0.0
        %4122 = vmatpush1.msra.mxu0 0.0
        %4123 = vmatprep.subr.mxu0 0.0
        %4124 = vmatpush1.msra.mxu0 0.0
        %4125 = vmatprep.subr.mxu0 0.0
        %4126 = vmatpush1.msra.mxu0 0.0
        %4127 = vmatprep.subr.mxu0 0.0
        %4128 = vmatpush1.msra.mxu0 0.0
        %4129 = vmatprep.subr.mxu0 0.0
        %4130 = vmatpush1.msra.mxu0 0.0
        %4131 = vmatprep.subr.mxu0 0.0
        %4132 = vmatpush1.msra.mxu0 0.0
        %4133 = vmatprep.subr.mxu0 0.0
        %4134 = vmatpush1.msra.mxu0 0.0
        %4135 = vmatprep.subr.mxu0 0.0
        %4136 = vmatpush1.msra.mxu0 0.0
        %4137 = vmatprep.subr.mxu0 0.0
        %4138 = vmatpush1.msra.mxu0 0.0
        %4139 = vmatprep.subr.mxu0 0.0
        %4140 = vmatpush1.msra.mxu0 0.0
        %4141 = vmatprep.subr.mxu0 0.0
        %4142 = vmatpush1.msra.mxu0 0.0
        %4143 = vmatprep.subr.mxu0 0.0
        %4144 = vmatpush1.msra.mxu0 0.0
        %4145 = vmatprep.subr.mxu0 0.0
        %4146 = vmatpush1.msra.mxu0 0.0
        %4147 = vmatprep.subr.mxu0 0.0
        %4148 = vmatpush1.msra.mxu0 0.0
        %4149 = vmatprep.subr.mxu0 0.0
        %4150 = vmatpush1.msra.mxu0 0.0
        %4151 = vmatprep.mubr.f32.mxu0 0.0
        %4152 = vmatmul.mubr.f32.gmra.mrb[0].mxu0 %v3994
        %v4153 = vpop.f32.mrb[0].mxu0
        %v4154 = vadd.f32 %v4085, %v4153
        %v4155 = vpop.f32.mrb[0].mxu0
        %4156 = vmatprep.mubr.f32.mxu0 0.0
        %4157 = vmatmul.mubr.f32.gmra.mrb[0].mxu0 %v3997
        %v4158 = vpop.f32.mrb[0].mxu0
        %v4159 = vadd.f32 %v4085, %v4158
        %v4160 = vpop.f32.mrb[0].mxu0
        %4161 = vdwg.mxu0
        %s4162 = scalar_lea.vmem %s31, 128
        %v4163 = vld [vmem:[%s4162] sm:$0xff]
        %v4164 = vld [vmem:[%s4162 + $0x8] sm:$0xff]
        %v4165 = vld [vmem:[%s4162 + $0x10] sm:$0xff]
        %v4166 = vld [vmem:[%s4162 + $0x18] sm:$0xff]
        %s4167 = scalar_lea.vmem %s37, 4
        %v4168 = vld [vmem:[%s4167] sm:$0x1]
        %v4170 = vlaneseq
        %v4171 = vshrl.u32 %v4170, 7
        %v4172 = vsub.s32 0, %v4171
        %v4173 = vrot.slane %v4168, %v4172
        %4175 = vmatprep.subr.mxu0 0.0
        %4176 = vmatpush1.msra.mxu0 %v4163
        %4177 = vmatprep.subr.mxu0 0.0
        %4178 = vmatpush1.msra.mxu0 %v4164
        %4179 = vmatprep.subr.mxu0 0.0
        %4180 = vmatpush1.msra.mxu0 %v4165
        %4181 = vmatprep.subr.mxu0 0.0
        %4182 = vmatpush1.msra.mxu0 %v4166
        %4183 = vmatprep.subr.mxu0 0.0
        %4184 = vmatpush1.msra.mxu0 0.0
        %4185 = vmatprep.subr.mxu0 0.0
        %4186 = vmatpush1.msra.mxu0 0.0
        %4187 = vmatprep.subr.mxu0 0.0
        %4188 = vmatpush1.msra.mxu0 0.0
        %4189 = vmatprep.subr.mxu0 0.0
        %4190 = vmatpush1.msra.mxu0 0.0
        %4191 = vmatprep.subr.mxu0 0.0
        %4192 = vmatpush1.msra.mxu0 0.0
        %4193 = vmatprep.subr.mxu0 0.0
        %4194 = vmatpush1.msra.mxu0 0.0
        %4195 = vmatprep.subr.mxu0 0.0
        %4196 = vmatpush1.msra.mxu0 0.0
        %4197 = vmatprep.subr.mxu0 0.0
        %4198 = vmatpush1.msra.mxu0 0.0
        %4199 = vmatprep.subr.mxu0 0.0
        %4200 = vmatpush1.msra.mxu0 0.0
        %4201 = vmatprep.subr.mxu0 0.0
        %4202 = vmatpush1.msra.mxu0 0.0
        %4203 = vmatprep.subr.mxu0 0.0
        %4204 = vmatpush1.msra.mxu0 0.0
        %4205 = vmatprep.subr.mxu0 0.0
        %4206 = vmatpush1.msra.mxu0 0.0
        %4207 = vmatprep.subr.mxu0 0.0
        %4208 = vmatpush1.msra.mxu0 0.0
        %4209 = vmatprep.subr.mxu0 0.0
        %4210 = vmatpush1.msra.mxu0 0.0
        %4211 = vmatprep.subr.mxu0 0.0
        %4212 = vmatpush1.msra.mxu0 0.0
        %4213 = vmatprep.subr.mxu0 0.0
        %4214 = vmatpush1.msra.mxu0 0.0
        %4215 = vmatprep.subr.mxu0 0.0
        %4216 = vmatpush1.msra.mxu0 0.0
        %4217 = vmatprep.subr.mxu0 0.0
        %4218 = vmatpush1.msra.mxu0 0.0
        %4219 = vmatprep.subr.mxu0 0.0
        %4220 = vmatpush1.msra.mxu0 0.0
        %4221 = vmatprep.subr.mxu0 0.0
        %4222 = vmatpush1.msra.mxu0 0.0
        %4223 = vmatprep.subr.mxu0 0.0
        %4224 = vmatpush1.msra.mxu0 0.0
        %4225 = vmatprep.subr.mxu0 0.0
        %4226 = vmatpush1.msra.mxu0 0.0
        %4227 = vmatprep.subr.mxu0 0.0
        %4228 = vmatpush1.msra.mxu0 0.0
        %4229 = vmatprep.subr.mxu0 0.0
        %4230 = vmatpush1.msra.mxu0 0.0
        %4231 = vmatprep.subr.mxu0 0.0
        %4232 = vmatpush1.msra.mxu0 0.0
        %4233 = vmatprep.subr.mxu0 0.0
        %4234 = vmatpush1.msra.mxu0 0.0
        %4235 = vmatprep.subr.mxu0 0.0
        %4236 = vmatpush1.msra.mxu0 0.0
        %4237 = vmatprep.subr.mxu0 0.0
        %4238 = vmatpush1.msra.mxu0 0.0
        %4239 = vmatprep.mubr.f32.mxu0 0.0
        %4240 = vmatmul.mubr.f32.gmra.mrb[0].mxu0 %v3994
        %v4241 = vpop.f32.mrb[0].mxu0
        %v4242 = vadd.f32 %v4173, %v4241
        %v4243 = vpop.f32.mrb[0].mxu0
        %4244 = vmatprep.mubr.f32.mxu0 0.0
        %4245 = vmatmul.mubr.f32.gmra.mrb[0].mxu0 %v3997
        %v4246 = vpop.f32.mrb[0].mxu0
        %v4247 = vadd.f32 %v4173, %v4246
        %v4248 = vpop.f32.mrb[0].mxu0
        %4249 = vdwg.mxu0
        %v4251 = vsel %vm1769, %v4066, 0
        %v4254 = vsel %vm1769, %v4071, 0
        %v4257 = vsel %vm1769, %v4154, 0
        %v4260 = vsel %vm1769, %v4159, 0
        %4262 = vmatprep.subr.mxu0 0.0
        %4263 = vmatpush1.xpose.msra.mxu0 %v4257
        %4264 = vmatprep.subr.mxu0 0.0
        %4265 = vmatpush1.xpose.msra.mxu0 %v4260
        %4266 = vmatprep.subr.mxu0 0.0
        %4267 = vmatpush1.xpose.msra.mxu0 0.0
        %4268 = vmatprep.subr.mxu0 0.0
        %4269 = vmatpush1.xpose.msra.mxu0 0.0
        %4270 = vmatprep.subr.mxu0 0.0
        %4271 = vmatpush1.xpose.msra.mxu0 0.0
        %4272 = vmatprep.subr.mxu0 0.0
        %4273 = vmatpush1.xpose.msra.mxu0 0.0
        %4274 = vmatprep.subr.mxu0 0.0
        %4275 = vmatpush1.xpose.msra.mxu0 0.0
        %4276 = vmatprep.subr.mxu0 0.0
        %4277 = vmatpush1.xpose.msra.mxu0 0.0
        %4278 = vmatprep.subr.mxu0 0.0
        %4279 = vmatpush1.xpose.msra.mxu0 0.0
        %4280 = vmatprep.subr.mxu0 0.0
        %4281 = vmatpush1.xpose.msra.mxu0 0.0
        %4282 = vmatprep.subr.mxu0 0.0
        %4283 = vmatpush1.xpose.msra.mxu0 0.0
        %4284 = vmatprep.subr.mxu0 0.0
        %4285 = vmatpush1.xpose.msra.mxu0 0.0
        %4286 = vmatprep.subr.mxu0 0.0
        %4287 = vmatpush1.xpose.msra.mxu0 0.0
        %4288 = vmatprep.subr.mxu0 0.0
        %4289 = vmatpush1.xpose.msra.mxu0 0.0
        %4290 = vmatprep.subr.mxu0 0.0
        %4291 = vmatpush1.xpose.msra.mxu0 0.0
        %4292 = vmatprep.subr.mxu0 0.0
        %4293 = vmatpush1.xpose.msra.mxu0 0.0
        %4294 = vmatprep.subr.mxu0 0.0
        %4295 = vmatpush1.xpose.msra.mxu0 0.0
        %4296 = vmatprep.subr.mxu0 0.0
        %4297 = vmatpush1.xpose.msra.mxu0 0.0
        %4298 = vmatprep.subr.mxu0 0.0
        %4299 = vmatpush1.xpose.msra.mxu0 0.0
        %4300 = vmatprep.subr.mxu0 0.0
        %4301 = vmatpush1.xpose.msra.mxu0 0.0
        %4302 = vmatprep.subr.mxu0 0.0
        %4303 = vmatpush1.xpose.msra.mxu0 0.0
        %4304 = vmatprep.subr.mxu0 0.0
        %4305 = vmatpush1.xpose.msra.mxu0 0.0
        %4306 = vmatprep.subr.mxu0 0.0
        %4307 = vmatpush1.xpose.msra.mxu0 0.0
        %4308 = vmatprep.subr.mxu0 0.0
        %4309 = vmatpush1.xpose.msra.mxu0 0.0
        %4310 = vmatprep.subr.mxu0 0.0
        %4311 = vmatpush1.xpose.msra.mxu0 0.0
        %4312 = vmatprep.subr.mxu0 0.0
        %4313 = vmatpush1.xpose.msra.mxu0 0.0
        %4314 = vmatprep.subr.mxu0 0.0
        %4315 = vmatpush1.xpose.msra.mxu0 0.0
        %4316 = vmatprep.subr.mxu0 0.0
        %4317 = vmatpush1.xpose.msra.mxu0 0.0
        %4318 = vmatprep.subr.mxu0 0.0
        %4319 = vmatpush1.xpose.msra.mxu0 0.0
        %4320 = vmatprep.subr.mxu0 0.0
        %4321 = vmatpush1.xpose.msra.mxu0 0.0
        %4322 = vmatprep.subr.mxu0 0.0
        %4323 = vmatpush1.xpose.msra.mxu0 0.0
        %4324 = vmatprep.subr.mxu0 0.0
        %4325 = vmatpush1.xpose.msra.mxu0 0.0
        %4326 = vmatprep.mubr.f32.mxu0 0.0
        %4327 = vmatmul.mubr.f32.gmra.mrb[0].mxu0 %v4251
        %v4328 = vpop.f32.mrb[0].mxu0
        %v4329 = vadd.f32 0.0, %v4328
        %v4330 = vpop.f32.mrb[0].mxu0
        %4331 = vmatprep.mubr.f32.mxu0 0.0
        %4332 = vmatmul.mubr.f32.gmra.mrb[0].mxu0 %v4254
        %v4333 = vpop.f32.mrb[0].mxu0
        %v4334 = vadd.f32 0.0, %v4333
        %v4335 = vpop.f32.mrb[0].mxu0
        %4336 = vdwg.mxu0
        %v4337 = vmul.f32 %v4329, 0.35355338
        %v4338 = vmul.f32 %v4334, 0.35355338
        %v4339 = vadd.f32 %v4337, %v1863
        %v4340 = vadd.f32 %v4338, %v1863
        %v4341 = vsel %vm1867, %v4339, -inf
        %4342 = vmax.xlane.f32.xlu0 %v4341
        %v4343 = vpop.xlane.xlu0 %4342
        %v4344 = vsel %vm1867, %v4340, -inf
        %4345 = vmax.xlane.f32.xlu0 %v4344
        %v4346 = vpop.xlane.xlu0 %4345
        %v4347 = vsub.f32 %v4339, %v4343
        %v4348 = vsub.f32 %v4340, %v4346
        %v4349 = vmul.f32 %v4347, 1.442695
        %v4350 = vpow.pop %v4349
        %v4351 = vmul.f32 %v4348, 1.442695
        %v4352 = vpow.pop %v4351
        %v4353 = vsel %vm1867, %v4350, 0.0
        %4354 = vadd.xlane.f32.xlu0 %v4353
        %v4355 = vpop.xlane.xlu0 %4354
        %v4356 = vsel %vm1867, %v4352, 0.0
        %4357 = vadd.xlane.f32.xlu0 %v4356
        %v4358 = vpop.xlane.xlu0 %4357
        %v4359 = vrcp.pop %v4355
        %v4360 = vmul.f32 %v4350, %v4359
        %v4361 = vrcp.pop %v4358
        %v4362 = vmul.f32 %v4352, %v4361
        %v4364 = vsel %vm1867, %v4360, 0
        %v4367 = vsel %vm1867, %v4362, 0
        %4369 = vmatprep.subr.mxu0 0.0
        %4370 = vmatpush1.msra.mxu0 %v4242
        %4371 = vmatprep.subr.mxu0 0.0
        %4372 = vmatpush1.msra.mxu0 %v4247
        %4373 = vmatprep.subr.mxu0 0.0
        %4374 = vmatpush1.msra.mxu0 0.0
        %4375 = vmatprep.subr.mxu0 0.0
        %4376 = vmatpush1.msra.mxu0 0.0
        %4377 = vmatprep.subr.mxu0 0.0
        %4378 = vmatpush1.msra.mxu0 0.0
        %4379 = vmatprep.subr.mxu0 0.0
        %4380 = vmatpush1.msra.mxu0 0.0
        %4381 = vmatprep.subr.mxu0 0.0
        %4382 = vmatpush1.msra.mxu0 0.0
        %4383 = vmatprep.subr.mxu0 0.0
        %4384 = vmatpush1.msra.mxu0 0.0
        %4385 = vmatprep.subr.mxu0 0.0
        %4386 = vmatpush1.msra.mxu0 0.0
        %4387 = vmatprep.subr.mxu0 0.0
        %4388 = vmatpush1.msra.mxu0 0.0
        %4389 = vmatprep.subr.mxu0 0.0
        %4390 = vmatpush1.msra.mxu0 0.0
        %4391 = vmatprep.subr.mxu0 0.0
        %4392 = vmatpush1.msra.mxu0 0.0
        %4393 = vmatprep.subr.mxu0 0.0
        %4394 = vmatpush1.msra.mxu0 0.0
        %4395 = vmatprep.subr.mxu0 0.0
        %4396 = vmatpush1.msra.mxu0 0.0
        %4397 = vmatprep.subr.mxu0 0.0
        %4398 = vmatpush1.msra.mxu0 0.0
        %4399 = vmatprep.subr.mxu0 0.0
        %4400 = vmatpush1.msra.mxu0 0.0
        %4401 = vmatprep.subr.mxu0 0.0
        %4402 = vmatpush1.msra.mxu0 0.0
        %4403 = vmatprep.subr.mxu0 0.0
        %4404 = vmatpush1.msra.mxu0 0.0
        %4405 = vmatprep.subr.mxu0 0.0
        %4406 = vmatpush1.msra.mxu0 0.0
        %4407 = vmatprep.subr.mxu0 0.0
        %4408 = vmatpush1.msra.mxu0 0.0
        %4409 = vmatprep.subr.mxu0 0.0
        %4410 = vmatpush1.msra.mxu0 0.0
        %4411 = vmatprep.subr.mxu0 0.0
        %4412 = vmatpush1.msra.mxu0 0.0
        %4413 = vmatprep.subr.mxu0 0.0
        %4414 = vmatpush1.msra.mxu0 0.0
        %4415 = vmatprep.subr.mxu0 0.0
        %4416 = vmatpush1.msra.mxu0 0.0
        %4417 = vmatprep.subr.mxu0 0.0
        %4418 = vmatpush1.msra.mxu0 0.0
        %4419 = vmatprep.subr.mxu0 0.0
        %4420 = vmatpush1.msra.mxu0 0.0
        %4421 = vmatprep.subr.mxu0 0.0
        %4422 = vmatpush1.msra.mxu0 0.0
        %4423 = vmatprep.subr.mxu0 0.0
        %4424 = vmatpush1.msra.mxu0 0.0
        %4425 = vmatprep.subr.mxu0 0.0
        %4426 = vmatpush1.msra.mxu0 0.0
        %4427 = vmatprep.subr.mxu0 0.0
        %4428 = vmatpush1.msra.mxu0 0.0
        %4429 = vmatprep.subr.mxu0 0.0
        %4430 = vmatpush1.msra.mxu0 0.0
        %4431 = vmatprep.subr.mxu0 0.0
        %4432 = vmatpush1.msra.mxu0 0.0
        %4433 = vmatprep.mubr.f32.mxu0 0.0
        %4434 = vmatmul.mubr.f32.gmra.mrb[0].mxu0 %v4364
        %v4435 = vpop.f32.mrb[0].mxu0
        %v4436 = vadd.f32 0.0, %v4435
        %v4437 = vpop.f32.mrb[0].mxu0
        %4438 = vmatprep.mubr.f32.mxu0 0.0
        %4439 = vmatmul.mubr.f32.gmra.mrb[0].mxu0 %v4367
        %v4440 = vpop.f32.mrb[0].mxu0
        %v4441 = vadd.f32 0.0, %v4440
        %v4442 = vpop.f32.mrb[0].mxu0
        %4443 = vdwg.mxu0
        %s4444 = scalar_lea.vmem %s39, 32
        %v4445 = vld [vmem:[%s4444] sm:$0xff]
        %s4446 = scalar_lea.vmem %s27, 160
        %v4447 = vld [vmem:[%s4446] sm:$0xff]
        %v4448 = vld [vmem:[%s4446 + $0x8] sm:$0xff]
        %v4449 = vld [vmem:[%s4446 + $0x10] sm:$0xff]
        %v4450 = vld [vmem:[%s4446 + $0x18] sm:$0xff]
        %s4451 = scalar_lea.vmem %s33, 5
        %v4452 = vld [vmem:[%s4451] sm:$0x1]
        %v4454 = vlaneseq
        %v4455 = vshrl.u32 %v4454, 7
        %v4456 = vsub.s32 0, %v4455
        %v4457 = vrot.slane %v4452, %v4456
        %4459 = vmatprep.subr.mxu0 0.0
        %4460 = vmatpush1.msra.mxu0 %v4447
        %4461 = vmatprep.subr.mxu0 0.0
        %4462 = vmatpush1.msra.mxu0 %v4448
        %4463 = vmatprep.subr.mxu0 0.0
        %4464 = vmatpush1.msra.mxu0 %v4449
        %4465 = vmatprep.subr.mxu0 0.0
        %4466 = vmatpush1.msra.mxu0 %v4450
        %4467 = vmatprep.subr.mxu0 0.0
        %4468 = vmatpush1.msra.mxu0 0.0
        %4469 = vmatprep.subr.mxu0 0.0
        %4470 = vmatpush1.msra.mxu0 0.0
        %4471 = vmatprep.subr.mxu0 0.0
        %4472 = vmatpush1.msra.mxu0 0.0
        %4473 = vmatprep.subr.mxu0 0.0
        %4474 = vmatpush1.msra.mxu0 0.0
        %4475 = vmatprep.subr.mxu0 0.0
        %4476 = vmatpush1.msra.mxu0 0.0
        %4477 = vmatprep.subr.mxu0 0.0
        %4478 = vmatpush1.msra.mxu0 0.0
        %4479 = vmatprep.subr.mxu0 0.0
        %4480 = vmatpush1.msra.mxu0 0.0
        %4481 = vmatprep.subr.mxu0 0.0
        %4482 = vmatpush1.msra.mxu0 0.0
        %4483 = vmatprep.subr.mxu0 0.0
        %4484 = vmatpush1.msra.mxu0 0.0
        %4485 = vmatprep.subr.mxu0 0.0
        %4486 = vmatpush1.msra.mxu0 0.0
        %4487 = vmatprep.subr.mxu0 0.0
        %4488 = vmatpush1.msra.mxu0 0.0
        %4489 = vmatprep.subr.mxu0 0.0
        %4490 = vmatpush1.msra.mxu0 0.0
        %4491 = vmatprep.subr.mxu0 0.0
        %4492 = vmatpush1.msra.mxu0 0.0
        %4493 = vmatprep.subr.mxu0 0.0
        %4494 = vmatpush1.msra.mxu0 0.0
        %4495 = vmatprep.subr.mxu0 0.0
        %4496 = vmatpush1.msra.mxu0 0.0
        %4497 = vmatprep.subr.mxu0 0.0
        %4498 = vmatpush1.msra.mxu0 0.0
        %4499 = vmatprep.subr.mxu0 0.0
        %4500 = vmatpush1.msra.mxu0 0.0
        %4501 = vmatprep.subr.mxu0 0.0
        %4502 = vmatpush1.msra.mxu0 0.0
        %4503 = vmatprep.subr.mxu0 0.0
        %4504 = vmatpush1.msra.mxu0 0.0
        %4505 = vmatprep.subr.mxu0 0.0
        %4506 = vmatpush1.msra.mxu0 0.0
        %4507 = vmatprep.subr.mxu0 0.0
        %4508 = vmatpush1.msra.mxu0 0.0
        %4509 = vmatprep.subr.mxu0 0.0
        %4510 = vmatpush1.msra.mxu0 0.0
        %4511 = vmatprep.subr.mxu0 0.0
        %4512 = vmatpush1.msra.mxu0 0.0
        %4513 = vmatprep.subr.mxu0 0.0
        %4514 = vmatpush1.msra.mxu0 0.0
        %4515 = vmatprep.subr.mxu0 0.0
        %4516 = vmatpush1.msra.mxu0 0.0
        %4517 = vmatprep.subr.mxu0 0.0
        %4518 = vmatpush1.msra.mxu0 0.0
        %4519 = vmatprep.subr.mxu0 0.0
        %4520 = vmatpush1.msra.mxu0 0.0
        %4521 = vmatprep.subr.mxu0 0.0
        %4522 = vmatpush1.msra.mxu0 0.0
        %4523 = vmatprep.mubr.f32.mxu0 0.0
        %4524 = vmatmul.mubr.f32.gmra.mrb[0].mxu0 %v3994
        %v4525 = vpop.f32.mrb[0].mxu0
        %v4526 = vadd.f32 %v4457, %v4525
        %v4527 = vpop.f32.mrb[0].mxu0
        %4528 = vmatprep.mubr.f32.mxu0 0.0
        %4529 = vmatmul.mubr.f32.gmra.mrb[0].mxu0 %v3997
        %v4530 = vpop.f32.mrb[0].mxu0
        %v4531 = vadd.f32 %v4457, %v4530
        %v4532 = vpop.f32.mrb[0].mxu0
        %4533 = vdwg.mxu0
        %s4534 = scalar_lea.vmem %s29, 160
        %v4535 = vld [vmem:[%s4534] sm:$0xff]
        %v4536 = vld [vmem:[%s4534 + $0x8] sm:$0xff]
        %v4537 = vld [vmem:[%s4534 + $0x10] sm:$0xff]
        %v4538 = vld [vmem:[%s4534 + $0x18] sm:$0xff]
        %s4539 = scalar_lea.vmem %s35, 5
        %v4540 = vld [vmem:[%s4539] sm:$0x1]
        %v4542 = vlaneseq
        %v4543 = vshrl.u32 %v4542, 7
        %v4544 = vsub.s32 0, %v4543
        %v4545 = vrot.slane %v4540, %v4544
        %4547 = vmatprep.subr.mxu0 0.0
        %4548 = vmatpush1.msra.mxu0 %v4535
        %4549 = vmatprep.subr.mxu0 0.0
        %4550 = vmatpush1.msra.mxu0 %v4536
        %4551 = vmatprep.subr.mxu0 0.0
        %4552 = vmatpush1.msra.mxu0 %v4537
        %4553 = vmatprep.subr.mxu0 0.0
        %4554 = vmatpush1.msra.mxu0 %v4538
        %4555 = vmatprep.subr.mxu0 0.0
        %4556 = vmatpush1.msra.mxu0 0.0
        %4557 = vmatprep.subr.mxu0 0.0
        %4558 = vmatpush1.msra.mxu0 0.0
        %4559 = vmatprep.subr.mxu0 0.0
        %4560 = vmatpush1.msra.mxu0 0.0
        %4561 = vmatprep.subr.mxu0 0.0
        %4562 = vmatpush1.msra.mxu0 0.0
        %4563 = vmatprep.subr.mxu0 0.0
        %4564 = vmatpush1.msra.mxu0 0.0
        %4565 = vmatprep.subr.mxu0 0.0
        %4566 = vmatpush1.msra.mxu0 0.0
        %4567 = vmatprep.subr.mxu0 0.0
        %4568 = vmatpush1.msra.mxu0 0.0
        %4569 = vmatprep.subr.mxu0 0.0
        %4570 = vmatpush1.msra.mxu0 0.0
        %4571 = vmatprep.subr.mxu0 0.0
        %4572 = vmatpush1.msra.mxu0 0.0
        %4573 = vmatprep.subr.mxu0 0.0
        %4574 = vmatpush1.msra.mxu0 0.0
        %4575 = vmatprep.subr.mxu0 0.0
        %4576 = vmatpush1.msra.mxu0 0.0
        %4577 = vmatprep.subr.mxu0 0.0
        %4578 = vmatpush1.msra.mxu0 0.0
        %4579 = vmatprep.subr.mxu0 0.0
        %4580 = vmatpush1.msra.mxu0 0.0
        %4581 = vmatprep.subr.mxu0 0.0
        %4582 = vmatpush1.msra.mxu0 0.0
        %4583 = vmatprep.subr.mxu0 0.0
        %4584 = vmatpush1.msra.mxu0 0.0
        %4585 = vmatprep.subr.mxu0 0.0
        %4586 = vmatpush1.msra.mxu0 0.0
        %4587 = vmatprep.subr.mxu0 0.0
        %4588 = vmatpush1.msra.mxu0 0.0
        %4589 = vmatprep.subr.mxu0 0.0
        %4590 = vmatpush1.msra.mxu0 0.0
        %4591 = vmatprep.subr.mxu0 0.0
        %4592 = vmatpush1.msra.mxu0 0.0
        %4593 = vmatprep.subr.mxu0 0.0
        %4594 = vmatpush1.msra.mxu0 0.0
        %4595 = vmatprep.subr.mxu0 0.0
        %4596 = vmatpush1.msra.mxu0 0.0
        %4597 = vmatprep.subr.mxu0 0.0
        %4598 = vmatpush1.msra.mxu0 0.0
        %4599 = vmatprep.subr.mxu0 0.0
        %4600 = vmatpush1.msra.mxu0 0.0
        %4601 = vmatprep.subr.mxu0 0.0
        %4602 = vmatpush1.msra.mxu0 0.0
        %4603 = vmatprep.subr.mxu0 0.0
        %4604 = vmatpush1.msra.mxu0 0.0
        %4605 = vmatprep.subr.mxu0 0.0
        %4606 = vmatpush1.msra.mxu0 0.0
        %4607 = vmatprep.subr.mxu0 0.0
        %4608 = vmatpush1.msra.mxu0 0.0
        %4609 = vmatprep.subr.mxu0 0.0
        %4610 = vmatpush1.msra.mxu0 0.0
        %4611 = vmatprep.mubr.f32.mxu0 0.0
        %4612 = vmatmul.mubr.f32.gmra.mrb[0].mxu0 %v3994
        %v4613 = vpop.f32.mrb[0].mxu0
        %v4614 = vadd.f32 %v4545, %v4613
        %v4615 = vpop.f32.mrb[0].mxu0
        %4616 = vmatprep.mubr.f32.mxu0 0.0
        %4617 = vmatmul.mubr.f32.gmra.mrb[0].mxu0 %v3997
        %v4618 = vpop.f32.mrb[0].mxu0
        %v4619 = vadd.f32 %v4545, %v4618
        %v4620 = vpop.f32.mrb[0].mxu0
        %4621 = vdwg.mxu0
        %s4622 = scalar_lea.vmem %s31, 160
        %v4623 = vld [vmem:[%s4622] sm:$0xff]
        %v4624 = vld [vmem:[%s4622 + $0x8] sm:$0xff]
        %v4625 = vld [vmem:[%s4622 + $0x10] sm:$0xff]
        %v4626 = vld [vmem:[%s4622 + $0x18] sm:$0xff]
        %s4627 = scalar_lea.vmem %s37, 5
        %v4628 = vld [vmem:[%s4627] sm:$0x1]
        %v4630 = vlaneseq
        %v4631 = vshrl.u32 %v4630, 7
        %v4632 = vsub.s32 0, %v4631
        %v4633 = vrot.slane %v4628, %v4632
        %4635 = vmatprep.subr.mxu0 0.0
        %4636 = vmatpush1.msra.mxu0 %v4623
        %4637 = vmatprep.subr.mxu0 0.0
        %4638 = vmatpush1.msra.mxu0 %v4624
        %4639 = vmatprep.subr.mxu0 0.0
        %4640 = vmatpush1.msra.mxu0 %v4625
        %4641 = vmatprep.subr.mxu0 0.0
        %4642 = vmatpush1.msra.mxu0 %v4626
        %4643 = vmatprep.subr.mxu0 0.0
        %4644 = vmatpush1.msra.mxu0 0.0
        %4645 = vmatprep.subr.mxu0 0.0
        %4646 = vmatpush1.msra.mxu0 0.0
        %4647 = vmatprep.subr.mxu0 0.0
        %4648 = vmatpush1.msra.mxu0 0.0
        %4649 = vmatprep.subr.mxu0 0.0
        %4650 = vmatpush1.msra.mxu0 0.0
        %4651 = vmatprep.subr.mxu0 0.0
        %4652 = vmatpush1.msra.mxu0 0.0
        %4653 = vmatprep.subr.mxu0 0.0
        %4654 = vmatpush1.msra.mxu0 0.0
        %4655 = vmatprep.subr.mxu0 0.0
        %4656 = vmatpush1.msra.mxu0 0.0
        %4657 = vmatprep.subr.mxu0 0.0
        %4658 = vmatpush1.msra.mxu0 0.0
        %4659 = vmatprep.subr.mxu0 0.0
        %4660 = vmatpush1.msra.mxu0 0.0
        %4661 = vmatprep.subr.mxu0 0.0
        %4662 = vmatpush1.msra.mxu0 0.0
        %4663 = vmatprep.subr.mxu0 0.0
        %4664 = vmatpush1.msra.mxu0 0.0
        %4665 = vmatprep.subr.mxu0 0.0
        %4666 = vmatpush1.msra.mxu0 0.0
        %4667 = vmatprep.subr.mxu0 0.0
        %4668 = vmatpush1.msra.mxu0 0.0
        %4669 = vmatprep.subr.mxu0 0.0
        %4670 = vmatpush1.msra.mxu0 0.0
        %4671 = vmatprep.subr.mxu0 0.0
        %4672 = vmatpush1.msra.mxu0 0.0
        %4673 = vmatprep.subr.mxu0 0.0
        %4674 = vmatpush1.msra.mxu0 0.0
        %4675 = vmatprep.subr.mxu0 0.0
        %4676 = vmatpush1.msra.mxu0 0.0
        %4677 = vmatprep.subr.mxu0 0.0
        %4678 = vmatpush1.msra.mxu0 0.0
        %4679 = vmatprep.subr.mxu0 0.0
        %4680 = vmatpush1.msra.mxu0 0.0
        %4681 = vmatprep.subr.mxu0 0.0
        %4682 = vmatpush1.msra.mxu0 0.0
        %4683 = vmatprep.subr.mxu0 0.0
        %4684 = vmatpush1.msra.mxu0 0.0
        %4685 = vmatprep.subr.mxu0 0.0
        %4686 = vmatpush1.msra.mxu0 0.0
        %4687 = vmatprep.subr.mxu0 0.0
        %4688 = vmatpush1.msra.mxu0 0.0
        %4689 = vmatprep.subr.mxu0 0.0
        %4690 = vmatpush1.msra.mxu0 0.0
        %4691 = vmatprep.subr.mxu0 0.0
        %4692 = vmatpush1.msra.mxu0 0.0
        %4693 = vmatprep.subr.mxu0 0.0
        %4694 = vmatpush1.msra.mxu0 0.0
        %4695 = vmatprep.subr.mxu0 0.0
        %4696 = vmatpush1.msra.mxu0 0.0
        %4697 = vmatprep.subr.mxu0 0.0
        %4698 = vmatpush1.msra.mxu0 0.0
        %4699 = vmatprep.mubr.f32.mxu0 0.0
        %4700 = vmatmul.mubr.f32.gmra.mrb[0].mxu0 %v3994
        %v4701 = vpop.f32.mrb[0].mxu0
        %v4702 = vadd.f32 %v4633, %v4701
        %v4703 = vpop.f32.mrb[0].mxu0
        %4704 = vmatprep.mubr.f32.mxu0 0.0
        %4705 = vmatmul.mubr.f32.gmra.mrb[0].mxu0 %v3997
        %v4706 = vpop.f32.mrb[0].mxu0
        %v4707 = vadd.f32 %v4633, %v4706
        %v4708 = vpop.f32.mrb[0].mxu0
        %4709 = vdwg.mxu0
        %v4711 = vsel %vm1769, %v4526, 0
        %v4714 = vsel %vm1769, %v4531, 0
        %v4717 = vsel %vm1769, %v4614, 0
        %v4720 = vsel %vm1769, %v4619, 0
        %4722 = vmatprep.subr.mxu0 0.0
        %4723 = vmatpush1.xpose.msra.mxu0 %v4717
        %4724 = vmatprep.subr.mxu0 0.0
        %4725 = vmatpush1.xpose.msra.mxu0 %v4720
        %4726 = vmatprep.subr.mxu0 0.0
        %4727 = vmatpush1.xpose.msra.mxu0 0.0
        %4728 = vmatprep.subr.mxu0 0.0
        %4729 = vmatpush1.xpose.msra.mxu0 0.0
        %4730 = vmatprep.subr.mxu0 0.0
        %4731 = vmatpush1.xpose.msra.mxu0 0.0
        %4732 = vmatprep.subr.mxu0 0.0
        %4733 = vmatpush1.xpose.msra.mxu0 0.0
        %4734 = vmatprep.subr.mxu0 0.0
        %4735 = vmatpush1.xpose.msra.mxu0 0.0
        %4736 = vmatprep.subr.mxu0 0.0
        %4737 = vmatpush1.xpose.msra.mxu0 0.0
        %4738 = vmatprep.subr.mxu0 0.0
        %4739 = vmatpush1.xpose.msra.mxu0 0.0
        %4740 = vmatprep.subr.mxu0 0.0
        %4741 = vmatpush1.xpose.msra.mxu0 0.0
        %4742 = vmatprep.subr.mxu0 0.0
        %4743 = vmatpush1.xpose.msra.mxu0 0.0
        %4744 = vmatprep.subr.mxu0 0.0
        %4745 = vmatpush1.xpose.msra.mxu0 0.0
        %4746 = vmatprep.subr.mxu0 0.0
        %4747 = vmatpush1.xpose.msra.mxu0 0.0
        %4748 = vmatprep.subr.mxu0 0.0
        %4749 = vmatpush1.xpose.msra.mxu0 0.0
        %4750 = vmatprep.subr.mxu0 0.0
        %4751 = vmatpush1.xpose.msra.mxu0 0.0
        %4752 = vmatprep.subr.mxu0 0.0
        %4753 = vmatpush1.xpose.msra.mxu0 0.0
        %4754 = vmatprep.subr.mxu0 0.0
        %4755 = vmatpush1.xpose.msra.mxu0 0.0
        %4756 = vmatprep.subr.mxu0 0.0
        %4757 = vmatpush1.xpose.msra.mxu0 0.0
        %4758 = vmatprep.subr.mxu0 0.0
        %4759 = vmatpush1.xpose.msra.mxu0 0.0
        %4760 = vmatprep.subr.mxu0 0.0
        %4761 = vmatpush1.xpose.msra.mxu0 0.0
        %4762 = vmatprep.subr.mxu0 0.0
        %4763 = vmatpush1.xpose.msra.mxu0 0.0
        %4764 = vmatprep.subr.mxu0 0.0
        %4765 = vmatpush1.xpose.msra.mxu0 0.0
        %4766 = vmatprep.subr.mxu0 0.0
        %4767 = vmatpush1.xpose.msra.mxu0 0.0
        %4768 = vmatprep.subr.mxu0 0.0
        %4769 = vmatpush1.xpose.msra.mxu0 0.0
        %4770 = vmatprep.subr.mxu0 0.0
        %4771 = vmatpush1.xpose.msra.mxu0 0.0
        %4772 = vmatprep.subr.mxu0 0.0
        %4773 = vmatpush1.xpose.msra.mxu0 0.0
        %4774 = vmatprep.subr.mxu0 0.0
        %4775 = vmatpush1.xpose.msra.mxu0 0.0
        %4776 = vmatprep.subr.mxu0 0.0
        %4777 = vmatpush1.xpose.msra.mxu0 0.0
        %4778 = vmatprep.subr.mxu0 0.0
        %4779 = vmatpush1.xpose.msra.mxu0 0.0
        %4780 = vmatprep.subr.mxu0 0.0
        %4781 = vmatpush1.xpose.msra.mxu0 0.0
        %4782 = vmatprep.subr.mxu0 0.0
        %4783 = vmatpush1.xpose.msra.mxu0 0.0
        %4784 = vmatprep.subr.mxu0 0.0
        %4785 = vmatpush1.xpose.msra.mxu0 0.0
        %4786 = vmatprep.mubr.f32.mxu0 0.0
        %4787 = vmatmul.mubr.f32.gmra.mrb[0].mxu0 %v4711
        %v4788 = vpop.f32.mrb[0].mxu0
        %v4789 = vadd.f32 0.0, %v4788
        %v4790 = vpop.f32.mrb[0].mxu0
        %4791 = vmatprep.mubr.f32.mxu0 0.0
        %4792 = vmatmul.mubr.f32.gmra.mrb[0].mxu0 %v4714
        %v4793 = vpop.f32.mrb[0].mxu0
        %v4794 = vadd.f32 0.0, %v4793
        %v4795 = vpop.f32.mrb[0].mxu0
        %4796 = vdwg.mxu0
        %v4797 = vmul.f32 %v4789, 0.35355338
        %v4798 = vmul.f32 %v4794, 0.35355338
        %v4799 = vadd.f32 %v4797, %v1863
        %v4800 = vadd.f32 %v4798, %v1863
        %v4801 = vsel %vm1867, %v4799, -inf
        %4802 = vmax.xlane.f32.xlu0 %v4801
        %v4803 = vpop.xlane.xlu0 %4802
        %v4804 = vsel %vm1867, %v4800, -inf
        %4805 = vmax.xlane.f32.xlu0 %v4804
        %v4806 = vpop.xlane.xlu0 %4805
        %v4807 = vsub.f32 %v4799, %v4803
        %v4808 = vsub.f32 %v4800, %v4806
        %v4809 = vmul.f32 %v4807, 1.442695
        %v4810 = vpow.pop %v4809
        %v4811 = vmul.f32 %v4808, 1.442695
        %v4812 = vpow.pop %v4811
        %v4813 = vsel %vm1867, %v4810, 0.0
        %4814 = vadd.xlane.f32.xlu0 %v4813
        %v4815 = vpop.xlane.xlu0 %4814
        %v4816 = vsel %vm1867, %v4812, 0.0
        %4817 = vadd.xlane.f32.xlu0 %v4816
        %v4818 = vpop.xlane.xlu0 %4817
        %v4819 = vrcp.pop %v4815
        %v4820 = vmul.f32 %v4810, %v4819
        %v4821 = vrcp.pop %v4818
        %v4822 = vmul.f32 %v4812, %v4821
        %v4824 = vsel %vm1867, %v4820, 0
        %v4827 = vsel %vm1867, %v4822, 0
        %4829 = vmatprep.subr.mxu0 0.0
        %4830 = vmatpush1.msra.mxu0 %v4702
        %4831 = vmatprep.subr.mxu0 0.0
        %4832 = vmatpush1.msra.mxu0 %v4707
        %4833 = vmatprep.subr.mxu0 0.0
        %4834 = vmatpush1.msra.mxu0 0.0
        %4835 = vmatprep.subr.mxu0 0.0
        %4836 = vmatpush1.msra.mxu0 0.0
        %4837 = vmatprep.subr.mxu0 0.0
        %4838 = vmatpush1.msra.mxu0 0.0
        %4839 = vmatprep.subr.mxu0 0.0
        %4840 = vmatpush1.msra.mxu0 0.0
        %4841 = vmatprep.subr.mxu0 0.0
        %4842 = vmatpush1.msra.mxu0 0.0
        %4843 = vmatprep.subr.mxu0 0.0
        %4844 = vmatpush1.msra.mxu0 0.0
        %4845 = vmatprep.subr.mxu0 0.0
        %4846 = vmatpush1.msra.mxu0 0.0
        %4847 = vmatprep.subr.mxu0 0.0
        %4848 = vmatpush1.msra.mxu0 0.0
        %4849 = vmatprep.subr.mxu0 0.0
        %4850 = vmatpush1.msra.mxu0 0.0
        %4851 = vmatprep.subr.mxu0 0.0
        %4852 = vmatpush1.msra.mxu0 0.0
        %4853 = vmatprep.subr.mxu0 0.0
        %4854 = vmatpush1.msra.mxu0 0.0
        %4855 = vmatprep.subr.mxu0 0.0
        %4856 = vmatpush1.msra.mxu0 0.0
        %4857 = vmatprep.subr.mxu0 0.0
        %4858 = vmatpush1.msra.mxu0 0.0
        %4859 = vmatprep.subr.mxu0 0.0
        %4860 = vmatpush1.msra.mxu0 0.0
        %4861 = vmatprep.subr.mxu0 0.0
        %4862 = vmatpush1.msra.mxu0 0.0
        %4863 = vmatprep.subr.mxu0 0.0
        %4864 = vmatpush1.msra.mxu0 0.0
        %4865 = vmatprep.subr.mxu0 0.0
        %4866 = vmatpush1.msra.mxu0 0.0
        %4867 = vmatprep.subr.mxu0 0.0
        %4868 = vmatpush1.msra.mxu0 0.0
        %4869 = vmatprep.subr.mxu0 0.0
        %4870 = vmatpush1.msra.mxu0 0.0
        %4871 = vmatprep.subr.mxu0 0.0
        %4872 = vmatpush1.msra.mxu0 0.0
        %4873 = vmatprep.subr.mxu0 0.0
        %4874 = vmatpush1.msra.mxu0 0.0
        %4875 = vmatprep.subr.mxu0 0.0
        %4876 = vmatpush1.msra.mxu0 0.0
        %4877 = vmatprep.subr.mxu0 0.0
        %4878 = vmatpush1.msra.mxu0 0.0
        %4879 = vmatprep.subr.mxu0 0.0
        %4880 = vmatpush1.msra.mxu0 0.0
        %4881 = vmatprep.subr.mxu0 0.0
        %4882 = vmatpush1.msra.mxu0 0.0
        %4883 = vmatprep.subr.mxu0 0.0
        %4884 = vmatpush1.msra.mxu0 0.0
        %4885 = vmatprep.subr.mxu0 0.0
        %4886 = vmatpush1.msra.mxu0 0.0
        %4887 = vmatprep.subr.mxu0 0.0
        %4888 = vmatpush1.msra.mxu0 0.0
        %4889 = vmatprep.subr.mxu0 0.0
        %4890 = vmatpush1.msra.mxu0 0.0
        %4891 = vmatprep.subr.mxu0 0.0
        %4892 = vmatpush1.msra.mxu0 0.0
        %4893 = vmatprep.mubr.f32.mxu0 0.0
        %4894 = vmatmul.mubr.f32.gmra.mrb[0].mxu0 %v4824
        %v4895 = vpop.f32.mrb[0].mxu0
        %v4896 = vadd.f32 0.0, %v4895
        %v4897 = vpop.f32.mrb[0].mxu0
        %4898 = vmatprep.mubr.f32.mxu0 0.0
        %4899 = vmatmul.mubr.f32.gmra.mrb[0].mxu0 %v4827
        %v4900 = vpop.f32.mrb[0].mxu0
        %v4901 = vadd.f32 0.0, %v4900
        %v4902 = vpop.f32.mrb[0].mxu0
        %4903 = vdwg.mxu0
        %s4904 = scalar_lea.vmem %s39, 40
        %v4905 = vld [vmem:[%s4904] sm:$0xff]
        %v4907 = vsel %vm1769, %v4896, 0
        %v4910 = vsel %vm1769, %v4901, 0
        %4912 = vmatprep.subr.mxu0 0.0
        %4913 = vmatpush1.msra.mxu0 %v4905
        %4914 = vmatprep.subr.mxu0 0.0
        %4915 = vmatpush1.msra.mxu0 0.0
        %4916 = vmatprep.subr.mxu0 0.0
        %4917 = vmatpush1.msra.mxu0 0.0
        %4918 = vmatprep.subr.mxu0 0.0
        %4919 = vmatpush1.msra.mxu0 0.0
        %4920 = vmatprep.subr.mxu0 0.0
        %4921 = vmatpush1.msra.mxu0 0.0
        %4922 = vmatprep.subr.mxu0 0.0
        %4923 = vmatpush1.msra.mxu0 0.0
        %4924 = vmatprep.subr.mxu0 0.0
        %4925 = vmatpush1.msra.mxu0 0.0
        %4926 = vmatprep.subr.mxu0 0.0
        %4927 = vmatpush1.msra.mxu0 0.0
        %4928 = vmatprep.subr.mxu0 0.0
        %4929 = vmatpush1.msra.mxu0 0.0
        %4930 = vmatprep.subr.mxu0 0.0
        %4931 = vmatpush1.msra.mxu0 0.0
        %4932 = vmatprep.subr.mxu0 0.0
        %4933 = vmatpush1.msra.mxu0 0.0
        %4934 = vmatprep.subr.mxu0 0.0
        %4935 = vmatpush1.msra.mxu0 0.0
        %4936 = vmatprep.subr.mxu0 0.0
        %4937 = vmatpush1.msra.mxu0 0.0
        %4938 = vmatprep.subr.mxu0 0.0
        %4939 = vmatpush1.msra.mxu0 0.0
        %4940 = vmatprep.subr.mxu0 0.0
        %4941 = vmatpush1.msra.mxu0 0.0
        %4942 = vmatprep.subr.mxu0 0.0
        %4943 = vmatpush1.msra.mxu0 0.0
        %4944 = vmatprep.subr.mxu0 0.0
        %4945 = vmatpush1.msra.mxu0 0.0
        %4946 = vmatprep.subr.mxu0 0.0
        %4947 = vmatpush1.msra.mxu0 0.0
        %4948 = vmatprep.subr.mxu0 0.0
        %4949 = vmatpush1.msra.mxu0 0.0
        %4950 = vmatprep.subr.mxu0 0.0
        %4951 = vmatpush1.msra.mxu0 0.0
        %4952 = vmatprep.subr.mxu0 0.0
        %4953 = vmatpush1.msra.mxu0 0.0
        %4954 = vmatprep.subr.mxu0 0.0
        %4955 = vmatpush1.msra.mxu0 0.0
        %4956 = vmatprep.subr.mxu0 0.0
        %4957 = vmatpush1.msra.mxu0 0.0
        %4958 = vmatprep.subr.mxu0 0.0
        %4959 = vmatpush1.msra.mxu0 0.0
        %4960 = vmatprep.subr.mxu0 0.0
        %4961 = vmatpush1.msra.mxu0 0.0
        %4962 = vmatprep.subr.mxu0 0.0
        %4963 = vmatpush1.msra.mxu0 0.0
        %4964 = vmatprep.subr.mxu0 0.0
        %4965 = vmatpush1.msra.mxu0 0.0
        %4966 = vmatprep.subr.mxu0 0.0
        %4967 = vmatpush1.msra.mxu0 0.0
        %4968 = vmatprep.subr.mxu0 0.0
        %4969 = vmatpush1.msra.mxu0 0.0
        %4970 = vmatprep.subr.mxu0 0.0
        %4971 = vmatpush1.msra.mxu0 0.0
        %4972 = vmatprep.subr.mxu0 0.0
        %4973 = vmatpush1.msra.mxu0 0.0
        %4974 = vmatprep.subr.mxu0 0.0
        %4975 = vmatpush1.msra.mxu0 0.0
        %4976 = vmatprep.mubr.f32.mxu0 0.0
        %4977 = vmatmul.mubr.f32.gmra.mrb[0].mxu0 %v4907
        %v4978 = vpop.f32.mrb[0].mxu0
        %v4979 = vadd.f32 0.0, %v4978
        %v4980 = vpop.f32.mrb[0].mxu0
        %4981 = vmatprep.mubr.f32.mxu0 0.0
        %4982 = vmatmul.mubr.f32.gmra.mrb[0].mxu0 %v4910
        %v4983 = vpop.f32.mrb[0].mxu0
        %v4984 = vadd.f32 0.0, %v4983
        %v4985 = vpop.f32.mrb[0].mxu0
        %4986 = vdwg.mxu0
        %v4988 = vsel %vm1769, %v4436, 0
        %v4991 = vsel %vm1769, %v4441, 0
        %4993 = vmatprep.subr.mxu0 0.0
        %4994 = vmatpush1.msra.mxu0 %v4445
        %4995 = vmatprep.subr.mxu0 0.0
        %4996 = vmatpush1.msra.mxu0 0.0
        %4997 = vmatprep.subr.mxu0 0.0
        %4998 = vmatpush1.msra.mxu0 0.0
        %4999 = vmatprep.subr.mxu0 0.0
        %5000 = vmatpush1.msra.mxu0 0.0
        %5001 = vmatprep.subr.mxu0 0.0
        %5002 = vmatpush1.msra.mxu0 0.0
        %5003 = vmatprep.subr.mxu0 0.0
        %5004 = vmatpush1.msra.mxu0 0.0
        %5005 = vmatprep.subr.mxu0 0.0
        %5006 = vmatpush1.msra.mxu0 0.0
        %5007 = vmatprep.subr.mxu0 0.0
        %5008 = vmatpush1.msra.mxu0 0.0
        %5009 = vmatprep.subr.mxu0 0.0
        %5010 = vmatpush1.msra.mxu0 0.0
        %5011 = vmatprep.subr.mxu0 0.0
        %5012 = vmatpush1.msra.mxu0 0.0
        %5013 = vmatprep.subr.mxu0 0.0
        %5014 = vmatpush1.msra.mxu0 0.0
        %5015 = vmatprep.subr.mxu0 0.0
        %5016 = vmatpush1.msra.mxu0 0.0
        %5017 = vmatprep.subr.mxu0 0.0
        %5018 = vmatpush1.msra.mxu0 0.0
        %5019 = vmatprep.subr.mxu0 0.0
        %5020 = vmatpush1.msra.mxu0 0.0
        %5021 = vmatprep.subr.mxu0 0.0
        %5022 = vmatpush1.msra.mxu0 0.0
        %5023 = vmatprep.subr.mxu0 0.0
        %5024 = vmatpush1.msra.mxu0 0.0
        %5025 = vmatprep.subr.mxu0 0.0
        %5026 = vmatpush1.msra.mxu0 0.0
        %5027 = vmatprep.subr.mxu0 0.0
        %5028 = vmatpush1.msra.mxu0 0.0
        %5029 = vmatprep.subr.mxu0 0.0
        %5030 = vmatpush1.msra.mxu0 0.0
        %5031 = vmatprep.subr.mxu0 0.0
        %5032 = vmatpush1.msra.mxu0 0.0
        %5033 = vmatprep.subr.mxu0 0.0
        %5034 = vmatpush1.msra.mxu0 0.0
        %5035 = vmatprep.subr.mxu0 0.0
        %5036 = vmatpush1.msra.mxu0 0.0
        %5037 = vmatprep.subr.mxu0 0.0
        %5038 = vmatpush1.msra.mxu0 0.0
        %5039 = vmatprep.subr.mxu0 0.0
        %5040 = vmatpush1.msra.mxu0 0.0
        %5041 = vmatprep.subr.mxu0 0.0
        %5042 = vmatpush1.msra.mxu0 0.0
        %5043 = vmatprep.subr.mxu0 0.0
        %5044 = vmatpush1.msra.mxu0 0.0
        %5045 = vmatprep.subr.mxu0 0.0
        %5046 = vmatpush1.msra.mxu0 0.0
        %5047 = vmatprep.subr.mxu0 0.0
        %5048 = vmatpush1.msra.mxu0 0.0
        %5049 = vmatprep.subr.mxu0 0.0
        %5050 = vmatpush1.msra.mxu0 0.0
        %5051 = vmatprep.subr.mxu0 0.0
        %5052 = vmatpush1.msra.mxu0 0.0
        %5053 = vmatprep.subr.mxu0 0.0
        %5054 = vmatpush1.msra.mxu0 0.0
        %5055 = vmatprep.subr.mxu0 0.0
        %5056 = vmatpush1.msra.mxu0 0.0
        %5057 = vmatprep.mubr.f32.mxu0 0.0
        %5058 = vmatmul.mubr.f32.gmra.mrb[0].mxu0 %v4988
        %v5059 = vpop.f32.mrb[0].mxu0
        %v5060 = vadd.f32 %v4979, %v5059
        %v5061 = vpop.f32.mrb[0].mxu0
        %5062 = vmatprep.mubr.f32.mxu0 0.0
        %5063 = vmatmul.mubr.f32.gmra.mrb[0].mxu0 %v4991
        %v5064 = vpop.f32.mrb[0].mxu0
        %v5065 = vadd.f32 %v4984, %v5064
        %v5066 = vpop.f32.mrb[0].mxu0
        %5067 = vdwg.mxu0
        %s5068 = scalar_lea.vmem %s27, 192
        %v5069 = vld [vmem:[%s5068] sm:$0xff]
        %v5070 = vld [vmem:[%s5068 + $0x8] sm:$0xff]
        %v5071 = vld [vmem:[%s5068 + $0x10] sm:$0xff]
        %v5072 = vld [vmem:[%s5068 + $0x18] sm:$0xff]
        %s5073 = scalar_lea.vmem %s33, 6
        %v5074 = vld [vmem:[%s5073] sm:$0x1]
        %v5076 = vlaneseq
        %v5077 = vshrl.u32 %v5076, 7
        %v5078 = vsub.s32 0, %v5077
        %v5079 = vrot.slane %v5074, %v5078
        %5081 = vmatprep.subr.mxu0 0.0
        %5082 = vmatpush1.msra.mxu0 %v5069
        %5083 = vmatprep.subr.mxu0 0.0
        %5084 = vmatpush1.msra.mxu0 %v5070
        %5085 = vmatprep.subr.mxu0 0.0
        %5086 = vmatpush1.msra.mxu0 %v5071
        %5087 = vmatprep.subr.mxu0 0.0
        %5088 = vmatpush1.msra.mxu0 %v5072
        %5089 = vmatprep.subr.mxu0 0.0
        %5090 = vmatpush1.msra.mxu0 0.0
        %5091 = vmatprep.subr.mxu0 0.0
        %5092 = vmatpush1.msra.mxu0 0.0
        %5093 = vmatprep.subr.mxu0 0.0
        %5094 = vmatpush1.msra.mxu0 0.0
        %5095 = vmatprep.subr.mxu0 0.0
        %5096 = vmatpush1.msra.mxu0 0.0
        %5097 = vmatprep.subr.mxu0 0.0
        %5098 = vmatpush1.msra.mxu0 0.0
        %5099 = vmatprep.subr.mxu0 0.0
        %5100 = vmatpush1.msra.mxu0 0.0
        %5101 = vmatprep.subr.mxu0 0.0
        %5102 = vmatpush1.msra.mxu0 0.0
        %5103 = vmatprep.subr.mxu0 0.0
        %5104 = vmatpush1.msra.mxu0 0.0
        %5105 = vmatprep.subr.mxu0 0.0
        %5106 = vmatpush1.msra.mxu0 0.0
        %5107 = vmatprep.subr.mxu0 0.0
        %5108 = vmatpush1.msra.mxu0 0.0
        %5109 = vmatprep.subr.mxu0 0.0
        %5110 = vmatpush1.msra.mxu0 0.0
        %5111 = vmatprep.subr.mxu0 0.0
        %5112 = vmatpush1.msra.mxu0 0.0
        %5113 = vmatprep.subr.mxu0 0.0
        %5114 = vmatpush1.msra.mxu0 0.0
        %5115 = vmatprep.subr.mxu0 0.0
        %5116 = vmatpush1.msra.mxu0 0.0
        %5117 = vmatprep.subr.mxu0 0.0
        %5118 = vmatpush1.msra.mxu0 0.0
        %5119 = vmatprep.subr.mxu0 0.0
        %5120 = vmatpush1.msra.mxu0 0.0
        %5121 = vmatprep.subr.mxu0 0.0
        %5122 = vmatpush1.msra.mxu0 0.0
        %5123 = vmatprep.subr.mxu0 0.0
        %5124 = vmatpush1.msra.mxu0 0.0
        %5125 = vmatprep.subr.mxu0 0.0
        %5126 = vmatpush1.msra.mxu0 0.0
        %5127 = vmatprep.subr.mxu0 0.0
        %5128 = vmatpush1.msra.mxu0 0.0
        %5129 = vmatprep.subr.mxu0 0.0
        %5130 = vmatpush1.msra.mxu0 0.0
        %5131 = vmatprep.subr.mxu0 0.0
        %5132 = vmatpush1.msra.mxu0 0.0
        %5133 = vmatprep.subr.mxu0 0.0
        %5134 = vmatpush1.msra.mxu0 0.0
        %5135 = vmatprep.subr.mxu0 0.0
        %5136 = vmatpush1.msra.mxu0 0.0
        %5137 = vmatprep.subr.mxu0 0.0
        %5138 = vmatpush1.msra.mxu0 0.0
        %5139 = vmatprep.subr.mxu0 0.0
        %5140 = vmatpush1.msra.mxu0 0.0
        %5141 = vmatprep.subr.mxu0 0.0
        %5142 = vmatpush1.msra.mxu0 0.0
        %5143 = vmatprep.subr.mxu0 0.0
        %5144 = vmatpush1.msra.mxu0 0.0
        %5145 = vmatprep.mubr.f32.mxu0 0.0
        %5146 = vmatmul.mubr.f32.gmra.mrb[0].mxu0 %v3994
        %v5147 = vpop.f32.mrb[0].mxu0
        %v5148 = vadd.f32 %v5079, %v5147
        %v5149 = vpop.f32.mrb[0].mxu0
        %5150 = vmatprep.mubr.f32.mxu0 0.0
        %5151 = vmatmul.mubr.f32.gmra.mrb[0].mxu0 %v3997
        %v5152 = vpop.f32.mrb[0].mxu0
        %v5153 = vadd.f32 %v5079, %v5152
        %v5154 = vpop.f32.mrb[0].mxu0
        %5155 = vdwg.mxu0
        %s5156 = scalar_lea.vmem %s29, 192
        %v5157 = vld [vmem:[%s5156] sm:$0xff]
        %v5158 = vld [vmem:[%s5156 + $0x8] sm:$0xff]
        %v5159 = vld [vmem:[%s5156 + $0x10] sm:$0xff]
        %v5160 = vld [vmem:[%s5156 + $0x18] sm:$0xff]
        %s5161 = scalar_lea.vmem %s35, 6
        %v5162 = vld [vmem:[%s5161] sm:$0x1]
        %v5164 = vlaneseq
        %v5165 = vshrl.u32 %v5164, 7
        %v5166 = vsub.s32 0, %v5165
        %v5167 = vrot.slane %v5162, %v5166
        %5169 = vmatprep.subr.mxu0 0.0
        %5170 = vmatpush1.msra.mxu0 %v5157
        %5171 = vmatprep.subr.mxu0 0.0
        %5172 = vmatpush1.msra.mxu0 %v5158
        %5173 = vmatprep.subr.mxu0 0.0
        %5174 = vmatpush1.msra.mxu0 %v5159
        %5175 = vmatprep.subr.mxu0 0.0
        %5176 = vmatpush1.msra.mxu0 %v5160
        %5177 = vmatprep.subr.mxu0 0.0
        %5178 = vmatpush1.msra.mxu0 0.0
        %5179 = vmatprep.subr.mxu0 0.0
        %5180 = vmatpush1.msra.mxu0 0.0
        %5181 = vmatprep.subr.mxu0 0.0
        %5182 = vmatpush1.msra.mxu0 0.0
        %5183 = vmatprep.subr.mxu0 0.0
        %5184 = vmatpush1.msra.mxu0 0.0
        %5185 = vmatprep.subr.mxu0 0.0
        %5186 = vmatpush1.msra.mxu0 0.0
        %5187 = vmatprep.subr.mxu0 0.0
        %5188 = vmatpush1.msra.mxu0 0.0
        %5189 = vmatprep.subr.mxu0 0.0
        %5190 = vmatpush1.msra.mxu0 0.0
        %5191 = vmatprep.subr.mxu0 0.0
        %5192 = vmatpush1.msra.mxu0 0.0
        %5193 = vmatprep.subr.mxu0 0.0
        %5194 = vmatpush1.msra.mxu0 0.0
        %5195 = vmatprep.subr.mxu0 0.0
        %5196 = vmatpush1.msra.mxu0 0.0
        %5197 = vmatprep.subr.mxu0 0.0
        %5198 = vmatpush1.msra.mxu0 0.0
        %5199 = vmatprep.subr.mxu0 0.0
        %5200 = vmatpush1.msra.mxu0 0.0
        %5201 = vmatprep.subr.mxu0 0.0
        %5202 = vmatpush1.msra.mxu0 0.0
        %5203 = vmatprep.subr.mxu0 0.0
        %5204 = vmatpush1.msra.mxu0 0.0
        %5205 = vmatprep.subr.mxu0 0.0
        %5206 = vmatpush1.msra.mxu0 0.0
        %5207 = vmatprep.subr.mxu0 0.0
        %5208 = vmatpush1.msra.mxu0 0.0
        %5209 = vmatprep.subr.mxu0 0.0
        %5210 = vmatpush1.msra.mxu0 0.0
        %5211 = vmatprep.subr.mxu0 0.0
        %5212 = vmatpush1.msra.mxu0 0.0
        %5213 = vmatprep.subr.mxu0 0.0
        %5214 = vmatpush1.msra.mxu0 0.0
        %5215 = vmatprep.subr.mxu0 0.0
        %5216 = vmatpush1.msra.mxu0 0.0
        %5217 = vmatprep.subr.mxu0 0.0
        %5218 = vmatpush1.msra.mxu0 0.0
        %5219 = vmatprep.subr.mxu0 0.0
        %5220 = vmatpush1.msra.mxu0 0.0
        %5221 = vmatprep.subr.mxu0 0.0
        %5222 = vmatpush1.msra.mxu0 0.0
        %5223 = vmatprep.subr.mxu0 0.0
        %5224 = vmatpush1.msra.mxu0 0.0
        %5225 = vmatprep.subr.mxu0 0.0
        %5226 = vmatpush1.msra.mxu0 0.0
        %5227 = vmatprep.subr.mxu0 0.0
        %5228 = vmatpush1.msra.mxu0 0.0
        %5229 = vmatprep.subr.mxu0 0.0
        %5230 = vmatpush1.msra.mxu0 0.0
        %5231 = vmatprep.subr.mxu0 0.0
        %5232 = vmatpush1.msra.mxu0 0.0
        %5233 = vmatprep.mubr.f32.mxu0 0.0
        %5234 = vmatmul.mubr.f32.gmra.mrb[0].mxu0 %v3994
        %v5235 = vpop.f32.mrb[0].mxu0
        %v5236 = vadd.f32 %v5167, %v5235
        %v5237 = vpop.f32.mrb[0].mxu0
        %5238 = vmatprep.mubr.f32.mxu0 0.0
        %5239 = vmatmul.mubr.f32.gmra.mrb[0].mxu0 %v3997
        %v5240 = vpop.f32.mrb[0].mxu0
        %v5241 = vadd.f32 %v5167, %v5240
        %v5242 = vpop.f32.mrb[0].mxu0
        %5243 = vdwg.mxu0
        %s5244 = scalar_lea.vmem %s31, 192
        %v5245 = vld [vmem:[%s5244] sm:$0xff]
        %v5246 = vld [vmem:[%s5244 + $0x8] sm:$0xff]
        %v5247 = vld [vmem:[%s5244 + $0x10] sm:$0xff]
        %v5248 = vld [vmem:[%s5244 + $0x18] sm:$0xff]
        %s5249 = scalar_lea.vmem %s37, 6
        %v5250 = vld [vmem:[%s5249] sm:$0x1]
        %v5252 = vlaneseq
        %v5253 = vshrl.u32 %v5252, 7
        %v5254 = vsub.s32 0, %v5253
        %v5255 = vrot.slane %v5250, %v5254
        %5257 = vmatprep.subr.mxu0 0.0
        %5258 = vmatpush1.msra.mxu0 %v5245
        %5259 = vmatprep.subr.mxu0 0.0
        %5260 = vmatpush1.msra.mxu0 %v5246
        %5261 = vmatprep.subr.mxu0 0.0
        %5262 = vmatpush1.msra.mxu0 %v5247
        %5263 = vmatprep.subr.mxu0 0.0
        %5264 = vmatpush1.msra.mxu0 %v5248
        %5265 = vmatprep.subr.mxu0 0.0
        %5266 = vmatpush1.msra.mxu0 0.0
        %5267 = vmatprep.subr.mxu0 0.0
        %5268 = vmatpush1.msra.mxu0 0.0
        %5269 = vmatprep.subr.mxu0 0.0
        %5270 = vmatpush1.msra.mxu0 0.0
        %5271 = vmatprep.subr.mxu0 0.0
        %5272 = vmatpush1.msra.mxu0 0.0
        %5273 = vmatprep.subr.mxu0 0.0
        %5274 = vmatpush1.msra.mxu0 0.0
        %5275 = vmatprep.subr.mxu0 0.0
        %5276 = vmatpush1.msra.mxu0 0.0
        %5277 = vmatprep.subr.mxu0 0.0
        %5278 = vmatpush1.msra.mxu0 0.0
        %5279 = vmatprep.subr.mxu0 0.0
        %5280 = vmatpush1.msra.mxu0 0.0
        %5281 = vmatprep.subr.mxu0 0.0
        %5282 = vmatpush1.msra.mxu0 0.0
        %5283 = vmatprep.subr.mxu0 0.0
        %5284 = vmatpush1.msra.mxu0 0.0
        %5285 = vmatprep.subr.mxu0 0.0
        %5286 = vmatpush1.msra.mxu0 0.0
        %5287 = vmatprep.subr.mxu0 0.0
        %5288 = vmatpush1.msra.mxu0 0.0
        %5289 = vmatprep.subr.mxu0 0.0
        %5290 = vmatpush1.msra.mxu0 0.0
        %5291 = vmatprep.subr.mxu0 0.0
        %5292 = vmatpush1.msra.mxu0 0.0
        %5293 = vmatprep.subr.mxu0 0.0
        %5294 = vmatpush1.msra.mxu0 0.0
        %5295 = vmatprep.subr.mxu0 0.0
        %5296 = vmatpush1.msra.mxu0 0.0
        %5297 = vmatprep.subr.mxu0 0.0
        %5298 = vmatpush1.msra.mxu0 0.0
        %5299 = vmatprep.subr.mxu0 0.0
        %5300 = vmatpush1.msra.mxu0 0.0
        %5301 = vmatprep.subr.mxu0 0.0
        %5302 = vmatpush1.msra.mxu0 0.0
        %5303 = vmatprep.subr.mxu0 0.0
        %5304 = vmatpush1.msra.mxu0 0.0
        %5305 = vmatprep.subr.mxu0 0.0
        %5306 = vmatpush1.msra.mxu0 0.0
        %5307 = vmatprep.subr.mxu0 0.0
        %5308 = vmatpush1.msra.mxu0 0.0
        %5309 = vmatprep.subr.mxu0 0.0
        %5310 = vmatpush1.msra.mxu0 0.0
        %5311 = vmatprep.subr.mxu0 0.0
        %5312 = vmatpush1.msra.mxu0 0.0
        %5313 = vmatprep.subr.mxu0 0.0
        %5314 = vmatpush1.msra.mxu0 0.0
        %5315 = vmatprep.subr.mxu0 0.0
        %5316 = vmatpush1.msra.mxu0 0.0
        %5317 = vmatprep.subr.mxu0 0.0
        %5318 = vmatpush1.msra.mxu0 0.0
        %5319 = vmatprep.subr.mxu0 0.0
        %5320 = vmatpush1.msra.mxu0 0.0
        %5321 = vmatprep.mubr.f32.mxu0 0.0
        %5322 = vmatmul.mubr.f32.gmra.mrb[0].mxu0 %v3994
        %v5323 = vpop.f32.mrb[0].mxu0
        %v5324 = vadd.f32 %v5255, %v5323
        %v5325 = vpop.f32.mrb[0].mxu0
        %5326 = vmatprep.mubr.f32.mxu0 0.0
        %5327 = vmatmul.mubr.f32.gmra.mrb[0].mxu0 %v3997
        %v5328 = vpop.f32.mrb[0].mxu0
        %v5329 = vadd.f32 %v5255, %v5328
        %v5330 = vpop.f32.mrb[0].mxu0
        %5331 = vdwg.mxu0
        %v5333 = vsel %vm1769, %v5148, 0
        %v5336 = vsel %vm1769, %v5153, 0
        %v5339 = vsel %vm1769, %v5236, 0
        %v5342 = vsel %vm1769, %v5241, 0
        %5344 = vmatprep.subr.mxu0 0.0
        %5345 = vmatpush1.xpose.msra.mxu0 %v5339
        %5346 = vmatprep.subr.mxu0 0.0
        %5347 = vmatpush1.xpose.msra.mxu0 %v5342
        %5348 = vmatprep.subr.mxu0 0.0
        %5349 = vmatpush1.xpose.msra.mxu0 0.0
        %5350 = vmatprep.subr.mxu0 0.0
        %5351 = vmatpush1.xpose.msra.mxu0 0.0
        %5352 = vmatprep.subr.mxu0 0.0
        %5353 = vmatpush1.xpose.msra.mxu0 0.0
        %5354 = vmatprep.subr.mxu0 0.0
        %5355 = vmatpush1.xpose.msra.mxu0 0.0
        %5356 = vmatprep.subr.mxu0 0.0
        %5357 = vmatpush1.xpose.msra.mxu0 0.0
        %5358 = vmatprep.subr.mxu0 0.0
        %5359 = vmatpush1.xpose.msra.mxu0 0.0
        %5360 = vmatprep.subr.mxu0 0.0
        %5361 = vmatpush1.xpose.msra.mxu0 0.0
        %5362 = vmatprep.subr.mxu0 0.0
        %5363 = vmatpush1.xpose.msra.mxu0 0.0
        %5364 = vmatprep.subr.mxu0 0.0
        %5365 = vmatpush1.xpose.msra.mxu0 0.0
        %5366 = vmatprep.subr.mxu0 0.0
        %5367 = vmatpush1.xpose.msra.mxu0 0.0
        %5368 = vmatprep.subr.mxu0 0.0
        %5369 = vmatpush1.xpose.msra.mxu0 0.0
        %5370 = vmatprep.subr.mxu0 0.0
        %5371 = vmatpush1.xpose.msra.mxu0 0.0
        %5372 = vmatprep.subr.mxu0 0.0
        %5373 = vmatpush1.xpose.msra.mxu0 0.0
        %5374 = vmatprep.subr.mxu0 0.0
        %5375 = vmatpush1.xpose.msra.mxu0 0.0
        %5376 = vmatprep.subr.mxu0 0.0
        %5377 = vmatpush1.xpose.msra.mxu0 0.0
        %5378 = vmatprep.subr.mxu0 0.0
        %5379 = vmatpush1.xpose.msra.mxu0 0.0
        %5380 = vmatprep.subr.mxu0 0.0
        %5381 = vmatpush1.xpose.msra.mxu0 0.0
        %5382 = vmatprep.subr.mxu0 0.0
        %5383 = vmatpush1.xpose.msra.mxu0 0.0
        %5384 = vmatprep.subr.mxu0 0.0
        %5385 = vmatpush1.xpose.msra.mxu0 0.0
        %5386 = vmatprep.subr.mxu0 0.0
        %5387 = vmatpush1.xpose.msra.mxu0 0.0
        %5388 = vmatprep.subr.mxu0 0.0
        %5389 = vmatpush1.xpose.msra.mxu0 0.0
        %5390 = vmatprep.subr.mxu0 0.0
        %5391 = vmatpush1.xpose.msra.mxu0 0.0
        %5392 = vmatprep.subr.mxu0 0.0
        %5393 = vmatpush1.xpose.msra.mxu0 0.0
        %5394 = vmatprep.subr.mxu0 0.0
        %5395 = vmatpush1.xpose.msra.mxu0 0.0
        %5396 = vmatprep.subr.mxu0 0.0
        %5397 = vmatpush1.xpose.msra.mxu0 0.0
        %5398 = vmatprep.subr.mxu0 0.0
        %5399 = vmatpush1.xpose.msra.mxu0 0.0
        %5400 = vmatprep.subr.mxu0 0.0
        %5401 = vmatpush1.xpose.msra.mxu0 0.0
        %5402 = vmatprep.subr.mxu0 0.0
        %5403 = vmatpush1.xpose.msra.mxu0 0.0
        %5404 = vmatprep.subr.mxu0 0.0
        %5405 = vmatpush1.xpose.msra.mxu0 0.0
        %5406 = vmatprep.subr.mxu0 0.0
        %5407 = vmatpush1.xpose.msra.mxu0 0.0
        %5408 = vmatprep.mubr.f32.mxu0 0.0
        %5409 = vmatmul.mubr.f32.gmra.mrb[0].mxu0 %v5333
        %v5410 = vpop.f32.mrb[0].mxu0
        %v5411 = vadd.f32 0.0, %v5410
        %v5412 = vpop.f32.mrb[0].mxu0
        %5413 = vmatprep.mubr.f32.mxu0 0.0
        %5414 = vmatmul.mubr.f32.gmra.mrb[0].mxu0 %v5336
        %v5415 = vpop.f32.mrb[0].mxu0
        %v5416 = vadd.f32 0.0, %v5415
        %v5417 = vpop.f32.mrb[0].mxu0
        %5418 = vdwg.mxu0
        %v5419 = vmul.f32 %v5411, 0.35355338
        %v5420 = vmul.f32 %v5416, 0.35355338
        %v5421 = vadd.f32 %v5419, %v1863
        %v5422 = vadd.f32 %v5420, %v1863
        %v5423 = vsel %vm1867, %v5421, -inf
        %5424 = vmax.xlane.f32.xlu0 %v5423
        %v5425 = vpop.xlane.xlu0 %5424
        %v5426 = vsel %vm1867, %v5422, -inf
        %5427 = vmax.xlane.f32.xlu0 %v5426
        %v5428 = vpop.xlane.xlu0 %5427
        %v5429 = vsub.f32 %v5421, %v5425
        %v5430 = vsub.f32 %v5422, %v5428
        %v5431 = vmul.f32 %v5429, 1.442695
        %v5432 = vpow.pop %v5431
        %v5433 = vmul.f32 %v5430, 1.442695
        %v5434 = vpow.pop %v5433
        %v5435 = vsel %vm1867, %v5432, 0.0
        %5436 = vadd.xlane.f32.xlu0 %v5435
        %v5437 = vpop.xlane.xlu0 %5436
        %v5438 = vsel %vm1867, %v5434, 0.0
        %5439 = vadd.xlane.f32.xlu0 %v5438
        %v5440 = vpop.xlane.xlu0 %5439
        %v5441 = vrcp.pop %v5437
        %v5442 = vmul.f32 %v5432, %v5441
        %v5443 = vrcp.pop %v5440
        %v5444 = vmul.f32 %v5434, %v5443
        %v5446 = vsel %vm1867, %v5442, 0
        %v5449 = vsel %vm1867, %v5444, 0
        %5451 = vmatprep.subr.mxu0 0.0
        %5452 = vmatpush1.msra.mxu0 %v5324
        %5453 = vmatprep.subr.mxu0 0.0
        %5454 = vmatpush1.msra.mxu0 %v5329
        %5455 = vmatprep.subr.mxu0 0.0
        %5456 = vmatpush1.msra.mxu0 0.0
        %5457 = vmatprep.subr.mxu0 0.0
        %5458 = vmatpush1.msra.mxu0 0.0
        %5459 = vmatprep.subr.mxu0 0.0
        %5460 = vmatpush1.msra.mxu0 0.0
        %5461 = vmatprep.subr.mxu0 0.0
        %5462 = vmatpush1.msra.mxu0 0.0
        %5463 = vmatprep.subr.mxu0 0.0
        %5464 = vmatpush1.msra.mxu0 0.0
        %5465 = vmatprep.subr.mxu0 0.0
        %5466 = vmatpush1.msra.mxu0 0.0
        %5467 = vmatprep.subr.mxu0 0.0
        %5468 = vmatpush1.msra.mxu0 0.0
        %5469 = vmatprep.subr.mxu0 0.0
        %5470 = vmatpush1.msra.mxu0 0.0
        %5471 = vmatprep.subr.mxu0 0.0
        %5472 = vmatpush1.msra.mxu0 0.0
        %5473 = vmatprep.subr.mxu0 0.0
        %5474 = vmatpush1.msra.mxu0 0.0
        %5475 = vmatprep.subr.mxu0 0.0
        %5476 = vmatpush1.msra.mxu0 0.0
        %5477 = vmatprep.subr.mxu0 0.0
        %5478 = vmatpush1.msra.mxu0 0.0
        %5479 = vmatprep.subr.mxu0 0.0
        %5480 = vmatpush1.msra.mxu0 0.0
        %5481 = vmatprep.subr.mxu0 0.0
        %5482 = vmatpush1.msra.mxu0 0.0
        %5483 = vmatprep.subr.mxu0 0.0
        %5484 = vmatpush1.msra.mxu0 0.0
        %5485 = vmatprep.subr.mxu0 0.0
        %5486 = vmatpush1.msra.mxu0 0.0
        %5487 = vmatprep.subr.mxu0 0.0
        %5488 = vmatpush1.msra.mxu0 0.0
        %5489 = vmatprep.subr.mxu0 0.0
        %5490 = vmatpush1.msra.mxu0 0.0
        %5491 = vmatprep.subr.mxu0 0.0
        %5492 = vmatpush1.msra.mxu0 0.0
        %5493 = vmatprep.subr.mxu0 0.0
        %5494 = vmatpush1.msra.mxu0 0.0
        %5495 = vmatprep.subr.mxu0 0.0
        %5496 = vmatpush1.msra.mxu0 0.0
        %5497 = vmatprep.subr.mxu0 0.0
        %5498 = vmatpush1.msra.mxu0 0.0
        %5499 = vmatprep.subr.mxu0 0.0
        %5500 = vmatpush1.msra.mxu0 0.0
        %5501 = vmatprep.subr.mxu0 0.0
        %5502 = vmatpush1.msra.mxu0 0.0
        %5503 = vmatprep.subr.mxu0 0.0
        %5504 = vmatpush1.msra.mxu0 0.0
        %5505 = vmatprep.subr.mxu0 0.0
        %5506 = vmatpush1.msra.mxu0 0.0
        %5507 = vmatprep.subr.mxu0 0.0
        %5508 = vmatpush1.msra.mxu0 0.0
        %5509 = vmatprep.subr.mxu0 0.0
        %5510 = vmatpush1.msra.mxu0 0.0
        %5511 = vmatprep.subr.mxu0 0.0
        %5512 = vmatpush1.msra.mxu0 0.0
        %5513 = vmatprep.subr.mxu0 0.0
        %5514 = vmatpush1.msra.mxu0 0.0
        %5515 = vmatprep.mubr.f32.mxu0 0.0
        %5516 = vmatmul.mubr.f32.gmra.mrb[0].mxu0 %v5446
        %v5517 = vpop.f32.mrb[0].mxu0
        %v5518 = vadd.f32 0.0, %v5517
        %v5519 = vpop.f32.mrb[0].mxu0
        %5520 = vmatprep.mubr.f32.mxu0 0.0
        %5521 = vmatmul.mubr.f32.gmra.mrb[0].mxu0 %v5449
        %v5522 = vpop.f32.mrb[0].mxu0
        %v5523 = vadd.f32 0.0, %v5522
        %v5524 = vpop.f32.mrb[0].mxu0
        %5525 = vdwg.mxu0
        %s5526 = scalar_lea.vmem %s39, 48
        %v5527 = vld [vmem:[%s5526] sm:$0xff]
        %v5529 = vsel %vm1769, %v5518, 0
        %v5532 = vsel %vm1769, %v5523, 0
        %5534 = vmatprep.subr.mxu0 0.0
        %5535 = vmatpush1.msra.mxu0 %v5527
        %5536 = vmatprep.subr.mxu0 0.0
        %5537 = vmatpush1.msra.mxu0 0.0
        %5538 = vmatprep.subr.mxu0 0.0
        %5539 = vmatpush1.msra.mxu0 0.0
        %5540 = vmatprep.subr.mxu0 0.0
        %5541 = vmatpush1.msra.mxu0 0.0
        %5542 = vmatprep.subr.mxu0 0.0
        %5543 = vmatpush1.msra.mxu0 0.0
        %5544 = vmatprep.subr.mxu0 0.0
        %5545 = vmatpush1.msra.mxu0 0.0
        %5546 = vmatprep.subr.mxu0 0.0
        %5547 = vmatpush1.msra.mxu0 0.0
        %5548 = vmatprep.subr.mxu0 0.0
        %5549 = vmatpush1.msra.mxu0 0.0
        %5550 = vmatprep.subr.mxu0 0.0
        %5551 = vmatpush1.msra.mxu0 0.0
        %5552 = vmatprep.subr.mxu0 0.0
        %5553 = vmatpush1.msra.mxu0 0.0
        %5554 = vmatprep.subr.mxu0 0.0
        %5555 = vmatpush1.msra.mxu0 0.0
        %5556 = vmatprep.subr.mxu0 0.0
        %5557 = vmatpush1.msra.mxu0 0.0
        %5558 = vmatprep.subr.mxu0 0.0
        %5559 = vmatpush1.msra.mxu0 0.0
        %5560 = vmatprep.subr.mxu0 0.0
        %5561 = vmatpush1.msra.mxu0 0.0
        %5562 = vmatprep.subr.mxu0 0.0
        %5563 = vmatpush1.msra.mxu0 0.0
        %5564 = vmatprep.subr.mxu0 0.0
        %5565 = vmatpush1.msra.mxu0 0.0
        %5566 = vmatprep.subr.mxu0 0.0
        %5567 = vmatpush1.msra.mxu0 0.0
        %5568 = vmatprep.subr.mxu0 0.0
        %5569 = vmatpush1.msra.mxu0 0.0
        %5570 = vmatprep.subr.mxu0 0.0
        %5571 = vmatpush1.msra.mxu0 0.0
        %5572 = vmatprep.subr.mxu0 0.0
        %5573 = vmatpush1.msra.mxu0 0.0
        %5574 = vmatprep.subr.mxu0 0.0
        %5575 = vmatpush1.msra.mxu0 0.0
        %5576 = vmatprep.subr.mxu0 0.0
        %5577 = vmatpush1.msra.mxu0 0.0
        %5578 = vmatprep.subr.mxu0 0.0
        %5579 = vmatpush1.msra.mxu0 0.0
        %5580 = vmatprep.subr.mxu0 0.0
        %5581 = vmatpush1.msra.mxu0 0.0
        %5582 = vmatprep.subr.mxu0 0.0
        %5583 = vmatpush1.msra.mxu0 0.0
        %5584 = vmatprep.subr.mxu0 0.0
        %5585 = vmatpush1.msra.mxu0 0.0
        %5586 = vmatprep.subr.mxu0 0.0
        %5587 = vmatpush1.msra.mxu0 0.0
        %5588 = vmatprep.subr.mxu0 0.0
        %5589 = vmatpush1.msra.mxu0 0.0
        %5590 = vmatprep.subr.mxu0 0.0
        %5591 = vmatpush1.msra.mxu0 0.0
        %5592 = vmatprep.subr.mxu0 0.0
        %5593 = vmatpush1.msra.mxu0 0.0
        %5594 = vmatprep.subr.mxu0 0.0
        %5595 = vmatpush1.msra.mxu0 0.0
        %5596 = vmatprep.subr.mxu0 0.0
        %5597 = vmatpush1.msra.mxu0 0.0
        %5598 = vmatprep.mubr.f32.mxu0 0.0
        %5599 = vmatmul.mubr.f32.gmra.mrb[0].mxu0 %v5529
        %v5600 = vpop.f32.mrb[0].mxu0
        %v5601 = vadd.f32 0.0, %v5600
        %v5602 = vpop.f32.mrb[0].mxu0
        %5603 = vmatprep.mubr.f32.mxu0 0.0
        %5604 = vmatmul.mubr.f32.gmra.mrb[0].mxu0 %v5532
        %v5605 = vpop.f32.mrb[0].mxu0
        %v5606 = vadd.f32 0.0, %v5605
        %v5607 = vpop.f32.mrb[0].mxu0
        %5608 = vdwg.mxu0
        %v5609 = vadd.f32 %v5060, %v5601
        %v5610 = vadd.f32 %v5065, %v5606
        %s5611 = scalar_lea.vmem %s27, 224
        %v5612 = vld [vmem:[%s5611] sm:$0xff]
        %v5613 = vld [vmem:[%s5611 + $0x8] sm:$0xff]
        %v5614 = vld [vmem:[%s5611 + $0x10] sm:$0xff]
        %v5615 = vld [vmem:[%s5611 + $0x18] sm:$0xff]
        %s5616 = scalar_lea.vmem %s33, 7
        %v5617 = vld [vmem:[%s5616] sm:$0x1]
        %v5619 = vlaneseq
        %v5620 = vshrl.u32 %v5619, 7
        %v5621 = vsub.s32 0, %v5620
        %v5622 = vrot.slane %v5617, %v5621
        %5624 = vmatprep.subr.mxu0 0.0
        %5625 = vmatpush1.msra.mxu0 %v5612
        %5626 = vmatprep.subr.mxu0 0.0
        %5627 = vmatpush1.msra.mxu0 %v5613
        %5628 = vmatprep.subr.mxu0 0.0
        %5629 = vmatpush1.msra.mxu0 %v5614
        %5630 = vmatprep.subr.mxu0 0.0
        %5631 = vmatpush1.msra.mxu0 %v5615
        %5632 = vmatprep.subr.mxu0 0.0
        %5633 = vmatpush1.msra.mxu0 0.0
        %5634 = vmatprep.subr.mxu0 0.0
        %5635 = vmatpush1.msra.mxu0 0.0
        %5636 = vmatprep.subr.mxu0 0.0
        %5637 = vmatpush1.msra.mxu0 0.0
        %5638 = vmatprep.subr.mxu0 0.0
        %5639 = vmatpush1.msra.mxu0 0.0
        %5640 = vmatprep.subr.mxu0 0.0
        %5641 = vmatpush1.msra.mxu0 0.0
        %5642 = vmatprep.subr.mxu0 0.0
        %5643 = vmatpush1.msra.mxu0 0.0
        %5644 = vmatprep.subr.mxu0 0.0
        %5645 = vmatpush1.msra.mxu0 0.0
        %5646 = vmatprep.subr.mxu0 0.0
        %5647 = vmatpush1.msra.mxu0 0.0
        %5648 = vmatprep.subr.mxu0 0.0
        %5649 = vmatpush1.msra.mxu0 0.0
        %5650 = vmatprep.subr.mxu0 0.0
        %5651 = vmatpush1.msra.mxu0 0.0
        %5652 = vmatprep.subr.mxu0 0.0
        %5653 = vmatpush1.msra.mxu0 0.0
        %5654 = vmatprep.subr.mxu0 0.0
        %5655 = vmatpush1.msra.mxu0 0.0
        %5656 = vmatprep.subr.mxu0 0.0
        %5657 = vmatpush1.msra.mxu0 0.0
        %5658 = vmatprep.subr.mxu0 0.0
        %5659 = vmatpush1.msra.mxu0 0.0
        %5660 = vmatprep.subr.mxu0 0.0
        %5661 = vmatpush1.msra.mxu0 0.0
        %5662 = vmatprep.subr.mxu0 0.0
        %5663 = vmatpush1.msra.mxu0 0.0
        %5664 = vmatprep.subr.mxu0 0.0
        %5665 = vmatpush1.msra.mxu0 0.0
        %5666 = vmatprep.subr.mxu0 0.0
        %5667 = vmatpush1.msra.mxu0 0.0
        %5668 = vmatprep.subr.mxu0 0.0
        %5669 = vmatpush1.msra.mxu0 0.0
        %5670 = vmatprep.subr.mxu0 0.0
        %5671 = vmatpush1.msra.mxu0 0.0
        %5672 = vmatprep.subr.mxu0 0.0
        %5673 = vmatpush1.msra.mxu0 0.0
        %5674 = vmatprep.subr.mxu0 0.0
        %5675 = vmatpush1.msra.mxu0 0.0
        %5676 = vmatprep.subr.mxu0 0.0
        %5677 = vmatpush1.msra.mxu0 0.0
        %5678 = vmatprep.subr.mxu0 0.0
        %5679 = vmatpush1.msra.mxu0 0.0
        %5680 = vmatprep.subr.mxu0 0.0
        %5681 = vmatpush1.msra.mxu0 0.0
        %5682 = vmatprep.subr.mxu0 0.0
        %5683 = vmatpush1.msra.mxu0 0.0
        %5684 = vmatprep.subr.mxu0 0.0
        %5685 = vmatpush1.msra.mxu0 0.0
        %5686 = vmatprep.subr.mxu0 0.0
        %5687 = vmatpush1.msra.mxu0 0.0
        %5688 = vmatprep.mubr.f32.mxu0 0.0
        %5689 = vmatmul.mubr.f32.gmra.mrb[0].mxu0 %v3994
        %v5690 = vpop.f32.mrb[0].mxu0
        %v5691 = vadd.f32 %v5622, %v5690
        %v5692 = vpop.f32.mrb[0].mxu0
        %5693 = vmatprep.mubr.f32.mxu0 0.0
        %5694 = vmatmul.mubr.f32.gmra.mrb[0].mxu0 %v3997
        %v5695 = vpop.f32.mrb[0].mxu0
        %v5696 = vadd.f32 %v5622, %v5695
        %v5697 = vpop.f32.mrb[0].mxu0
        %5698 = vdwg.mxu0
        %s5699 = scalar_lea.vmem %s29, 224
        %v5700 = vld [vmem:[%s5699] sm:$0xff]
        %v5701 = vld [vmem:[%s5699 + $0x8] sm:$0xff]
        %v5702 = vld [vmem:[%s5699 + $0x10] sm:$0xff]
        %v5703 = vld [vmem:[%s5699 + $0x18] sm:$0xff]
        %s5704 = scalar_lea.vmem %s35, 7
        %v5705 = vld [vmem:[%s5704] sm:$0x1]
        %v5707 = vlaneseq
        %v5708 = vshrl.u32 %v5707, 7
        %v5709 = vsub.s32 0, %v5708
        %v5710 = vrot.slane %v5705, %v5709
        %5712 = vmatprep.subr.mxu0 0.0
        %5713 = vmatpush1.msra.mxu0 %v5700
        %5714 = vmatprep.subr.mxu0 0.0
        %5715 = vmatpush1.msra.mxu0 %v5701
        %5716 = vmatprep.subr.mxu0 0.0
        %5717 = vmatpush1.msra.mxu0 %v5702
        %5718 = vmatprep.subr.mxu0 0.0
        %5719 = vmatpush1.msra.mxu0 %v5703
        %5720 = vmatprep.subr.mxu0 0.0
        %5721 = vmatpush1.msra.mxu0 0.0
        %5722 = vmatprep.subr.mxu0 0.0
        %5723 = vmatpush1.msra.mxu0 0.0
        %5724 = vmatprep.subr.mxu0 0.0
        %5725 = vmatpush1.msra.mxu0 0.0
        %5726 = vmatprep.subr.mxu0 0.0
        %5727 = vmatpush1.msra.mxu0 0.0
        %5728 = vmatprep.subr.mxu0 0.0
        %5729 = vmatpush1.msra.mxu0 0.0
        %5730 = vmatprep.subr.mxu0 0.0
        %5731 = vmatpush1.msra.mxu0 0.0
        %5732 = vmatprep.subr.mxu0 0.0
        %5733 = vmatpush1.msra.mxu0 0.0
        %5734 = vmatprep.subr.mxu0 0.0
        %5735 = vmatpush1.msra.mxu0 0.0
        %5736 = vmatprep.subr.mxu0 0.0
        %5737 = vmatpush1.msra.mxu0 0.0
        %5738 = vmatprep.subr.mxu0 0.0
        %5739 = vmatpush1.msra.mxu0 0.0
        %5740 = vmatprep.subr.mxu0 0.0
        %5741 = vmatpush1.msra.mxu0 0.0
        %5742 = vmatprep.subr.mxu0 0.0
        %5743 = vmatpush1.msra.mxu0 0.0
        %5744 = vmatprep.subr.mxu0 0.0
        %5745 = vmatpush1.msra.mxu0 0.0
        %5746 = vmatprep.subr.mxu0 0.0
        %5747 = vmatpush1.msra.mxu0 0.0
        %5748 = vmatprep.subr.mxu0 0.0
        %5749 = vmatpush1.msra.mxu0 0.0
        %5750 = vmatprep.subr.mxu0 0.0
        %5751 = vmatpush1.msra.mxu0 0.0
        %5752 = vmatprep.subr.mxu0 0.0
        %5753 = vmatpush1.msra.mxu0 0.0
        %5754 = vmatprep.subr.mxu0 0.0
        %5755 = vmatpush1.msra.mxu0 0.0
        %5756 = vmatprep.subr.mxu0 0.0
        %5757 = vmatpush1.msra.mxu0 0.0
        %5758 = vmatprep.subr.mxu0 0.0
        %5759 = vmatpush1.msra.mxu0 0.0
        %5760 = vmatprep.subr.mxu0 0.0
        %5761 = vmatpush1.msra.mxu0 0.0
        %5762 = vmatprep.subr.mxu0 0.0
        %5763 = vmatpush1.msra.mxu0 0.0
        %5764 = vmatprep.subr.mxu0 0.0
        %5765 = vmatpush1.msra.mxu0 0.0
        %5766 = vmatprep.subr.mxu0 0.0
        %5767 = vmatpush1.msra.mxu0 0.0
        %5768 = vmatprep.subr.mxu0 0.0
        %5769 = vmatpush1.msra.mxu0 0.0
        %5770 = vmatprep.subr.mxu0 0.0
        %5771 = vmatpush1.msra.mxu0 0.0
        %5772 = vmatprep.subr.mxu0 0.0
        %5773 = vmatpush1.msra.mxu0 0.0
        %5774 = vmatprep.subr.mxu0 0.0
        %5775 = vmatpush1.msra.mxu0 0.0
        %5776 = vmatprep.mubr.f32.mxu0 0.0
        %5777 = vmatmul.mubr.f32.gmra.mrb[0].mxu0 %v3994
        %v5778 = vpop.f32.mrb[0].mxu0
        %v5779 = vadd.f32 %v5710, %v5778
        %v5780 = vpop.f32.mrb[0].mxu0
        %5781 = vmatprep.mubr.f32.mxu0 0.0
        %5782 = vmatmul.mubr.f32.gmra.mrb[0].mxu0 %v3997
        %v5783 = vpop.f32.mrb[0].mxu0
        %v5784 = vadd.f32 %v5710, %v5783
        %v5785 = vpop.f32.mrb[0].mxu0
        %5786 = vdwg.mxu0
        %s5787 = scalar_lea.vmem %s31, 224
        %v5788 = vld [vmem:[%s5787] sm:$0xff]
        %v5789 = vld [vmem:[%s5787 + $0x8] sm:$0xff]
        %v5790 = vld [vmem:[%s5787 + $0x10] sm:$0xff]
        %v5791 = vld [vmem:[%s5787 + $0x18] sm:$0xff]
        %s5792 = scalar_lea.vmem %s37, 7
        %v5793 = vld [vmem:[%s5792] sm:$0x1]
        %v5795 = vlaneseq
        %v5796 = vshrl.u32 %v5795, 7
        %v5797 = vsub.s32 0, %v5796
        %v5798 = vrot.slane %v5793, %v5797
        %5800 = vmatprep.subr.mxu0 0.0
        %5801 = vmatpush1.msra.mxu0 %v5788
        %5802 = vmatprep.subr.mxu0 0.0
        %5803 = vmatpush1.msra.mxu0 %v5789
        %5804 = vmatprep.subr.mxu0 0.0
        %5805 = vmatpush1.msra.mxu0 %v5790
        %5806 = vmatprep.subr.mxu0 0.0
        %5807 = vmatpush1.msra.mxu0 %v5791
        %5808 = vmatprep.subr.mxu0 0.0
        %5809 = vmatpush1.msra.mxu0 0.0
        %5810 = vmatprep.subr.mxu0 0.0
        %5811 = vmatpush1.msra.mxu0 0.0
        %5812 = vmatprep.subr.mxu0 0.0
        %5813 = vmatpush1.msra.mxu0 0.0
        %5814 = vmatprep.subr.mxu0 0.0
        %5815 = vmatpush1.msra.mxu0 0.0
        %5816 = vmatprep.subr.mxu0 0.0
        %5817 = vmatpush1.msra.mxu0 0.0
        %5818 = vmatprep.subr.mxu0 0.0
        %5819 = vmatpush1.msra.mxu0 0.0
        %5820 = vmatprep.subr.mxu0 0.0
        %5821 = vmatpush1.msra.mxu0 0.0
        %5822 = vmatprep.subr.mxu0 0.0
        %5823 = vmatpush1.msra.mxu0 0.0
        %5824 = vmatprep.subr.mxu0 0.0
        %5825 = vmatpush1.msra.mxu0 0.0
        %5826 = vmatprep.subr.mxu0 0.0
        %5827 = vmatpush1.msra.mxu0 0.0
        %5828 = vmatprep.subr.mxu0 0.0
        %5829 = vmatpush1.msra.mxu0 0.0
        %5830 = vmatprep.subr.mxu0 0.0
        %5831 = vmatpush1.msra.mxu0 0.0
        %5832 = vmatprep.subr.mxu0 0.0
        %5833 = vmatpush1.msra.mxu0 0.0
        %5834 = vmatprep.subr.mxu0 0.0
        %5835 = vmatpush1.msra.mxu0 0.0
        %5836 = vmatprep.subr.mxu0 0.0
        %5837 = vmatpush1.msra.mxu0 0.0
        %5838 = vmatprep.subr.mxu0 0.0
        %5839 = vmatpush1.msra.mxu0 0.0
        %5840 = vmatprep.subr.mxu0 0.0
        %5841 = vmatpush1.msra.mxu0 0.0
        %5842 = vmatprep.subr.mxu0 0.0
        %5843 = vmatpush1.msra.mxu0 0.0
        %5844 = vmatprep.subr.mxu0 0.0
        %5845 = vmatpush1.msra.mxu0 0.0
        %5846 = vmatprep.subr.mxu0 0.0
        %5847 = vmatpush1.msra.mxu0 0.0
        %5848 = vmatprep.subr.mxu0 0.0
        %5849 = vmatpush1.msra.mxu0 0.0
        %5850 = vmatprep.subr.mxu0 0.0
        %5851 = vmatpush1.msra.mxu0 0.0
        %5852 = vmatprep.subr.mxu0 0.0
        %5853 = vmatpush1.msra.mxu0 0.0
        %5854 = vmatprep.subr.mxu0 0.0
        %5855 = vmatpush1.msra.mxu0 0.0
        %5856 = vmatprep.subr.mxu0 0.0
        %5857 = vmatpush1.msra.mxu0 0.0
        %5858 = vmatprep.subr.mxu0 0.0
        %5859 = vmatpush1.msra.mxu0 0.0
        %5860 = vmatprep.subr.mxu0 0.0
        %5861 = vmatpush1.msra.mxu0 0.0
        %5862 = vmatprep.subr.mxu0 0.0
        %5863 = vmatpush1.msra.mxu0 0.0
        %5864 = vmatprep.mubr.f32.mxu0 0.0
        %5865 = vmatmul.mubr.f32.gmra.mrb[0].mxu0 %v3994
        %v5866 = vpop.f32.mrb[0].mxu0
        %v5867 = vadd.f32 %v5798, %v5866
        %v5868 = vpop.f32.mrb[0].mxu0
        %5869 = vmatprep.mubr.f32.mxu0 0.0
        %5870 = vmatmul.mubr.f32.gmra.mrb[0].mxu0 %v3997
        %v5871 = vpop.f32.mrb[0].mxu0
        %v5872 = vadd.f32 %v5798, %v5871
        %v5873 = vpop.f32.mrb[0].mxu0
        %5874 = vdwg.mxu0
        %v5876 = vsel %vm1769, %v5691, 0
        %v5879 = vsel %vm1769, %v5696, 0
        %v5882 = vsel %vm1769, %v5779, 0
        %v5885 = vsel %vm1769, %v5784, 0
        %5887 = vmatprep.subr.mxu0 0.0
        %5888 = vmatpush1.xpose.msra.mxu0 %v5882
        %5889 = vmatprep.subr.mxu0 0.0
        %5890 = vmatpush1.xpose.msra.mxu0 %v5885
        %5891 = vmatprep.subr.mxu0 0.0
        %5892 = vmatpush1.xpose.msra.mxu0 0.0
        %5893 = vmatprep.subr.mxu0 0.0
        %5894 = vmatpush1.xpose.msra.mxu0 0.0
        %5895 = vmatprep.subr.mxu0 0.0
        %5896 = vmatpush1.xpose.msra.mxu0 0.0
        %5897 = vmatprep.subr.mxu0 0.0
        %5898 = vmatpush1.xpose.msra.mxu0 0.0
        %5899 = vmatprep.subr.mxu0 0.0
        %5900 = vmatpush1.xpose.msra.mxu0 0.0
        %5901 = vmatprep.subr.mxu0 0.0
        %5902 = vmatpush1.xpose.msra.mxu0 0.0
        %5903 = vmatprep.subr.mxu0 0.0
        %5904 = vmatpush1.xpose.msra.mxu0 0.0
        %5905 = vmatprep.subr.mxu0 0.0
        %5906 = vmatpush1.xpose.msra.mxu0 0.0
        %5907 = vmatprep.subr.mxu0 0.0
        %5908 = vmatpush1.xpose.msra.mxu0 0.0
        %5909 = vmatprep.subr.mxu0 0.0
        %5910 = vmatpush1.xpose.msra.mxu0 0.0
        %5911 = vmatprep.subr.mxu0 0.0
        %5912 = vmatpush1.xpose.msra.mxu0 0.0
        %5913 = vmatprep.subr.mxu0 0.0
        %5914 = vmatpush1.xpose.msra.mxu0 0.0
        %5915 = vmatprep.subr.mxu0 0.0
        %5916 = vmatpush1.xpose.msra.mxu0 0.0
        %5917 = vmatprep.subr.mxu0 0.0
        %5918 = vmatpush1.xpose.msra.mxu0 0.0
        %5919 = vmatprep.subr.mxu0 0.0
        %5920 = vmatpush1.xpose.msra.mxu0 0.0
        %5921 = vmatprep.subr.mxu0 0.0
        %5922 = vmatpush1.xpose.msra.mxu0 0.0
        %5923 = vmatprep.subr.mxu0 0.0
        %5924 = vmatpush1.xpose.msra.mxu0 0.0
        %5925 = vmatprep.subr.mxu0 0.0
        %5926 = vmatpush1.xpose.msra.mxu0 0.0
        %5927 = vmatprep.subr.mxu0 0.0
        %5928 = vmatpush1.xpose.msra.mxu0 0.0
        %5929 = vmatprep.subr.mxu0 0.0
        %5930 = vmatpush1.xpose.msra.mxu0 0.0
        %5931 = vmatprep.subr.mxu0 0.0
        %5932 = vmatpush1.xpose.msra.mxu0 0.0
        %5933 = vmatprep.subr.mxu0 0.0
        %5934 = vmatpush1.xpose.msra.mxu0 0.0
        %5935 = vmatprep.subr.mxu0 0.0
        %5936 = vmatpush1.xpose.msra.mxu0 0.0
        %5937 = vmatprep.subr.mxu0 0.0
        %5938 = vmatpush1.xpose.msra.mxu0 0.0
        %5939 = vmatprep.subr.mxu0 0.0
        %5940 = vmatpush1.xpose.msra.mxu0 0.0
        %5941 = vmatprep.subr.mxu0 0.0
        %5942 = vmatpush1.xpose.msra.mxu0 0.0
        %5943 = vmatprep.subr.mxu0 0.0
        %5944 = vmatpush1.xpose.msra.mxu0 0.0
        %5945 = vmatprep.subr.mxu0 0.0
        %5946 = vmatpush1.xpose.msra.mxu0 0.0
        %5947 = vmatprep.subr.mxu0 0.0
        %5948 = vmatpush1.xpose.msra.mxu0 0.0
        %5949 = vmatprep.subr.mxu0 0.0
        %5950 = vmatpush1.xpose.msra.mxu0 0.0
        %5951 = vmatprep.mubr.f32.mxu0 0.0
        %5952 = vmatmul.mubr.f32.gmra.mrb[0].mxu0 %v5876
        %v5953 = vpop.f32.mrb[0].mxu0
        %v5954 = vadd.f32 0.0, %v5953
        %v5955 = vpop.f32.mrb[0].mxu0
        %5956 = vmatprep.mubr.f32.mxu0 0.0
        %5957 = vmatmul.mubr.f32.gmra.mrb[0].mxu0 %v5879
        %v5958 = vpop.f32.mrb[0].mxu0
        %v5959 = vadd.f32 0.0, %v5958
        %v5960 = vpop.f32.mrb[0].mxu0
        %5961 = vdwg.mxu0
        %v5962 = vmul.f32 %v5954, 0.35355338
        %v5963 = vmul.f32 %v5959, 0.35355338
        %v5964 = vadd.f32 %v5962, %v1863
        %v5965 = vadd.f32 %v5963, %v1863
        %v5966 = vsel %vm1867, %v5964, -inf
        %5967 = vmax.xlane.f32.xlu0 %v5966
        %v5968 = vpop.xlane.xlu0 %5967
        %v5969 = vsel %vm1867, %v5965, -inf
        %5970 = vmax.xlane.f32.xlu0 %v5969
        %v5971 = vpop.xlane.xlu0 %5970
        %v5972 = vsub.f32 %v5964, %v5968
        %v5973 = vsub.f32 %v5965, %v5971
        %v5974 = vmul.f32 %v5972, 1.442695
        %v5975 = vpow.pop %v5974
        %v5976 = vmul.f32 %v5973, 1.442695
        %v5977 = vpow.pop %v5976
        %v5978 = vsel %vm1867, %v5975, 0.0
        %5979 = vadd.xlane.f32.xlu0 %v5978
        %v5980 = vpop.xlane.xlu0 %5979
        %v5981 = vsel %vm1867, %v5977, 0.0
        %5982 = vadd.xlane.f32.xlu0 %v5981
        %v5983 = vpop.xlane.xlu0 %5982
        %v5984 = vrcp.pop %v5980
        %v5985 = vmul.f32 %v5975, %v5984
        %v5986 = vrcp.pop %v5983
        %v5987 = vmul.f32 %v5977, %v5986
        %v5989 = vsel %vm1867, %v5985, 0
        %v5992 = vsel %vm1867, %v5987, 0
        %5994 = vmatprep.subr.mxu0 0.0
        %5995 = vmatpush1.msra.mxu0 %v5867
        %5996 = vmatprep.subr.mxu0 0.0
        %5997 = vmatpush1.msra.mxu0 %v5872
        %5998 = vmatprep.subr.mxu0 0.0
        %5999 = vmatpush1.msra.mxu0 0.0
        %6000 = vmatprep.subr.mxu0 0.0
        %6001 = vmatpush1.msra.mxu0 0.0
        %6002 = vmatprep.subr.mxu0 0.0
        %6003 = vmatpush1.msra.mxu0 0.0
        %6004 = vmatprep.subr.mxu0 0.0
        %6005 = vmatpush1.msra.mxu0 0.0
        %6006 = vmatprep.subr.mxu0 0.0
        %6007 = vmatpush1.msra.mxu0 0.0
        %6008 = vmatprep.subr.mxu0 0.0
        %6009 = vmatpush1.msra.mxu0 0.0
        %6010 = vmatprep.subr.mxu0 0.0
        %6011 = vmatpush1.msra.mxu0 0.0
        %6012 = vmatprep.subr.mxu0 0.0
        %6013 = vmatpush1.msra.mxu0 0.0
        %6014 = vmatprep.subr.mxu0 0.0
        %6015 = vmatpush1.msra.mxu0 0.0
        %6016 = vmatprep.subr.mxu0 0.0
        %6017 = vmatpush1.msra.mxu0 0.0
        %6018 = vmatprep.subr.mxu0 0.0
        %6019 = vmatpush1.msra.mxu0 0.0
        %6020 = vmatprep.subr.mxu0 0.0
        %6021 = vmatpush1.msra.mxu0 0.0
        %6022 = vmatprep.subr.mxu0 0.0
        %6023 = vmatpush1.msra.mxu0 0.0
        %6024 = vmatprep.subr.mxu0 0.0
        %6025 = vmatpush1.msra.mxu0 0.0
        %6026 = vmatprep.subr.mxu0 0.0
        %6027 = vmatpush1.msra.mxu0 0.0
        %6028 = vmatprep.subr.mxu0 0.0
        %6029 = vmatpush1.msra.mxu0 0.0
        %6030 = vmatprep.subr.mxu0 0.0
        %6031 = vmatpush1.msra.mxu0 0.0
        %6032 = vmatprep.subr.mxu0 0.0
        %6033 = vmatpush1.msra.mxu0 0.0
        %6034 = vmatprep.subr.mxu0 0.0
        %6035 = vmatpush1.msra.mxu0 0.0
        %6036 = vmatprep.subr.mxu0 0.0
        %6037 = vmatpush1.msra.mxu0 0.0
        %6038 = vmatprep.subr.mxu0 0.0
        %6039 = vmatpush1.msra.mxu0 0.0
        %6040 = vmatprep.subr.mxu0 0.0
        %6041 = vmatpush1.msra.mxu0 0.0
        %6042 = vmatprep.subr.mxu0 0.0
        %6043 = vmatpush1.msra.mxu0 0.0
        %6044 = vmatprep.subr.mxu0 0.0
        %6045 = vmatpush1.msra.mxu0 0.0
        %6046 = vmatprep.subr.mxu0 0.0
        %6047 = vmatpush1.msra.mxu0 0.0
        %6048 = vmatprep.subr.mxu0 0.0
        %6049 = vmatpush1.msra.mxu0 0.0
        %6050 = vmatprep.subr.mxu0 0.0
        %6051 = vmatpush1.msra.mxu0 0.0
        %6052 = vmatprep.subr.mxu0 0.0
        %6053 = vmatpush1.msra.mxu0 0.0
        %6054 = vmatprep.subr.mxu0 0.0
        %6055 = vmatpush1.msra.mxu0 0.0
        %6056 = vmatprep.subr.mxu0 0.0
        %6057 = vmatpush1.msra.mxu0 0.0
        %6058 = vmatprep.mubr.f32.mxu0 0.0
        %6059 = vmatmul.mubr.f32.gmra.mrb[0].mxu0 %v5989
        %v6060 = vpop.f32.mrb[0].mxu0
        %v6061 = vadd.f32 0.0, %v6060
        %v6062 = vpop.f32.mrb[0].mxu0
        %6063 = vmatprep.mubr.f32.mxu0 0.0
        %6064 = vmatmul.mubr.f32.gmra.mrb[0].mxu0 %v5992
        %v6065 = vpop.f32.mrb[0].mxu0
        %v6066 = vadd.f32 0.0, %v6065
        %v6067 = vpop.f32.mrb[0].mxu0
        %6068 = vdwg.mxu0
        %s6069 = scalar_lea.vmem %s39, 56
        %v6070 = vld [vmem:[%s6069] sm:$0xff]
        %v6072 = vsel %vm1769, %v6061, 0
        %v6075 = vsel %vm1769, %v6066, 0
        %6077 = vmatprep.subr.mxu0 0.0
        %6078 = vmatpush1.msra.mxu0 %v6070
        %6079 = vmatprep.subr.mxu0 0.0
        %6080 = vmatpush1.msra.mxu0 0.0
        %6081 = vmatprep.subr.mxu0 0.0
        %6082 = vmatpush1.msra.mxu0 0.0
        %6083 = vmatprep.subr.mxu0 0.0
        %6084 = vmatpush1.msra.mxu0 0.0
        %6085 = vmatprep.subr.mxu0 0.0
        %6086 = vmatpush1.msra.mxu0 0.0
        %6087 = vmatprep.subr.mxu0 0.0
        %6088 = vmatpush1.msra.mxu0 0.0
        %6089 = vmatprep.subr.mxu0 0.0
        %6090 = vmatpush1.msra.mxu0 0.0
        %6091 = vmatprep.subr.mxu0 0.0
        %6092 = vmatpush1.msra.mxu0 0.0
        %6093 = vmatprep.subr.mxu0 0.0
        %6094 = vmatpush1.msra.mxu0 0.0
        %6095 = vmatprep.subr.mxu0 0.0
        %6096 = vmatpush1.msra.mxu0 0.0
        %6097 = vmatprep.subr.mxu0 0.0
        %6098 = vmatpush1.msra.mxu0 0.0
        %6099 = vmatprep.subr.mxu0 0.0
        %6100 = vmatpush1.msra.mxu0 0.0
        %6101 = vmatprep.subr.mxu0 0.0
        %6102 = vmatpush1.msra.mxu0 0.0
        %6103 = vmatprep.subr.mxu0 0.0
        %6104 = vmatpush1.msra.mxu0 0.0
        %6105 = vmatprep.subr.mxu0 0.0
        %6106 = vmatpush1.msra.mxu0 0.0
        %6107 = vmatprep.subr.mxu0 0.0
        %6108 = vmatpush1.msra.mxu0 0.0
        %6109 = vmatprep.subr.mxu0 0.0
        %6110 = vmatpush1.msra.mxu0 0.0
        %6111 = vmatprep.subr.mxu0 0.0
        %6112 = vmatpush1.msra.mxu0 0.0
        %6113 = vmatprep.subr.mxu0 0.0
        %6114 = vmatpush1.msra.mxu0 0.0
        %6115 = vmatprep.subr.mxu0 0.0
        %6116 = vmatpush1.msra.mxu0 0.0
        %6117 = vmatprep.subr.mxu0 0.0
        %6118 = vmatpush1.msra.mxu0 0.0
        %6119 = vmatprep.subr.mxu0 0.0
        %6120 = vmatpush1.msra.mxu0 0.0
        %6121 = vmatprep.subr.mxu0 0.0
        %6122 = vmatpush1.msra.mxu0 0.0
        %6123 = vmatprep.subr.mxu0 0.0
        %6124 = vmatpush1.msra.mxu0 0.0
        %6125 = vmatprep.subr.mxu0 0.0
        %6126 = vmatpush1.msra.mxu0 0.0
        %6127 = vmatprep.subr.mxu0 0.0
        %6128 = vmatpush1.msra.mxu0 0.0
        %6129 = vmatprep.subr.mxu0 0.0
        %6130 = vmatpush1.msra.mxu0 0.0
        %6131 = vmatprep.subr.mxu0 0.0
        %6132 = vmatpush1.msra.mxu0 0.0
        %6133 = vmatprep.subr.mxu0 0.0
        %6134 = vmatpush1.msra.mxu0 0.0
        %6135 = vmatprep.subr.mxu0 0.0
        %6136 = vmatpush1.msra.mxu0 0.0
        %6137 = vmatprep.subr.mxu0 0.0
        %6138 = vmatpush1.msra.mxu0 0.0
        %6139 = vmatprep.subr.mxu0 0.0
        %6140 = vmatpush1.msra.mxu0 0.0
        %6141 = vmatprep.mubr.f32.mxu0 0.0
        %6142 = vmatmul.mubr.f32.gmra.mrb[0].mxu0 %v6072
        %v6143 = vpop.f32.mrb[0].mxu0
        %v6144 = vadd.f32 0.0, %v6143
        %v6145 = vpop.f32.mrb[0].mxu0
        %6146 = vmatprep.mubr.f32.mxu0 0.0
        %6147 = vmatmul.mubr.f32.gmra.mrb[0].mxu0 %v6075
        %v6148 = vpop.f32.mrb[0].mxu0
        %v6149 = vadd.f32 0.0, %v6148
        %v6150 = vpop.f32.mrb[0].mxu0
        %6151 = vdwg.mxu0
        %v6152 = vadd.f32 %v5609, %v6144
        %v6153 = vadd.f32 %v5610, %v6149
        %s6154 = scalar_lea.vmem %s41, 1
        %v6155 = vld [vmem:[%s6154] sm:$0x1]
        %v6157 = vlaneseq
        %v6158 = vshrl.u32 %v6157, 7
        %v6159 = vsub.s32 0, %v6158
        %v6160 = vrot.slane %v6155, %v6159
        %v6162 = vadd.f32 %v6152, %v6160
        %v6163 = vadd.f32 %v6153, %v6160
        %v6164 = vadd.f32 %v6162, %v3978
        %v6165 = vadd.f32 %v6163, %v3979
        %s6166 = scalar_lea.vmem %s43, 1
        %v6167 = vld [vmem:[%s6166] sm:$0x1]
        %s6168 = scalar_lea.vmem %s45, 1
        %v6169 = vld [vmem:[%s6168] sm:$0x1]
        %v6170 = vsel %vm1458, %v6164, 0.0
        %6171 = vadd.xlane.f32.xlu0 %v6170
        %v6172 = vpop.xlane.xlu0 %6171
        %v6173 = vsel %vm1458, %v6165, 0.0
        %6174 = vadd.xlane.f32.xlu0 %v6173
        %v6175 = vpop.xlane.xlu0 %6174
        %v6176 = vmul.f32 %v6172, %v1465
        %v6177 = vmul.f32 %v6175, %v1465
        %v6178 = vsub.f32 %v6164, %v6176
        %v6179 = vsub.f32 %v6165, %v6177
        %v6180 = vmul.f32 %v6178, %v6178
        %v6181 = vmul.f32 %v6179, %v6179
        %v6182 = vsel %vm1458, %v6180, 0.0
        %6183 = vadd.xlane.f32.xlu0 %v6182
        %v6184 = vpop.xlane.xlu0 %6183
        %v6185 = vsel %vm1458, %v6181, 0.0
        %6186 = vadd.xlane.f32.xlu0 %v6185
        %v6187 = vpop.xlane.xlu0 %6186
        %v6188 = vmul.f32 %v6184, %v1465
        %v6189 = vmul.f32 %v6187, %v1465
        %v6190 = vadd.f32 %v6188, 1e-12
        %v6191 = vadd.f32 %v6189, 1e-12
        %v6192 = vrsqrt.pop %v6190
        %v6193 = vrsqrt.pop %v6191
        %v6194 = vmul.f32 %v6178, %v6192
        %v6195 = vmul.f32 %v6179, %v6193
        %v6197 = vlaneseq
        %v6198 = vshrl.u32 %v6197, 7
        %v6199 = vsub.s32 0, %v6198
        %v6200 = vrot.slane %v6167, %v6199
        %v6202 = vmul.f32 %v6194, %v6200
        %v6203 = vmul.f32 %v6195, %v6200
        %v6205 = vlaneseq
        %v6206 = vshrl.u32 %v6205, 7
        %v6207 = vsub.s32 0, %v6206
        %v6208 = vrot.slane %v6169, %v6207
        %v6210 = vadd.f32 %v6202, %v6208
        %v6211 = vadd.f32 %v6203, %v6208
        %s6212 = scalar_lea.vmem %s47, 32
        %v6213 = vld [vmem:[%s6212] sm:$0xff]
        %v6214 = vld [vmem:[%s6212 + $0x8] sm:$0xff]
        %v6215 = vld [vmem:[%s6212 + $0x10] sm:$0xff]
        %v6216 = vld [vmem:[%s6212 + $0x18] sm:$0xff]
        %s6217 = scalar_lea.vmem %s49, 1
        %v6218 = vld [vmem:[%s6217] sm:$0x1]
        %v6220 = vlaneseq
        %v6221 = vshrl.u32 %v6220, 7
        %v6222 = vsub.s32 0, %v6221
        %v6223 = vrot.slane %v6218, %v6222
        %v6226 = vsel %vm1458, %v6210, 0
        %v6229 = vsel %vm1458, %v6211, 0
        %6231 = vmatprep.subr.mxu0 0.0
        %6232 = vmatpush1.msra.mxu0 %v6213
        %6233 = vmatprep.subr.mxu0 0.0
        %6234 = vmatpush1.msra.mxu0 %v6214
        %6235 = vmatprep.subr.mxu0 0.0
        %6236 = vmatpush1.msra.mxu0 %v6215
        %6237 = vmatprep.subr.mxu0 0.0
        %6238 = vmatpush1.msra.mxu0 %v6216
        %6239 = vmatprep.subr.mxu0 0.0
        %6240 = vmatpush1.msra.mxu0 0.0
        %6241 = vmatprep.subr.mxu0 0.0
        %6242 = vmatpush1.msra.mxu0 0.0
        %6243 = vmatprep.subr.mxu0 0.0
        %6244 = vmatpush1.msra.mxu0 0.0
        %6245 = vmatprep.subr.mxu0 0.0
        %6246 = vmatpush1.msra.mxu0 0.0
        %6247 = vmatprep.subr.mxu0 0.0
        %6248 = vmatpush1.msra.mxu0 0.0
        %6249 = vmatprep.subr.mxu0 0.0
        %6250 = vmatpush1.msra.mxu0 0.0
        %6251 = vmatprep.subr.mxu0 0.0
        %6252 = vmatpush1.msra.mxu0 0.0
        %6253 = vmatprep.subr.mxu0 0.0
        %6254 = vmatpush1.msra.mxu0 0.0
        %6255 = vmatprep.subr.mxu0 0.0
        %6256 = vmatpush1.msra.mxu0 0.0
        %6257 = vmatprep.subr.mxu0 0.0
        %6258 = vmatpush1.msra.mxu0 0.0
        %6259 = vmatprep.subr.mxu0 0.0
        %6260 = vmatpush1.msra.mxu0 0.0
        %6261 = vmatprep.subr.mxu0 0.0
        %6262 = vmatpush1.msra.mxu0 0.0
        %6263 = vmatprep.subr.mxu0 0.0
        %6264 = vmatpush1.msra.mxu0 0.0
        %6265 = vmatprep.subr.mxu0 0.0
        %6266 = vmatpush1.msra.mxu0 0.0
        %6267 = vmatprep.subr.mxu0 0.0
        %6268 = vmatpush1.msra.mxu0 0.0
        %6269 = vmatprep.subr.mxu0 0.0
        %6270 = vmatpush1.msra.mxu0 0.0
        %6271 = vmatprep.subr.mxu0 0.0
        %6272 = vmatpush1.msra.mxu0 0.0
        %6273 = vmatprep.subr.mxu0 0.0
        %6274 = vmatpush1.msra.mxu0 0.0
        %6275 = vmatprep.subr.mxu0 0.0
        %6276 = vmatpush1.msra.mxu0 0.0
        %6277 = vmatprep.subr.mxu0 0.0
        %6278 = vmatpush1.msra.mxu0 0.0
        %6279 = vmatprep.subr.mxu0 0.0
        %6280 = vmatpush1.msra.mxu0 0.0
        %6281 = vmatprep.subr.mxu0 0.0
        %6282 = vmatpush1.msra.mxu0 0.0
        %6283 = vmatprep.subr.mxu0 0.0
        %6284 = vmatpush1.msra.mxu0 0.0
        %6285 = vmatprep.subr.mxu0 0.0
        %6286 = vmatpush1.msra.mxu0 0.0
        %6287 = vmatprep.subr.mxu0 0.0
        %6288 = vmatpush1.msra.mxu0 0.0
        %6289 = vmatprep.subr.mxu0 0.0
        %6290 = vmatpush1.msra.mxu0 0.0
        %6291 = vmatprep.subr.mxu0 0.0
        %6292 = vmatpush1.msra.mxu0 0.0
        %6293 = vmatprep.subr.mxu0 0.0
        %6294 = vmatpush1.msra.mxu0 0.0
        %6295 = vmatprep.mubr.f32.mxu0 0.0
        %6296 = vmatmul.mubr.f32.gmra.mrb[0].mxu0 %v6226
        %v6297 = vpop.f32.mrb[0].mxu0
        %v6298 = vadd.f32 %v6223, %v6297
        %v6299 = vpop.f32.mrb[0].mxu0
        %6300 = vmatprep.mubr.f32.mxu0 0.0
        %6301 = vmatmul.mubr.f32.gmra.mrb[0].mxu0 %v6229
        %v6302 = vpop.f32.mrb[0].mxu0
        %v6303 = vadd.f32 %v6223, %v6302
        %v6304 = vpop.f32.mrb[0].mxu0
        %6305 = vdwg.mxu0
        %v6306 = vmul.f32 %v6298, 0.5
        %v6307 = vmul.f32 %v6303, 0.5
        %v6308 = vmul.f32 %v6298, 0.70710677
        %v6309 = vmul.f32 %v6303, 0.70710677
        %v6310 = verf.f32.pop %v6308
        %v6311 = verf.f32.pop %v6309
        %v6312 = vadd.f32 %v6310, 1.0
        %v6313 = vadd.f32 %v6311, 1.0
        %v6314 = vmul.f32 %v6306, %v6312
        %v6315 = vmul.f32 %v6307, %v6313
        %s6316 = scalar_lea.vmem %s51, 64
        %v6317 = vld [vmem:[%s6316] sm:$0xff]
        %v6318 = vld [vmem:[%s6316 + $0x8] sm:$0xff]
        %v6319 = vld [vmem:[%s6316 + $0x10] sm:$0xff]
        %v6320 = vld [vmem:[%s6316 + $0x18] sm:$0xff]
        %v6321 = vld [vmem:[%s6316 + $0x20] sm:$0xff]
        %v6322 = vld [vmem:[%s6316 + $0x28] sm:$0xff]
        %v6323 = vld [vmem:[%s6316 + $0x30] sm:$0xff]
        %v6324 = vld [vmem:[%s6316 + $0x38] sm:$0xff]
        %s6325 = scalar_lea.vmem %s53, 1
        %v6326 = vld [vmem:[%s6325] sm:$0x1]
        %v6328 = vlaneseq
        %v6329 = vshrl.u32 %v6328, 7
        %v6330 = vsub.s32 0, %v6329
        %v6331 = vrot.slane %v6326, %v6330
        %v6334 = vsel %vm3852, %v6314, 0
        %v6337 = vsel %vm3852, %v6315, 0
        %6339 = vmatprep.subr.mxu0 0.0
        %6340 = vmatpush1.msra.mxu0 %v6317
        %6341 = vmatprep.subr.mxu0 0.0
        %6342 = vmatpush1.msra.mxu0 %v6318
        %6343 = vmatprep.subr.mxu0 0.0
        %6344 = vmatpush1.msra.mxu0 %v6319
        %6345 = vmatprep.subr.mxu0 0.0
        %6346 = vmatpush1.msra.mxu0 %v6320
        %6347 = vmatprep.subr.mxu0 0.0
        %6348 = vmatpush1.msra.mxu0 %v6321
        %6349 = vmatprep.subr.mxu0 0.0
        %6350 = vmatpush1.msra.mxu0 %v6322
        %6351 = vmatprep.subr.mxu0 0.0
        %6352 = vmatpush1.msra.mxu0 %v6323
        %6353 = vmatprep.subr.mxu0 0.0
        %6354 = vmatpush1.msra.mxu0 %v6324
        %6355 = vmatprep.subr.mxu0 0.0
        %6356 = vmatpush1.msra.mxu0 0.0
        %6357 = vmatprep.subr.mxu0 0.0
        %6358 = vmatpush1.msra.mxu0 0.0
        %6359 = vmatprep.subr.mxu0 0.0
        %6360 = vmatpush1.msra.mxu0 0.0
        %6361 = vmatprep.subr.mxu0 0.0
        %6362 = vmatpush1.msra.mxu0 0.0
        %6363 = vmatprep.subr.mxu0 0.0
        %6364 = vmatpush1.msra.mxu0 0.0
        %6365 = vmatprep.subr.mxu0 0.0
        %6366 = vmatpush1.msra.mxu0 0.0
        %6367 = vmatprep.subr.mxu0 0.0
        %6368 = vmatpush1.msra.mxu0 0.0
        %6369 = vmatprep.subr.mxu0 0.0
        %6370 = vmatpush1.msra.mxu0 0.0
        %6371 = vmatprep.subr.mxu0 0.0
        %6372 = vmatpush1.msra.mxu0 0.0
        %6373 = vmatprep.subr.mxu0 0.0
        %6374 = vmatpush1.msra.mxu0 0.0
        %6375 = vmatprep.subr.mxu0 0.0
        %6376 = vmatpush1.msra.mxu0 0.0
        %6377 = vmatprep.subr.mxu0 0.0
        %6378 = vmatpush1.msra.mxu0 0.0
        %6379 = vmatprep.subr.mxu0 0.0
        %6380 = vmatpush1.msra.mxu0 0.0
        %6381 = vmatprep.subr.mxu0 0.0
        %6382 = vmatpush1.msra.mxu0 0.0
        %6383 = vmatprep.subr.mxu0 0.0
        %6384 = vmatpush1.msra.mxu0 0.0
        %6385 = vmatprep.subr.mxu0 0.0
        %6386 = vmatpush1.msra.mxu0 0.0
        %6387 = vmatprep.subr.mxu0 0.0
        %6388 = vmatpush1.msra.mxu0 0.0
        %6389 = vmatprep.subr.mxu0 0.0
        %6390 = vmatpush1.msra.mxu0 0.0
        %6391 = vmatprep.subr.mxu0 0.0
        %6392 = vmatpush1.msra.mxu0 0.0
        %6393 = vmatprep.subr.mxu0 0.0
        %6394 = vmatpush1.msra.mxu0 0.0
        %6395 = vmatprep.subr.mxu0 0.0
        %6396 = vmatpush1.msra.mxu0 0.0
        %6397 = vmatprep.subr.mxu0 0.0
        %6398 = vmatpush1.msra.mxu0 0.0
        %6399 = vmatprep.subr.mxu0 0.0
        %6400 = vmatpush1.msra.mxu0 0.0
        %6401 = vmatprep.subr.mxu0 0.0
        %6402 = vmatpush1.msra.mxu0 0.0
        %6403 = vmatprep.mubr.f32.mxu0 0.0
        %6404 = vmatmul.mubr.f32.gmra.mrb[0].mxu0 %v6334
        %v6405 = vpop.f32.mrb[0].mxu0
        %v6406 = vadd.f32 %v6331, %v6405
        %v6407 = vpop.f32.mrb[0].mxu0
        %6408 = vmatprep.mubr.f32.mxu0 0.0
        %6409 = vmatmul.mubr.f32.gmra.mrb[0].mxu0 %v6337
        %v6410 = vpop.f32.mrb[0].mxu0
        %v6411 = vadd.f32 %v6331, %v6410
        %v6412 = vpop.f32.mrb[0].mxu0
        %6413 = vdwg.mxu0
        %v6414 = vadd.f32 %v6406, %v6210
        %v6415 = vadd.f32 %v6411, %v6211
        %s6416 = scalar_lea.vmem %s55, 1
        %v6417 = vld [vmem:[%s6416] sm:$0x1]
        %s6418 = scalar_lea.vmem %s57, 1
        %v6419 = vld [vmem:[%s6418] sm:$0x1]
        %v6420 = vsel %vm1458, %v6414, 0.0
        %6421 = vadd.xlane.f32.xlu0 %v6420
        %v6422 = vpop.xlane.xlu0 %6421
        %v6423 = vsel %vm1458, %v6415, 0.0
        %6424 = vadd.xlane.f32.xlu0 %v6423
        %v6425 = vpop.xlane.xlu0 %6424
        %v6426 = vmul.f32 %v6422, %v1465
        %v6427 = vmul.f32 %v6425, %v1465
        %v6428 = vsub.f32 %v6414, %v6426
        %v6429 = vsub.f32 %v6415, %v6427
        %v6430 = vmul.f32 %v6428, %v6428
        %v6431 = vmul.f32 %v6429, %v6429
        %v6432 = vsel %vm1458, %v6430, 0.0
        %6433 = vadd.xlane.f32.xlu0 %v6432
        %v6434 = vpop.xlane.xlu0 %6433
        %v6435 = vsel %vm1458, %v6431, 0.0
        %6436 = vadd.xlane.f32.xlu0 %v6435
        %v6437 = vpop.xlane.xlu0 %6436
        %v6438 = vmul.f32 %v6434, %v1465
        %v6439 = vmul.f32 %v6437, %v1465
        %v6440 = vadd.f32 %v6438, 1e-12
        %v6441 = vadd.f32 %v6439, 1e-12
        %v6442 = vrsqrt.pop %v6440
        %v6443 = vrsqrt.pop %v6441
        %v6444 = vmul.f32 %v6428, %v6442
        %v6445 = vmul.f32 %v6429, %v6443
        %v6447 = vlaneseq
        %v6448 = vshrl.u32 %v6447, 7
        %v6449 = vsub.s32 0, %v6448
        %v6450 = vrot.slane %v6417, %v6449
        %v6452 = vmul.f32 %v6444, %v6450
        %v6453 = vmul.f32 %v6445, %v6450
        %v6455 = vlaneseq
        %v6456 = vshrl.u32 %v6455, 7
        %v6457 = vsub.s32 0, %v6456
        %v6458 = vrot.slane %v6419, %v6457
        %v6460 = vadd.f32 %v6452, %v6458
        %v6461 = vadd.f32 %v6453, %v6458
        %v6462 = vld [vmem:[%s59] sm:$0xff]
        %v6463 = vld [vmem:[%s59 + $0x8] sm:$0xff]
        %v6464 = vld [vmem:[%s59 + $0x10] sm:$0xff]
        %v6465 = vld [vmem:[%s59 + $0x18] sm:$0xff]
        %v6466 = vld [vmem:[%s61] sm:$0x1]
        %v6468 = vlaneseq
        %v6469 = vshrl.u32 %v6468, 7
        %v6470 = vsub.s32 0, %v6469
        %v6471 = vrot.slane %v6466, %v6470
        %v6474 = vsel %vm1458, %v6460, 0
        %v6477 = vsel %vm1458, %v6461, 0
        %6479 = vmatprep.subr.mxu0 0.0
        %6480 = vmatpush1.msra.mxu0 %v6462
        %6481 = vmatprep.subr.mxu0 0.0
        %6482 = vmatpush1.msra.mxu0 %v6463
        %6483 = vmatprep.subr.mxu0 0.0
        %6484 = vmatpush1.msra.mxu0 %v6464
        %6485 = vmatprep.subr.mxu0 0.0
        %6486 = vmatpush1.msra.mxu0 %v6465
        %6487 = vmatprep.subr.mxu0 0.0
        %6488 = vmatpush1.msra.mxu0 0.0
        %6489 = vmatprep.subr.mxu0 0.0
        %6490 = vmatpush1.msra.mxu0 0.0
        %6491 = vmatprep.subr.mxu0 0.0
        %6492 = vmatpush1.msra.mxu0 0.0
        %6493 = vmatprep.subr.mxu0 0.0
        %6494 = vmatpush1.msra.mxu0 0.0
        %6495 = vmatprep.subr.mxu0 0.0
        %6496 = vmatpush1.msra.mxu0 0.0
        %6497 = vmatprep.subr.mxu0 0.0
        %6498 = vmatpush1.msra.mxu0 0.0
        %6499 = vmatprep.subr.mxu0 0.0
        %6500 = vmatpush1.msra.mxu0 0.0
        %6501 = vmatprep.subr.mxu0 0.0
        %6502 = vmatpush1.msra.mxu0 0.0
        %6503 = vmatprep.subr.mxu0 0.0
        %6504 = vmatpush1.msra.mxu0 0.0
        %6505 = vmatprep.subr.mxu0 0.0
        %6506 = vmatpush1.msra.mxu0 0.0
        %6507 = vmatprep.subr.mxu0 0.0
        %6508 = vmatpush1.msra.mxu0 0.0
        %6509 = vmatprep.subr.mxu0 0.0
        %6510 = vmatpush1.msra.mxu0 0.0
        %6511 = vmatprep.subr.mxu0 0.0
        %6512 = vmatpush1.msra.mxu0 0.0
        %6513 = vmatprep.subr.mxu0 0.0
        %6514 = vmatpush1.msra.mxu0 0.0
        %6515 = vmatprep.subr.mxu0 0.0
        %6516 = vmatpush1.msra.mxu0 0.0
        %6517 = vmatprep.subr.mxu0 0.0
        %6518 = vmatpush1.msra.mxu0 0.0
        %6519 = vmatprep.subr.mxu0 0.0
        %6520 = vmatpush1.msra.mxu0 0.0
        %6521 = vmatprep.subr.mxu0 0.0
        %6522 = vmatpush1.msra.mxu0 0.0
        %6523 = vmatprep.subr.mxu0 0.0
        %6524 = vmatpush1.msra.mxu0 0.0
        %6525 = vmatprep.subr.mxu0 0.0
        %6526 = vmatpush1.msra.mxu0 0.0
        %6527 = vmatprep.subr.mxu0 0.0
        %6528 = vmatpush1.msra.mxu0 0.0
        %6529 = vmatprep.subr.mxu0 0.0
        %6530 = vmatpush1.msra.mxu0 0.0
        %6531 = vmatprep.subr.mxu0 0.0
        %6532 = vmatpush1.msra.mxu0 0.0
        %6533 = vmatprep.subr.mxu0 0.0
        %6534 = vmatpush1.msra.mxu0 0.0
        %6535 = vmatprep.subr.mxu0 0.0
        %6536 = vmatpush1.msra.mxu0 0.0
        %6537 = vmatprep.subr.mxu0 0.0
        %6538 = vmatpush1.msra.mxu0 0.0
        %6539 = vmatprep.subr.mxu0 0.0
        %6540 = vmatpush1.msra.mxu0 0.0
        %6541 = vmatprep.subr.mxu0 0.0
        %6542 = vmatpush1.msra.mxu0 0.0
        %6543 = vmatprep.mubr.f32.mxu0 0.0
        %6544 = vmatmul.mubr.f32.gmra.mrb[0].mxu0 %v6474
        %v6545 = vpop.f32.mrb[0].mxu0
        %v6546 = vadd.f32 %v6471, %v6545
        %v6547 = vpop.f32.mrb[0].mxu0
        %6548 = vmatprep.mubr.f32.mxu0 0.0
        %6549 = vmatmul.mubr.f32.gmra.mrb[0].mxu0 %v6477
        %v6550 = vpop.f32.mrb[0].mxu0
        %v6551 = vadd.f32 %v6471, %v6550
        %v6552 = vpop.f32.mrb[0].mxu0
        %6553 = vdwg.mxu0
        %vm6554 = vcmask 662528
        %6555 = vst.msk [vmem:[%s1140] sm:$0xff] %vm6554, %v6546
        %6556 = vst.msk [vmem:[%s1140 + $0x8] sm:$0xff] %vm6554, %v6551
        %vm6559 = vcmask 1042432
        %v6560 = vrot.slane %v6546, 5
        %v6561 = vrot.slane %v6551, 5
        %v6562 = vsel %vm6559, %v6560, %v6561
        %6563 = vrot.lane.b32.xlu0 %v6562, 8
        %v6564 = vpop.permute.xlu0 %6563
        %v6566 = vrot.slane %v6551, 2
        %6567 = vrot.lane.b32.xlu0 %v6566, 16
        %v6568 = vpop.permute.xlu0 %6567
        %v6570 = vsel %vm1769, %v6546, %v6564
        %v6571 = vsel %vm1867, %v6570, %v6568
        %v6572 = vld [vmem:[%s63] sm:$0xff]
        %v6573 = vld [vmem:[%s63 + $0x8] sm:$0xff]
        %v6574 = vld [vmem:[%s63 + $0x10] sm:$0xff]
        %v6575 = vld [vmem:[%s65] sm:$0x1]
        %v6577 = vlaneseq
        %v6578 = vshrl.u32 %v6577, 7
        %v6579 = vsub.s32 0, %v6578
        %v6580 = vrot.slane %v6575, %v6579
        %v6583 = vrot.slane %v6571, 1
        %vm6584 = vcmask 195584
        %v6585 = vsel %vm6584, %v6583, 0
        %6587 = vmatprep.subr.mxu0 0.0
        %6588 = vmatpush1.msra.mxu0 %v6572
        %6589 = vmatprep.subr.mxu0 0.0
        %6590 = vmatpush1.msra.mxu0 %v6573
        %6591 = vmatprep.subr.mxu0 0.0
        %6592 = vmatpush1.msra.mxu0 %v6574
        %6593 = vmatprep.subr.mxu0 0.0
        %6594 = vmatpush1.msra.mxu0 0.0
        %6595 = vmatprep.subr.mxu0 0.0
        %6596 = vmatpush1.msra.mxu0 0.0
        %6597 = vmatprep.subr.mxu0 0.0
        %6598 = vmatpush1.msra.mxu0 0.0
        %6599 = vmatprep.subr.mxu0 0.0
        %6600 = vmatpush1.msra.mxu0 0.0
        %6601 = vmatprep.subr.mxu0 0.0
        %6602 = vmatpush1.msra.mxu0 0.0
        %6603 = vmatprep.subr.mxu0 0.0
        %6604 = vmatpush1.msra.mxu0 0.0
        %6605 = vmatprep.subr.mxu0 0.0
        %6606 = vmatpush1.msra.mxu0 0.0
        %6607 = vmatprep.subr.mxu0 0.0
        %6608 = vmatpush1.msra.mxu0 0.0
        %6609 = vmatprep.subr.mxu0 0.0
        %6610 = vmatpush1.msra.mxu0 0.0
        %6611 = vmatprep.subr.mxu0 0.0
        %6612 = vmatpush1.msra.mxu0 0.0
        %6613 = vmatprep.subr.mxu0 0.0
        %6614 = vmatpush1.msra.mxu0 0.0
        %6615 = vmatprep.subr.mxu0 0.0
        %6616 = vmatpush1.msra.mxu0 0.0
        %6617 = vmatprep.subr.mxu0 0.0
        %6618 = vmatpush1.msra.mxu0 0.0
        %6619 = vmatprep.subr.mxu0 0.0
        %6620 = vmatpush1.msra.mxu0 0.0
        %6621 = vmatprep.subr.mxu0 0.0
        %6622 = vmatpush1.msra.mxu0 0.0
        %6623 = vmatprep.subr.mxu0 0.0
        %6624 = vmatpush1.msra.mxu0 0.0
        %6625 = vmatprep.subr.mxu0 0.0
        %6626 = vmatpush1.msra.mxu0 0.0
        %6627 = vmatprep.subr.mxu0 0.0
        %6628 = vmatpush1.msra.mxu0 0.0
        %6629 = vmatprep.subr.mxu0 0.0
        %6630 = vmatpush1.msra.mxu0 0.0
        %6631 = vmatprep.subr.mxu0 0.0
        %6632 = vmatpush1.msra.mxu0 0.0
        %6633 = vmatprep.subr.mxu0 0.0
        %6634 = vmatpush1.msra.mxu0 0.0
        %6635 = vmatprep.subr.mxu0 0.0
        %6636 = vmatpush1.msra.mxu0 0.0
        %6637 = vmatprep.subr.mxu0 0.0
        %6638 = vmatpush1.msra.mxu0 0.0
        %6639 = vmatprep.subr.mxu0 0.0
        %6640 = vmatpush1.msra.mxu0 0.0
        %6641 = vmatprep.subr.mxu0 0.0
        %6642 = vmatpush1.msra.mxu0 0.0
        %6643 = vmatprep.subr.mxu0 0.0
        %6644 = vmatpush1.msra.mxu0 0.0
        %6645 = vmatprep.subr.mxu0 0.0
        %6646 = vmatpush1.msra.mxu0 0.0
        %6647 = vmatprep.subr.mxu0 0.0
        %6648 = vmatpush1.msra.mxu0 0.0
        %6649 = vmatprep.subr.mxu0 0.0
        %6650 = vmatpush1.msra.mxu0 0.0
        %6651 = vmatprep.mubr.f32.mxu0 0.0
        %6652 = vmatmul.mubr.f32.gmra.mrb[0].mxu0 %v6585
        %v6653 = vpop.f32.mrb[0].mxu0
        %v6654 = vadd.f32 %v6580, %v6653
        %v6655 = vpop.f32.mrb[0].mxu0
        %6656 = vdwg.mxu0
        %vm6657 = vcmask 3072
        %v6658 = vsel %vm6657, %v6654, -inf
        %v6659 = vrot.slane %v6658, 4
        %v6660 = vmax.f32 %v6658, %v6659
        %v6661 = vrot.slane %v6660, 2
        %v6662 = vmax.f32 %v6660, %v6661
        %v6663 = vrot.slane %v6662, 1
        %v6664 = vmax.f32 %v6662, %v6663
        %v6665 = vsub.f32 %v6654, %v6664
        %v6666 = vmul.f32 %v6665, 1.442695
        %v6667 = vpow.pop %v6666
        %v6668 = vsel %vm6657, %v6667, 0.0
        %v6669 = vrot.slane %v6668, 4
        %v6670 = vadd.f32 %v6668, %v6669
        %v6671 = vrot.slane %v6670, 2
        %v6672 = vadd.f32 %v6670, %v6671
        %v6673 = vrot.slane %v6672, 1
        %v6674 = vadd.f32 %v6672, %v6673
        %v6675 = vrcp.pop %v6674
        %v6676 = vmul.f32 %v6667, %v6675
        %6678 = vset.pattern.permute.xlu0 0
        %6679 = vperm.xlu0 %6678, %v6676
        %v6680 = vpop.permute.xlu0 %6679
        %v6683 = vmul.f32 %v6680, %v6583
        %vm6684 = vcmask 191488
        %v6685 = vsel %vm6684, %v6683, 0.0
        %v6686 = vrot.slane %v6685, 4
        %v6687 = vadd.f32 %v6685, %v6686
        %v6688 = vrot.slane %v6687, 2
        %v6689 = vadd.f32 %v6687, %v6688
        %v6690 = vrot.slane %v6689, 1
        %v6691 = vadd.f32 %v6689, %v6690
        %vm6692 = vcmask 188416
        %6693 = vst.msk [vmem:[%s1111] sm:$0x1] %vm6692, %v6691
        %6695 = vrot.lane.b32.xlu0 %v6654, 127
        %v6696 = vpop.permute.xlu0 %6695
        %6698 = vst.msk [vmem:[%s1144] sm:$0xf] %vm6657, %v6696
        %p6699 = scmp.lt.s32.totalorder %s86, 1
        %s6700 = scalar_select %p6699, %s86, 1
        %s6701 = smul.addr %s6700, 2
        %s6702 = smul.addr %s6701, 8
        %s6703 = scalar_lea.vmem %s67, %s6702
        %s6704 = sand.u32 %s833, 1
        %s6705 = scalar_lea.sflag [#allocation3], %s6704
        %s6706 = sand.u32 %s833, 1
        %s6707 = scalar_lea.vmem [#allocation2], %s6706
        %p6708 = scmp.lt.s32.totalorder %s86, 1
        %s6709 = scalar_select %p6708, %s86, 1
        %s6710 = smul.addr %s6709, 4
        %s6711 = scalar_lea.vmem %s71, %s6710
        // Predicated region
        $region153: #{run.1} parent=151 // pred_check
          %p6712 = pneg %p817
        $region154: #{run.1} parent=151 // pred_check_branch
          %6714 = sbr.rel (%p6712) target = $region156
        $region155: #{run.1} parent=151 // pred_region
          _
        $region156: #{run.1} parent=151 // pred_fallthru
          _
        // Predicated region
        $region157: #{run.1} parent=151 // pred_check
          %p6715 = pneg %p843
        $region158: #{run.1} parent=151 // pred_check_branch
          %6717 = sbr.rel (%p6715) target = $region160
        $region159: #{run.1} parent=151 // pred_region
          %s6719 = ssub.s32 16, 16
          %6720 = vsyncadd %s6705, %s6719
          %s6721 = smul.addr %s86, 16
          %s6722 = scalar_lea.hbm %s69, %s6721
          %s6724 = sshll.u32 %s6707, 4
          %s6725 = int_to_ptr.vmem [resolvable:$true] %s6724
          %6727 = dma.vmem_to_hbm [thread:$0]  %s6725, 16, %s6722, %s6705
        $region160: #{run.1} parent=151 // pred_fallthru
          _
        // Predicated region
        $region161: #{run.1} parent=151 // pred_check
          %p6728 = pneg %p869
        $region162: #{run.1} parent=151 // pred_check_branch
          %6730 = sbr.rel (%p6728) target = $region164
        $region163: #{run.1} parent=151 // pred_region
          _
        $region164: #{run.1} parent=151 // pred_fallthru
          _
      $region152: #{run.1} parent=5 // pred_fallthru
        _
      %p6731 = scmp.le.s32.totalorder 2, %s81
      // Predicated region
      $region165: #{run.1} parent=5 // pred_check
        %p6732 = pneg %p6731
      $region166: #{run.1} parent=5 // pred_check_branch
        %6734 = sbr.rel (%p6732) target = $region168
      $region167: #{run.1} parent=5 // pred_region
        %s6735 = ssub.s32 %s81, 2
        // Predicated region
        $region169: #{run.1} parent=167 // pred_check
          %p6736 = pneg %p823
        $region170: #{run.1} parent=167 // pred_check_branch
          %6738 = sbr.rel (%p6736) target = $region172
        $region171: #{run.1} parent=167 // pred_region
          %p6739 = scmp.lt.s32.totalorder %s87, 1
          %s6740 = scalar_select %p6739, %s87, 1
          %s6741 = smul.addr %s6740, 2
          %s6742 = smul.addr %s6741, 8
          %s6743 = scalar_lea.vmem %s67, %s6742
        $region172: #{run.1} parent=167 // pred_fallthru
          _
        // Predicated region
        $region173: #{run.1} parent=167 // pred_check
          %p6744 = pneg %p849
        $region174: #{run.1} parent=167 // pred_check_branch
          %6746 = sbr.rel (%p6744) target = $region176
        $region175: #{run.1} parent=167 // pred_region
          %s6747 = sand.u32 %s834, 1
          %s6748 = scalar_lea.sflag [#allocation3], %s6747
          %s6749 = sand.u32 %s834, 1
          %s6750 = scalar_lea.vmem [#allocation2], %s6749
          %6751 = dma.done %s6748, 16
        $region176: #{run.1} parent=167 // pred_fallthru
          _
        // Predicated region
        $region177: #{run.1} parent=167 // pred_check
          %p6752 = pneg %p875
        $region178: #{run.1} parent=167 // pred_check_branch
          %6754 = sbr.rel (%p6752) target = $region180
        $region179: #{run.1} parent=167 // pred_region
          %p6755 = scmp.lt.s32.totalorder %s87, 1
          %s6756 = scalar_select %p6755, %s87, 1
          %s6757 = smul.addr %s6756, 4
          %s6758 = scalar_lea.vmem %s71, %s6757
        $region180: #{run.1} parent=167 // pred_fallthru
          _
      $region168: #{run.1} parent=5 // pred_fallthru
        _
    $region6: #{run.1} parent=1 // loop_footer
      %s85 = sadd.s32 1, %s81
    $region7: #{run.1} parent=1 // loop_footer_branch
      %80 = sbr.rel target = $region3
    $region8: #{run.1} parent=1 // loop_exit
      _
    %6759 = vsyncpa [#allocation3], 1
    %s6760 = scalar_lea.sflag [#allocation3], 1
    %6761 = vsyncpa %s6760, 1

</llo_original>
